<compile_context>
chip_gen: v7x
topology: tpu7x:2x2x1
jax: 0.10.0
libtpu: 0.0.40
codegen_flags: <defaults>
</compile_context>

<pallas_src>
import functools

import jax
import jax.numpy as jnp
import numpy as np
from jax.experimental import pallas as pl
from jax.experimental.pallas import tpu as pltpu


def _iota2(shape, dim):
    return jax.lax.broadcasted_iota(jnp.int32, shape, dim)


# ---------------------------------------------------------------------------
# In-kernel building blocks (operate on one image; everything stays in VMEM).
# ---------------------------------------------------------------------------
def _deconv2x2_s2(xs, pref, w_off, b_off, cu):
    """ConvTranspose2d(kernel=2, stride=2) for one image.

    xs: list of cin (H, W) f32 arrays -> list of cu (2H, 2W) f32 arrays.
    The four phase images t_ab = sum_c x_c * w[c,o,a,b] are VPU broadcast-FMAs; the
    stride-2 pixel-shuffle placement uses exact 0/1 dilation matrices on the MXU
    (out[2i+a, 2j+b] = t_ab[i, j]), so no unaligned stores / relayouts are needed.
    Weight layout: PyTorch ConvTranspose2d (cin, cu, 2, 2), flattened row-major at w_off.
    """
    cin = len(xs)
    H, W = xs[0].shape
    # P_a: (2H, H) with P_a[2i+a, i] = 1 ; Q_b: (W, 2W) with Q_b[j, 2j+b] = 1
    P = [(_iota2((2 * H, H), 0) == 2 * _iota2((2 * H, H), 1) + a).astype(jnp.float32)
         for a in range(2)]
    Q = [(_iota2((W, 2 * W), 1) == 2 * _iota2((W, 2 * W), 0) + b).astype(jnp.float32)
         for b in range(2)]
    out = []
    for o in range(cu):
        rows = None
        for a in range(2):
            cols = None
            for b in range(2):
                t = None
                for c in range(cin):
                    w = pref[w_off + ((c * cu + o) * 2 + a) * 2 + b]
                    t = xs[c] * w if t is None else t + xs[c] * w
                tb = jnp.dot(t, Q[b], preferred_element_type=jnp.float32)      # (H, 2W)
                cols = tb if cols is None else cols + tb
            ra = jnp.dot(P[a], cols, preferred_element_type=jnp.float32)       # (2H, 2W)
            rows = ra if rows is None else rows + ra
        out.append(rows + pref[b_off + o])
    return out


def _conv3x3_in_lrelu(chans, pad_fn, pad_ref, pref, w_off, b_off, g_off, bt_off,
                      cout, *, eps=1e-5, slope=0.1):
    """Conv2d(3x3, pad=1) + InstanceNorm2d(affine, biased var) + LeakyReLU(0.1) for one image.

    chans  : list of cin (H, W) f32 arrays.
    pad_fn : (H, W) -> (H+2, W+2) zero-halo embedding.
    pad_ref: VMEM scratch (>=cin, H+2, W+2); taps are read as shifted static windows of it.
    pref   : 1-D SMEM params ref; conv weight (HWIO order) at w_off, bias/gamma/beta at *_off.
    """
    cin = len(chans)
    H, W = chans[0].shape
    # in-kernel halo: aligned store of the fully zero-padded plane per input channel
    for c in range(cin):
        pad_ref[c] = pad_fn(chans[c])

    # conv: 9 * cin * cout scalar-broadcast FMAs on the VPU (no tiny-K MXU contractions)
    acc = [jnp.full((H, W), pref[b_off + co], jnp.float32) for co in range(cout)]
    for c in range(cin):
        for ky in range(3):
            for kx in range(3):
                tap = pad_ref[c, ky:ky + H, kx:kx + W]          # shifted (H, W) window
                base = w_off + (ky * 3 + kx) * cin * cout + c * cout
                for co in range(cout):
                    acc[co] = acc[co] + tap * pref[base + co]

    # InstanceNorm (one-pass stats, biased variance, eps=1e-5) + affine + LeakyReLU(0.1)
    inv_hw = 1.0 / float(H * W)
    out = []
    for co in range(cout):
        a = acc[co]
        s1 = jnp.sum(a, keepdims=True)                          # (1, 1)
        s2 = jnp.sum(a * a, keepdims=True)                      # (1, 1)
        mean = s1 * inv_hw
        var = s2 * inv_hw - mean * mean                         # E[x^2] - E[x]^2
        scale = pref[g_off + co] * jax.lax.rsqrt(var + eps)
        y = (a - mean) * scale + pref[bt_off + co]
        out.append(jnp.where(y > 0, y, slope * y))
    return out


# ---------------------------------------------------------------------------
# Fused kernel: one image per grid step (all intermediates stay in VMEM).
# ---------------------------------------------------------------------------
def _upcat_kernel(params_ref, x_ref, o_ref, pad_ref, *, cin, cu, cout, offs):
    (o_upw, o_upb, o_w0, o_b0, o_g0, o_bt0, o_w1, o_b1, o_g1, o_bt1) = offs
    H, W = x_ref.shape[1], x_ref.shape[2]
    H2, W2 = 2 * H, 2 * W

    # exact 0/1 zero-halo embedding matrices (shared by both convs):
    #   (er @ v @ ec)[i, k] = v[i-1, k-1] inside, 0 on the 1-pixel border
    er = (_iota2((H2 + 2, H2), 0) == _iota2((H2 + 2, H2), 1) + 1).astype(jnp.float32)
    ec = (_iota2((W2, W2 + 2), 1) == _iota2((W2, W2 + 2), 0) + 1).astype(jnp.float32)
    pad_fn = lambda v: jnp.dot(
        er, jnp.dot(v, ec, preferred_element_type=jnp.float32),
        preferred_element_type=jnp.float32)

    xs = [x_ref[c] for c in range(cin)]                         # cin x (H, W)

    # 1) upsample: ConvTranspose2d(k=2, s=2)
    y = _deconv2x2_s2(xs, params_ref, o_upw, o_upb, cu)         # cu x (H2, W2)

    # 2) conv_0  /  3) conv_1   (dropout = 0.0 -> identity, not emitted)
    y = _conv3x3_in_lrelu(y, pad_fn, pad_ref, params_ref, o_w0, o_b0, o_g0, o_bt0, cout)
    y = _conv3x3_in_lrelu(y, pad_fn, pad_ref, params_ref, o_w1, o_b1, o_g1, o_bt1, cout)

    # 4) lane-dense store: interleave channels on the lane axis,
    #    out[h, w*cout + c] = y[c][h, w]   ->  last dim = W2*cout = 128 (unmasked stores)
    wq = _iota2((W2, W2 * cout), 0)
    kq = _iota2((W2, W2 * cout), 1)
    out = jnp.zeros((H2, W2 * cout), jnp.float32)
    for c in range(cout):
        sel = (kq == cout * wq + c).astype(jnp.float32)         # (W2, W2*cout) 0/1 scatter
        out = out + jnp.dot(y[c], sel, preferred_element_type=jnp.float32)
    o_ref[...] = out


def upcat_forward(x, p):
    """UpCat.forward (dim=2, halves=True, upsample='deconv').

    x: (N, Cin, H, W) float32 (NCHW, as in the PyTorch module).
    Returns (N, Cout, 2H, 2W) float32.
    """
    N, Ci, H, W = x.shape
    Cu = p["up_w"].shape[1]
    Co = p["c0_w"].shape[-1]
    H2, W2 = 2 * H, 2 * W

    # pack all (tiny) weights / biases / affine params into one 1-D f32 SMEM array
    names = ("up_w", "up_b", "c0_w", "c0_b", "c0_g", "c0_beta",
             "c1_w", "c1_b", "c1_g", "c1_beta")
    flats = [p[k].astype(jnp.float32).reshape(-1) for k in names]
    sizes = [int(f.shape[0]) for f in flats]
    offs = tuple(int(v) for v in np.cumsum([0] + sizes[:-1]))
    params_flat = jnp.concatenate(flats)

    kernel = functools.partial(_upcat_kernel, cin=Ci, cu=Cu, cout=Co, offs=offs)

    out = pl.pallas_call(
        kernel,
        out_shape=jax.ShapeDtypeStruct((N, H2, W2 * Co), jnp.float32),
        grid=(N,),                                              # one image / step; N>=2 feeds both v7x TCs
        in_specs=[
            pl.BlockSpec(memory_space=pltpu.MemorySpace.SMEM),  # packed scalar params
            pl.BlockSpec((None, Ci, H, W), lambda n: (n, 0, 0, 0)),   # one NCHW image per step
        ],
        out_specs=pl.BlockSpec((None, H2, W2 * Co), lambda n: (n, 0, 0)),   # lane-dense slab
        scratch_shapes=[pltpu.VMEM((max(Cu, Co), H2 + 2, W2 + 2), jnp.float32)],  # haloed planes
        compiler_params=pltpu.CompilerParams(dimension_semantics=("parallel",)),
    )(params_flat, x)

    # (N, H2, W2*Co): lane axis is (w, c) with c fastest -> free reshape to NHWC, then a tiny
    # (32 KB) transpose to NCHW for PyTorch layout parity (all large intermediates stayed in VMEM).
    return jnp.transpose(out.reshape(N, H2, W2, Co), (0, 3, 1, 2))


# ---------------------------------------------------------------------------
# Plain-JAX reference (independent implementation) for verification.
# ---------------------------------------------------------------------------
def reference_upcat(x, p):
    N, Ci, H, W = x.shape
    Cu = p["up_w"].shape[1]
    y = jnp.einsum("ncij,coab->niajbo", x, p["up_w"]).reshape(N, 2 * H, 2 * W, Cu)
    y = y + p["up_b"]

    def block(z, w, b, g, bt):
        z = jax.lax.conv_general_dilated(
            z, w, (1, 1), "SAME", dimension_numbers=("NHWC", "HWIO", "NHWC")) + b
        m = jnp.mean(z, axis=(1, 2), keepdims=True)
        v = jnp.mean((z - m) ** 2, axis=(1, 2), keepdims=True)   # biased, like PyTorch IN
        z = (z - m) / jnp.sqrt(v + 1e-5) * g + bt
        return jnp.where(z > 0, z, 0.1 * z)

    y = block(y, p["c0_w"], p["c0_b"], p["c0_g"], p["c0_beta"])
    y = block(y, p["c1_w"], p["c1_b"], p["c1_g"], p["c1_beta"])
    return jnp.transpose(y, (0, 3, 1, 2))                        # NCHW


if __name__ == "__main__":
    key = jax.random.PRNGKey(0)
    N, in_chns, Hs, Ws = 2, 4, 16, 16
    out_chns = 4
    up_chns = in_chns // 2                                       # halves=True

    ks = jax.random.split(key, 10)
    x = jax.random.normal(ks[0], (N, in_chns, Hs, Ws), jnp.float32)   # NCHW, like PyTorch

    params = dict(
        # ConvTranspose2d(in_chns, up_chns, kernel=2, stride=2): weight (Cin, Cout, 2, 2)
        up_w=0.3 * jax.random.normal(ks[1], (in_chns, up_chns, 2, 2), jnp.float32),
        up_b=0.1 * jax.random.normal(ks[2], (up_chns,), jnp.float32),
        # conv_0: Conv2d(up_chns, out_chns, 3, pad=1) weights in HWIO + InstanceNorm affine
        c0_w=0.3 * jax.random.normal(ks[3], (3, 3, up_chns, out_chns), jnp.float32),
        c0_b=0.1 * jax.random.normal(ks[4], (out_chns,), jnp.float32),
        c0_g=1.0 + 0.1 * jax.random.normal(ks[5], (out_chns,), jnp.float32),
        c0_beta=0.1 * jax.random.normal(ks[6], (out_chns,), jnp.float32),
        # conv_1: Conv2d(out_chns, out_chns, 3, pad=1) + InstanceNorm affine
        c1_w=0.3 * jax.random.normal(ks[7], (3, 3, out_chns, out_chns), jnp.float32),
        c1_b=0.1 * jax.random.normal(ks[8], (out_chns,), jnp.float32),
        c1_g=jnp.ones((out_chns,), jnp.float32),
        c1_beta=jnp.zeros((out_chns,), jnp.float32),
    )

    out = jax.block_until_ready(upcat_forward(x, params))
    ref = jax.block_until_ready(reference_upcat(x, params))

    assert out.shape == (N, out_chns, 2 * Hs, 2 * Ws), out.shape
    np.testing.assert_allclose(np.asarray(out), np.asarray(ref), atol=1e-4, rtol=1e-4)
    print("KERNEL_OK")
</pallas_src>

<mosaic_0001>
module attributes {stable_mosaic.version = 11 : i64} {
  func.func @_upcat_kernel(%arg0: i32, %arg1: memref<274xf32, #tpu.memory_space<smem>>, %arg2: memref<1x4x16x16xf32, #tpu.memory_space<vmem>>, %arg3: memref<1x32x128xf32, #tpu.memory_space<vmem>>, %arg4: memref<4x34x34xf32, #tpu.memory_space<vmem>>) attributes {dimension_semantics = [#tpu.dimension_semantics<parallel>], iteration_bounds = array<i64: 2>, scalar_prefetch = 0 : i64, scratch_operands = 1 : i64, tpu.core_type = #tpu.core_type<tc>, window_params = [{transform_indices = @transform_0, window_bounds = array<i64: 274>}, {transform_indices = @transform_1, window_bounds = array<i64: 1, 4, 16, 16>}, {transform_indices = @transform_2, window_bounds = array<i64: 1, 32, 128>}]} {
    %0 = tpu.iota {dimensions = array<i32: 0>} : vector<34x32xi32>
    %1 = tpu.iota {dimensions = array<i32: 1>} : vector<34x32xi32>
    %c1_i32 = arith.constant 1 : i32
    %2 = vector.broadcast %c1_i32 : i32 to vector<34x32xi32>
    %3 = arith.addi %1, %2 : vector<34x32xi32>
    %4 = arith.cmpi eq, %0, %3 : vector<34x32xi32>
    %5 = arith.extui %4 : vector<34x32xi1> to vector<34x32xi32>
    %6 = arith.sitofp %5 : vector<34x32xi32> to vector<34x32xf32>
    %7 = tpu.iota {dimensions = array<i32: 1>} : vector<32x34xi32>
    %8 = tpu.iota {dimensions = array<i32: 0>} : vector<32x34xi32>
    %c1_i32_0 = arith.constant 1 : i32
    %9 = vector.broadcast %c1_i32_0 : i32 to vector<32x34xi32>
    %10 = arith.addi %8, %9 : vector<32x34xi32>
    %11 = arith.cmpi eq, %7, %10 : vector<32x34xi32>
    %12 = arith.extui %11 : vector<32x34xi1> to vector<32x34xi32>
    %13 = arith.sitofp %12 : vector<32x34xi32> to vector<32x34xf32>
    %c0 = arith.constant 0 : index
    %c0_1 = arith.constant 0 : index
    %c0_2 = arith.constant 0 : index
    %c0_3 = arith.constant 0 : index
    %14 = vector.load %arg2[%c0, %c0_1, %c0_2, %c0_3] : memref<1x4x16x16xf32, #tpu.memory_space<vmem>>, vector<1x1x16x16xf32>
    %15 = vector.shape_cast %14 : vector<1x1x16x16xf32> to vector<16x16xf32>
    %c0_4 = arith.constant 0 : index
    %c1 = arith.constant 1 : index
    %c0_5 = arith.constant 0 : index
    %c0_6 = arith.constant 0 : index
    %16 = vector.load %arg2[%c0_4, %c1, %c0_5, %c0_6] : memref<1x4x16x16xf32, #tpu.memory_space<vmem>>, vector<1x1x16x16xf32>
    %17 = vector.shape_cast %16 : vector<1x1x16x16xf32> to vector<16x16xf32>
    %c0_7 = arith.constant 0 : index
    %c2 = arith.constant 2 : index
    %c0_8 = arith.constant 0 : index
    %c0_9 = arith.constant 0 : index
    %18 = vector.load %arg2[%c0_7, %c2, %c0_8, %c0_9] : memref<1x4x16x16xf32, #tpu.memory_space<vmem>>, vector<1x1x16x16xf32>
    %19 = vector.shape_cast %18 : vector<1x1x16x16xf32> to vector<16x16xf32>
    %c0_10 = arith.constant 0 : index
    %c3 = arith.constant 3 : index
    %c0_11 = arith.constant 0 : index
    %c0_12 = arith.constant 0 : index
    %20 = vector.load %arg2[%c0_10, %c3, %c0_11, %c0_12] : memref<1x4x16x16xf32, #tpu.memory_space<vmem>>, vector<1x1x16x16xf32>
    %21 = vector.shape_cast %20 : vector<1x1x16x16xf32> to vector<16x16xf32>
    %22 = tpu.iota {dimensions = array<i32: 0>} : vector<32x16xi32>
    %23 = tpu.iota {dimensions = array<i32: 1>} : vector<32x16xi32>
    %c2_i32 = arith.constant 2 : i32
    %24 = vector.broadcast %c2_i32 : i32 to vector<32x16xi32>
    %25 = arith.muli %24, %23 : vector<32x16xi32>
    %c0_i32 = arith.constant 0 : i32
    %26 = vector.broadcast %c0_i32 : i32 to vector<32x16xi32>
    %27 = arith.addi %25, %26 : vector<32x16xi32>
    %28 = arith.cmpi eq, %22, %27 : vector<32x16xi32>
    %29 = arith.extui %28 : vector<32x16xi1> to vector<32x16xi32>
    %30 = arith.sitofp %29 : vector<32x16xi32> to vector<32x16xf32>
    %31 = tpu.iota {dimensions = array<i32: 0>} : vector<32x16xi32>
    %32 = tpu.iota {dimensions = array<i32: 1>} : vector<32x16xi32>
    %c2_i32_13 = arith.constant 2 : i32
    %33 = vector.broadcast %c2_i32_13 : i32 to vector<32x16xi32>
    %34 = arith.muli %33, %32 : vector<32x16xi32>
    %c1_i32_14 = arith.constant 1 : i32
    %35 = vector.broadcast %c1_i32_14 : i32 to vector<32x16xi32>
    %36 = arith.addi %34, %35 : vector<32x16xi32>
    %37 = arith.cmpi eq, %31, %36 : vector<32x16xi32>
    %38 = arith.extui %37 : vector<32x16xi1> to vector<32x16xi32>
    %39 = arith.sitofp %38 : vector<32x16xi32> to vector<32x16xf32>
    %40 = tpu.iota {dimensions = array<i32: 1>} : vector<16x32xi32>
    %41 = tpu.iota {dimensions = array<i32: 0>} : vector<16x32xi32>
    %c2_i32_15 = arith.constant 2 : i32
    %42 = vector.broadcast %c2_i32_15 : i32 to vector<16x32xi32>
    %43 = arith.muli %42, %41 : vector<16x32xi32>
    %c0_i32_16 = arith.constant 0 : i32
    %44 = vector.broadcast %c0_i32_16 : i32 to vector<16x32xi32>
    %45 = arith.addi %43, %44 : vector<16x32xi32>
    %46 = arith.cmpi eq, %40, %45 : vector<16x32xi32>
    %47 = arith.extui %46 : vector<16x32xi1> to vector<16x32xi32>
    %48 = arith.sitofp %47 : vector<16x32xi32> to vector<16x32xf32>
    %49 = tpu.iota {dimensions = array<i32: 1>} : vector<16x32xi32>
    %50 = tpu.iota {dimensions = array<i32: 0>} : vector<16x32xi32>
    %c2_i32_17 = arith.constant 2 : i32
    %51 = vector.broadcast %c2_i32_17 : i32 to vector<16x32xi32>
    %52 = arith.muli %51, %50 : vector<16x32xi32>
    %c1_i32_18 = arith.constant 1 : i32
    %53 = vector.broadcast %c1_i32_18 : i32 to vector<16x32xi32>
    %54 = arith.addi %52, %53 : vector<16x32xi32>
    %55 = arith.cmpi eq, %49, %54 : vector<16x32xi32>
    %56 = arith.extui %55 : vector<16x32xi1> to vector<16x32xi32>
    %57 = arith.sitofp %56 : vector<16x32xi32> to vector<16x32xf32>
    %c0_19 = arith.constant 0 : index
    %58 = memref.load %arg1[%c0_19] : memref<274xf32, #tpu.memory_space<smem>>
    %59 = vector.broadcast %58 : f32 to vector<16x16xf32>
    %60 = arith.mulf %15, %59 : vector<16x16xf32>
    %c8 = arith.constant 8 : index
    %61 = memref.load %arg1[%c8] : memref<274xf32, #tpu.memory_space<smem>>
    %62 = vector.broadcast %61 : f32 to vector<16x16xf32>
    %63 = arith.mulf %17, %62 : vector<16x16xf32>
    %64 = arith.addf %60, %63 : vector<16x16xf32>
    %c16 = arith.constant 16 : index
    %65 = memref.load %arg1[%c16] : memref<274xf32, #tpu.memory_space<smem>>
    %66 = vector.broadcast %65 : f32 to vector<16x16xf32>
    %67 = arith.mulf %19, %66 : vector<16x16xf32>
    %68 = arith.addf %64, %67 : vector<16x16xf32>
    %c24 = arith.constant 24 : index
    %69 = memref.load %arg1[%c24] : memref<274xf32, #tpu.memory_space<smem>>
    %70 = vector.broadcast %69 : f32 to vector<16x16xf32>
    %71 = arith.mulf %21, %70 : vector<16x16xf32>
    %72 = arith.addf %68, %71 : vector<16x16xf32>
    %cst = arith.constant dense<0.000000e+00> : vector<16x32xf32>
    %73 = tpu.matmul %72, %48, %cst {dimension_numbers = #tpu.dot_dimension_numbers<[1], [0], [0], [1], [0, 0, 1, 1], [], []>} : vector<16x16xf32>, vector<16x32xf32>, vector<16x32xf32> -> vector<16x32xf32>
    %c1_20 = arith.constant 1 : index
    %74 = memref.load %arg1[%c1_20] : memref<274xf32, #tpu.memory_space<smem>>
    %75 = vector.broadcast %74 : f32 to vector<16x16xf32>
    %76 = arith.mulf %15, %75 : vector<16x16xf32>
    %c9 = arith.constant 9 : index
    %77 = memref.load %arg1[%c9] : memref<274xf32, #tpu.memory_space<smem>>
    %78 = vector.broadcast %77 : f32 to vector<16x16xf32>
    %79 = arith.mulf %17, %78 : vector<16x16xf32>
    %80 = arith.addf %76, %79 : vector<16x16xf32>
    %c17 = arith.constant 17 : index
    %81 = memref.load %arg1[%c17] : memref<274xf32, #tpu.memory_space<smem>>
    %82 = vector.broadcast %81 : f32 to vector<16x16xf32>
    %83 = arith.mulf %19, %82 : vector<16x16xf32>
    %84 = arith.addf %80, %83 : vector<16x16xf32>
    %c25 = arith.constant 25 : index
    %85 = memref.load %arg1[%c25] : memref<274xf32, #tpu.memory_space<smem>>
    %86 = vector.broadcast %85 : f32 to vector<16x16xf32>
    %87 = arith.mulf %21, %86 : vector<16x16xf32>
    %88 = arith.addf %84, %87 : vector<16x16xf32>
    %cst_21 = arith.constant dense<0.000000e+00> : vector<16x32xf32>
    %89 = tpu.matmul %88, %57, %cst_21 {dimension_numbers = #tpu.dot_dimension_numbers<[1], [0], [0], [1], [0, 0, 1, 1], [], []>} : vector<16x16xf32>, vector<16x32xf32>, vector<16x32xf32> -> vector<16x32xf32>
    %90 = arith.addf %73, %89 : vector<16x32xf32>
    %cst_22 = arith.constant dense<0.000000e+00> : vector<32x32xf32>
    %91 = tpu.matmul %30, %90, %cst_22 {dimension_numbers = #tpu.dot_dimension_numbers<[1], [0], [0], [1], [0, 0, 1, 1], [], []>} : vector<32x16xf32>, vector<16x32xf32>, vector<32x32xf32> -> vector<32x32xf32>
    %c2_23 = arith.constant 2 : index
    %92 = memref.load %arg1[%c2_23] : memref<274xf32, #tpu.memory_space<smem>>
    %93 = vector.broadcast %92 : f32 to vector<16x16xf32>
    %94 = arith.mulf %15, %93 : vector<16x16xf32>
    %c10 = arith.constant 10 : index
    %95 = memref.load %arg1[%c10] : memref<274xf32, #tpu.memory_space<smem>>
    %96 = vector.broadcast %95 : f32 to vector<16x16xf32>
    %97 = arith.mulf %17, %96 : vector<16x16xf32>
    %98 = arith.addf %94, %97 : vector<16x16xf32>
    %c18 = arith.constant 18 : index
    %99 = memref.load %arg1[%c18] : memref<274xf32, #tpu.memory_space<smem>>
    %100 = vector.broadcast %99 : f32 to vector<16x16xf32>
    %101 = arith.mulf %19, %100 : vector<16x16xf32>
    %102 = arith.addf %98, %101 : vector<16x16xf32>
    %c26 = arith.constant 26 : index
    %103 = memref.load %arg1[%c26] : memref<274xf32, #tpu.memory_space<smem>>
    %104 = vector.broadcast %103 : f32 to vector<16x16xf32>
    %105 = arith.mulf %21, %104 : vector<16x16xf32>
    %106 = arith.addf %102, %105 : vector<16x16xf32>
    %cst_24 = arith.constant dense<0.000000e+00> : vector<16x32xf32>
    %107 = tpu.matmul %106, %48, %cst_24 {dimension_numbers = #tpu.dot_dimension_numbers<[1], [0], [0], [1], [0, 0, 1, 1], [], []>} : vector<16x16xf32>, vector<16x32xf32>, vector<16x32xf32> -> vector<16x32xf32>
    %c3_25 = arith.constant 3 : index
    %108 = memref.load %arg1[%c3_25] : memref<274xf32, #tpu.memory_space<smem>>
    %109 = vector.broadcast %108 : f32 to vector<16x16xf32>
    %110 = arith.mulf %15, %109 : vector<16x16xf32>
    %c11 = arith.constant 11 : index
    %111 = memref.load %arg1[%c11] : memref<274xf32, #tpu.memory_space<smem>>
    %112 = vector.broadcast %111 : f32 to vector<16x16xf32>
    %113 = arith.mulf %17, %112 : vector<16x16xf32>
    %114 = arith.addf %110, %113 : vector<16x16xf32>
    %c19 = arith.constant 19 : index
    %115 = memref.load %arg1[%c19] : memref<274xf32, #tpu.memory_space<smem>>
    %116 = vector.broadcast %115 : f32 to vector<16x16xf32>
    %117 = arith.mulf %19, %116 : vector<16x16xf32>
    %118 = arith.addf %114, %117 : vector<16x16xf32>
    %c27 = arith.constant 27 : index
    %119 = memref.load %arg1[%c27] : memref<274xf32, #tpu.memory_space<smem>>
    %120 = vector.broadcast %119 : f32 to vector<16x16xf32>
    %121 = arith.mulf %21, %120 : vector<16x16xf32>
    %122 = arith.addf %118, %121 : vector<16x16xf32>
    %cst_26 = arith.constant dense<0.000000e+00> : vector<16x32xf32>
    %123 = tpu.matmul %122, %57, %cst_26 {dimension_numbers = #tpu.dot_dimension_numbers<[1], [0], [0], [1], [0, 0, 1, 1], [], []>} : vector<16x16xf32>, vector<16x32xf32>, vector<16x32xf32> -> vector<16x32xf32>
    %124 = arith.addf %107, %123 : vector<16x32xf32>
    %cst_27 = arith.constant dense<0.000000e+00> : vector<32x32xf32>
    %125 = tpu.matmul %39, %124, %cst_27 {dimension_numbers = #tpu.dot_dimension_numbers<[1], [0], [0], [1], [0, 0, 1, 1], [], []>} : vector<32x16xf32>, vector<16x32xf32>, vector<32x32xf32> -> vector<32x32xf32>
    %126 = arith.addf %91, %125 : vector<32x32xf32>
    %c32 = arith.constant 32 : index
    %127 = memref.load %arg1[%c32] : memref<274xf32, #tpu.memory_space<smem>>
    %128 = vector.broadcast %127 : f32 to vector<32x32xf32>
    %129 = arith.addf %126, %128 : vector<32x32xf32>
    %c4 = arith.constant 4 : index
    %130 = memref.load %arg1[%c4] : memref<274xf32, #tpu.memory_space<smem>>
    %131 = vector.broadcast %130 : f32 to vector<16x16xf32>
    %132 = arith.mulf %15, %131 : vector<16x16xf32>
    %c12 = arith.constant 12 : index
    %133 = memref.load %arg1[%c12] : memref<274xf32, #tpu.memory_space<smem>>
    %134 = vector.broadcast %133 : f32 to vector<16x16xf32>
    %135 = arith.mulf %17, %134 : vector<16x16xf32>
    %136 = arith.addf %132, %135 : vector<16x16xf32>
    %c20 = arith.constant 20 : index
    %137 = memref.load %arg1[%c20] : memref<274xf32, #tpu.memory_space<smem>>
    %138 = vector.broadcast %137 : f32 to vector<16x16xf32>
    %139 = arith.mulf %19, %138 : vector<16x16xf32>
    %140 = arith.addf %136, %139 : vector<16x16xf32>
    %c28 = arith.constant 28 : index
    %141 = memref.load %arg1[%c28] : memref<274xf32, #tpu.memory_space<smem>>
    %142 = vector.broadcast %141 : f32 to vector<16x16xf32>
    %143 = arith.mulf %21, %142 : vector<16x16xf32>
    %144 = arith.addf %140, %143 : vector<16x16xf32>
    %cst_28 = arith.constant dense<0.000000e+00> : vector<16x32xf32>
    %145 = tpu.matmul %144, %48, %cst_28 {dimension_numbers = #tpu.dot_dimension_numbers<[1], [0], [0], [1], [0, 0, 1, 1], [], []>} : vector<16x16xf32>, vector<16x32xf32>, vector<16x32xf32> -> vector<16x32xf32>
    %c5 = arith.constant 5 : index
    %146 = memref.load %arg1[%c5] : memref<274xf32, #tpu.memory_space<smem>>
    %147 = vector.broadcast %146 : f32 to vector<16x16xf32>
    %148 = arith.mulf %15, %147 : vector<16x16xf32>
    %c13 = arith.constant 13 : index
    %149 = memref.load %arg1[%c13] : memref<274xf32, #tpu.memory_space<smem>>
    %150 = vector.broadcast %149 : f32 to vector<16x16xf32>
    %151 = arith.mulf %17, %150 : vector<16x16xf32>
    %152 = arith.addf %148, %151 : vector<16x16xf32>
    %c21 = arith.constant 21 : index
    %153 = memref.load %arg1[%c21] : memref<274xf32, #tpu.memory_space<smem>>
    %154 = vector.broadcast %153 : f32 to vector<16x16xf32>
    %155 = arith.mulf %19, %154 : vector<16x16xf32>
    %156 = arith.addf %152, %155 : vector<16x16xf32>
    %c29 = arith.constant 29 : index
    %157 = memref.load %arg1[%c29] : memref<274xf32, #tpu.memory_space<smem>>
    %158 = vector.broadcast %157 : f32 to vector<16x16xf32>
    %159 = arith.mulf %21, %158 : vector<16x16xf32>
    %160 = arith.addf %156, %159 : vector<16x16xf32>
    %cst_29 = arith.constant dense<0.000000e+00> : vector<16x32xf32>
    %161 = tpu.matmul %160, %57, %cst_29 {dimension_numbers = #tpu.dot_dimension_numbers<[1], [0], [0], [1], [0, 0, 1, 1], [], []>} : vector<16x16xf32>, vector<16x32xf32>, vector<16x32xf32> -> vector<16x32xf32>
    %162 = arith.addf %145, %161 : vector<16x32xf32>
    %cst_30 = arith.constant dense<0.000000e+00> : vector<32x32xf32>
    %163 = tpu.matmul %30, %162, %cst_30 {dimension_numbers = #tpu.dot_dimension_numbers<[1], [0], [0], [1], [0, 0, 1, 1], [], []>} : vector<32x16xf32>, vector<16x32xf32>, vector<32x32xf32> -> vector<32x32xf32>
    %c6 = arith.constant 6 : index
    %164 = memref.load %arg1[%c6] : memref<274xf32, #tpu.memory_space<smem>>
    %165 = vector.broadcast %164 : f32 to vector<16x16xf32>
    %166 = arith.mulf %15, %165 : vector<16x16xf32>
    %c14 = arith.constant 14 : index
    %167 = memref.load %arg1[%c14] : memref<274xf32, #tpu.memory_space<smem>>
    %168 = vector.broadcast %167 : f32 to vector<16x16xf32>
    %169 = arith.mulf %17, %168 : vector<16x16xf32>
    %170 = arith.addf %166, %169 : vector<16x16xf32>
    %c22 = arith.constant 22 : index
    %171 = memref.load %arg1[%c22] : memref<274xf32, #tpu.memory_space<smem>>
    %172 = vector.broadcast %171 : f32 to vector<16x16xf32>
    %173 = arith.mulf %19, %172 : vector<16x16xf32>
    %174 = arith.addf %170, %173 : vector<16x16xf32>
    %c30 = arith.constant 30 : index
    %175 = memref.load %arg1[%c30] : memref<274xf32, #tpu.memory_space<smem>>
    %176 = vector.broadcast %175 : f32 to vector<16x16xf32>
    %177 = arith.mulf %21, %176 : vector<16x16xf32>
    %178 = arith.addf %174, %177 : vector<16x16xf32>
    %cst_31 = arith.constant dense<0.000000e+00> : vector<16x32xf32>
    %179 = tpu.matmul %178, %48, %cst_31 {dimension_numbers = #tpu.dot_dimension_numbers<[1], [0], [0], [1], [0, 0, 1, 1], [], []>} : vector<16x16xf32>, vector<16x32xf32>, vector<16x32xf32> -> vector<16x32xf32>
    %c7 = arith.constant 7 : index
    %180 = memref.load %arg1[%c7] : memref<274xf32, #tpu.memory_space<smem>>
    %181 = vector.broadcast %180 : f32 to vector<16x16xf32>
    %182 = arith.mulf %15, %181 : vector<16x16xf32>
    %c15 = arith.constant 15 : index
    %183 = memref.load %arg1[%c15] : memref<274xf32, #tpu.memory_space<smem>>
    %184 = vector.broadcast %183 : f32 to vector<16x16xf32>
    %185 = arith.mulf %17, %184 : vector<16x16xf32>
    %186 = arith.addf %182, %185 : vector<16x16xf32>
    %c23 = arith.constant 23 : index
    %187 = memref.load %arg1[%c23] : memref<274xf32, #tpu.memory_space<smem>>
    %188 = vector.broadcast %187 : f32 to vector<16x16xf32>
    %189 = arith.mulf %19, %188 : vector<16x16xf32>
    %190 = arith.addf %186, %189 : vector<16x16xf32>
    %c31 = arith.constant 31 : index
    %191 = memref.load %arg1[%c31] : memref<274xf32, #tpu.memory_space<smem>>
    %192 = vector.broadcast %191 : f32 to vector<16x16xf32>
    %193 = arith.mulf %21, %192 : vector<16x16xf32>
    %194 = arith.addf %190, %193 : vector<16x16xf32>
    %cst_32 = arith.constant dense<0.000000e+00> : vector<16x32xf32>
    %195 = tpu.matmul %194, %57, %cst_32 {dimension_numbers = #tpu.dot_dimension_numbers<[1], [0], [0], [1], [0, 0, 1, 1], [], []>} : vector<16x16xf32>, vector<16x32xf32>, vector<16x32xf32> -> vector<16x32xf32>
    %196 = arith.addf %179, %195 : vector<16x32xf32>
    %cst_33 = arith.constant dense<0.000000e+00> : vector<32x32xf32>
    %197 = tpu.matmul %39, %196, %cst_33 {dimension_numbers = #tpu.dot_dimension_numbers<[1], [0], [0], [1], [0, 0, 1, 1], [], []>} : vector<32x16xf32>, vector<16x32xf32>, vector<32x32xf32> -> vector<32x32xf32>
    %198 = arith.addf %163, %197 : vector<32x32xf32>
    %c33 = arith.constant 33 : index
    %199 = memref.load %arg1[%c33] : memref<274xf32, #tpu.memory_space<smem>>
    %200 = vector.broadcast %199 : f32 to vector<32x32xf32>
    %201 = arith.addf %198, %200 : vector<32x32xf32>
    %cst_34 = arith.constant dense<0.000000e+00> : vector<32x34xf32>
    %202 = tpu.matmul %129, %13, %cst_34 {dimension_numbers = #tpu.dot_dimension_numbers<[1], [0], [0], [1], [0, 0, 1, 1], [], []>} : vector<32x32xf32>, vector<32x34xf32>, vector<32x34xf32> -> vector<32x34xf32>
    %cst_35 = arith.constant dense<0.000000e+00> : vector<34x34xf32>
    %203 = tpu.matmul %6, %202, %cst_35 {dimension_numbers = #tpu.dot_dimension_numbers<[1], [0], [0], [1], [0, 0, 1, 1], [], []>} : vector<34x32xf32>, vector<32x34xf32>, vector<34x34xf32> -> vector<34x34xf32>
    %c0_36 = arith.constant 0 : index
    %c0_37 = arith.constant 0 : index
    %c0_38 = arith.constant 0 : index
    %204 = vector.load %arg4[%c0_36, %c0_37, %c0_38] : memref<4x34x34xf32, #tpu.memory_space<vmem>>, vector<1x34x34xf32>
    %205 = vector.shape_cast %204 : vector<1x34x34xf32> to vector<34x34xf32>
    %206 = vector.shape_cast %203 : vector<34x34xf32> to vector<1x34x34xf32>
    tpu.vector_store %arg4[%c0_36, %c0_37, %c0_38], %206 {strides = array<i32>} : memref<4x34x34xf32, #tpu.memory_space<vmem>>, vector<1x34x34xf32>,
    %cst_39 = arith.constant dense<0.000000e+00> : vector<32x34xf32>
    %207 = tpu.matmul %201, %13, %cst_39 {dimension_numbers = #tpu.dot_dimension_numbers<[1], [0], [0], [1], [0, 0, 1, 1], [], []>} : vector<32x32xf32>, vector<32x34xf32>, vector<32x34xf32> -> vector<32x34xf32>
    %cst_40 = arith.constant dense<0.000000e+00> : vector<34x34xf32>
    %208 = tpu.matmul %6, %207, %cst_40 {dimension_numbers = #tpu.dot_dimension_numbers<[1], [0], [0], [1], [0, 0, 1, 1], [], []>} : vector<34x32xf32>, vector<32x34xf32>, vector<34x34xf32> -> vector<34x34xf32>
    %c1_41 = arith.constant 1 : index
    %c0_42 = arith.constant 0 : index
    %c0_43 = arith.constant 0 : index
    %209 = vector.load %arg4[%c1_41, %c0_42, %c0_43] : memref<4x34x34xf32, #tpu.memory_space<vmem>>, vector<1x34x34xf32>
    %210 = vector.shape_cast %209 : vector<1x34x34xf32> to vector<34x34xf32>
    %211 = vector.shape_cast %208 : vector<34x34xf32> to vector<1x34x34xf32>
    tpu.vector_store %arg4[%c1_41, %c0_42, %c0_43], %211 {strides = array<i32>} : memref<4x34x34xf32, #tpu.memory_space<vmem>>, vector<1x34x34xf32>,
    %c106 = arith.constant 106 : index
    %212 = memref.load %arg1[%c106] : memref<274xf32, #tpu.memory_space<smem>>
    %213 = vector.broadcast %212 : f32 to vector<32x32xf32>
    %c107 = arith.constant 107 : index
    %214 = memref.load %arg1[%c107] : memref<274xf32, #tpu.memory_space<smem>>
    %215 = vector.broadcast %214 : f32 to vector<32x32xf32>
    %c108 = arith.constant 108 : index
    %216 = memref.load %arg1[%c108] : memref<274xf32, #tpu.memory_space<smem>>
    %217 = vector.broadcast %216 : f32 to vector<32x32xf32>
    %c109 = arith.constant 109 : index
    %218 = memref.load %arg1[%c109] : memref<274xf32, #tpu.memory_space<smem>>
    %219 = vector.broadcast %218 : f32 to vector<32x32xf32>
    %c0_44 = arith.constant 0 : index
    %c0_45 = arith.constant 0 : index
    %c0_46 = arith.constant 0 : index
    %220 = vector.load %arg4[%c0_44, %c0_45, %c0_46] : memref<4x34x34xf32, #tpu.memory_space<vmem>>, vector<1x32x32xf32>
    %221 = vector.shape_cast %220 : vector<1x32x32xf32> to vector<32x32xf32>
    %c34 = arith.constant 34 : index
    %222 = memref.load %arg1[%c34] : memref<274xf32, #tpu.memory_space<smem>>
    %223 = vector.broadcast %222 : f32 to vector<32x32xf32>
    %224 = arith.mulf %221, %223 : vector<32x32xf32>
    %225 = arith.addf %213, %224 : vector<32x32xf32>
    %c35 = arith.constant 35 : index
    %226 = memref.load %arg1[%c35] : memref<274xf32, #tpu.memory_space<smem>>
    %227 = vector.broadcast %226 : f32 to vector<32x32xf32>
    %228 = arith.mulf %221, %227 : vector<32x32xf32>
    %229 = arith.addf %215, %228 : vector<32x32xf32>
    %c36 = arith.constant 36 : index
    %230 = memref.load %arg1[%c36] : memref<274xf32, #tpu.memory_space<smem>>
    %231 = vector.broadcast %230 : f32 to vector<32x32xf32>
    %232 = arith.mulf %221, %231 : vector<32x32xf32>
    %233 = arith.addf %217, %232 : vector<32x32xf32>
    %c37 = arith.constant 37 : index
    %234 = memref.load %arg1[%c37] : memref<274xf32, #tpu.memory_space<smem>>
    %235 = vector.broadcast %234 : f32 to vector<32x32xf32>
    %236 = arith.mulf %221, %235 : vector<32x32xf32>
    %237 = arith.addf %219, %236 : vector<32x32xf32>
    %c0_47 = arith.constant 0 : index
    %c0_48 = arith.constant 0 : index
    %c1_49 = arith.constant 1 : index
    %238 = vector.load %arg4[%c0_47, %c0_48, %c1_49] : memref<4x34x34xf32, #tpu.memory_space<vmem>>, vector<1x32x32xf32>
    %239 = vector.shape_cast %238 : vector<1x32x32xf32> to vector<32x32xf32>
    %c42 = arith.constant 42 : index
    %240 = memref.load %arg1[%c42] : memref<274xf32, #tpu.memory_space<smem>>
    %241 = vector.broadcast %240 : f32 to vector<32x32xf32>
    %242 = arith.mulf %239, %241 : vector<32x32xf32>
    %243 = arith.addf %225, %242 : vector<32x32xf32>
    %c43 = arith.constant 43 : index
    %244 = memref.load %arg1[%c43] : memref<274xf32, #tpu.memory_space<smem>>
    %245 = vector.broadcast %244 : f32 to vector<32x32xf32>
    %246 = arith.mulf %239, %245 : vector<32x32xf32>
    %247 = arith.addf %229, %246 : vector<32x32xf32>
    %c44 = arith.constant 44 : index
    %248 = memref.load %arg1[%c44] : memref<274xf32, #tpu.memory_space<smem>>
    %249 = vector.broadcast %248 : f32 to vector<32x32xf32>
    %250 = arith.mulf %239, %249 : vector<32x32xf32>
    %251 = arith.addf %233, %250 : vector<32x32xf32>
    %c45 = arith.constant 45 : index
    %252 = memref.load %arg1[%c45] : memref<274xf32, #tpu.memory_space<smem>>
    %253 = vector.broadcast %252 : f32 to vector<32x32xf32>
    %254 = arith.mulf %239, %253 : vector<32x32xf32>
    %255 = arith.addf %237, %254 : vector<32x32xf32>
    %c0_50 = arith.constant 0 : index
    %c0_51 = arith.constant 0 : index
    %c2_52 = arith.constant 2 : index
    %256 = vector.load %arg4[%c0_50, %c0_51, %c2_52] : memref<4x34x34xf32, #tpu.memory_space<vmem>>, vector<1x32x32xf32>
    %257 = vector.shape_cast %256 : vector<1x32x32xf32> to vector<32x32xf32>
    %c50 = arith.constant 50 : index
    %258 = memref.load %arg1[%c50] : memref<274xf32, #tpu.memory_space<smem>>
    %259 = vector.broadcast %258 : f32 to vector<32x32xf32>
    %260 = arith.mulf %257, %259 : vector<32x32xf32>
    %261 = arith.addf %243, %260 : vector<32x32xf32>
    %c51 = arith.constant 51 : index
    %262 = memref.load %arg1[%c51] : memref<274xf32, #tpu.memory_space<smem>>
    %263 = vector.broadcast %262 : f32 to vector<32x32xf32>
    %264 = arith.mulf %257, %263 : vector<32x32xf32>
    %265 = arith.addf %247, %264 : vector<32x32xf32>
    %c52 = arith.constant 52 : index
    %266 = memref.load %arg1[%c52] : memref<274xf32, #tpu.memory_space<smem>>
    %267 = vector.broadcast %266 : f32 to vector<32x32xf32>
    %268 = arith.mulf %257, %267 : vector<32x32xf32>
    %269 = arith.addf %251, %268 : vector<32x32xf32>
    %c53 = arith.constant 53 : index
    %270 = memref.load %arg1[%c53] : memref<274xf32, #tpu.memory_space<smem>>
    %271 = vector.broadcast %270 : f32 to vector<32x32xf32>
    %272 = arith.mulf %257, %271 : vector<32x32xf32>
    %273 = arith.addf %255, %272 : vector<32x32xf32>
    %c0_53 = arith.constant 0 : index
    %c1_54 = arith.constant 1 : index
    %c0_55 = arith.constant 0 : index
    %274 = vector.load %arg4[%c0_53, %c1_54, %c0_55] : memref<4x34x34xf32, #tpu.memory_space<vmem>>, vector<1x32x32xf32>
    %275 = vector.shape_cast %274 : vector<1x32x32xf32> to vector<32x32xf32>
    %c58 = arith.constant 58 : index
    %276 = memref.load %arg1[%c58] : memref<274xf32, #tpu.memory_space<smem>>
    %277 = vector.broadcast %276 : f32 to vector<32x32xf32>
    %278 = arith.mulf %275, %277 : vector<32x32xf32>
    %279 = arith.addf %261, %278 : vector<32x32xf32>
    %c59 = arith.constant 59 : index
    %280 = memref.load %arg1[%c59] : memref<274xf32, #tpu.memory_space<smem>>
    %281 = vector.broadcast %280 : f32 to vector<32x32xf32>
    %282 = arith.mulf %275, %281 : vector<32x32xf32>
    %283 = arith.addf %265, %282 : vector<32x32xf32>
    %c60 = arith.constant 60 : index
    %284 = memref.load %arg1[%c60] : memref<274xf32, #tpu.memory_space<smem>>
    %285 = vector.broadcast %284 : f32 to vector<32x32xf32>
    %286 = arith.mulf %275, %285 : vector<32x32xf32>
    %287 = arith.addf %269, %286 : vector<32x32xf32>
    %c61 = arith.constant 61 : index
    %288 = memref.load %arg1[%c61] : memref<274xf32, #tpu.memory_space<smem>>
    %289 = vector.broadcast %288 : f32 to vector<32x32xf32>
    %290 = arith.mulf %275, %289 : vector<32x32xf32>
    %291 = arith.addf %273, %290 : vector<32x32xf32>
    %c0_56 = arith.constant 0 : index
    %c1_57 = arith.constant 1 : index
    %c1_58 = arith.constant 1 : index
    %292 = vector.load %arg4[%c0_56, %c1_57, %c1_58] : memref<4x34x34xf32, #tpu.memory_space<vmem>>, vector<1x32x32xf32>
    %293 = vector.shape_cast %292 : vector<1x32x32xf32> to vector<32x32xf32>
    %c66 = arith.constant 66 : index
    %294 = memref.load %arg1[%c66] : memref<274xf32, #tpu.memory_space<smem>>
    %295 = vector.broadcast %294 : f32 to vector<32x32xf32>
    %296 = arith.mulf %293, %295 : vector<32x32xf32>
    %297 = arith.addf %279, %296 : vector<32x32xf32>
    %c67 = arith.constant 67 : index
    %298 = memref.load %arg1[%c67] : memref<274xf32, #tpu.memory_space<smem>>
    %299 = vector.broadcast %298 : f32 to vector<32x32xf32>
    %300 = arith.mulf %293, %299 : vector<32x32xf32>
    %301 = arith.addf %283, %300 : vector<32x32xf32>
    %c68 = arith.constant 68 : index
    %302 = memref.load %arg1[%c68] : memref<274xf32, #tpu.memory_space<smem>>
    %303 = vector.broadcast %302 : f32 to vector<32x32xf32>
    %304 = arith.mulf %293, %303 : vector<32x32xf32>
    %305 = arith.addf %287, %304 : vector<32x32xf32>
    %c69 = arith.constant 69 : index
    %306 = memref.load %arg1[%c69] : memref<274xf32, #tpu.memory_space<smem>>
    %307 = vector.broadcast %306 : f32 to vector<32x32xf32>
    %308 = arith.mulf %293, %307 : vector<32x32xf32>
    %309 = arith.addf %291, %308 : vector<32x32xf32>
    %c0_59 = arith.constant 0 : index
    %c1_60 = arith.constant 1 : index
    %c2_61 = arith.constant 2 : index
    %310 = vector.load %arg4[%c0_59, %c1_60, %c2_61] : memref<4x34x34xf32, #tpu.memory_space<vmem>>, vector<1x32x32xf32>
    %311 = vector.shape_cast %310 : vector<1x32x32xf32> to vector<32x32xf32>
    %c74 = arith.constant 74 : index
    %312 = memref.load %arg1[%c74] : memref<274xf32, #tpu.memory_space<smem>>
    %313 = vector.broadcast %312 : f32 to vector<32x32xf32>
    %314 = arith.mulf %311, %313 : vector<32x32xf32>
    %315 = arith.addf %297, %314 : vector<32x32xf32>
    %c75 = arith.constant 75 : index
    %316 = memref.load %arg1[%c75] : memref<274xf32, #tpu.memory_space<smem>>
    %317 = vector.broadcast %316 : f32 to vector<32x32xf32>
    %318 = arith.mulf %311, %317 : vector<32x32xf32>
    %319 = arith.addf %301, %318 : vector<32x32xf32>
    %c76 = arith.constant 76 : index
    %320 = memref.load %arg1[%c76] : memref<274xf32, #tpu.memory_space<smem>>
    %321 = vector.broadcast %320 : f32 to vector<32x32xf32>
    %322 = arith.mulf %311, %321 : vector<32x32xf32>
    %323 = arith.addf %305, %322 : vector<32x32xf32>
    %c77 = arith.constant 77 : index
    %324 = memref.load %arg1[%c77] : memref<274xf32, #tpu.memory_space<smem>>
    %325 = vector.broadcast %324 : f32 to vector<32x32xf32>
    %326 = arith.mulf %311, %325 : vector<32x32xf32>
    %327 = arith.addf %309, %326 : vector<32x32xf32>
    %c0_62 = arith.constant 0 : index
    %c2_63 = arith.constant 2 : index
    %c0_64 = arith.constant 0 : index
    %328 = vector.load %arg4[%c0_62, %c2_63, %c0_64] : memref<4x34x34xf32, #tpu.memory_space<vmem>>, vector<1x32x32xf32>
    %329 = vector.shape_cast %328 : vector<1x32x32xf32> to vector<32x32xf32>
    %c82 = arith.constant 82 : index
    %330 = memref.load %arg1[%c82] : memref<274xf32, #tpu.memory_space<smem>>
    %331 = vector.broadcast %330 : f32 to vector<32x32xf32>
    %332 = arith.mulf %329, %331 : vector<32x32xf32>
    %333 = arith.addf %315, %332 : vector<32x32xf32>
    %c83 = arith.constant 83 : index
    %334 = memref.load %arg1[%c83] : memref<274xf32, #tpu.memory_space<smem>>
    %335 = vector.broadcast %334 : f32 to vector<32x32xf32>
    %336 = arith.mulf %329, %335 : vector<32x32xf32>
    %337 = arith.addf %319, %336 : vector<32x32xf32>
    %c84 = arith.constant 84 : index
    %338 = memref.load %arg1[%c84] : memref<274xf32, #tpu.memory_space<smem>>
    %339 = vector.broadcast %338 : f32 to vector<32x32xf32>
    %340 = arith.mulf %329, %339 : vector<32x32xf32>
    %341 = arith.addf %323, %340 : vector<32x32xf32>
    %c85 = arith.constant 85 : index
    %342 = memref.load %arg1[%c85] : memref<274xf32, #tpu.memory_space<smem>>
    %343 = vector.broadcast %342 : f32 to vector<32x32xf32>
    %344 = arith.mulf %329, %343 : vector<32x32xf32>
    %345 = arith.addf %327, %344 : vector<32x32xf32>
    %c0_65 = arith.constant 0 : index
    %c2_66 = arith.constant 2 : index
    %c1_67 = arith.constant 1 : index
    %346 = vector.load %arg4[%c0_65, %c2_66, %c1_67] : memref<4x34x34xf32, #tpu.memory_space<vmem>>, vector<1x32x32xf32>
    %347 = vector.shape_cast %346 : vector<1x32x32xf32> to vector<32x32xf32>
    %c90 = arith.constant 90 : index
    %348 = memref.load %arg1[%c90] : memref<274xf32, #tpu.memory_space<smem>>
    %349 = vector.broadcast %348 : f32 to vector<32x32xf32>
    %350 = arith.mulf %347, %349 : vector<32x32xf32>
    %351 = arith.addf %333, %350 : vector<32x32xf32>
    %c91 = arith.constant 91 : index
    %352 = memref.load %arg1[%c91] : memref<274xf32, #tpu.memory_space<smem>>
    %353 = vector.broadcast %352 : f32 to vector<32x32xf32>
    %354 = arith.mulf %347, %353 : vector<32x32xf32>
    %355 = arith.addf %337, %354 : vector<32x32xf32>
    %c92 = arith.constant 92 : index
    %356 = memref.load %arg1[%c92] : memref<274xf32, #tpu.memory_space<smem>>
    %357 = vector.broadcast %356 : f32 to vector<32x32xf32>
    %358 = arith.mulf %347, %357 : vector<32x32xf32>
    %359 = arith.addf %341, %358 : vector<32x32xf32>
    %c93 = arith.constant 93 : index
    %360 = memref.load %arg1[%c93] : memref<274xf32, #tpu.memory_space<smem>>
    %361 = vector.broadcast %360 : f32 to vector<32x32xf32>
    %362 = arith.mulf %347, %361 : vector<32x32xf32>
    %363 = arith.addf %345, %362 : vector<32x32xf32>
    %c0_68 = arith.constant 0 : index
    %c2_69 = arith.constant 2 : index
    %c2_70 = arith.constant 2 : index
    %364 = vector.load %arg4[%c0_68, %c2_69, %c2_70] : memref<4x34x34xf32, #tpu.memory_space<vmem>>, vector<1x32x32xf32>
    %365 = vector.shape_cast %364 : vector<1x32x32xf32> to vector<32x32xf32>
    %c98 = arith.constant 98 : index
    %366 = memref.load %arg1[%c98] : memref<274xf32, #tpu.memory_space<smem>>
    %367 = vector.broadcast %366 : f32 to vector<32x32xf32>
    %368 = arith.mulf %365, %367 : vector<32x32xf32>
    %369 = arith.addf %351, %368 : vector<32x32xf32>
    %c99 = arith.constant 99 : index
    %370 = memref.load %arg1[%c99] : memref<274xf32, #tpu.memory_space<smem>>
    %371 = vector.broadcast %370 : f32 to vector<32x32xf32>
    %372 = arith.mulf %365, %371 : vector<32x32xf32>
    %373 = arith.addf %355, %372 : vector<32x32xf32>
    %c100 = arith.constant 100 : index
    %374 = memref.load %arg1[%c100] : memref<274xf32, #tpu.memory_space<smem>>
    %375 = vector.broadcast %374 : f32 to vector<32x32xf32>
    %376 = arith.mulf %365, %375 : vector<32x32xf32>
    %377 = arith.addf %359, %376 : vector<32x32xf32>
    %c101 = arith.constant 101 : index
    %378 = memref.load %arg1[%c101] : memref<274xf32, #tpu.memory_space<smem>>
    %379 = vector.broadcast %378 : f32 to vector<32x32xf32>
    %380 = arith.mulf %365, %379 : vector<32x32xf32>
    %381 = arith.addf %363, %380 : vector<32x32xf32>
    %c1_71 = arith.constant 1 : index
    %c0_72 = arith.constant 0 : index
    %c0_73 = arith.constant 0 : index
    %382 = vector.load %arg4[%c1_71, %c0_72, %c0_73] : memref<4x34x34xf32, #tpu.memory_space<vmem>>, vector<1x32x32xf32>
    %383 = vector.shape_cast %382 : vector<1x32x32xf32> to vector<32x32xf32>
    %c38 = arith.constant 38 : index
    %384 = memref.load %arg1[%c38] : memref<274xf32, #tpu.memory_space<smem>>
    %385 = vector.broadcast %384 : f32 to vector<32x32xf32>
    %386 = arith.mulf %383, %385 : vector<32x32xf32>
    %387 = arith.addf %369, %386 : vector<32x32xf32>
    %c39 = arith.constant 39 : index
    %388 = memref.load %arg1[%c39] : memref<274xf32, #tpu.memory_space<smem>>
    %389 = vector.broadcast %388 : f32 to vector<32x32xf32>
    %390 = arith.mulf %383, %389 : vector<32x32xf32>
    %391 = arith.addf %373, %390 : vector<32x32xf32>
    %c40 = arith.constant 40 : index
    %392 = memref.load %arg1[%c40] : memref<274xf32, #tpu.memory_space<smem>>
    %393 = vector.broadcast %392 : f32 to vector<32x32xf32>
    %394 = arith.mulf %383, %393 : vector<32x32xf32>
    %395 = arith.addf %377, %394 : vector<32x32xf32>
    %c41 = arith.constant 41 : index
    %396 = memref.load %arg1[%c41] : memref<274xf32, #tpu.memory_space<smem>>
    %397 = vector.broadcast %396 : f32 to vector<32x32xf32>
    %398 = arith.mulf %383, %397 : vector<32x32xf32>
    %399 = arith.addf %381, %398 : vector<32x32xf32>
    %c1_74 = arith.constant 1 : index
    %c0_75 = arith.constant 0 : index
    %c1_76 = arith.constant 1 : index
    %400 = vector.load %arg4[%c1_74, %c0_75, %c1_76] : memref<4x34x34xf32, #tpu.memory_space<vmem>>, vector<1x32x32xf32>
    %401 = vector.shape_cast %400 : vector<1x32x32xf32> to vector<32x32xf32>
    %c46 = arith.constant 46 : index
    %402 = memref.load %arg1[%c46] : memref<274xf32, #tpu.memory_space<smem>>
    %403 = vector.broadcast %402 : f32 to vector<32x32xf32>
    %404 = arith.mulf %401, %403 : vector<32x32xf32>
    %405 = arith.addf %387, %404 : vector<32x32xf32>
    %c47 = arith.constant 47 : index
    %406 = memref.load %arg1[%c47] : memref<274xf32, #tpu.memory_space<smem>>
    %407 = vector.broadcast %406 : f32 to vector<32x32xf32>
    %408 = arith.mulf %401, %407 : vector<32x32xf32>
    %409 = arith.addf %391, %408 : vector<32x32xf32>
    %c48 = arith.constant 48 : index
    %410 = memref.load %arg1[%c48] : memref<274xf32, #tpu.memory_space<smem>>
    %411 = vector.broadcast %410 : f32 to vector<32x32xf32>
    %412 = arith.mulf %401, %411 : vector<32x32xf32>
    %413 = arith.addf %395, %412 : vector<32x32xf32>
    %c49 = arith.constant 49 : index
    %414 = memref.load %arg1[%c49] : memref<274xf32, #tpu.memory_space<smem>>
    %415 = vector.broadcast %414 : f32 to vector<32x32xf32>
    %416 = arith.mulf %401, %415 : vector<32x32xf32>
    %417 = arith.addf %399, %416 : vector<32x32xf32>
    %c1_77 = arith.constant 1 : index
    %c0_78 = arith.constant 0 : index
    %c2_79 = arith.constant 2 : index
    %418 = vector.load %arg4[%c1_77, %c0_78, %c2_79] : memref<4x34x34xf32, #tpu.memory_space<vmem>>, vector<1x32x32xf32>
    %419 = vector.shape_cast %418 : vector<1x32x32xf32> to vector<32x32xf32>
    %c54 = arith.constant 54 : index
    %420 = memref.load %arg1[%c54] : memref<274xf32, #tpu.memory_space<smem>>
    %421 = vector.broadcast %420 : f32 to vector<32x32xf32>
    %422 = arith.mulf %419, %421 : vector<32x32xf32>
    %423 = arith.addf %405, %422 : vector<32x32xf32>
    %c55 = arith.constant 55 : index
    %424 = memref.load %arg1[%c55] : memref<274xf32, #tpu.memory_space<smem>>
    %425 = vector.broadcast %424 : f32 to vector<32x32xf32>
    %426 = arith.mulf %419, %425 : vector<32x32xf32>
    %427 = arith.addf %409, %426 : vector<32x32xf32>
    %c56 = arith.constant 56 : index
    %428 = memref.load %arg1[%c56] : memref<274xf32, #tpu.memory_space<smem>>
    %429 = vector.broadcast %428 : f32 to vector<32x32xf32>
    %430 = arith.mulf %419, %429 : vector<32x32xf32>
    %431 = arith.addf %413, %430 : vector<32x32xf32>
    %c57 = arith.constant 57 : index
    %432 = memref.load %arg1[%c57] : memref<274xf32, #tpu.memory_space<smem>>
    %433 = vector.broadcast %432 : f32 to vector<32x32xf32>
    %434 = arith.mulf %419, %433 : vector<32x32xf32>
    %435 = arith.addf %417, %434 : vector<32x32xf32>
    %c1_80 = arith.constant 1 : index
    %c1_81 = arith.constant 1 : index
    %c0_82 = arith.constant 0 : index
    %436 = vector.load %arg4[%c1_80, %c1_81, %c0_82] : memref<4x34x34xf32, #tpu.memory_space<vmem>>, vector<1x32x32xf32>
    %437 = vector.shape_cast %436 : vector<1x32x32xf32> to vector<32x32xf32>
    %c62 = arith.constant 62 : index
    %438 = memref.load %arg1[%c62] : memref<274xf32, #tpu.memory_space<smem>>
    %439 = vector.broadcast %438 : f32 to vector<32x32xf32>
    %440 = arith.mulf %437, %439 : vector<32x32xf32>
    %441 = arith.addf %423, %440 : vector<32x32xf32>
    %c63 = arith.constant 63 : index
    %442 = memref.load %arg1[%c63] : memref<274xf32, #tpu.memory_space<smem>>
    %443 = vector.broadcast %442 : f32 to vector<32x32xf32>
    %444 = arith.mulf %437, %443 : vector<32x32xf32>
    %445 = arith.addf %427, %444 : vector<32x32xf32>
    %c64 = arith.constant 64 : index
    %446 = memref.load %arg1[%c64] : memref<274xf32, #tpu.memory_space<smem>>
    %447 = vector.broadcast %446 : f32 to vector<32x32xf32>
    %448 = arith.mulf %437, %447 : vector<32x32xf32>
    %449 = arith.addf %431, %448 : vector<32x32xf32>
    %c65 = arith.constant 65 : index
    %450 = memref.load %arg1[%c65] : memref<274xf32, #tpu.memory_space<smem>>
    %451 = vector.broadcast %450 : f32 to vector<32x32xf32>
    %452 = arith.mulf %437, %451 : vector<32x32xf32>
    %453 = arith.addf %435, %452 : vector<32x32xf32>
    %c1_83 = arith.constant 1 : index
    %c1_84 = arith.constant 1 : index
    %c1_85 = arith.constant 1 : index
    %454 = vector.load %arg4[%c1_83, %c1_84, %c1_85] : memref<4x34x34xf32, #tpu.memory_space<vmem>>, vector<1x32x32xf32>
    %455 = vector.shape_cast %454 : vector<1x32x32xf32> to vector<32x32xf32>
    %c70 = arith.constant 70 : index
    %456 = memref.load %arg1[%c70] : memref<274xf32, #tpu.memory_space<smem>>
    %457 = vector.broadcast %456 : f32 to vector<32x32xf32>
    %458 = arith.mulf %455, %457 : vector<32x32xf32>
    %459 = arith.addf %441, %458 : vector<32x32xf32>
    %c71 = arith.constant 71 : index
    %460 = memref.load %arg1[%c71] : memref<274xf32, #tpu.memory_space<smem>>
    %461 = vector.broadcast %460 : f32 to vector<32x32xf32>
    %462 = arith.mulf %455, %461 : vector<32x32xf32>
    %463 = arith.addf %445, %462 : vector<32x32xf32>
    %c72 = arith.constant 72 : index
    %464 = memref.load %arg1[%c72] : memref<274xf32, #tpu.memory_space<smem>>
    %465 = vector.broadcast %464 : f32 to vector<32x32xf32>
    %466 = arith.mulf %455, %465 : vector<32x32xf32>
    %467 = arith.addf %449, %466 : vector<32x32xf32>
    %c73 = arith.constant 73 : index
    %468 = memref.load %arg1[%c73] : memref<274xf32, #tpu.memory_space<smem>>
    %469 = vector.broadcast %468 : f32 to vector<32x32xf32>
    %470 = arith.mulf %455, %469 : vector<32x32xf32>
    %471 = arith.addf %453, %470 : vector<32x32xf32>
    %c1_86 = arith.constant 1 : index
    %c1_87 = arith.constant 1 : index
    %c2_88 = arith.constant 2 : index
    %472 = vector.load %arg4[%c1_86, %c1_87, %c2_88] : memref<4x34x34xf32, #tpu.memory_space<vmem>>, vector<1x32x32xf32>
    %473 = vector.shape_cast %472 : vector<1x32x32xf32> to vector<32x32xf32>
    %c78 = arith.constant 78 : index
    %474 = memref.load %arg1[%c78] : memref<274xf32, #tpu.memory_space<smem>>
    %475 = vector.broadcast %474 : f32 to vector<32x32xf32>
    %476 = arith.mulf %473, %475 : vector<32x32xf32>
    %477 = arith.addf %459, %476 : vector<32x32xf32>
    %c79 = arith.constant 79 : index
    %478 = memref.load %arg1[%c79] : memref<274xf32, #tpu.memory_space<smem>>
    %479 = vector.broadcast %478 : f32 to vector<32x32xf32>
    %480 = arith.mulf %473, %479 : vector<32x32xf32>
    %481 = arith.addf %463, %480 : vector<32x32xf32>
    %c80 = arith.constant 80 : index
    %482 = memref.load %arg1[%c80] : memref<274xf32, #tpu.memory_space<smem>>
    %483 = vector.broadcast %482 : f32 to vector<32x32xf32>
    %484 = arith.mulf %473, %483 : vector<32x32xf32>
    %485 = arith.addf %467, %484 : vector<32x32xf32>
    %c81 = arith.constant 81 : index
    %486 = memref.load %arg1[%c81] : memref<274xf32, #tpu.memory_space<smem>>
    %487 = vector.broadcast %486 : f32 to vector<32x32xf32>
    %488 = arith.mulf %473, %487 : vector<32x32xf32>
    %489 = arith.addf %471, %488 : vector<32x32xf32>
    %c1_89 = arith.constant 1 : index
    %c2_90 = arith.constant 2 : index
    %c0_91 = arith.constant 0 : index
    %490 = vector.load %arg4[%c1_89, %c2_90, %c0_91] : memref<4x34x34xf32, #tpu.memory_space<vmem>>, vector<1x32x32xf32>
    %491 = vector.shape_cast %490 : vector<1x32x32xf32> to vector<32x32xf32>
    %c86 = arith.constant 86 : index
    %492 = memref.load %arg1[%c86] : memref<274xf32, #tpu.memory_space<smem>>
    %493 = vector.broadcast %492 : f32 to vector<32x32xf32>
    %494 = arith.mulf %491, %493 : vector<32x32xf32>
    %495 = arith.addf %477, %494 : vector<32x32xf32>
    %c87 = arith.constant 87 : index
    %496 = memref.load %arg1[%c87] : memref<274xf32, #tpu.memory_space<smem>>
    %497 = vector.broadcast %496 : f32 to vector<32x32xf32>
    %498 = arith.mulf %491, %497 : vector<32x32xf32>
    %499 = arith.addf %481, %498 : vector<32x32xf32>
    %c88 = arith.constant 88 : index
    %500 = memref.load %arg1[%c88] : memref<274xf32, #tpu.memory_space<smem>>
    %501 = vector.broadcast %500 : f32 to vector<32x32xf32>
    %502 = arith.mulf %491, %501 : vector<32x32xf32>
    %503 = arith.addf %485, %502 : vector<32x32xf32>
    %c89 = arith.constant 89 : index
    %504 = memref.load %arg1[%c89] : memref<274xf32, #tpu.memory_space<smem>>
    %505 = vector.broadcast %504 : f32 to vector<32x32xf32>
    %506 = arith.mulf %491, %505 : vector<32x32xf32>
    %507 = arith.addf %489, %506 : vector<32x32xf32>
    %c1_92 = arith.constant 1 : index
    %c2_93 = arith.constant 2 : index
    %c1_94 = arith.constant 1 : index
    %508 = vector.load %arg4[%c1_92, %c2_93, %c1_94] : memref<4x34x34xf32, #tpu.memory_space<vmem>>, vector<1x32x32xf32>
    %509 = vector.shape_cast %508 : vector<1x32x32xf32> to vector<32x32xf32>
    %c94 = arith.constant 94 : index
    %510 = memref.load %arg1[%c94] : memref<274xf32, #tpu.memory_space<smem>>
    %511 = vector.broadcast %510 : f32 to vector<32x32xf32>
    %512 = arith.mulf %509, %511 : vector<32x32xf32>
    %513 = arith.addf %495, %512 : vector<32x32xf32>
    %c95 = arith.constant 95 : index
    %514 = memref.load %arg1[%c95] : memref<274xf32, #tpu.memory_space<smem>>
    %515 = vector.broadcast %514 : f32 to vector<32x32xf32>
    %516 = arith.mulf %509, %515 : vector<32x32xf32>
    %517 = arith.addf %499, %516 : vector<32x32xf32>
    %c96 = arith.constant 96 : index
    %518 = memref.load %arg1[%c96] : memref<274xf32, #tpu.memory_space<smem>>
    %519 = vector.broadcast %518 : f32 to vector<32x32xf32>
    %520 = arith.mulf %509, %519 : vector<32x32xf32>
    %521 = arith.addf %503, %520 : vector<32x32xf32>
    %c97 = arith.constant 97 : index
    %522 = memref.load %arg1[%c97] : memref<274xf32, #tpu.memory_space<smem>>
    %523 = vector.broadcast %522 : f32 to vector<32x32xf32>
    %524 = arith.mulf %509, %523 : vector<32x32xf32>
    %525 = arith.addf %507, %524 : vector<32x32xf32>
    %c1_95 = arith.constant 1 : index
    %c2_96 = arith.constant 2 : index
    %c2_97 = arith.constant 2 : index
    %526 = vector.load %arg4[%c1_95, %c2_96, %c2_97] : memref<4x34x34xf32, #tpu.memory_space<vmem>>, vector<1x32x32xf32>
    %527 = vector.shape_cast %526 : vector<1x32x32xf32> to vector<32x32xf32>
    %c102 = arith.constant 102 : index
    %528 = memref.load %arg1[%c102] : memref<274xf32, #tpu.memory_space<smem>>
    %529 = vector.broadcast %528 : f32 to vector<32x32xf32>
    %530 = arith.mulf %527, %529 : vector<32x32xf32>
    %531 = arith.addf %513, %530 : vector<32x32xf32>
    %c103 = arith.constant 103 : index
    %532 = memref.load %arg1[%c103] : memref<274xf32, #tpu.memory_space<smem>>
    %533 = vector.broadcast %532 : f32 to vector<32x32xf32>
    %534 = arith.mulf %527, %533 : vector<32x32xf32>
    %535 = arith.addf %517, %534 : vector<32x32xf32>
    %c104 = arith.constant 104 : index
    %536 = memref.load %arg1[%c104] : memref<274xf32, #tpu.memory_space<smem>>
    %537 = vector.broadcast %536 : f32 to vector<32x32xf32>
    %538 = arith.mulf %527, %537 : vector<32x32xf32>
    %539 = arith.addf %521, %538 : vector<32x32xf32>
    %c105 = arith.constant 105 : index
    %540 = memref.load %arg1[%c105] : memref<274xf32, #tpu.memory_space<smem>>
    %541 = vector.broadcast %540 : f32 to vector<32x32xf32>
    %542 = arith.mulf %527, %541 : vector<32x32xf32>
    %543 = arith.addf %525, %542 : vector<32x32xf32>
    %544 = vector.shape_cast %531 : vector<32x32xf32> to vector<1x32x32xf32>
    %cst_98 = arith.constant dense<0.000000e+00> : vector<1xf32>
    %545 = vector.multi_reduction <add>, %544, %cst_98 [1, 2] : vector<1x32x32xf32> to vector<1xf32>
    %546 = vector.shape_cast %545 : vector<1xf32> to vector<1x1x1xf32>
    %547 = vector.extract %546[0, 0, 0] : f32 from vector<1x1x1xf32>
    %548 = vector.broadcast %547 : f32 to vector<1x1xf32>
    %549 = arith.mulf %531, %531 : vector<32x32xf32>
    %550 = vector.shape_cast %549 : vector<32x32xf32> to vector<1x32x32xf32>
    %cst_99 = arith.constant dense<0.000000e+00> : vector<1xf32>
    %551 = vector.multi_reduction <add>, %550, %cst_99 [1, 2] : vector<1x32x32xf32> to vector<1xf32>
    %552 = vector.shape_cast %551 : vector<1xf32> to vector<1x1x1xf32>
    %553 = vector.extract %552[0, 0, 0] : f32 from vector<1x1x1xf32>
    %554 = vector.broadcast %553 : f32 to vector<1x1xf32>
    %cst_100 = arith.constant 9.765625E-4 : f32
    %555 = vector.broadcast %cst_100 : f32 to vector<1x1xf32>
    %556 = arith.mulf %548, %555 : vector<1x1xf32>
    %cst_101 = arith.constant 9.765625E-4 : f32
    %557 = vector.broadcast %cst_101 : f32 to vector<1x1xf32>
    %558 = arith.mulf %554, %557 : vector<1x1xf32>
    %559 = arith.mulf %556, %556 : vector<1x1xf32>
    %560 = arith.subf %558, %559 : vector<1x1xf32>
    %c110 = arith.constant 110 : index
    %561 = memref.load %arg1[%c110] : memref<274xf32, #tpu.memory_space<smem>>
    %cst_102 = arith.constant 9.99999974E-6 : f32
    %562 = vector.broadcast %cst_102 : f32 to vector<1x1xf32>
    %563 = arith.addf %560, %562 : vector<1x1xf32>
    %564 = math.rsqrt %563 : vector<1x1xf32>
    %565 = vector.broadcast %561 : f32 to vector<1x1xf32>
    %566 = arith.mulf %565, %564 : vector<1x1xf32>
    %567 = vector.broadcast %556 : vector<1x1xf32> to vector<32x32xf32>
    %568 = arith.subf %531, %567 : vector<32x32xf32>
    %569 = vector.broadcast %566 : vector<1x1xf32> to vector<32x32xf32>
    %570 = arith.mulf %568, %569 : vector<32x32xf32>
    %c114 = arith.constant 114 : index
    %571 = memref.load %arg1[%c114] : memref<274xf32, #tpu.memory_space<smem>>
    %572 = vector.broadcast %571 : f32 to vector<32x32xf32>
    %573 = arith.addf %570, %572 : vector<32x32xf32>
    %cst_103 = arith.constant 0.000000e+00 : f32
    %574 = vector.broadcast %cst_103 : f32 to vector<32x32xf32>
    %575 = arith.cmpf ogt, %573, %574 : vector<32x32xf32>
    %cst_104 = arith.constant 1.000000e-01 : f32
    %576 = vector.broadcast %cst_104 : f32 to vector<32x32xf32>
    %577 = arith.mulf %576, %573 : vector<32x32xf32>
    %578 = arith.select %575, %573, %577 : vector<32x32xi1>, vector<32x32xf32>
    %579 = vector.shape_cast %535 : vector<32x32xf32> to vector<1x32x32xf32>
    %cst_105 = arith.constant dense<0.000000e+00> : vector<1xf32>
    %580 = vector.multi_reduction <add>, %579, %cst_105 [1, 2] : vector<1x32x32xf32> to vector<1xf32>
    %581 = vector.shape_cast %580 : vector<1xf32> to vector<1x1x1xf32>
    %582 = vector.extract %581[0, 0, 0] : f32 from vector<1x1x1xf32>
    %583 = vector.broadcast %582 : f32 to vector<1x1xf32>
    %584 = arith.mulf %535, %535 : vector<32x32xf32>
    %585 = vector.shape_cast %584 : vector<32x32xf32> to vector<1x32x32xf32>
    %cst_106 = arith.constant dense<0.000000e+00> : vector<1xf32>
    %586 = vector.multi_reduction <add>, %585, %cst_106 [1, 2] : vector<1x32x32xf32> to vector<1xf32>
    %587 = vector.shape_cast %586 : vector<1xf32> to vector<1x1x1xf32>
    %588 = vector.extract %587[0, 0, 0] : f32 from vector<1x1x1xf32>
    %589 = vector.broadcast %588 : f32 to vector<1x1xf32>
    %cst_107 = arith.constant 9.765625E-4 : f32
    %590 = vector.broadcast %cst_107 : f32 to vector<1x1xf32>
    %591 = arith.mulf %583, %590 : vector<1x1xf32>
    %cst_108 = arith.constant 9.765625E-4 : f32
    %592 = vector.broadcast %cst_108 : f32 to vector<1x1xf32>
    %593 = arith.mulf %589, %592 : vector<1x1xf32>
    %594 = arith.mulf %591, %591 : vector<1x1xf32>
    %595 = arith.subf %593, %594 : vector<1x1xf32>
    %c111 = arith.constant 111 : index
    %596 = memref.load %arg1[%c111] : memref<274xf32, #tpu.memory_space<smem>>
    %cst_109 = arith.constant 9.99999974E-6 : f32
    %597 = vector.broadcast %cst_109 : f32 to vector<1x1xf32>
    %598 = arith.addf %595, %597 : vector<1x1xf32>
    %599 = math.rsqrt %598 : vector<1x1xf32>
    %600 = vector.broadcast %596 : f32 to vector<1x1xf32>
    %601 = arith.mulf %600, %599 : vector<1x1xf32>
    %602 = vector.broadcast %591 : vector<1x1xf32> to vector<32x32xf32>
    %603 = arith.subf %535, %602 : vector<32x32xf32>
    %604 = vector.broadcast %601 : vector<1x1xf32> to vector<32x32xf32>
    %605 = arith.mulf %603, %604 : vector<32x32xf32>
    %c115 = arith.constant 115 : index
    %606 = memref.load %arg1[%c115] : memref<274xf32, #tpu.memory_space<smem>>
    %607 = vector.broadcast %606 : f32 to vector<32x32xf32>
    %608 = arith.addf %605, %607 : vector<32x32xf32>
    %cst_110 = arith.constant 0.000000e+00 : f32
    %609 = vector.broadcast %cst_110 : f32 to vector<32x32xf32>
    %610 = arith.cmpf ogt, %608, %609 : vector<32x32xf32>
    %cst_111 = arith.constant 1.000000e-01 : f32
    %611 = vector.broadcast %cst_111 : f32 to vector<32x32xf32>
    %612 = arith.mulf %611, %608 : vector<32x32xf32>
    %613 = arith.select %610, %608, %612 : vector<32x32xi1>, vector<32x32xf32>
    %614 = vector.shape_cast %539 : vector<32x32xf32> to vector<1x32x32xf32>
    %cst_112 = arith.constant dense<0.000000e+00> : vector<1xf32>
    %615 = vector.multi_reduction <add>, %614, %cst_112 [1, 2] : vector<1x32x32xf32> to vector<1xf32>
    %616 = vector.shape_cast %615 : vector<1xf32> to vector<1x1x1xf32>
    %617 = vector.extract %616[0, 0, 0] : f32 from vector<1x1x1xf32>
    %618 = vector.broadcast %617 : f32 to vector<1x1xf32>
    %619 = arith.mulf %539, %539 : vector<32x32xf32>
    %620 = vector.shape_cast %619 : vector<32x32xf32> to vector<1x32x32xf32>
    %cst_113 = arith.constant dense<0.000000e+00> : vector<1xf32>
    %621 = vector.multi_reduction <add>, %620, %cst_113 [1, 2] : vector<1x32x32xf32> to vector<1xf32>
    %622 = vector.shape_cast %621 : vector<1xf32> to vector<1x1x1xf32>
    %623 = vector.extract %622[0, 0, 0] : f32 from vector<1x1x1xf32>
    %624 = vector.broadcast %623 : f32 to vector<1x1xf32>
    %cst_114 = arith.constant 9.765625E-4 : f32
    %625 = vector.broadcast %cst_114 : f32 to vector<1x1xf32>
    %626 = arith.mulf %618, %625 : vector<1x1xf32>
    %cst_115 = arith.constant 9.765625E-4 : f32
    %627 = vector.broadcast %cst_115 : f32 to vector<1x1xf32>
    %628 = arith.mulf %624, %627 : vector<1x1xf32>
    %629 = arith.mulf %626, %626 : vector<1x1xf32>
    %630 = arith.subf %628, %629 : vector<1x1xf32>
    %c112 = arith.constant 112 : index
    %631 = memref.load %arg1[%c112] : memref<274xf32, #tpu.memory_space<smem>>
    %cst_116 = arith.constant 9.99999974E-6 : f32
    %632 = vector.broadcast %cst_116 : f32 to vector<1x1xf32>
    %633 = arith.addf %630, %632 : vector<1x1xf32>
    %634 = math.rsqrt %633 : vector<1x1xf32>
    %635 = vector.broadcast %631 : f32 to vector<1x1xf32>
    %636 = arith.mulf %635, %634 : vector<1x1xf32>
    %637 = vector.broadcast %626 : vector<1x1xf32> to vector<32x32xf32>
    %638 = arith.subf %539, %637 : vector<32x32xf32>
    %639 = vector.broadcast %636 : vector<1x1xf32> to vector<32x32xf32>
    %640 = arith.mulf %638, %639 : vector<32x32xf32>
    %c116 = arith.constant 116 : index
    %641 = memref.load %arg1[%c116] : memref<274xf32, #tpu.memory_space<smem>>
    %642 = vector.broadcast %641 : f32 to vector<32x32xf32>
    %643 = arith.addf %640, %642 : vector<32x32xf32>
    %cst_117 = arith.constant 0.000000e+00 : f32
    %644 = vector.broadcast %cst_117 : f32 to vector<32x32xf32>
    %645 = arith.cmpf ogt, %643, %644 : vector<32x32xf32>
    %cst_118 = arith.constant 1.000000e-01 : f32
    %646 = vector.broadcast %cst_118 : f32 to vector<32x32xf32>
    %647 = arith.mulf %646, %643 : vector<32x32xf32>
    %648 = arith.select %645, %643, %647 : vector<32x32xi1>, vector<32x32xf32>
    %649 = vector.shape_cast %543 : vector<32x32xf32> to vector<1x32x32xf32>
    %cst_119 = arith.constant dense<0.000000e+00> : vector<1xf32>
    %650 = vector.multi_reduction <add>, %649, %cst_119 [1, 2] : vector<1x32x32xf32> to vector<1xf32>
    %651 = vector.shape_cast %650 : vector<1xf32> to vector<1x1x1xf32>
    %652 = vector.extract %651[0, 0, 0] : f32 from vector<1x1x1xf32>
    %653 = vector.broadcast %652 : f32 to vector<1x1xf32>
    %654 = arith.mulf %543, %543 : vector<32x32xf32>
    %655 = vector.shape_cast %654 : vector<32x32xf32> to vector<1x32x32xf32>
    %cst_120 = arith.constant dense<0.000000e+00> : vector<1xf32>
    %656 = vector.multi_reduction <add>, %655, %cst_120 [1, 2] : vector<1x32x32xf32> to vector<1xf32>
    %657 = vector.shape_cast %656 : vector<1xf32> to vector<1x1x1xf32>
    %658 = vector.extract %657[0, 0, 0] : f32 from vector<1x1x1xf32>
    %659 = vector.broadcast %658 : f32 to vector<1x1xf32>
    %cst_121 = arith.constant 9.765625E-4 : f32
    %660 = vector.broadcast %cst_121 : f32 to vector<1x1xf32>
    %661 = arith.mulf %653, %660 : vector<1x1xf32>
    %cst_122 = arith.constant 9.765625E-4 : f32
    %662 = vector.broadcast %cst_122 : f32 to vector<1x1xf32>
    %663 = arith.mulf %659, %662 : vector<1x1xf32>
    %664 = arith.mulf %661, %661 : vector<1x1xf32>
    %665 = arith.subf %663, %664 : vector<1x1xf32>
    %c113 = arith.constant 113 : index
    %666 = memref.load %arg1[%c113] : memref<274xf32, #tpu.memory_space<smem>>
    %cst_123 = arith.constant 9.99999974E-6 : f32
    %667 = vector.broadcast %cst_123 : f32 to vector<1x1xf32>
    %668 = arith.addf %665, %667 : vector<1x1xf32>
    %669 = math.rsqrt %668 : vector<1x1xf32>
    %670 = vector.broadcast %666 : f32 to vector<1x1xf32>
    %671 = arith.mulf %670, %669 : vector<1x1xf32>
    %672 = vector.broadcast %661 : vector<1x1xf32> to vector<32x32xf32>
    %673 = arith.subf %543, %672 : vector<32x32xf32>
    %674 = vector.broadcast %671 : vector<1x1xf32> to vector<32x32xf32>
    %675 = arith.mulf %673, %674 : vector<32x32xf32>
    %c117 = arith.constant 117 : index
    %676 = memref.load %arg1[%c117] : memref<274xf32, #tpu.memory_space<smem>>
    %677 = vector.broadcast %676 : f32 to vector<32x32xf32>
    %678 = arith.addf %675, %677 : vector<32x32xf32>
    %cst_124 = arith.constant 0.000000e+00 : f32
    %679 = vector.broadcast %cst_124 : f32 to vector<32x32xf32>
    %680 = arith.cmpf ogt, %678, %679 : vector<32x32xf32>
    %cst_125 = arith.constant 1.000000e-01 : f32
    %681 = vector.broadcast %cst_125 : f32 to vector<32x32xf32>
    %682 = arith.mulf %681, %678 : vector<32x32xf32>
    %683 = arith.select %680, %678, %682 : vector<32x32xi1>, vector<32x32xf32>
    %cst_126 = arith.constant dense<0.000000e+00> : vector<32x34xf32>
    %684 = tpu.matmul %578, %13, %cst_126 {dimension_numbers = #tpu.dot_dimension_numbers<[1], [0], [0], [1], [0, 0, 1, 1], [], []>} : vector<32x32xf32>, vector<32x34xf32>, vector<32x34xf32> -> vector<32x34xf32>
    %cst_127 = arith.constant dense<0.000000e+00> : vector<34x34xf32>
    %685 = tpu.matmul %6, %684, %cst_127 {dimension_numbers = #tpu.dot_dimension_numbers<[1], [0], [0], [1], [0, 0, 1, 1], [], []>} : vector<34x32xf32>, vector<32x34xf32>, vector<34x34xf32> -> vector<34x34xf32>
    %c0_128 = arith.constant 0 : index
    %c0_129 = arith.constant 0 : index
    %c0_130 = arith.constant 0 : index
    %686 = vector.load %arg4[%c0_128, %c0_129, %c0_130] : memref<4x34x34xf32, #tpu.memory_space<vmem>>, vector<1x34x34xf32>
    %687 = vector.shape_cast %686 : vector<1x34x34xf32> to vector<34x34xf32>
    %688 = vector.shape_cast %685 : vector<34x34xf32> to vector<1x34x34xf32>
    tpu.vector_store %arg4[%c0_128, %c0_129, %c0_130], %688 {strides = array<i32>} : memref<4x34x34xf32, #tpu.memory_space<vmem>>, vector<1x34x34xf32>,
    %cst_131 = arith.constant dense<0.000000e+00> : vector<32x34xf32>
    %689 = tpu.matmul %613, %13, %cst_131 {dimension_numbers = #tpu.dot_dimension_numbers<[1], [0], [0], [1], [0, 0, 1, 1], [], []>} : vector<32x32xf32>, vector<32x34xf32>, vector<32x34xf32> -> vector<32x34xf32>
    %cst_132 = arith.constant dense<0.000000e+00> : vector<34x34xf32>
    %690 = tpu.matmul %6, %689, %cst_132 {dimension_numbers = #tpu.dot_dimension_numbers<[1], [0], [0], [1], [0, 0, 1, 1], [], []>} : vector<34x32xf32>, vector<32x34xf32>, vector<34x34xf32> -> vector<34x34xf32>
    %c1_133 = arith.constant 1 : index
    %c0_134 = arith.constant 0 : index
    %c0_135 = arith.constant 0 : index
    %691 = vector.load %arg4[%c1_133, %c0_134, %c0_135] : memref<4x34x34xf32, #tpu.memory_space<vmem>>, vector<1x34x34xf32>
    %692 = vector.shape_cast %691 : vector<1x34x34xf32> to vector<34x34xf32>
    %693 = vector.shape_cast %690 : vector<34x34xf32> to vector<1x34x34xf32>
    tpu.vector_store %arg4[%c1_133, %c0_134, %c0_135], %693 {strides = array<i32>} : memref<4x34x34xf32, #tpu.memory_space<vmem>>, vector<1x34x34xf32>,
    %cst_136 = arith.constant dense<0.000000e+00> : vector<32x34xf32>
    %694 = tpu.matmul %648, %13, %cst_136 {dimension_numbers = #tpu.dot_dimension_numbers<[1], [0], [0], [1], [0, 0, 1, 1], [], []>} : vector<32x32xf32>, vector<32x34xf32>, vector<32x34xf32> -> vector<32x34xf32>
    %cst_137 = arith.constant dense<0.000000e+00> : vector<34x34xf32>
    %695 = tpu.matmul %6, %694, %cst_137 {dimension_numbers = #tpu.dot_dimension_numbers<[1], [0], [0], [1], [0, 0, 1, 1], [], []>} : vector<34x32xf32>, vector<32x34xf32>, vector<34x34xf32> -> vector<34x34xf32>
    %c2_138 = arith.constant 2 : index
    %c0_139 = arith.constant 0 : index
    %c0_140 = arith.constant 0 : index
    %696 = vector.load %arg4[%c2_138, %c0_139, %c0_140] : memref<4x34x34xf32, #tpu.memory_space<vmem>>, vector<1x34x34xf32>
    %697 = vector.shape_cast %696 : vector<1x34x34xf32> to vector<34x34xf32>
    %698 = vector.shape_cast %695 : vector<34x34xf32> to vector<1x34x34xf32>
    tpu.vector_store %arg4[%c2_138, %c0_139, %c0_140], %698 {strides = array<i32>} : memref<4x34x34xf32, #tpu.memory_space<vmem>>, vector<1x34x34xf32>,
    %cst_141 = arith.constant dense<0.000000e+00> : vector<32x34xf32>
    %699 = tpu.matmul %683, %13, %cst_141 {dimension_numbers = #tpu.dot_dimension_numbers<[1], [0], [0], [1], [0, 0, 1, 1], [], []>} : vector<32x32xf32>, vector<32x34xf32>, vector<32x34xf32> -> vector<32x34xf32>
    %cst_142 = arith.constant dense<0.000000e+00> : vector<34x34xf32>
    %700 = tpu.matmul %6, %699, %cst_142 {dimension_numbers = #tpu.dot_dimension_numbers<[1], [0], [0], [1], [0, 0, 1, 1], [], []>} : vector<34x32xf32>, vector<32x34xf32>, vector<34x34xf32> -> vector<34x34xf32>
    %c3_143 = arith.constant 3 : index
    %c0_144 = arith.constant 0 : index
    %c0_145 = arith.constant 0 : index
    %701 = vector.load %arg4[%c3_143, %c0_144, %c0_145] : memref<4x34x34xf32, #tpu.memory_space<vmem>>, vector<1x34x34xf32>
    %702 = vector.shape_cast %701 : vector<1x34x34xf32> to vector<34x34xf32>
    %703 = vector.shape_cast %700 : vector<34x34xf32> to vector<1x34x34xf32>
    tpu.vector_store %arg4[%c3_143, %c0_144, %c0_145], %703 {strides = array<i32>} : memref<4x34x34xf32, #tpu.memory_space<vmem>>, vector<1x34x34xf32>,
    %c262 = arith.constant 262 : index
    %704 = memref.load %arg1[%c262] : memref<274xf32, #tpu.memory_space<smem>>
    %705 = vector.broadcast %704 : f32 to vector<32x32xf32>
    %c263 = arith.constant 263 : index
    %706 = memref.load %arg1[%c263] : memref<274xf32, #tpu.memory_space<smem>>
    %707 = vector.broadcast %706 : f32 to vector<32x32xf32>
    %c264 = arith.constant 264 : index
    %708 = memref.load %arg1[%c264] : memref<274xf32, #tpu.memory_space<smem>>
    %709 = vector.broadcast %708 : f32 to vector<32x32xf32>
    %c265 = arith.constant 265 : index
    %710 = memref.load %arg1[%c265] : memref<274xf32, #tpu.memory_space<smem>>
    %711 = vector.broadcast %710 : f32 to vector<32x32xf32>
    %c0_146 = arith.constant 0 : index
    %c0_147 = arith.constant 0 : index
    %c0_148 = arith.constant 0 : index
    %712 = vector.load %arg4[%c0_146, %c0_147, %c0_148] : memref<4x34x34xf32, #tpu.memory_space<vmem>>, vector<1x32x32xf32>
    %713 = vector.shape_cast %712 : vector<1x32x32xf32> to vector<32x32xf32>
    %c118 = arith.constant 118 : index
    %714 = memref.load %arg1[%c118] : memref<274xf32, #tpu.memory_space<smem>>
    %715 = vector.broadcast %714 : f32 to vector<32x32xf32>
    %716 = arith.mulf %713, %715 : vector<32x32xf32>
    %717 = arith.addf %705, %716 : vector<32x32xf32>
    %c119 = arith.constant 119 : index
    %718 = memref.load %arg1[%c119] : memref<274xf32, #tpu.memory_space<smem>>
    %719 = vector.broadcast %718 : f32 to vector<32x32xf32>
    %720 = arith.mulf %713, %719 : vector<32x32xf32>
    %721 = arith.addf %707, %720 : vector<32x32xf32>
    %c120 = arith.constant 120 : index
    %722 = memref.load %arg1[%c120] : memref<274xf32, #tpu.memory_space<smem>>
    %723 = vector.broadcast %722 : f32 to vector<32x32xf32>
    %724 = arith.mulf %713, %723 : vector<32x32xf32>
    %725 = arith.addf %709, %724 : vector<32x32xf32>
    %c121 = arith.constant 121 : index
    %726 = memref.load %arg1[%c121] : memref<274xf32, #tpu.memory_space<smem>>
    %727 = vector.broadcast %726 : f32 to vector<32x32xf32>
    %728 = arith.mulf %713, %727 : vector<32x32xf32>
    %729 = arith.addf %711, %728 : vector<32x32xf32>
    %c0_149 = arith.constant 0 : index
    %c0_150 = arith.constant 0 : index
    %c1_151 = arith.constant 1 : index
    %730 = vector.load %arg4[%c0_149, %c0_150, %c1_151] : memref<4x34x34xf32, #tpu.memory_space<vmem>>, vector<1x32x32xf32>
    %731 = vector.shape_cast %730 : vector<1x32x32xf32> to vector<32x32xf32>
    %c134 = arith.constant 134 : index
    %732 = memref.load %arg1[%c134] : memref<274xf32, #tpu.memory_space<smem>>
    %733 = vector.broadcast %732 : f32 to vector<32x32xf32>
    %734 = arith.mulf %731, %733 : vector<32x32xf32>
    %735 = arith.addf %717, %734 : vector<32x32xf32>
    %c135 = arith.constant 135 : index
    %736 = memref.load %arg1[%c135] : memref<274xf32, #tpu.memory_space<smem>>
    %737 = vector.broadcast %736 : f32 to vector<32x32xf32>
    %738 = arith.mulf %731, %737 : vector<32x32xf32>
    %739 = arith.addf %721, %738 : vector<32x32xf32>
    %c136 = arith.constant 136 : index
    %740 = memref.load %arg1[%c136] : memref<274xf32, #tpu.memory_space<smem>>
    %741 = vector.broadcast %740 : f32 to vector<32x32xf32>
    %742 = arith.mulf %731, %741 : vector<32x32xf32>
    %743 = arith.addf %725, %742 : vector<32x32xf32>
    %c137 = arith.constant 137 : index
    %744 = memref.load %arg1[%c137] : memref<274xf32, #tpu.memory_space<smem>>
    %745 = vector.broadcast %744 : f32 to vector<32x32xf32>
    %746 = arith.mulf %731, %745 : vector<32x32xf32>
    %747 = arith.addf %729, %746 : vector<32x32xf32>
    %c0_152 = arith.constant 0 : index
    %c0_153 = arith.constant 0 : index
    %c2_154 = arith.constant 2 : index
    %748 = vector.load %arg4[%c0_152, %c0_153, %c2_154] : memref<4x34x34xf32, #tpu.memory_space<vmem>>, vector<1x32x32xf32>
    %749 = vector.shape_cast %748 : vector<1x32x32xf32> to vector<32x32xf32>
    %c150 = arith.constant 150 : index
    %750 = memref.load %arg1[%c150] : memref<274xf32, #tpu.memory_space<smem>>
    %751 = vector.broadcast %750 : f32 to vector<32x32xf32>
    %752 = arith.mulf %749, %751 : vector<32x32xf32>
    %753 = arith.addf %735, %752 : vector<32x32xf32>
    %c151 = arith.constant 151 : index
    %754 = memref.load %arg1[%c151] : memref<274xf32, #tpu.memory_space<smem>>
    %755 = vector.broadcast %754 : f32 to vector<32x32xf32>
    %756 = arith.mulf %749, %755 : vector<32x32xf32>
    %757 = arith.addf %739, %756 : vector<32x32xf32>
    %c152 = arith.constant 152 : index
    %758 = memref.load %arg1[%c152] : memref<274xf32, #tpu.memory_space<smem>>
    %759 = vector.broadcast %758 : f32 to vector<32x32xf32>
    %760 = arith.mulf %749, %759 : vector<32x32xf32>
    %761 = arith.addf %743, %760 : vector<32x32xf32>
    %c153 = arith.constant 153 : index
    %762 = memref.load %arg1[%c153] : memref<274xf32, #tpu.memory_space<smem>>
    %763 = vector.broadcast %762 : f32 to vector<32x32xf32>
    %764 = arith.mulf %749, %763 : vector<32x32xf32>
    %765 = arith.addf %747, %764 : vector<32x32xf32>
    %c0_155 = arith.constant 0 : index
    %c1_156 = arith.constant 1 : index
    %c0_157 = arith.constant 0 : index
    %766 = vector.load %arg4[%c0_155, %c1_156, %c0_157] : memref<4x34x34xf32, #tpu.memory_space<vmem>>, vector<1x32x32xf32>
    %767 = vector.shape_cast %766 : vector<1x32x32xf32> to vector<32x32xf32>
    %c166 = arith.constant 166 : index
    %768 = memref.load %arg1[%c166] : memref<274xf32, #tpu.memory_space<smem>>
    %769 = vector.broadcast %768 : f32 to vector<32x32xf32>
    %770 = arith.mulf %767, %769 : vector<32x32xf32>
    %771 = arith.addf %753, %770 : vector<32x32xf32>
    %c167 = arith.constant 167 : index
    %772 = memref.load %arg1[%c167] : memref<274xf32, #tpu.memory_space<smem>>
    %773 = vector.broadcast %772 : f32 to vector<32x32xf32>
    %774 = arith.mulf %767, %773 : vector<32x32xf32>
    %775 = arith.addf %757, %774 : vector<32x32xf32>
    %c168 = arith.constant 168 : index
    %776 = memref.load %arg1[%c168] : memref<274xf32, #tpu.memory_space<smem>>
    %777 = vector.broadcast %776 : f32 to vector<32x32xf32>
    %778 = arith.mulf %767, %777 : vector<32x32xf32>
    %779 = arith.addf %761, %778 : vector<32x32xf32>
    %c169 = arith.constant 169 : index
    %780 = memref.load %arg1[%c169] : memref<274xf32, #tpu.memory_space<smem>>
    %781 = vector.broadcast %780 : f32 to vector<32x32xf32>
    %782 = arith.mulf %767, %781 : vector<32x32xf32>
    %783 = arith.addf %765, %782 : vector<32x32xf32>
    %c0_158 = arith.constant 0 : index
    %c1_159 = arith.constant 1 : index
    %c1_160 = arith.constant 1 : index
    %784 = vector.load %arg4[%c0_158, %c1_159, %c1_160] : memref<4x34x34xf32, #tpu.memory_space<vmem>>, vector<1x32x32xf32>
    %785 = vector.shape_cast %784 : vector<1x32x32xf32> to vector<32x32xf32>
    %c182 = arith.constant 182 : index
    %786 = memref.load %arg1[%c182] : memref<274xf32, #tpu.memory_space<smem>>
    %787 = vector.broadcast %786 : f32 to vector<32x32xf32>
    %788 = arith.mulf %785, %787 : vector<32x32xf32>
    %789 = arith.addf %771, %788 : vector<32x32xf32>
    %c183 = arith.constant 183 : index
    %790 = memref.load %arg1[%c183] : memref<274xf32, #tpu.memory_space<smem>>
    %791 = vector.broadcast %790 : f32 to vector<32x32xf32>
    %792 = arith.mulf %785, %791 : vector<32x32xf32>
    %793 = arith.addf %775, %792 : vector<32x32xf32>
    %c184 = arith.constant 184 : index
    %794 = memref.load %arg1[%c184] : memref<274xf32, #tpu.memory_space<smem>>
    %795 = vector.broadcast %794 : f32 to vector<32x32xf32>
    %796 = arith.mulf %785, %795 : vector<32x32xf32>
    %797 = arith.addf %779, %796 : vector<32x32xf32>
    %c185 = arith.constant 185 : index
    %798 = memref.load %arg1[%c185] : memref<274xf32, #tpu.memory_space<smem>>
    %799 = vector.broadcast %798 : f32 to vector<32x32xf32>
    %800 = arith.mulf %785, %799 : vector<32x32xf32>
    %801 = arith.addf %783, %800 : vector<32x32xf32>
    %c0_161 = arith.constant 0 : index
    %c1_162 = arith.constant 1 : index
    %c2_163 = arith.constant 2 : index
    %802 = vector.load %arg4[%c0_161, %c1_162, %c2_163] : memref<4x34x34xf32, #tpu.memory_space<vmem>>, vector<1x32x32xf32>
    %803 = vector.shape_cast %802 : vector<1x32x32xf32> to vector<32x32xf32>
    %c198 = arith.constant 198 : index
    %804 = memref.load %arg1[%c198] : memref<274xf32, #tpu.memory_space<smem>>
    %805 = vector.broadcast %804 : f32 to vector<32x32xf32>
    %806 = arith.mulf %803, %805 : vector<32x32xf32>
    %807 = arith.addf %789, %806 : vector<32x32xf32>
    %c199 = arith.constant 199 : index
    %808 = memref.load %arg1[%c199] : memref<274xf32, #tpu.memory_space<smem>>
    %809 = vector.broadcast %808 : f32 to vector<32x32xf32>
    %810 = arith.mulf %803, %809 : vector<32x32xf32>
    %811 = arith.addf %793, %810 : vector<32x32xf32>
    %c200 = arith.constant 200 : index
    %812 = memref.load %arg1[%c200] : memref<274xf32, #tpu.memory_space<smem>>
    %813 = vector.broadcast %812 : f32 to vector<32x32xf32>
    %814 = arith.mulf %803, %813 : vector<32x32xf32>
    %815 = arith.addf %797, %814 : vector<32x32xf32>
    %c201 = arith.constant 201 : index
    %816 = memref.load %arg1[%c201] : memref<274xf32, #tpu.memory_space<smem>>
    %817 = vector.broadcast %816 : f32 to vector<32x32xf32>
    %818 = arith.mulf %803, %817 : vector<32x32xf32>
    %819 = arith.addf %801, %818 : vector<32x32xf32>
    %c0_164 = arith.constant 0 : index
    %c2_165 = arith.constant 2 : index
    %c0_166 = arith.constant 0 : index
    %820 = vector.load %arg4[%c0_164, %c2_165, %c0_166] : memref<4x34x34xf32, #tpu.memory_space<vmem>>, vector<1x32x32xf32>
    %821 = vector.shape_cast %820 : vector<1x32x32xf32> to vector<32x32xf32>
    %c214 = arith.constant 214 : index
    %822 = memref.load %arg1[%c214] : memref<274xf32, #tpu.memory_space<smem>>
    %823 = vector.broadcast %822 : f32 to vector<32x32xf32>
    %824 = arith.mulf %821, %823 : vector<32x32xf32>
    %825 = arith.addf %807, %824 : vector<32x32xf32>
    %c215 = arith.constant 215 : index
    %826 = memref.load %arg1[%c215] : memref<274xf32, #tpu.memory_space<smem>>
    %827 = vector.broadcast %826 : f32 to vector<32x32xf32>
    %828 = arith.mulf %821, %827 : vector<32x32xf32>
    %829 = arith.addf %811, %828 : vector<32x32xf32>
    %c216 = arith.constant 216 : index
    %830 = memref.load %arg1[%c216] : memref<274xf32, #tpu.memory_space<smem>>
    %831 = vector.broadcast %830 : f32 to vector<32x32xf32>
    %832 = arith.mulf %821, %831 : vector<32x32xf32>
    %833 = arith.addf %815, %832 : vector<32x32xf32>
    %c217 = arith.constant 217 : index
    %834 = memref.load %arg1[%c217] : memref<274xf32, #tpu.memory_space<smem>>
    %835 = vector.broadcast %834 : f32 to vector<32x32xf32>
    %836 = arith.mulf %821, %835 : vector<32x32xf32>
    %837 = arith.addf %819, %836 : vector<32x32xf32>
    %c0_167 = arith.constant 0 : index
    %c2_168 = arith.constant 2 : index
    %c1_169 = arith.constant 1 : index
    %838 = vector.load %arg4[%c0_167, %c2_168, %c1_169] : memref<4x34x34xf32, #tpu.memory_space<vmem>>, vector<1x32x32xf32>
    %839 = vector.shape_cast %838 : vector<1x32x32xf32> to vector<32x32xf32>
    %c230 = arith.constant 230 : index
    %840 = memref.load %arg1[%c230] : memref<274xf32, #tpu.memory_space<smem>>
    %841 = vector.broadcast %840 : f32 to vector<32x32xf32>
    %842 = arith.mulf %839, %841 : vector<32x32xf32>
    %843 = arith.addf %825, %842 : vector<32x32xf32>
    %c231 = arith.constant 231 : index
    %844 = memref.load %arg1[%c231] : memref<274xf32, #tpu.memory_space<smem>>
    %845 = vector.broadcast %844 : f32 to vector<32x32xf32>
    %846 = arith.mulf %839, %845 : vector<32x32xf32>
    %847 = arith.addf %829, %846 : vector<32x32xf32>
    %c232 = arith.constant 232 : index
    %848 = memref.load %arg1[%c232] : memref<274xf32, #tpu.memory_space<smem>>
    %849 = vector.broadcast %848 : f32 to vector<32x32xf32>
    %850 = arith.mulf %839, %849 : vector<32x32xf32>
    %851 = arith.addf %833, %850 : vector<32x32xf32>
    %c233 = arith.constant 233 : index
    %852 = memref.load %arg1[%c233] : memref<274xf32, #tpu.memory_space<smem>>
    %853 = vector.broadcast %852 : f32 to vector<32x32xf32>
    %854 = arith.mulf %839, %853 : vector<32x32xf32>
    %855 = arith.addf %837, %854 : vector<32x32xf32>
    %c0_170 = arith.constant 0 : index
    %c2_171 = arith.constant 2 : index
    %c2_172 = arith.constant 2 : index
    %856 = vector.load %arg4[%c0_170, %c2_171, %c2_172] : memref<4x34x34xf32, #tpu.memory_space<vmem>>, vector<1x32x32xf32>
    %857 = vector.shape_cast %856 : vector<1x32x32xf32> to vector<32x32xf32>
    %c246 = arith.constant 246 : index
    %858 = memref.load %arg1[%c246] : memref<274xf32, #tpu.memory_space<smem>>
    %859 = vector.broadcast %858 : f32 to vector<32x32xf32>
    %860 = arith.mulf %857, %859 : vector<32x32xf32>
    %861 = arith.addf %843, %860 : vector<32x32xf32>
    %c247 = arith.constant 247 : index
    %862 = memref.load %arg1[%c247] : memref<274xf32, #tpu.memory_space<smem>>
    %863 = vector.broadcast %862 : f32 to vector<32x32xf32>
    %864 = arith.mulf %857, %863 : vector<32x32xf32>
    %865 = arith.addf %847, %864 : vector<32x32xf32>
    %c248 = arith.constant 248 : index
    %866 = memref.load %arg1[%c248] : memref<274xf32, #tpu.memory_space<smem>>
    %867 = vector.broadcast %866 : f32 to vector<32x32xf32>
    %868 = arith.mulf %857, %867 : vector<32x32xf32>
    %869 = arith.addf %851, %868 : vector<32x32xf32>
    %c249 = arith.constant 249 : index
    %870 = memref.load %arg1[%c249] : memref<274xf32, #tpu.memory_space<smem>>
    %871 = vector.broadcast %870 : f32 to vector<32x32xf32>
    %872 = arith.mulf %857, %871 : vector<32x32xf32>
    %873 = arith.addf %855, %872 : vector<32x32xf32>
    %c1_173 = arith.constant 1 : index
    %c0_174 = arith.constant 0 : index
    %c0_175 = arith.constant 0 : index
    %874 = vector.load %arg4[%c1_173, %c0_174, %c0_175] : memref<4x34x34xf32, #tpu.memory_space<vmem>>, vector<1x32x32xf32>
    %875 = vector.shape_cast %874 : vector<1x32x32xf32> to vector<32x32xf32>
    %c122 = arith.constant 122 : index
    %876 = memref.load %arg1[%c122] : memref<274xf32, #tpu.memory_space<smem>>
    %877 = vector.broadcast %876 : f32 to vector<32x32xf32>
    %878 = arith.mulf %875, %877 : vector<32x32xf32>
    %879 = arith.addf %861, %878 : vector<32x32xf32>
    %c123 = arith.constant 123 : index
    %880 = memref.load %arg1[%c123] : memref<274xf32, #tpu.memory_space<smem>>
    %881 = vector.broadcast %880 : f32 to vector<32x32xf32>
    %882 = arith.mulf %875, %881 : vector<32x32xf32>
    %883 = arith.addf %865, %882 : vector<32x32xf32>
    %c124 = arith.constant 124 : index
    %884 = memref.load %arg1[%c124] : memref<274xf32, #tpu.memory_space<smem>>
    %885 = vector.broadcast %884 : f32 to vector<32x32xf32>
    %886 = arith.mulf %875, %885 : vector<32x32xf32>
    %887 = arith.addf %869, %886 : vector<32x32xf32>
    %c125 = arith.constant 125 : index
    %888 = memref.load %arg1[%c125] : memref<274xf32, #tpu.memory_space<smem>>
    %889 = vector.broadcast %888 : f32 to vector<32x32xf32>
    %890 = arith.mulf %875, %889 : vector<32x32xf32>
    %891 = arith.addf %873, %890 : vector<32x32xf32>
    %c1_176 = arith.constant 1 : index
    %c0_177 = arith.constant 0 : index
    %c1_178 = arith.constant 1 : index
    %892 = vector.load %arg4[%c1_176, %c0_177, %c1_178] : memref<4x34x34xf32, #tpu.memory_space<vmem>>, vector<1x32x32xf32>
    %893 = vector.shape_cast %892 : vector<1x32x32xf32> to vector<32x32xf32>
    %c138 = arith.constant 138 : index
    %894 = memref.load %arg1[%c138] : memref<274xf32, #tpu.memory_space<smem>>
    %895 = vector.broadcast %894 : f32 to vector<32x32xf32>
    %896 = arith.mulf %893, %895 : vector<32x32xf32>
    %897 = arith.addf %879, %896 : vector<32x32xf32>
    %c139 = arith.constant 139 : index
    %898 = memref.load %arg1[%c139] : memref<274xf32, #tpu.memory_space<smem>>
    %899 = vector.broadcast %898 : f32 to vector<32x32xf32>
    %900 = arith.mulf %893, %899 : vector<32x32xf32>
    %901 = arith.addf %883, %900 : vector<32x32xf32>
    %c140 = arith.constant 140 : index
    %902 = memref.load %arg1[%c140] : memref<274xf32, #tpu.memory_space<smem>>
    %903 = vector.broadcast %902 : f32 to vector<32x32xf32>
    %904 = arith.mulf %893, %903 : vector<32x32xf32>
    %905 = arith.addf %887, %904 : vector<32x32xf32>
    %c141 = arith.constant 141 : index
    %906 = memref.load %arg1[%c141] : memref<274xf32, #tpu.memory_space<smem>>
    %907 = vector.broadcast %906 : f32 to vector<32x32xf32>
    %908 = arith.mulf %893, %907 : vector<32x32xf32>
    %909 = arith.addf %891, %908 : vector<32x32xf32>
    %c1_179 = arith.constant 1 : index
    %c0_180 = arith.constant 0 : index
    %c2_181 = arith.constant 2 : index
    %910 = vector.load %arg4[%c1_179, %c0_180, %c2_181] : memref<4x34x34xf32, #tpu.memory_space<vmem>>, vector<1x32x32xf32>
    %911 = vector.shape_cast %910 : vector<1x32x32xf32> to vector<32x32xf32>
    %c154 = arith.constant 154 : index
    %912 = memref.load %arg1[%c154] : memref<274xf32, #tpu.memory_space<smem>>
    %913 = vector.broadcast %912 : f32 to vector<32x32xf32>
    %914 = arith.mulf %911, %913 : vector<32x32xf32>
    %915 = arith.addf %897, %914 : vector<32x32xf32>
    %c155 = arith.constant 155 : index
    %916 = memref.load %arg1[%c155] : memref<274xf32, #tpu.memory_space<smem>>
    %917 = vector.broadcast %916 : f32 to vector<32x32xf32>
    %918 = arith.mulf %911, %917 : vector<32x32xf32>
    %919 = arith.addf %901, %918 : vector<32x32xf32>
    %c156 = arith.constant 156 : index
    %920 = memref.load %arg1[%c156] : memref<274xf32, #tpu.memory_space<smem>>
    %921 = vector.broadcast %920 : f32 to vector<32x32xf32>
    %922 = arith.mulf %911, %921 : vector<32x32xf32>
    %923 = arith.addf %905, %922 : vector<32x32xf32>
    %c157 = arith.constant 157 : index
    %924 = memref.load %arg1[%c157] : memref<274xf32, #tpu.memory_space<smem>>
    %925 = vector.broadcast %924 : f32 to vector<32x32xf32>
    %926 = arith.mulf %911, %925 : vector<32x32xf32>
    %927 = arith.addf %909, %926 : vector<32x32xf32>
    %c1_182 = arith.constant 1 : index
    %c1_183 = arith.constant 1 : index
    %c0_184 = arith.constant 0 : index
    %928 = vector.load %arg4[%c1_182, %c1_183, %c0_184] : memref<4x34x34xf32, #tpu.memory_space<vmem>>, vector<1x32x32xf32>
    %929 = vector.shape_cast %928 : vector<1x32x32xf32> to vector<32x32xf32>
    %c170 = arith.constant 170 : index
    %930 = memref.load %arg1[%c170] : memref<274xf32, #tpu.memory_space<smem>>
    %931 = vector.broadcast %930 : f32 to vector<32x32xf32>
    %932 = arith.mulf %929, %931 : vector<32x32xf32>
    %933 = arith.addf %915, %932 : vector<32x32xf32>
    %c171 = arith.constant 171 : index
    %934 = memref.load %arg1[%c171] : memref<274xf32, #tpu.memory_space<smem>>
    %935 = vector.broadcast %934 : f32 to vector<32x32xf32>
    %936 = arith.mulf %929, %935 : vector<32x32xf32>
    %937 = arith.addf %919, %936 : vector<32x32xf32>
    %c172 = arith.constant 172 : index
    %938 = memref.load %arg1[%c172] : memref<274xf32, #tpu.memory_space<smem>>
    %939 = vector.broadcast %938 : f32 to vector<32x32xf32>
    %940 = arith.mulf %929, %939 : vector<32x32xf32>
    %941 = arith.addf %923, %940 : vector<32x32xf32>
    %c173 = arith.constant 173 : index
    %942 = memref.load %arg1[%c173] : memref<274xf32, #tpu.memory_space<smem>>
    %943 = vector.broadcast %942 : f32 to vector<32x32xf32>
    %944 = arith.mulf %929, %943 : vector<32x32xf32>
    %945 = arith.addf %927, %944 : vector<32x32xf32>
    %c1_185 = arith.constant 1 : index
    %c1_186 = arith.constant 1 : index
    %c1_187 = arith.constant 1 : index
    %946 = vector.load %arg4[%c1_185, %c1_186, %c1_187] : memref<4x34x34xf32, #tpu.memory_space<vmem>>, vector<1x32x32xf32>
    %947 = vector.shape_cast %946 : vector<1x32x32xf32> to vector<32x32xf32>
    %c186 = arith.constant 186 : index
    %948 = memref.load %arg1[%c186] : memref<274xf32, #tpu.memory_space<smem>>
    %949 = vector.broadcast %948 : f32 to vector<32x32xf32>
    %950 = arith.mulf %947, %949 : vector<32x32xf32>
    %951 = arith.addf %933, %950 : vector<32x32xf32>
    %c187 = arith.constant 187 : index
    %952 = memref.load %arg1[%c187] : memref<274xf32, #tpu.memory_space<smem>>
    %953 = vector.broadcast %952 : f32 to vector<32x32xf32>
    %954 = arith.mulf %947, %953 : vector<32x32xf32>
    %955 = arith.addf %937, %954 : vector<32x32xf32>
    %c188 = arith.constant 188 : index
    %956 = memref.load %arg1[%c188] : memref<274xf32, #tpu.memory_space<smem>>
    %957 = vector.broadcast %956 : f32 to vector<32x32xf32>
    %958 = arith.mulf %947, %957 : vector<32x32xf32>
    %959 = arith.addf %941, %958 : vector<32x32xf32>
    %c189 = arith.constant 189 : index
    %960 = memref.load %arg1[%c189] : memref<274xf32, #tpu.memory_space<smem>>
    %961 = vector.broadcast %960 : f32 to vector<32x32xf32>
    %962 = arith.mulf %947, %961 : vector<32x32xf32>
    %963 = arith.addf %945, %962 : vector<32x32xf32>
    %c1_188 = arith.constant 1 : index
    %c1_189 = arith.constant 1 : index
    %c2_190 = arith.constant 2 : index
    %964 = vector.load %arg4[%c1_188, %c1_189, %c2_190] : memref<4x34x34xf32, #tpu.memory_space<vmem>>, vector<1x32x32xf32>
    %965 = vector.shape_cast %964 : vector<1x32x32xf32> to vector<32x32xf32>
    %c202 = arith.constant 202 : index
    %966 = memref.load %arg1[%c202] : memref<274xf32, #tpu.memory_space<smem>>
    %967 = vector.broadcast %966 : f32 to vector<32x32xf32>
    %968 = arith.mulf %965, %967 : vector<32x32xf32>
    %969 = arith.addf %951, %968 : vector<32x32xf32>
    %c203 = arith.constant 203 : index
    %970 = memref.load %arg1[%c203] : memref<274xf32, #tpu.memory_space<smem>>
    %971 = vector.broadcast %970 : f32 to vector<32x32xf32>
    %972 = arith.mulf %965, %971 : vector<32x32xf32>
    %973 = arith.addf %955, %972 : vector<32x32xf32>
    %c204 = arith.constant 204 : index
    %974 = memref.load %arg1[%c204] : memref<274xf32, #tpu.memory_space<smem>>
    %975 = vector.broadcast %974 : f32 to vector<32x32xf32>
    %976 = arith.mulf %965, %975 : vector<32x32xf32>
    %977 = arith.addf %959, %976 : vector<32x32xf32>
    %c205 = arith.constant 205 : index
    %978 = memref.load %arg1[%c205] : memref<274xf32, #tpu.memory_space<smem>>
    %979 = vector.broadcast %978 : f32 to vector<32x32xf32>
    %980 = arith.mulf %965, %979 : vector<32x32xf32>
    %981 = arith.addf %963, %980 : vector<32x32xf32>
    %c1_191 = arith.constant 1 : index
    %c2_192 = arith.constant 2 : index
    %c0_193 = arith.constant 0 : index
    %982 = vector.load %arg4[%c1_191, %c2_192, %c0_193] : memref<4x34x34xf32, #tpu.memory_space<vmem>>, vector<1x32x32xf32>
    %983 = vector.shape_cast %982 : vector<1x32x32xf32> to vector<32x32xf32>
    %c218 = arith.constant 218 : index
    %984 = memref.load %arg1[%c218] : memref<274xf32, #tpu.memory_space<smem>>
    %985 = vector.broadcast %984 : f32 to vector<32x32xf32>
    %986 = arith.mulf %983, %985 : vector<32x32xf32>
    %987 = arith.addf %969, %986 : vector<32x32xf32>
    %c219 = arith.constant 219 : index
    %988 = memref.load %arg1[%c219] : memref<274xf32, #tpu.memory_space<smem>>
    %989 = vector.broadcast %988 : f32 to vector<32x32xf32>
    %990 = arith.mulf %983, %989 : vector<32x32xf32>
    %991 = arith.addf %973, %990 : vector<32x32xf32>
    %c220 = arith.constant 220 : index
    %992 = memref.load %arg1[%c220] : memref<274xf32, #tpu.memory_space<smem>>
    %993 = vector.broadcast %992 : f32 to vector<32x32xf32>
    %994 = arith.mulf %983, %993 : vector<32x32xf32>
    %995 = arith.addf %977, %994 : vector<32x32xf32>
    %c221 = arith.constant 221 : index
    %996 = memref.load %arg1[%c221] : memref<274xf32, #tpu.memory_space<smem>>
    %997 = vector.broadcast %996 : f32 to vector<32x32xf32>
    %998 = arith.mulf %983, %997 : vector<32x32xf32>
    %999 = arith.addf %981, %998 : vector<32x32xf32>
    %c1_194 = arith.constant 1 : index
    %c2_195 = arith.constant 2 : index
    %c1_196 = arith.constant 1 : index
    %1000 = vector.load %arg4[%c1_194, %c2_195, %c1_196] : memref<4x34x34xf32, #tpu.memory_space<vmem>>, vector<1x32x32xf32>
    %1001 = vector.shape_cast %1000 : vector<1x32x32xf32> to vector<32x32xf32>
    %c234 = arith.constant 234 : index
    %1002 = memref.load %arg1[%c234] : memref<274xf32, #tpu.memory_space<smem>>
    %1003 = vector.broadcast %1002 : f32 to vector<32x32xf32>
    %1004 = arith.mulf %1001, %1003 : vector<32x32xf32>
    %1005 = arith.addf %987, %1004 : vector<32x32xf32>
    %c235 = arith.constant 235 : index
    %1006 = memref.load %arg1[%c235] : memref<274xf32, #tpu.memory_space<smem>>
    %1007 = vector.broadcast %1006 : f32 to vector<32x32xf32>
    %1008 = arith.mulf %1001, %1007 : vector<32x32xf32>
    %1009 = arith.addf %991, %1008 : vector<32x32xf32>
    %c236 = arith.constant 236 : index
    %1010 = memref.load %arg1[%c236] : memref<274xf32, #tpu.memory_space<smem>>
    %1011 = vector.broadcast %1010 : f32 to vector<32x32xf32>
    %1012 = arith.mulf %1001, %1011 : vector<32x32xf32>
    %1013 = arith.addf %995, %1012 : vector<32x32xf32>
    %c237 = arith.constant 237 : index
    %1014 = memref.load %arg1[%c237] : memref<274xf32, #tpu.memory_space<smem>>
    %1015 = vector.broadcast %1014 : f32 to vector<32x32xf32>
    %1016 = arith.mulf %1001, %1015 : vector<32x32xf32>
    %1017 = arith.addf %999, %1016 : vector<32x32xf32>
    %c1_197 = arith.constant 1 : index
    %c2_198 = arith.constant 2 : index
    %c2_199 = arith.constant 2 : index
    %1018 = vector.load %arg4[%c1_197, %c2_198, %c2_199] : memref<4x34x34xf32, #tpu.memory_space<vmem>>, vector<1x32x32xf32>
    %1019 = vector.shape_cast %1018 : vector<1x32x32xf32> to vector<32x32xf32>
    %c250 = arith.constant 250 : index
    %1020 = memref.load %arg1[%c250] : memref<274xf32, #tpu.memory_space<smem>>
    %1021 = vector.broadcast %1020 : f32 to vector<32x32xf32>
    %1022 = arith.mulf %1019, %1021 : vector<32x32xf32>
    %1023 = arith.addf %1005, %1022 : vector<32x32xf32>
    %c251 = arith.constant 251 : index
    %1024 = memref.load %arg1[%c251] : memref<274xf32, #tpu.memory_space<smem>>
    %1025 = vector.broadcast %1024 : f32 to vector<32x32xf32>
    %1026 = arith.mulf %1019, %1025 : vector<32x32xf32>
    %1027 = arith.addf %1009, %1026 : vector<32x32xf32>
    %c252 = arith.constant 252 : index
    %1028 = memref.load %arg1[%c252] : memref<274xf32, #tpu.memory_space<smem>>
    %1029 = vector.broadcast %1028 : f32 to vector<32x32xf32>
    %1030 = arith.mulf %1019, %1029 : vector<32x32xf32>
    %1031 = arith.addf %1013, %1030 : vector<32x32xf32>
    %c253 = arith.constant 253 : index
    %1032 = memref.load %arg1[%c253] : memref<274xf32, #tpu.memory_space<smem>>
    %1033 = vector.broadcast %1032 : f32 to vector<32x32xf32>
    %1034 = arith.mulf %1019, %1033 : vector<32x32xf32>
    %1035 = arith.addf %1017, %1034 : vector<32x32xf32>
    %c2_200 = arith.constant 2 : index
    %c0_201 = arith.constant 0 : index
    %c0_202 = arith.constant 0 : index
    %1036 = vector.load %arg4[%c2_200, %c0_201, %c0_202] : memref<4x34x34xf32, #tpu.memory_space<vmem>>, vector<1x32x32xf32>
    %1037 = vector.shape_cast %1036 : vector<1x32x32xf32> to vector<32x32xf32>
    %c126 = arith.constant 126 : index
    %1038 = memref.load %arg1[%c126] : memref<274xf32, #tpu.memory_space<smem>>
    %1039 = vector.broadcast %1038 : f32 to vector<32x32xf32>
    %1040 = arith.mulf %1037, %1039 : vector<32x32xf32>
    %1041 = arith.addf %1023, %1040 : vector<32x32xf32>
    %c127 = arith.constant 127 : index
    %1042 = memref.load %arg1[%c127] : memref<274xf32, #tpu.memory_space<smem>>
    %1043 = vector.broadcast %1042 : f32 to vector<32x32xf32>
    %1044 = arith.mulf %1037, %1043 : vector<32x32xf32>
    %1045 = arith.addf %1027, %1044 : vector<32x32xf32>
    %c128 = arith.constant 128 : index
    %1046 = memref.load %arg1[%c128] : memref<274xf32, #tpu.memory_space<smem>>
    %1047 = vector.broadcast %1046 : f32 to vector<32x32xf32>
    %1048 = arith.mulf %1037, %1047 : vector<32x32xf32>
    %1049 = arith.addf %1031, %1048 : vector<32x32xf32>
    %c129 = arith.constant 129 : index
    %1050 = memref.load %arg1[%c129] : memref<274xf32, #tpu.memory_space<smem>>
    %1051 = vector.broadcast %1050 : f32 to vector<32x32xf32>
    %1052 = arith.mulf %1037, %1051 : vector<32x32xf32>
    %1053 = arith.addf %1035, %1052 : vector<32x32xf32>
    %c2_203 = arith.constant 2 : index
    %c0_204 = arith.constant 0 : index
    %c1_205 = arith.constant 1 : index
    %1054 = vector.load %arg4[%c2_203, %c0_204, %c1_205] : memref<4x34x34xf32, #tpu.memory_space<vmem>>, vector<1x32x32xf32>
    %1055 = vector.shape_cast %1054 : vector<1x32x32xf32> to vector<32x32xf32>
    %c142 = arith.constant 142 : index
    %1056 = memref.load %arg1[%c142] : memref<274xf32, #tpu.memory_space<smem>>
    %1057 = vector.broadcast %1056 : f32 to vector<32x32xf32>
    %1058 = arith.mulf %1055, %1057 : vector<32x32xf32>
    %1059 = arith.addf %1041, %1058 : vector<32x32xf32>
    %c143 = arith.constant 143 : index
    %1060 = memref.load %arg1[%c143] : memref<274xf32, #tpu.memory_space<smem>>
    %1061 = vector.broadcast %1060 : f32 to vector<32x32xf32>
    %1062 = arith.mulf %1055, %1061 : vector<32x32xf32>
    %1063 = arith.addf %1045, %1062 : vector<32x32xf32>
    %c144 = arith.constant 144 : index
    %1064 = memref.load %arg1[%c144] : memref<274xf32, #tpu.memory_space<smem>>
    %1065 = vector.broadcast %1064 : f32 to vector<32x32xf32>
    %1066 = arith.mulf %1055, %1065 : vector<32x32xf32>
    %1067 = arith.addf %1049, %1066 : vector<32x32xf32>
    %c145 = arith.constant 145 : index
    %1068 = memref.load %arg1[%c145] : memref<274xf32, #tpu.memory_space<smem>>
    %1069 = vector.broadcast %1068 : f32 to vector<32x32xf32>
    %1070 = arith.mulf %1055, %1069 : vector<32x32xf32>
    %1071 = arith.addf %1053, %1070 : vector<32x32xf32>
    %c2_206 = arith.constant 2 : index
    %c0_207 = arith.constant 0 : index
    %c2_208 = arith.constant 2 : index
    %1072 = vector.load %arg4[%c2_206, %c0_207, %c2_208] : memref<4x34x34xf32, #tpu.memory_space<vmem>>, vector<1x32x32xf32>
    %1073 = vector.shape_cast %1072 : vector<1x32x32xf32> to vector<32x32xf32>
    %c158 = arith.constant 158 : index
    %1074 = memref.load %arg1[%c158] : memref<274xf32, #tpu.memory_space<smem>>
    %1075 = vector.broadcast %1074 : f32 to vector<32x32xf32>
    %1076 = arith.mulf %1073, %1075 : vector<32x32xf32>
    %1077 = arith.addf %1059, %1076 : vector<32x32xf32>
    %c159 = arith.constant 159 : index
    %1078 = memref.load %arg1[%c159] : memref<274xf32, #tpu.memory_space<smem>>
    %1079 = vector.broadcast %1078 : f32 to vector<32x32xf32>
    %1080 = arith.mulf %1073, %1079 : vector<32x32xf32>
    %1081 = arith.addf %1063, %1080 : vector<32x32xf32>
    %c160 = arith.constant 160 : index
    %1082 = memref.load %arg1[%c160] : memref<274xf32, #tpu.memory_space<smem>>
    %1083 = vector.broadcast %1082 : f32 to vector<32x32xf32>
    %1084 = arith.mulf %1073, %1083 : vector<32x32xf32>
    %1085 = arith.addf %1067, %1084 : vector<32x32xf32>
    %c161 = arith.constant 161 : index
    %1086 = memref.load %arg1[%c161] : memref<274xf32, #tpu.memory_space<smem>>
    %1087 = vector.broadcast %1086 : f32 to vector<32x32xf32>
    %1088 = arith.mulf %1073, %1087 : vector<32x32xf32>
    %1089 = arith.addf %1071, %1088 : vector<32x32xf32>
    %c2_209 = arith.constant 2 : index
    %c1_210 = arith.constant 1 : index
    %c0_211 = arith.constant 0 : index
    %1090 = vector.load %arg4[%c2_209, %c1_210, %c0_211] : memref<4x34x34xf32, #tpu.memory_space<vmem>>, vector<1x32x32xf32>
    %1091 = vector.shape_cast %1090 : vector<1x32x32xf32> to vector<32x32xf32>
    %c174 = arith.constant 174 : index
    %1092 = memref.load %arg1[%c174] : memref<274xf32, #tpu.memory_space<smem>>
    %1093 = vector.broadcast %1092 : f32 to vector<32x32xf32>
    %1094 = arith.mulf %1091, %1093 : vector<32x32xf32>
    %1095 = arith.addf %1077, %1094 : vector<32x32xf32>
    %c175 = arith.constant 175 : index
    %1096 = memref.load %arg1[%c175] : memref<274xf32, #tpu.memory_space<smem>>
    %1097 = vector.broadcast %1096 : f32 to vector<32x32xf32>
    %1098 = arith.mulf %1091, %1097 : vector<32x32xf32>
    %1099 = arith.addf %1081, %1098 : vector<32x32xf32>
    %c176 = arith.constant 176 : index
    %1100 = memref.load %arg1[%c176] : memref<274xf32, #tpu.memory_space<smem>>
    %1101 = vector.broadcast %1100 : f32 to vector<32x32xf32>
    %1102 = arith.mulf %1091, %1101 : vector<32x32xf32>
    %1103 = arith.addf %1085, %1102 : vector<32x32xf32>
    %c177 = arith.constant 177 : index
    %1104 = memref.load %arg1[%c177] : memref<274xf32, #tpu.memory_space<smem>>
    %1105 = vector.broadcast %1104 : f32 to vector<32x32xf32>
    %1106 = arith.mulf %1091, %1105 : vector<32x32xf32>
    %1107 = arith.addf %1089, %1106 : vector<32x32xf32>
    %c2_212 = arith.constant 2 : index
    %c1_213 = arith.constant 1 : index
    %c1_214 = arith.constant 1 : index
    %1108 = vector.load %arg4[%c2_212, %c1_213, %c1_214] : memref<4x34x34xf32, #tpu.memory_space<vmem>>, vector<1x32x32xf32>
    %1109 = vector.shape_cast %1108 : vector<1x32x32xf32> to vector<32x32xf32>
    %c190 = arith.constant 190 : index
    %1110 = memref.load %arg1[%c190] : memref<274xf32, #tpu.memory_space<smem>>
    %1111 = vector.broadcast %1110 : f32 to vector<32x32xf32>
    %1112 = arith.mulf %1109, %1111 : vector<32x32xf32>
    %1113 = arith.addf %1095, %1112 : vector<32x32xf32>
    %c191 = arith.constant 191 : index
    %1114 = memref.load %arg1[%c191] : memref<274xf32, #tpu.memory_space<smem>>
    %1115 = vector.broadcast %1114 : f32 to vector<32x32xf32>
    %1116 = arith.mulf %1109, %1115 : vector<32x32xf32>
    %1117 = arith.addf %1099, %1116 : vector<32x32xf32>
    %c192 = arith.constant 192 : index
    %1118 = memref.load %arg1[%c192] : memref<274xf32, #tpu.memory_space<smem>>
    %1119 = vector.broadcast %1118 : f32 to vector<32x32xf32>
    %1120 = arith.mulf %1109, %1119 : vector<32x32xf32>
    %1121 = arith.addf %1103, %1120 : vector<32x32xf32>
    %c193 = arith.constant 193 : index
    %1122 = memref.load %arg1[%c193] : memref<274xf32, #tpu.memory_space<smem>>
    %1123 = vector.broadcast %1122 : f32 to vector<32x32xf32>
    %1124 = arith.mulf %1109, %1123 : vector<32x32xf32>
    %1125 = arith.addf %1107, %1124 : vector<32x32xf32>
    %c2_215 = arith.constant 2 : index
    %c1_216 = arith.constant 1 : index
    %c2_217 = arith.constant 2 : index
    %1126 = vector.load %arg4[%c2_215, %c1_216, %c2_217] : memref<4x34x34xf32, #tpu.memory_space<vmem>>, vector<1x32x32xf32>
    %1127 = vector.shape_cast %1126 : vector<1x32x32xf32> to vector<32x32xf32>
    %c206 = arith.constant 206 : index
    %1128 = memref.load %arg1[%c206] : memref<274xf32, #tpu.memory_space<smem>>
    %1129 = vector.broadcast %1128 : f32 to vector<32x32xf32>
    %1130 = arith.mulf %1127, %1129 : vector<32x32xf32>
    %1131 = arith.addf %1113, %1130 : vector<32x32xf32>
    %c207 = arith.constant 207 : index
    %1132 = memref.load %arg1[%c207] : memref<274xf32, #tpu.memory_space<smem>>
    %1133 = vector.broadcast %1132 : f32 to vector<32x32xf32>
    %1134 = arith.mulf %1127, %1133 : vector<32x32xf32>
    %1135 = arith.addf %1117, %1134 : vector<32x32xf32>
    %c208 = arith.constant 208 : index
    %1136 = memref.load %arg1[%c208] : memref<274xf32, #tpu.memory_space<smem>>
    %1137 = vector.broadcast %1136 : f32 to vector<32x32xf32>
    %1138 = arith.mulf %1127, %1137 : vector<32x32xf32>
    %1139 = arith.addf %1121, %1138 : vector<32x32xf32>
    %c209 = arith.constant 209 : index
    %1140 = memref.load %arg1[%c209] : memref<274xf32, #tpu.memory_space<smem>>
    %1141 = vector.broadcast %1140 : f32 to vector<32x32xf32>
    %1142 = arith.mulf %1127, %1141 : vector<32x32xf32>
    %1143 = arith.addf %1125, %1142 : vector<32x32xf32>
    %c2_218 = arith.constant 2 : index
    %c2_219 = arith.constant 2 : index
    %c0_220 = arith.constant 0 : index
    %1144 = vector.load %arg4[%c2_218, %c2_219, %c0_220] : memref<4x34x34xf32, #tpu.memory_space<vmem>>, vector<1x32x32xf32>
    %1145 = vector.shape_cast %1144 : vector<1x32x32xf32> to vector<32x32xf32>
    %c222 = arith.constant 222 : index
    %1146 = memref.load %arg1[%c222] : memref<274xf32, #tpu.memory_space<smem>>
    %1147 = vector.broadcast %1146 : f32 to vector<32x32xf32>
    %1148 = arith.mulf %1145, %1147 : vector<32x32xf32>
    %1149 = arith.addf %1131, %1148 : vector<32x32xf32>
    %c223 = arith.constant 223 : index
    %1150 = memref.load %arg1[%c223] : memref<274xf32, #tpu.memory_space<smem>>
    %1151 = vector.broadcast %1150 : f32 to vector<32x32xf32>
    %1152 = arith.mulf %1145, %1151 : vector<32x32xf32>
    %1153 = arith.addf %1135, %1152 : vector<32x32xf32>
    %c224 = arith.constant 224 : index
    %1154 = memref.load %arg1[%c224] : memref<274xf32, #tpu.memory_space<smem>>
    %1155 = vector.broadcast %1154 : f32 to vector<32x32xf32>
    %1156 = arith.mulf %1145, %1155 : vector<32x32xf32>
    %1157 = arith.addf %1139, %1156 : vector<32x32xf32>
    %c225 = arith.constant 225 : index
    %1158 = memref.load %arg1[%c225] : memref<274xf32, #tpu.memory_space<smem>>
    %1159 = vector.broadcast %1158 : f32 to vector<32x32xf32>
    %1160 = arith.mulf %1145, %1159 : vector<32x32xf32>
    %1161 = arith.addf %1143, %1160 : vector<32x32xf32>
    %c2_221 = arith.constant 2 : index
    %c2_222 = arith.constant 2 : index
    %c1_223 = arith.constant 1 : index
    %1162 = vector.load %arg4[%c2_221, %c2_222, %c1_223] : memref<4x34x34xf32, #tpu.memory_space<vmem>>, vector<1x32x32xf32>
    %1163 = vector.shape_cast %1162 : vector<1x32x32xf32> to vector<32x32xf32>
    %c238 = arith.constant 238 : index
    %1164 = memref.load %arg1[%c238] : memref<274xf32, #tpu.memory_space<smem>>
    %1165 = vector.broadcast %1164 : f32 to vector<32x32xf32>
    %1166 = arith.mulf %1163, %1165 : vector<32x32xf32>
    %1167 = arith.addf %1149, %1166 : vector<32x32xf32>
    %c239 = arith.constant 239 : index
    %1168 = memref.load %arg1[%c239] : memref<274xf32, #tpu.memory_space<smem>>
    %1169 = vector.broadcast %1168 : f32 to vector<32x32xf32>
    %1170 = arith.mulf %1163, %1169 : vector<32x32xf32>
    %1171 = arith.addf %1153, %1170 : vector<32x32xf32>
    %c240 = arith.constant 240 : index
    %1172 = memref.load %arg1[%c240] : memref<274xf32, #tpu.memory_space<smem>>
    %1173 = vector.broadcast %1172 : f32 to vector<32x32xf32>
    %1174 = arith.mulf %1163, %1173 : vector<32x32xf32>
    %1175 = arith.addf %1157, %1174 : vector<32x32xf32>
    %c241 = arith.constant 241 : index
    %1176 = memref.load %arg1[%c241] : memref<274xf32, #tpu.memory_space<smem>>
    %1177 = vector.broadcast %1176 : f32 to vector<32x32xf32>
    %1178 = arith.mulf %1163, %1177 : vector<32x32xf32>
    %1179 = arith.addf %1161, %1178 : vector<32x32xf32>
    %c2_224 = arith.constant 2 : index
    %c2_225 = arith.constant 2 : index
    %c2_226 = arith.constant 2 : index
    %1180 = vector.load %arg4[%c2_224, %c2_225, %c2_226] : memref<4x34x34xf32, #tpu.memory_space<vmem>>, vector<1x32x32xf32>
    %1181 = vector.shape_cast %1180 : vector<1x32x32xf32> to vector<32x32xf32>
    %c254 = arith.constant 254 : index
    %1182 = memref.load %arg1[%c254] : memref<274xf32, #tpu.memory_space<smem>>
    %1183 = vector.broadcast %1182 : f32 to vector<32x32xf32>
    %1184 = arith.mulf %1181, %1183 : vector<32x32xf32>
    %1185 = arith.addf %1167, %1184 : vector<32x32xf32>
    %c255 = arith.constant 255 : index
    %1186 = memref.load %arg1[%c255] : memref<274xf32, #tpu.memory_space<smem>>
    %1187 = vector.broadcast %1186 : f32 to vector<32x32xf32>
    %1188 = arith.mulf %1181, %1187 : vector<32x32xf32>
    %1189 = arith.addf %1171, %1188 : vector<32x32xf32>
    %c256 = arith.constant 256 : index
    %1190 = memref.load %arg1[%c256] : memref<274xf32, #tpu.memory_space<smem>>
    %1191 = vector.broadcast %1190 : f32 to vector<32x32xf32>
    %1192 = arith.mulf %1181, %1191 : vector<32x32xf32>
    %1193 = arith.addf %1175, %1192 : vector<32x32xf32>
    %c257 = arith.constant 257 : index
    %1194 = memref.load %arg1[%c257] : memref<274xf32, #tpu.memory_space<smem>>
    %1195 = vector.broadcast %1194 : f32 to vector<32x32xf32>
    %1196 = arith.mulf %1181, %1195 : vector<32x32xf32>
    %1197 = arith.addf %1179, %1196 : vector<32x32xf32>
    %c3_227 = arith.constant 3 : index
    %c0_228 = arith.constant 0 : index
    %c0_229 = arith.constant 0 : index
    %1198 = vector.load %arg4[%c3_227, %c0_228, %c0_229] : memref<4x34x34xf32, #tpu.memory_space<vmem>>, vector<1x32x32xf32>
    %1199 = vector.shape_cast %1198 : vector<1x32x32xf32> to vector<32x32xf32>
    %c130 = arith.constant 130 : index
    %1200 = memref.load %arg1[%c130] : memref<274xf32, #tpu.memory_space<smem>>
    %1201 = vector.broadcast %1200 : f32 to vector<32x32xf32>
    %1202 = arith.mulf %1199, %1201 : vector<32x32xf32>
    %1203 = arith.addf %1185, %1202 : vector<32x32xf32>
    %c131 = arith.constant 131 : index
    %1204 = memref.load %arg1[%c131] : memref<274xf32, #tpu.memory_space<smem>>
    %1205 = vector.broadcast %1204 : f32 to vector<32x32xf32>
    %1206 = arith.mulf %1199, %1205 : vector<32x32xf32>
    %1207 = arith.addf %1189, %1206 : vector<32x32xf32>
    %c132 = arith.constant 132 : index
    %1208 = memref.load %arg1[%c132] : memref<274xf32, #tpu.memory_space<smem>>
    %1209 = vector.broadcast %1208 : f32 to vector<32x32xf32>
    %1210 = arith.mulf %1199, %1209 : vector<32x32xf32>
    %1211 = arith.addf %1193, %1210 : vector<32x32xf32>
    %c133 = arith.constant 133 : index
    %1212 = memref.load %arg1[%c133] : memref<274xf32, #tpu.memory_space<smem>>
    %1213 = vector.broadcast %1212 : f32 to vector<32x32xf32>
    %1214 = arith.mulf %1199, %1213 : vector<32x32xf32>
    %1215 = arith.addf %1197, %1214 : vector<32x32xf32>
    %c3_230 = arith.constant 3 : index
    %c0_231 = arith.constant 0 : index
    %c1_232 = arith.constant 1 : index
    %1216 = vector.load %arg4[%c3_230, %c0_231, %c1_232] : memref<4x34x34xf32, #tpu.memory_space<vmem>>, vector<1x32x32xf32>
    %1217 = vector.shape_cast %1216 : vector<1x32x32xf32> to vector<32x32xf32>
    %c146 = arith.constant 146 : index
    %1218 = memref.load %arg1[%c146] : memref<274xf32, #tpu.memory_space<smem>>
    %1219 = vector.broadcast %1218 : f32 to vector<32x32xf32>
    %1220 = arith.mulf %1217, %1219 : vector<32x32xf32>
    %1221 = arith.addf %1203, %1220 : vector<32x32xf32>
    %c147 = arith.constant 147 : index
    %1222 = memref.load %arg1[%c147] : memref<274xf32, #tpu.memory_space<smem>>
    %1223 = vector.broadcast %1222 : f32 to vector<32x32xf32>
    %1224 = arith.mulf %1217, %1223 : vector<32x32xf32>
    %1225 = arith.addf %1207, %1224 : vector<32x32xf32>
    %c148 = arith.constant 148 : index
    %1226 = memref.load %arg1[%c148] : memref<274xf32, #tpu.memory_space<smem>>
    %1227 = vector.broadcast %1226 : f32 to vector<32x32xf32>
    %1228 = arith.mulf %1217, %1227 : vector<32x32xf32>
    %1229 = arith.addf %1211, %1228 : vector<32x32xf32>
    %c149 = arith.constant 149 : index
    %1230 = memref.load %arg1[%c149] : memref<274xf32, #tpu.memory_space<smem>>
    %1231 = vector.broadcast %1230 : f32 to vector<32x32xf32>
    %1232 = arith.mulf %1217, %1231 : vector<32x32xf32>
    %1233 = arith.addf %1215, %1232 : vector<32x32xf32>
    %c3_233 = arith.constant 3 : index
    %c0_234 = arith.constant 0 : index
    %c2_235 = arith.constant 2 : index
    %1234 = vector.load %arg4[%c3_233, %c0_234, %c2_235] : memref<4x34x34xf32, #tpu.memory_space<vmem>>, vector<1x32x32xf32>
    %1235 = vector.shape_cast %1234 : vector<1x32x32xf32> to vector<32x32xf32>
    %c162 = arith.constant 162 : index
    %1236 = memref.load %arg1[%c162] : memref<274xf32, #tpu.memory_space<smem>>
    %1237 = vector.broadcast %1236 : f32 to vector<32x32xf32>
    %1238 = arith.mulf %1235, %1237 : vector<32x32xf32>
    %1239 = arith.addf %1221, %1238 : vector<32x32xf32>
    %c163 = arith.constant 163 : index
    %1240 = memref.load %arg1[%c163] : memref<274xf32, #tpu.memory_space<smem>>
    %1241 = vector.broadcast %1240 : f32 to vector<32x32xf32>
    %1242 = arith.mulf %1235, %1241 : vector<32x32xf32>
    %1243 = arith.addf %1225, %1242 : vector<32x32xf32>
    %c164 = arith.constant 164 : index
    %1244 = memref.load %arg1[%c164] : memref<274xf32, #tpu.memory_space<smem>>
    %1245 = vector.broadcast %1244 : f32 to vector<32x32xf32>
    %1246 = arith.mulf %1235, %1245 : vector<32x32xf32>
    %1247 = arith.addf %1229, %1246 : vector<32x32xf32>
    %c165 = arith.constant 165 : index
    %1248 = memref.load %arg1[%c165] : memref<274xf32, #tpu.memory_space<smem>>
    %1249 = vector.broadcast %1248 : f32 to vector<32x32xf32>
    %1250 = arith.mulf %1235, %1249 : vector<32x32xf32>
    %1251 = arith.addf %1233, %1250 : vector<32x32xf32>
    %c3_236 = arith.constant 3 : index
    %c1_237 = arith.constant 1 : index
    %c0_238 = arith.constant 0 : index
    %1252 = vector.load %arg4[%c3_236, %c1_237, %c0_238] : memref<4x34x34xf32, #tpu.memory_space<vmem>>, vector<1x32x32xf32>
    %1253 = vector.shape_cast %1252 : vector<1x32x32xf32> to vector<32x32xf32>
    %c178 = arith.constant 178 : index
    %1254 = memref.load %arg1[%c178] : memref<274xf32, #tpu.memory_space<smem>>
    %1255 = vector.broadcast %1254 : f32 to vector<32x32xf32>
    %1256 = arith.mulf %1253, %1255 : vector<32x32xf32>
    %1257 = arith.addf %1239, %1256 : vector<32x32xf32>
    %c179 = arith.constant 179 : index
    %1258 = memref.load %arg1[%c179] : memref<274xf32, #tpu.memory_space<smem>>
    %1259 = vector.broadcast %1258 : f32 to vector<32x32xf32>
    %1260 = arith.mulf %1253, %1259 : vector<32x32xf32>
    %1261 = arith.addf %1243, %1260 : vector<32x32xf32>
    %c180 = arith.constant 180 : index
    %1262 = memref.load %arg1[%c180] : memref<274xf32, #tpu.memory_space<smem>>
    %1263 = vector.broadcast %1262 : f32 to vector<32x32xf32>
    %1264 = arith.mulf %1253, %1263 : vector<32x32xf32>
    %1265 = arith.addf %1247, %1264 : vector<32x32xf32>
    %c181 = arith.constant 181 : index
    %1266 = memref.load %arg1[%c181] : memref<274xf32, #tpu.memory_space<smem>>
    %1267 = vector.broadcast %1266 : f32 to vector<32x32xf32>
    %1268 = arith.mulf %1253, %1267 : vector<32x32xf32>
    %1269 = arith.addf %1251, %1268 : vector<32x32xf32>
    %c3_239 = arith.constant 3 : index
    %c1_240 = arith.constant 1 : index
    %c1_241 = arith.constant 1 : index
    %1270 = vector.load %arg4[%c3_239, %c1_240, %c1_241] : memref<4x34x34xf32, #tpu.memory_space<vmem>>, vector<1x32x32xf32>
    %1271 = vector.shape_cast %1270 : vector<1x32x32xf32> to vector<32x32xf32>
    %c194 = arith.constant 194 : index
    %1272 = memref.load %arg1[%c194] : memref<274xf32, #tpu.memory_space<smem>>
    %1273 = vector.broadcast %1272 : f32 to vector<32x32xf32>
    %1274 = arith.mulf %1271, %1273 : vector<32x32xf32>
    %1275 = arith.addf %1257, %1274 : vector<32x32xf32>
    %c195 = arith.constant 195 : index
    %1276 = memref.load %arg1[%c195] : memref<274xf32, #tpu.memory_space<smem>>
    %1277 = vector.broadcast %1276 : f32 to vector<32x32xf32>
    %1278 = arith.mulf %1271, %1277 : vector<32x32xf32>
    %1279 = arith.addf %1261, %1278 : vector<32x32xf32>
    %c196 = arith.constant 196 : index
    %1280 = memref.load %arg1[%c196] : memref<274xf32, #tpu.memory_space<smem>>
    %1281 = vector.broadcast %1280 : f32 to vector<32x32xf32>
    %1282 = arith.mulf %1271, %1281 : vector<32x32xf32>
    %1283 = arith.addf %1265, %1282 : vector<32x32xf32>
    %c197 = arith.constant 197 : index
    %1284 = memref.load %arg1[%c197] : memref<274xf32, #tpu.memory_space<smem>>
    %1285 = vector.broadcast %1284 : f32 to vector<32x32xf32>
    %1286 = arith.mulf %1271, %1285 : vector<32x32xf32>
    %1287 = arith.addf %1269, %1286 : vector<32x32xf32>
    %c3_242 = arith.constant 3 : index
    %c1_243 = arith.constant 1 : index
    %c2_244 = arith.constant 2 : index
    %1288 = vector.load %arg4[%c3_242, %c1_243, %c2_244] : memref<4x34x34xf32, #tpu.memory_space<vmem>>, vector<1x32x32xf32>
    %1289 = vector.shape_cast %1288 : vector<1x32x32xf32> to vector<32x32xf32>
    %c210 = arith.constant 210 : index
    %1290 = memref.load %arg1[%c210] : memref<274xf32, #tpu.memory_space<smem>>
    %1291 = vector.broadcast %1290 : f32 to vector<32x32xf32>
    %1292 = arith.mulf %1289, %1291 : vector<32x32xf32>
    %1293 = arith.addf %1275, %1292 : vector<32x32xf32>
    %c211 = arith.constant 211 : index
    %1294 = memref.load %arg1[%c211] : memref<274xf32, #tpu.memory_space<smem>>
    %1295 = vector.broadcast %1294 : f32 to vector<32x32xf32>
    %1296 = arith.mulf %1289, %1295 : vector<32x32xf32>
    %1297 = arith.addf %1279, %1296 : vector<32x32xf32>
    %c212 = arith.constant 212 : index
    %1298 = memref.load %arg1[%c212] : memref<274xf32, #tpu.memory_space<smem>>
    %1299 = vector.broadcast %1298 : f32 to vector<32x32xf32>
    %1300 = arith.mulf %1289, %1299 : vector<32x32xf32>
    %1301 = arith.addf %1283, %1300 : vector<32x32xf32>
    %c213 = arith.constant 213 : index
    %1302 = memref.load %arg1[%c213] : memref<274xf32, #tpu.memory_space<smem>>
    %1303 = vector.broadcast %1302 : f32 to vector<32x32xf32>
    %1304 = arith.mulf %1289, %1303 : vector<32x32xf32>
    %1305 = arith.addf %1287, %1304 : vector<32x32xf32>
    %c3_245 = arith.constant 3 : index
    %c2_246 = arith.constant 2 : index
    %c0_247 = arith.constant 0 : index
    %1306 = vector.load %arg4[%c3_245, %c2_246, %c0_247] : memref<4x34x34xf32, #tpu.memory_space<vmem>>, vector<1x32x32xf32>
    %1307 = vector.shape_cast %1306 : vector<1x32x32xf32> to vector<32x32xf32>
    %c226 = arith.constant 226 : index
    %1308 = memref.load %arg1[%c226] : memref<274xf32, #tpu.memory_space<smem>>
    %1309 = vector.broadcast %1308 : f32 to vector<32x32xf32>
    %1310 = arith.mulf %1307, %1309 : vector<32x32xf32>
    %1311 = arith.addf %1293, %1310 : vector<32x32xf32>
    %c227 = arith.constant 227 : index
    %1312 = memref.load %arg1[%c227] : memref<274xf32, #tpu.memory_space<smem>>
    %1313 = vector.broadcast %1312 : f32 to vector<32x32xf32>
    %1314 = arith.mulf %1307, %1313 : vector<32x32xf32>
    %1315 = arith.addf %1297, %1314 : vector<32x32xf32>
    %c228 = arith.constant 228 : index
    %1316 = memref.load %arg1[%c228] : memref<274xf32, #tpu.memory_space<smem>>
    %1317 = vector.broadcast %1316 : f32 to vector<32x32xf32>
    %1318 = arith.mulf %1307, %1317 : vector<32x32xf32>
    %1319 = arith.addf %1301, %1318 : vector<32x32xf32>
    %c229 = arith.constant 229 : index
    %1320 = memref.load %arg1[%c229] : memref<274xf32, #tpu.memory_space<smem>>
    %1321 = vector.broadcast %1320 : f32 to vector<32x32xf32>
    %1322 = arith.mulf %1307, %1321 : vector<32x32xf32>
    %1323 = arith.addf %1305, %1322 : vector<32x32xf32>
    %c3_248 = arith.constant 3 : index
    %c2_249 = arith.constant 2 : index
    %c1_250 = arith.constant 1 : index
    %1324 = vector.load %arg4[%c3_248, %c2_249, %c1_250] : memref<4x34x34xf32, #tpu.memory_space<vmem>>, vector<1x32x32xf32>
    %1325 = vector.shape_cast %1324 : vector<1x32x32xf32> to vector<32x32xf32>
    %c242 = arith.constant 242 : index
    %1326 = memref.load %arg1[%c242] : memref<274xf32, #tpu.memory_space<smem>>
    %1327 = vector.broadcast %1326 : f32 to vector<32x32xf32>
    %1328 = arith.mulf %1325, %1327 : vector<32x32xf32>
    %1329 = arith.addf %1311, %1328 : vector<32x32xf32>
    %c243 = arith.constant 243 : index
    %1330 = memref.load %arg1[%c243] : memref<274xf32, #tpu.memory_space<smem>>
    %1331 = vector.broadcast %1330 : f32 to vector<32x32xf32>
    %1332 = arith.mulf %1325, %1331 : vector<32x32xf32>
    %1333 = arith.addf %1315, %1332 : vector<32x32xf32>
    %c244 = arith.constant 244 : index
    %1334 = memref.load %arg1[%c244] : memref<274xf32, #tpu.memory_space<smem>>
    %1335 = vector.broadcast %1334 : f32 to vector<32x32xf32>
    %1336 = arith.mulf %1325, %1335 : vector<32x32xf32>
    %1337 = arith.addf %1319, %1336 : vector<32x32xf32>
    %c245 = arith.constant 245 : index
    %1338 = memref.load %arg1[%c245] : memref<274xf32, #tpu.memory_space<smem>>
    %1339 = vector.broadcast %1338 : f32 to vector<32x32xf32>
    %1340 = arith.mulf %1325, %1339 : vector<32x32xf32>
    %1341 = arith.addf %1323, %1340 : vector<32x32xf32>
    %c3_251 = arith.constant 3 : index
    %c2_252 = arith.constant 2 : index
    %c2_253 = arith.constant 2 : index
    %1342 = vector.load %arg4[%c3_251, %c2_252, %c2_253] : memref<4x34x34xf32, #tpu.memory_space<vmem>>, vector<1x32x32xf32>
    %1343 = vector.shape_cast %1342 : vector<1x32x32xf32> to vector<32x32xf32>
    %c258 = arith.constant 258 : index
    %1344 = memref.load %arg1[%c258] : memref<274xf32, #tpu.memory_space<smem>>
    %1345 = vector.broadcast %1344 : f32 to vector<32x32xf32>
    %1346 = arith.mulf %1343, %1345 : vector<32x32xf32>
    %1347 = arith.addf %1329, %1346 : vector<32x32xf32>
    %c259 = arith.constant 259 : index
    %1348 = memref.load %arg1[%c259] : memref<274xf32, #tpu.memory_space<smem>>
    %1349 = vector.broadcast %1348 : f32 to vector<32x32xf32>
    %1350 = arith.mulf %1343, %1349 : vector<32x32xf32>
    %1351 = arith.addf %1333, %1350 : vector<32x32xf32>
    %c260 = arith.constant 260 : index
    %1352 = memref.load %arg1[%c260] : memref<274xf32, #tpu.memory_space<smem>>
    %1353 = vector.broadcast %1352 : f32 to vector<32x32xf32>
    %1354 = arith.mulf %1343, %1353 : vector<32x32xf32>
    %1355 = arith.addf %1337, %1354 : vector<32x32xf32>
    %c261 = arith.constant 261 : index
    %1356 = memref.load %arg1[%c261] : memref<274xf32, #tpu.memory_space<smem>>
    %1357 = vector.broadcast %1356 : f32 to vector<32x32xf32>
    %1358 = arith.mulf %1343, %1357 : vector<32x32xf32>
    %1359 = arith.addf %1341, %1358 : vector<32x32xf32>
    %1360 = vector.shape_cast %1347 : vector<32x32xf32> to vector<1x32x32xf32>
    %cst_254 = arith.constant dense<0.000000e+00> : vector<1xf32>
    %1361 = vector.multi_reduction <add>, %1360, %cst_254 [1, 2] : vector<1x32x32xf32> to vector<1xf32>
    %1362 = vector.shape_cast %1361 : vector<1xf32> to vector<1x1x1xf32>
    %1363 = vector.extract %1362[0, 0, 0] : f32 from vector<1x1x1xf32>
    %1364 = vector.broadcast %1363 : f32 to vector<1x1xf32>
    %1365 = arith.mulf %1347, %1347 : vector<32x32xf32>
    %1366 = vector.shape_cast %1365 : vector<32x32xf32> to vector<1x32x32xf32>
    %cst_255 = arith.constant dense<0.000000e+00> : vector<1xf32>
    %1367 = vector.multi_reduction <add>, %1366, %cst_255 [1, 2] : vector<1x32x32xf32> to vector<1xf32>
    %1368 = vector.shape_cast %1367 : vector<1xf32> to vector<1x1x1xf32>
    %1369 = vector.extract %1368[0, 0, 0] : f32 from vector<1x1x1xf32>
    %1370 = vector.broadcast %1369 : f32 to vector<1x1xf32>
    %cst_256 = arith.constant 9.765625E-4 : f32
    %1371 = vector.broadcast %cst_256 : f32 to vector<1x1xf32>
    %1372 = arith.mulf %1364, %1371 : vector<1x1xf32>
    %cst_257 = arith.constant 9.765625E-4 : f32
    %1373 = vector.broadcast %cst_257 : f32 to vector<1x1xf32>
    %1374 = arith.mulf %1370, %1373 : vector<1x1xf32>
    %1375 = arith.mulf %1372, %1372 : vector<1x1xf32>
    %1376 = arith.subf %1374, %1375 : vector<1x1xf32>
    %c266 = arith.constant 266 : index
    %1377 = memref.load %arg1[%c266] : memref<274xf32, #tpu.memory_space<smem>>
    %cst_258 = arith.constant 9.99999974E-6 : f32
    %1378 = vector.broadcast %cst_258 : f32 to vector<1x1xf32>
    %1379 = arith.addf %1376, %1378 : vector<1x1xf32>
    %1380 = math.rsqrt %1379 : vector<1x1xf32>
    %1381 = vector.broadcast %1377 : f32 to vector<1x1xf32>
    %1382 = arith.mulf %1381, %1380 : vector<1x1xf32>
    %1383 = vector.broadcast %1372 : vector<1x1xf32> to vector<32x32xf32>
    %1384 = arith.subf %1347, %1383 : vector<32x32xf32>
    %1385 = vector.broadcast %1382 : vector<1x1xf32> to vector<32x32xf32>
    %1386 = arith.mulf %1384, %1385 : vector<32x32xf32>
    %c270 = arith.constant 270 : index
    %1387 = memref.load %arg1[%c270] : memref<274xf32, #tpu.memory_space<smem>>
    %1388 = vector.broadcast %1387 : f32 to vector<32x32xf32>
    %1389 = arith.addf %1386, %1388 : vector<32x32xf32>
    %cst_259 = arith.constant 0.000000e+00 : f32
    %1390 = vector.broadcast %cst_259 : f32 to vector<32x32xf32>
    %1391 = arith.cmpf ogt, %1389, %1390 : vector<32x32xf32>
    %cst_260 = arith.constant 1.000000e-01 : f32
    %1392 = vector.broadcast %cst_260 : f32 to vector<32x32xf32>
    %1393 = arith.mulf %1392, %1389 : vector<32x32xf32>
    %1394 = arith.select %1391, %1389, %1393 : vector<32x32xi1>, vector<32x32xf32>
    %1395 = vector.shape_cast %1351 : vector<32x32xf32> to vector<1x32x32xf32>
    %cst_261 = arith.constant dense<0.000000e+00> : vector<1xf32>
    %1396 = vector.multi_reduction <add>, %1395, %cst_261 [1, 2] : vector<1x32x32xf32> to vector<1xf32>
    %1397 = vector.shape_cast %1396 : vector<1xf32> to vector<1x1x1xf32>
    %1398 = vector.extract %1397[0, 0, 0] : f32 from vector<1x1x1xf32>
    %1399 = vector.broadcast %1398 : f32 to vector<1x1xf32>
    %1400 = arith.mulf %1351, %1351 : vector<32x32xf32>
    %1401 = vector.shape_cast %1400 : vector<32x32xf32> to vector<1x32x32xf32>
    %cst_262 = arith.constant dense<0.000000e+00> : vector<1xf32>
    %1402 = vector.multi_reduction <add>, %1401, %cst_262 [1, 2] : vector<1x32x32xf32> to vector<1xf32>
    %1403 = vector.shape_cast %1402 : vector<1xf32> to vector<1x1x1xf32>
    %1404 = vector.extract %1403[0, 0, 0] : f32 from vector<1x1x1xf32>
    %1405 = vector.broadcast %1404 : f32 to vector<1x1xf32>
    %cst_263 = arith.constant 9.765625E-4 : f32
    %1406 = vector.broadcast %cst_263 : f32 to vector<1x1xf32>
    %1407 = arith.mulf %1399, %1406 : vector<1x1xf32>
    %cst_264 = arith.constant 9.765625E-4 : f32
    %1408 = vector.broadcast %cst_264 : f32 to vector<1x1xf32>
    %1409 = arith.mulf %1405, %1408 : vector<1x1xf32>
    %1410 = arith.mulf %1407, %1407 : vector<1x1xf32>
    %1411 = arith.subf %1409, %1410 : vector<1x1xf32>
    %c267 = arith.constant 267 : index
    %1412 = memref.load %arg1[%c267] : memref<274xf32, #tpu.memory_space<smem>>
    %cst_265 = arith.constant 9.99999974E-6 : f32
    %1413 = vector.broadcast %cst_265 : f32 to vector<1x1xf32>
    %1414 = arith.addf %1411, %1413 : vector<1x1xf32>
    %1415 = math.rsqrt %1414 : vector<1x1xf32>
    %1416 = vector.broadcast %1412 : f32 to vector<1x1xf32>
    %1417 = arith.mulf %1416, %1415 : vector<1x1xf32>
    %1418 = vector.broadcast %1407 : vector<1x1xf32> to vector<32x32xf32>
    %1419 = arith.subf %1351, %1418 : vector<32x32xf32>
    %1420 = vector.broadcast %1417 : vector<1x1xf32> to vector<32x32xf32>
    %1421 = arith.mulf %1419, %1420 : vector<32x32xf32>
    %c271 = arith.constant 271 : index
    %1422 = memref.load %arg1[%c271] : memref<274xf32, #tpu.memory_space<smem>>
    %1423 = vector.broadcast %1422 : f32 to vector<32x32xf32>
    %1424 = arith.addf %1421, %1423 : vector<32x32xf32>
    %cst_266 = arith.constant 0.000000e+00 : f32
    %1425 = vector.broadcast %cst_266 : f32 to vector<32x32xf32>
    %1426 = arith.cmpf ogt, %1424, %1425 : vector<32x32xf32>
    %cst_267 = arith.constant 1.000000e-01 : f32
    %1427 = vector.broadcast %cst_267 : f32 to vector<32x32xf32>
    %1428 = arith.mulf %1427, %1424 : vector<32x32xf32>
    %1429 = arith.select %1426, %1424, %1428 : vector<32x32xi1>, vector<32x32xf32>
    %1430 = vector.shape_cast %1355 : vector<32x32xf32> to vector<1x32x32xf32>
    %cst_268 = arith.constant dense<0.000000e+00> : vector<1xf32>
    %1431 = vector.multi_reduction <add>, %1430, %cst_268 [1, 2] : vector<1x32x32xf32> to vector<1xf32>
    %1432 = vector.shape_cast %1431 : vector<1xf32> to vector<1x1x1xf32>
    %1433 = vector.extract %1432[0, 0, 0] : f32 from vector<1x1x1xf32>
    %1434 = vector.broadcast %1433 : f32 to vector<1x1xf32>
    %1435 = arith.mulf %1355, %1355 : vector<32x32xf32>
    %1436 = vector.shape_cast %1435 : vector<32x32xf32> to vector<1x32x32xf32>
    %cst_269 = arith.constant dense<0.000000e+00> : vector<1xf32>
    %1437 = vector.multi_reduction <add>, %1436, %cst_269 [1, 2] : vector<1x32x32xf32> to vector<1xf32>
    %1438 = vector.shape_cast %1437 : vector<1xf32> to vector<1x1x1xf32>
    %1439 = vector.extract %1438[0, 0, 0] : f32 from vector<1x1x1xf32>
    %1440 = vector.broadcast %1439 : f32 to vector<1x1xf32>
    %cst_270 = arith.constant 9.765625E-4 : f32
    %1441 = vector.broadcast %cst_270 : f32 to vector<1x1xf32>
    %1442 = arith.mulf %1434, %1441 : vector<1x1xf32>
    %cst_271 = arith.constant 9.765625E-4 : f32
    %1443 = vector.broadcast %cst_271 : f32 to vector<1x1xf32>
    %1444 = arith.mulf %1440, %1443 : vector<1x1xf32>
    %1445 = arith.mulf %1442, %1442 : vector<1x1xf32>
    %1446 = arith.subf %1444, %1445 : vector<1x1xf32>
    %c268 = arith.constant 268 : index
    %1447 = memref.load %arg1[%c268] : memref<274xf32, #tpu.memory_space<smem>>
    %cst_272 = arith.constant 9.99999974E-6 : f32
    %1448 = vector.broadcast %cst_272 : f32 to vector<1x1xf32>
    %1449 = arith.addf %1446, %1448 : vector<1x1xf32>
    %1450 = math.rsqrt %1449 : vector<1x1xf32>
    %1451 = vector.broadcast %1447 : f32 to vector<1x1xf32>
    %1452 = arith.mulf %1451, %1450 : vector<1x1xf32>
    %1453 = vector.broadcast %1442 : vector<1x1xf32> to vector<32x32xf32>
    %1454 = arith.subf %1355, %1453 : vector<32x32xf32>
    %1455 = vector.broadcast %1452 : vector<1x1xf32> to vector<32x32xf32>
    %1456 = arith.mulf %1454, %1455 : vector<32x32xf32>
    %c272 = arith.constant 272 : index
    %1457 = memref.load %arg1[%c272] : memref<274xf32, #tpu.memory_space<smem>>
    %1458 = vector.broadcast %1457 : f32 to vector<32x32xf32>
    %1459 = arith.addf %1456, %1458 : vector<32x32xf32>
    %cst_273 = arith.constant 0.000000e+00 : f32
    %1460 = vector.broadcast %cst_273 : f32 to vector<32x32xf32>
    %1461 = arith.cmpf ogt, %1459, %1460 : vector<32x32xf32>
    %cst_274 = arith.constant 1.000000e-01 : f32
    %1462 = vector.broadcast %cst_274 : f32 to vector<32x32xf32>
    %1463 = arith.mulf %1462, %1459 : vector<32x32xf32>
    %1464 = arith.select %1461, %1459, %1463 : vector<32x32xi1>, vector<32x32xf32>
    %1465 = vector.shape_cast %1359 : vector<32x32xf32> to vector<1x32x32xf32>
    %cst_275 = arith.constant dense<0.000000e+00> : vector<1xf32>
    %1466 = vector.multi_reduction <add>, %1465, %cst_275 [1, 2] : vector<1x32x32xf32> to vector<1xf32>
    %1467 = vector.shape_cast %1466 : vector<1xf32> to vector<1x1x1xf32>
    %1468 = vector.extract %1467[0, 0, 0] : f32 from vector<1x1x1xf32>
    %1469 = vector.broadcast %1468 : f32 to vector<1x1xf32>
    %1470 = arith.mulf %1359, %1359 : vector<32x32xf32>
    %1471 = vector.shape_cast %1470 : vector<32x32xf32> to vector<1x32x32xf32>
    %cst_276 = arith.constant dense<0.000000e+00> : vector<1xf32>
    %1472 = vector.multi_reduction <add>, %1471, %cst_276 [1, 2] : vector<1x32x32xf32> to vector<1xf32>
    %1473 = vector.shape_cast %1472 : vector<1xf32> to vector<1x1x1xf32>
    %1474 = vector.extract %1473[0, 0, 0] : f32 from vector<1x1x1xf32>
    %1475 = vector.broadcast %1474 : f32 to vector<1x1xf32>
    %cst_277 = arith.constant 9.765625E-4 : f32
    %1476 = vector.broadcast %cst_277 : f32 to vector<1x1xf32>
    %1477 = arith.mulf %1469, %1476 : vector<1x1xf32>
    %cst_278 = arith.constant 9.765625E-4 : f32
    %1478 = vector.broadcast %cst_278 : f32 to vector<1x1xf32>
    %1479 = arith.mulf %1475, %1478 : vector<1x1xf32>
    %1480 = arith.mulf %1477, %1477 : vector<1x1xf32>
    %1481 = arith.subf %1479, %1480 : vector<1x1xf32>
    %c269 = arith.constant 269 : index
    %1482 = memref.load %arg1[%c269] : memref<274xf32, #tpu.memory_space<smem>>
    %cst_279 = arith.constant 9.99999974E-6 : f32
    %1483 = vector.broadcast %cst_279 : f32 to vector<1x1xf32>
    %1484 = arith.addf %1481, %1483 : vector<1x1xf32>
    %1485 = math.rsqrt %1484 : vector<1x1xf32>
    %1486 = vector.broadcast %1482 : f32 to vector<1x1xf32>
    %1487 = arith.mulf %1486, %1485 : vector<1x1xf32>
    %1488 = vector.broadcast %1477 : vector<1x1xf32> to vector<32x32xf32>
    %1489 = arith.subf %1359, %1488 : vector<32x32xf32>
    %1490 = vector.broadcast %1487 : vector<1x1xf32> to vector<32x32xf32>
    %1491 = arith.mulf %1489, %1490 : vector<32x32xf32>
    %c273 = arith.constant 273 : index
    %1492 = memref.load %arg1[%c273] : memref<274xf32, #tpu.memory_space<smem>>
    %1493 = vector.broadcast %1492 : f32 to vector<32x32xf32>
    %1494 = arith.addf %1491, %1493 : vector<32x32xf32>
    %cst_280 = arith.constant 0.000000e+00 : f32
    %1495 = vector.broadcast %cst_280 : f32 to vector<32x32xf32>
    %1496 = arith.cmpf ogt, %1494, %1495 : vector<32x32xf32>
    %cst_281 = arith.constant 1.000000e-01 : f32
    %1497 = vector.broadcast %cst_281 : f32 to vector<32x32xf32>
    %1498 = arith.mulf %1497, %1494 : vector<32x32xf32>
    %1499 = arith.select %1496, %1494, %1498 : vector<32x32xi1>, vector<32x32xf32>
    %1500 = tpu.iota {dimensions = array<i32: 0>} : vector<32x128xi32>
    %1501 = tpu.iota {dimensions = array<i32: 1>} : vector<32x128xi32>
    %cst_282 = arith.constant 0.000000e+00 : f32
    %1502 = vector.broadcast %cst_282 : f32 to vector<32x128xf32>
    %c4_i32 = arith.constant 4 : i32
    %1503 = vector.broadcast %c4_i32 : i32 to vector<32x128xi32>
    %1504 = arith.muli %1503, %1500 : vector<32x128xi32>
    %c0_i32_283 = arith.constant 0 : i32
    %1505 = vector.broadcast %c0_i32_283 : i32 to vector<32x128xi32>
    %1506 = arith.addi %1504, %1505 : vector<32x128xi32>
    %1507 = arith.cmpi eq, %1501, %1506 : vector<32x128xi32>
    %1508 = arith.extui %1507 : vector<32x128xi1> to vector<32x128xi32>
    %1509 = arith.sitofp %1508 : vector<32x128xi32> to vector<32x128xf32>
    %cst_284 = arith.constant dense<0.000000e+00> : vector<32x128xf32>
    %1510 = tpu.matmul %1394, %1509, %cst_284 {dimension_numbers = #tpu.dot_dimension_numbers<[1], [0], [0], [1], [0, 0, 1, 1], [], []>} : vector<32x32xf32>, vector<32x128xf32>, vector<32x128xf32> -> vector<32x128xf32>
    %1511 = arith.addf %1502, %1510 : vector<32x128xf32>
    %c4_i32_285 = arith.constant 4 : i32
    %1512 = vector.broadcast %c4_i32_285 : i32 to vector<32x128xi32>
    %1513 = arith.muli %1512, %1500 : vector<32x128xi32>
    %c1_i32_286 = arith.constant 1 : i32
    %1514 = vector.broadcast %c1_i32_286 : i32 to vector<32x128xi32>
    %1515 = arith.addi %1513, %1514 : vector<32x128xi32>
    %1516 = arith.cmpi eq, %1501, %1515 : vector<32x128xi32>
    %1517 = arith.extui %1516 : vector<32x128xi1> to vector<32x128xi32>
    %1518 = arith.sitofp %1517 : vector<32x128xi32> to vector<32x128xf32>
    %cst_287 = arith.constant dense<0.000000e+00> : vector<32x128xf32>
    %1519 = tpu.matmul %1429, %1518, %cst_287 {dimension_numbers = #tpu.dot_dimension_numbers<[1], [0], [0], [1], [0, 0, 1, 1], [], []>} : vector<32x32xf32>, vector<32x128xf32>, vector<32x128xf32> -> vector<32x128xf32>
    %1520 = arith.addf %1511, %1519 : vector<32x128xf32>
    %c4_i32_288 = arith.constant 4 : i32
    %1521 = vector.broadcast %c4_i32_288 : i32 to vector<32x128xi32>
    %1522 = arith.muli %1521, %1500 : vector<32x128xi32>
    %c2_i32_289 = arith.constant 2 : i32
    %1523 = vector.broadcast %c2_i32_289 : i32 to vector<32x128xi32>
    %1524 = arith.addi %1522, %1523 : vector<32x128xi32>
    %1525 = arith.cmpi eq, %1501, %1524 : vector<32x128xi32>
    %1526 = arith.extui %1525 : vector<32x128xi1> to vector<32x128xi32>
    %1527 = arith.sitofp %1526 : vector<32x128xi32> to vector<32x128xf32>
    %cst_290 = arith.constant dense<0.000000e+00> : vector<32x128xf32>
    %1528 = tpu.matmul %1464, %1527, %cst_290 {dimension_numbers = #tpu.dot_dimension_numbers<[1], [0], [0], [1], [0, 0, 1, 1], [], []>} : vector<32x32xf32>, vector<32x128xf32>, vector<32x128xf32> -> vector<32x128xf32>
    %1529 = arith.addf %1520, %1528 : vector<32x128xf32>
    %c4_i32_291 = arith.constant 4 : i32
    %1530 = vector.broadcast %c4_i32_291 : i32 to vector<32x128xi32>
    %1531 = arith.muli %1530, %1500 : vector<32x128xi32>
    %c3_i32 = arith.constant 3 : i32
    %1532 = vector.broadcast %c3_i32 : i32 to vector<32x128xi32>
    %1533 = arith.addi %1531, %1532 : vector<32x128xi32>
    %1534 = arith.cmpi eq, %1501, %1533 : vector<32x128xi32>
    %1535 = arith.extui %1534 : vector<32x128xi1> to vector<32x128xi32>
    %1536 = arith.sitofp %1535 : vector<32x128xi32> to vector<32x128xf32>
    %cst_292 = arith.constant dense<0.000000e+00> : vector<32x128xf32>
    %1537 = tpu.matmul %1499, %1536, %cst_292 {dimension_numbers = #tpu.dot_dimension_numbers<[1], [0], [0], [1], [0, 0, 1, 1], [], []>} : vector<32x32xf32>, vector<32x128xf32>, vector<32x128xf32> -> vector<32x128xf32>
    %1538 = arith.addf %1529, %1537 : vector<32x128xf32>
    %c0_293 = arith.constant 0 : index
    %c0_294 = arith.constant 0 : index
    %c0_295 = arith.constant 0 : index
    %1539 = vector.load %arg3[%c0_293, %c0_294, %c0_295] : memref<1x32x128xf32, #tpu.memory_space<vmem>>, vector<1x32x128xf32>
    %1540 = vector.shape_cast %1539 : vector<1x32x128xf32> to vector<32x128xf32>
    %1541 = vector.shape_cast %1538 : vector<32x128xf32> to vector<1x32x128xf32>
    tpu.vector_store %arg3[%c0_293, %c0_294, %c0_295], %1541 {strides = array<i32>} : memref<1x32x128xf32, #tpu.memory_space<vmem>>, vector<1x32x128xf32>,
    return
  }
  func.func @transform_0(%arg0: i32) -> i32 {
    %c0_i32 = arith.constant 0 : i32
    %c0_i32_0 = arith.constant 0 : i32
    return %c0_i32 : i32
  }
  func.func @transform_1(%arg0: i32) -> (i32, i32, i32, i32) {
    %c0_i32 = arith.constant 0 : i32
    %c0_i32_0 = arith.constant 0 : i32
    %c0_i32_1 = arith.constant 0 : i32
    %c0_i32_2 = arith.constant 0 : i32
    return %arg0, %c0_i32, %c0_i32_0, %c0_i32_1 : i32, i32, i32, i32
  }
  func.func @transform_2(%arg0: i32) -> (i32, i32, i32) {
    %c0_i32 = arith.constant 0 : i32
    %c0_i32_0 = arith.constant 0 : i32
    %c0_i32_1 = arith.constant 0 : i32
    return %arg0, %c0_i32, %c0_i32_0 : i32, i32, i32
  }
}

</mosaic_0001>

<llo_original>
// kernel: tpu_custom_call.1
$region0: #{tpu_custom_call.1}
  #allocation0 [shape = 'u32[]', space=smem, size = 0x4, offset = 0x4, fixed_abs, tag = 'smem constant byte address 0x4 - core index']
  #allocation1 [shape = 'u32[144,128]{1,0:T(1,128)}', space=vmem, size = 0x12000, scoped, tag = 'internal scratch']
  #allocation2 [shape = 'f32[4,34,34]{2,1,0:T(8,128)}', space=vmem, size = 0x14000, scoped, tag = 'scratch operand']
  %s0 = inlined_call_operand.hbm [shape: f32[274], index: 0, kind: input, shape index: {}]
  %s1 = inlined_call_operand.hbm [shape: f32[2,4,16,16], index: 1, kind: input, shape index: {}]
  %s2 = inlined_call_operand.hbm [shape: f32[2,32,128], index: 2, kind: output, shape index: {}]
  %s3 = sld [smem:[#allocation0]]
  $region49: #{tpu_custom_call.1} parent=0
    _
  %s5 = ssub.s32 1, %s3
  %s6 = scalar_select 0, %s5, %s3
  $region1: #{tpu_custom_call.1} parent=0
    #allocation3 [shape = 'u8[1536]{0}', space=smem, size = 0x600, scoped, tag = 'input window, operand 0, single buffered']
    #allocation4 [shape = 's32[2]{0}', space=sflag, size = 0x8, scoped, tag = 'scoped memory for tpu_custom_call.1']
    #allocation5 [shape = 's32[2]{0}', space=sflag, size = 0x8, scoped, tag = 'scoped memory for tpu_custom_call.1']
    #allocation6 [shape = 's32[2]{0}', space=sflag, size = 0x8, scoped, tag = 'scoped memory for tpu_custom_call.1']
    #allocation7 [shape = 'u8[65536]{0}', space=vmem, size = 0x10000, scoped, tag = 'input window, operand 1']
    #allocation8 [shape = 'u8[32768]{0}', space=vmem, size = 0x8000, scoped, tag = 'output window, operand 0']
    %7 = vsyncpa [#allocation6], 0
    %8 = vsyncpa [#allocation4], 0
    %s9 = scalar_lea.sflag [#allocation4], 1
    %10 = vsyncpa %s9, 0
    %11 = vsyncpa [#allocation5], 0
    %s12 = scalar_lea.sflag [#allocation5], 1
    %13 = vsyncpa %s12, 0
    loop: start=0, step=1, limit=4
    $region2: #{tpu_custom_call.1} parent=1 // loop_pre_header
      _
    $region3: #{tpu_custom_call.1} parent=1 // loop_header
      %s15 = sphi 0, %s19
      %p16 = scmp.ge.s32.totalorder %s15, 4
      %s23 = sphi 0, %s23
      %s25 = sphi 0, %s23
      %s26 = sphi 0, %s25
      %s40 = sphi 0, %s26
      %s46 = sphi 0, %s48
      %s49 = sphi 0, %s46
      %s50 = sphi 0, %s49
      %s66 = sphi 0, %s50
      %s72 = sphi 0, %s74
      %s75 = sphi 0, %s72
      %s76 = sphi 0, %s75
      %s92 = sphi 0, %s76
    $region4: #{tpu_custom_call.1} parent=1 // loop_header_branch
      %18 = sbr.rel (%p16) target = $region8
    $region5: #{tpu_custom_call.1} parent=1 // loop_body
      %s20 = ssub.s32 %s15, 1
      %s21 = ssub.s32 %s15, 2
      %s22 = sadd.s32 %s15, 1
      %s24 = sadd.s32 %s23, 1
      %p27 = scmp.eq.s32.totalorder %s15, 1
      %p28 = scmp.ne.s32.totalorder %s23, %s25
      %p29 = scmp.eq.s32.totalorder %s15, 0
      %p30 = por %p28, %p29
      %p31 = scmp.ne.s32.totalorder %s23, %s25
      %p32 = scmp.eq.s32.totalorder %s20, 1
      %p33 = por %p31, %p32
      %p34 = scmp.ne.s32.totalorder %s25, %s26
      %p35 = scmp.eq.s32.totalorder %s20, 0
      %p36 = por %p34, %p35
      %p37 = scmp.ne.s32.totalorder %s25, %s26
      %p38 = scmp.eq.s32.totalorder %s21, 1
      %p39 = por %p37, %p38
      %p41 = scmp.ne.s32.totalorder %s26, %s40
      %p42 = scmp.eq.s32.totalorder %s21, 0
      %p43 = por %p41, %p42
      %s44 = ssub.s32 %s15, %s22
      %p45 = scmp.eq.s32.totalorder %s44, 0
      %s47 = sadd.s32 %s46, 1
      %s48 = scalar_select %p45, %s46, %s47
      %p51 = pneg %p45
      %p52 = scmp.eq.s32.totalorder %s15, 1
      %p53 = por %p51, %p52
      %p54 = scmp.ne.s32.totalorder %s46, %s49
      %p55 = scmp.eq.s32.totalorder %s15, 0
      %p56 = por %p54, %p55
      %p57 = scmp.ne.s32.totalorder %s46, %s49
      %p58 = scmp.eq.s32.totalorder %s20, 1
      %p59 = por %p57, %p58
      %p60 = scmp.ne.s32.totalorder %s49, %s50
      %p61 = scmp.eq.s32.totalorder %s20, 0
      %p62 = por %p60, %p61
      %p63 = scmp.ne.s32.totalorder %s49, %s50
      %p64 = scmp.eq.s32.totalorder %s21, 1
      %p65 = por %p63, %p64
      %p67 = scmp.ne.s32.totalorder %s50, %s66
      %p68 = scmp.eq.s32.totalorder %s21, 0
      %p69 = por %p67, %p68
      %s70 = ssub.s32 %s15, %s22
      %p71 = scmp.eq.s32.totalorder %s70, 0
      %s73 = sadd.s32 %s72, 1
      %s74 = scalar_select %p71, %s72, %s73
      %p77 = pneg %p71
      %p78 = scmp.eq.s32.totalorder %s15, 1
      %p79 = por %p77, %p78
      %p80 = scmp.ne.s32.totalorder %s72, %s75
      %p81 = scmp.eq.s32.totalorder %s15, 0
      %p82 = por %p80, %p81
      %p83 = scmp.ne.s32.totalorder %s72, %s75
      %p84 = scmp.eq.s32.totalorder %s20, 1
      %p85 = por %p83, %p84
      %p86 = scmp.ne.s32.totalorder %s75, %s76
      %p87 = scmp.eq.s32.totalorder %s20, 0
      %p88 = por %p86, %p87
      %p89 = scmp.ne.s32.totalorder %s75, %s76
      %p90 = scmp.eq.s32.totalorder %s21, 1
      %p91 = por %p89, %p90
      %p93 = scmp.ne.s32.totalorder %s76, %s92
      %p94 = scmp.eq.s32.totalorder %s21, 0
      %p95 = por %p93, %p94
      %p96 = scmp.le.s32.totalorder 1, %s15
      %p97 = scmp.lt.s32.totalorder %s15, 3
      %p98 = pnand %p96, %p97
      %p99 = pneg %p98
      // Predicated region
      $region9: #{tpu_custom_call.1} parent=5 // pred_check
        _
      $region10: #{tpu_custom_call.1} parent=5 // pred_check_branch
        %101 = sbr.rel (%p98) target = $region12
      $region11: #{tpu_custom_call.1} parent=5 // pred_region
        %s102 = ssub.s32 %s15, 1
        // Predicated region
        $region13: #{tpu_custom_call.1} parent=11 // pred_check
          %p103 = pneg %p36
        $region14: #{tpu_custom_call.1} parent=11 // pred_check_branch
          %105 = sbr.rel (%p103) target = $region16
        $region15: #{tpu_custom_call.1} parent=11 // pred_region
          %s107 = ssub.s32 48, 48
          %108 = vsyncadd [#allocation6], %s107
          %111 = dma.hbm_to_smem %s0, 48, [#allocation3], [#allocation6]
        $region16: #{tpu_custom_call.1} parent=11 // pred_fallthru
          _
      $region12: #{tpu_custom_call.1} parent=5 // pred_fallthru
        _
      %p112 = scmp.lt.s32.totalorder %s15, 2
      // Predicated region
      $region17: #{tpu_custom_call.1} parent=5 // pred_check
        %p113 = pneg %p112
      $region18: #{tpu_custom_call.1} parent=5 // pred_check_branch
        %115 = sbr.rel (%p113) target = $region20
      $region19: #{tpu_custom_call.1} parent=5 // pred_region
        // Predicated region
        $region21: #{tpu_custom_call.1} parent=19 // pred_check
          %p116 = pneg %p56
        $region22: #{tpu_custom_call.1} parent=19 // pred_check_branch
          %118 = sbr.rel (%p116) target = $region24
        $region23: #{tpu_custom_call.1} parent=19 // pred_region
          %s119 = sand.u32 %s46, 1
          %s120 = scalar_lea.sflag [#allocation4], %s119
          %s121 = sand.u32 %s46, 1
          %s122 = smul.addr %s121, 64
          %s123 = scalar_lea.vmem [#allocation7], %s122
          %s125 = ssub.s32 1024, 1024
          %126 = vsyncadd %s120, %s125
          %s127 = smul.addr %s15, 8
          %s128 = smul.addr %s127, 128
          %s129 = scalar_lea.hbm %s1, %s128
          %s130 = sshll.u32 %s123, 4
          %s131 = int_to_ptr.vmem [resolvable:$true] %s130
          %136 = dma.hbm_to_vmem [thread:$0]  %s129, 1024, %s131, %s120, 128, 128, 8
        $region24: #{tpu_custom_call.1} parent=19 // pred_fallthru
          _
      $region20: #{tpu_custom_call.1} parent=5 // pred_fallthru
        _
      %p137 = scmp.le.s32.totalorder 1, %s15
      %p138 = scmp.lt.s32.totalorder %s15, 3
      %p139 = pnand %p137, %p138
      %p140 = pneg %p139
      // Predicated region
      $region25: #{tpu_custom_call.1} parent=5 // pred_check
        _
      $region26: #{tpu_custom_call.1} parent=5 // pred_check_branch
        %142 = sbr.rel (%p139) target = $region28
      $region27: #{tpu_custom_call.1} parent=5 // pred_region
        %s143 = ssub.s32 %s15, 1
        // Predicated region
        $region29: #{tpu_custom_call.1} parent=27 // pred_check
          %p144 = pneg %p36
        $region30: #{tpu_custom_call.1} parent=27 // pred_check_branch
          %146 = sbr.rel (%p144) target = $region32
        $region31: #{tpu_custom_call.1} parent=27 // pred_region
          %147 = dma.done [#allocation6], 48
        $region32: #{tpu_custom_call.1} parent=27 // pred_fallthru
          _
        %s148 = sand.u32 %s49, 1
        %s149 = scalar_lea.sflag [#allocation4], %s148
        %s150 = sand.u32 %s49, 1
        %s151 = smul.addr %s150, 64
        %s152 = scalar_lea.vmem [#allocation7], %s151
        // Predicated region
        $region33: #{tpu_custom_call.1} parent=27 // pred_check
          %p153 = pneg %p62
        $region34: #{tpu_custom_call.1} parent=27 // pred_check_branch
          %155 = sbr.rel (%p153) target = $region36
        $region35: #{tpu_custom_call.1} parent=27 // pred_region
          %156 = dma.done %s149, 1024
        $region36: #{tpu_custom_call.1} parent=27 // pred_fallthru
          _
        %157 = sfence
        %p158 = pneg %p36
        %p159 = pneg %p33
        %s160 = sand.u32 %s49, 1
        %s161 = scalar_lea.sflag [#allocation4], %s160
        %s162 = sand.u32 %s49, 1
        %s163 = smul.addr %s162, 64
        %s164 = scalar_lea.vmem [#allocation7], %s163
        %p165 = pneg %p62
        %p166 = pneg %p59
        %p167 = pneg %p88
        %p168 = pneg %p85
        %s169 = sand.u32 %s75, 1
        %s170 = scalar_lea.sflag [#allocation5], %s169
        %s171 = sand.u32 %s75, 1
        %s172 = smul.addr %s171, 32
        %s173 = scalar_lea.vmem [#allocation8], %s172
        %v174 = vlaneseq
        %v175 = vshrl.u32 %v174, 7
        %v176 = vadd.s32 %v175, 8
        %v177 = vadd.s32 %v175, 16
        %v178 = vadd.s32 %v175, 24
        %v179 = vadd.s32 %v175, 32
        %v180 = vlaneseq
        %v181 = vand.u32 %v180, 127
        %v182 = vadd.s32 %v181, 1
        %vm183 = vcmp.eq.s32.totalorder %v175, %v182
        %vm184 = vcmp.eq.s32.totalorder %v176, %v182
        %vm185 = vcmp.eq.s32.totalorder %v177, %v182
        %vm186 = vcmp.eq.s32.totalorder %v178, %v182
        %vm187 = vcmp.eq.s32.totalorder %v179, %v182
        %v188 = vsel %vm183, 1, 0
        %v189 = vsel %vm184, 1, 0
        %v190 = vsel %vm185, 1, 0
        %v191 = vsel %vm186, 1, 0
        %v192 = vsel %vm187, 1, 0
        %v193 = vcvt.s32.f32 %v188
        %v194 = vcvt.s32.f32 %v189
        %v195 = vcvt.s32.f32 %v190
        %v196 = vcvt.s32.f32 %v191
        %v197 = vcvt.s32.f32 %v192
        %v198 = vadd.s32 %v175, 1
        %v199 = vadd.s32 %v176, 1
        %v200 = vadd.s32 %v177, 1
        %v201 = vadd.s32 %v178, 1
        %vm202 = vcmp.eq.s32.totalorder %v181, %v198
        %vm203 = vcmp.eq.s32.totalorder %v181, %v199
        %vm204 = vcmp.eq.s32.totalorder %v181, %v200
        %vm205 = vcmp.eq.s32.totalorder %v181, %v201
        %v206 = vsel %vm202, 1, 0
        %v207 = vsel %vm203, 1, 0
        %v208 = vsel %vm204, 1, 0
        %v209 = vsel %vm205, 1, 0
        %v210 = vcvt.s32.f32 %v206
        %v211 = vcvt.s32.f32 %v207
        %v212 = vcvt.s32.f32 %v208
        %v213 = vcvt.s32.f32 %v209
        %v214 = vld [vmem:[%s152] sm:$0xff]
        %v215 = vld [vmem:[%s152 + $0x8] sm:$0xff]
        %s216 = scalar_lea.vmem %s152, 16 [#allocation7]
        %v217 = vld [vmem:[%s216] sm:$0xff]
        %v218 = vld [vmem:[%s216 + $0x8] sm:$0xff]
        %s219 = scalar_lea.vmem %s152, 32 [#allocation7]
        %v220 = vld [vmem:[%s219] sm:$0xff]
        %v221 = vld [vmem:[%s219 + $0x8] sm:$0xff]
        %s222 = scalar_lea.vmem %s152, 48 [#allocation7]
        %v223 = vld [vmem:[%s222] sm:$0xff]
        %v224 = vld [vmem:[%s222 + $0x8] sm:$0xff]
        %v225 = vmul.u32 %v181, 2
        %vm226 = vcmp.eq.s32.totalorder %v175, %v225
        %vm227 = vcmp.eq.s32.totalorder %v176, %v225
        %vm228 = vcmp.eq.s32.totalorder %v177, %v225
        %vm229 = vcmp.eq.s32.totalorder %v178, %v225
        %v230 = vsel %vm226, 1, 0
        %v231 = vsel %vm227, 1, 0
        %v232 = vsel %vm228, 1, 0
        %v233 = vsel %vm229, 1, 0
        %v234 = vcvt.s32.f32 %v230
        %v235 = vcvt.s32.f32 %v231
        %v236 = vcvt.s32.f32 %v232
        %v237 = vcvt.s32.f32 %v233
        %v238 = vadd.s32 %v225, 1
        %vm239 = vcmp.eq.s32.totalorder %v175, %v238
        %vm240 = vcmp.eq.s32.totalorder %v176, %v238
        %vm241 = vcmp.eq.s32.totalorder %v177, %v238
        %vm242 = vcmp.eq.s32.totalorder %v178, %v238
        %v243 = vsel %vm239, 1, 0
        %v244 = vsel %vm240, 1, 0
        %v245 = vsel %vm241, 1, 0
        %v246 = vsel %vm242, 1, 0
        %v247 = vcvt.s32.f32 %v243
        %v248 = vcvt.s32.f32 %v244
        %v249 = vcvt.s32.f32 %v245
        %v250 = vcvt.s32.f32 %v246
        %v251 = vmul.u32 %v175, 2
        %v252 = vmul.u32 %v176, 2
        %vm253 = vcmp.eq.s32.totalorder %v181, %v251
        %vm254 = vcmp.eq.s32.totalorder %v181, %v252
        %v255 = vsel %vm253, 1, 0
        %v256 = vsel %vm254, 1, 0
        %v257 = vcvt.s32.f32 %v255
        %v258 = vcvt.s32.f32 %v256
        %v259 = vadd.s32 %v251, 1
        %v260 = vadd.s32 %v252, 1
        %vm261 = vcmp.eq.s32.totalorder %v181, %v259
        %vm262 = vcmp.eq.s32.totalorder %v181, %v260
        %v263 = vsel %vm261, 1, 0
        %v264 = vsel %vm262, 1, 0
        %v265 = vcvt.s32.f32 %v263
        %v266 = vcvt.s32.f32 %v264
        %s267 = sld [smem:[#allocation3]]
        %v268 = vstv %s267
        %v269 = vmul.f32 %v214, %v268
        %v270 = vmul.f32 %v215, %v268
        %s271 = sld [smem:[#allocation3 + $0x8]]
        %v272 = vstv %s271
        %v273 = vmul.f32 %v217, %v272
        %v274 = vmul.f32 %v218, %v272
        %v275 = vadd.f32 %v269, %v273
        %v276 = vadd.f32 %v270, %v274
        %s277 = sld [smem:[#allocation3 + $0x10]]
        %v278 = vstv %s277
        %v279 = vmul.f32 %v220, %v278
        %v280 = vmul.f32 %v221, %v278
        %v281 = vadd.f32 %v275, %v279
        %v282 = vadd.f32 %v276, %v280
        %s283 = sld [smem:[#allocation3 + $0x18]]
        %v284 = vstv %s283
        %v285 = vmul.f32 %v223, %v284
        %v286 = vmul.f32 %v224, %v284
        %v287 = vadd.f32 %v281, %v285
        %v288 = vadd.f32 %v282, %v286
        %s289 = sld [smem:[#allocation3 + $0x1]]
        %v290 = vstv %s289
        %v291 = vmul.f32 %v214, %v290
        %v292 = vmul.f32 %v215, %v290
        %s293 = sld [smem:[#allocation3 + $0x9]]
        %v294 = vstv %s293
        %v295 = vmul.f32 %v217, %v294
        %v296 = vmul.f32 %v218, %v294
        %v297 = vadd.f32 %v291, %v295
        %v298 = vadd.f32 %v292, %v296
        %s299 = sld [smem:[#allocation3 + $0x11]]
        %v300 = vstv %s299
        %v301 = vmul.f32 %v220, %v300
        %v302 = vmul.f32 %v221, %v300
        %v303 = vadd.f32 %v297, %v301
        %v304 = vadd.f32 %v298, %v302
        %s305 = sld [smem:[#allocation3 + $0x19]]
        %v306 = vstv %s305
        %v307 = vmul.f32 %v223, %v306
        %v308 = vmul.f32 %v224, %v306
        %v309 = vadd.f32 %v303, %v307
        %v310 = vadd.f32 %v304, %v308
        %vm311 = vcmask 130048
        %v313 = vsel %vm311, %v309, 0
        %v316 = vsel %vm311, %v310, 0
        %318 = vmatprep.subr.mxu0 0.0
        %319 = vmatpush1.msra.mxu0 %v265
        %320 = vmatprep.subr.mxu0 0.0
        %321 = vmatpush1.msra.mxu0 %v266
        %322 = vmatprep.subr.mxu0 0.0
        %323 = vmatpush1.msra.mxu0 0.0
        %324 = vmatprep.subr.mxu0 0.0
        %325 = vmatpush1.msra.mxu0 0.0
        %326 = vmatprep.subr.mxu0 0.0
        %327 = vmatpush1.msra.mxu0 0.0
        %328 = vmatprep.subr.mxu0 0.0
        %329 = vmatpush1.msra.mxu0 0.0
        %330 = vmatprep.subr.mxu0 0.0
        %331 = vmatpush1.msra.mxu0 0.0
        %332 = vmatprep.subr.mxu0 0.0
        %333 = vmatpush1.msra.mxu0 0.0
        %334 = vmatprep.subr.mxu0 0.0
        %335 = vmatpush1.msra.mxu0 0.0
        %336 = vmatprep.subr.mxu0 0.0
        %337 = vmatpush1.msra.mxu0 0.0
        %338 = vmatprep.subr.mxu0 0.0
        %339 = vmatpush1.msra.mxu0 0.0
        %340 = vmatprep.subr.mxu0 0.0
        %341 = vmatpush1.msra.mxu0 0.0
        %342 = vmatprep.subr.mxu0 0.0
        %343 = vmatpush1.msra.mxu0 0.0
        %344 = vmatprep.subr.mxu0 0.0
        %345 = vmatpush1.msra.mxu0 0.0
        %346 = vmatprep.subr.mxu0 0.0
        %347 = vmatpush1.msra.mxu0 0.0
        %348 = vmatprep.subr.mxu0 0.0
        %349 = vmatpush1.msra.mxu0 0.0
        %350 = vmatprep.subr.mxu0 0.0
        %351 = vmatpush1.msra.mxu0 0.0
        %352 = vmatprep.subr.mxu0 0.0
        %353 = vmatpush1.msra.mxu0 0.0
        %354 = vmatprep.subr.mxu0 0.0
        %355 = vmatpush1.msra.mxu0 0.0
        %356 = vmatprep.subr.mxu0 0.0
        %357 = vmatpush1.msra.mxu0 0.0
        %358 = vmatprep.subr.mxu0 0.0
        %359 = vmatpush1.msra.mxu0 0.0
        %360 = vmatprep.subr.mxu0 0.0
        %361 = vmatpush1.msra.mxu0 0.0
        %362 = vmatprep.subr.mxu0 0.0
        %363 = vmatpush1.msra.mxu0 0.0
        %364 = vmatprep.subr.mxu0 0.0
        %365 = vmatpush1.msra.mxu0 0.0
        %366 = vmatprep.subr.mxu0 0.0
        %367 = vmatpush1.msra.mxu0 0.0
        %368 = vmatprep.subr.mxu0 0.0
        %369 = vmatpush1.msra.mxu0 0.0
        %370 = vmatprep.subr.mxu0 0.0
        %371 = vmatpush1.msra.mxu0 0.0
        %372 = vmatprep.subr.mxu0 0.0
        %373 = vmatpush1.msra.mxu0 0.0
        %374 = vmatprep.subr.mxu0 0.0
        %375 = vmatpush1.msra.mxu0 0.0
        %376 = vmatprep.subr.mxu0 0.0
        %377 = vmatpush1.msra.mxu0 0.0
        %378 = vmatprep.subr.mxu0 0.0
        %379 = vmatpush1.msra.mxu0 0.0
        %380 = vmatprep.subr.mxu0 0.0
        %381 = vmatpush1.msra.mxu0 0.0
        %382 = vmatprep.mubr.f32.mxu0 0.0
        %383 = vmatmul.mubr.f32.gmra.mrb[0].mxu0 %v313
        %v384 = vpop.f32.mrb[0].mxu0
        %v385 = vadd.f32 0.0, %v384
        %v386 = vpop.f32.mrb[0].mxu0
        %387 = vmatprep.mubr.f32.mxu0 0.0
        %388 = vmatmul.mubr.f32.gmra.mrb[0].mxu0 %v316
        %v389 = vpop.f32.mrb[0].mxu0
        %v390 = vadd.f32 0.0, %v389
        %v391 = vpop.f32.mrb[0].mxu0
        %392 = vdwg.mxu0
        %v394 = vsel %vm311, %v287, 0
        %v397 = vsel %vm311, %v288, 0
        %399 = vmatprep.subr.mxu0 0.0
        %400 = vmatpush1.msra.mxu0 %v257
        %401 = vmatprep.subr.mxu0 0.0
        %402 = vmatpush1.msra.mxu0 %v258
        %403 = vmatprep.subr.mxu0 0.0
        %404 = vmatpush1.msra.mxu0 0.0
        %405 = vmatprep.subr.mxu0 0.0
        %406 = vmatpush1.msra.mxu0 0.0
        %407 = vmatprep.subr.mxu0 0.0
        %408 = vmatpush1.msra.mxu0 0.0
        %409 = vmatprep.subr.mxu0 0.0
        %410 = vmatpush1.msra.mxu0 0.0
        %411 = vmatprep.subr.mxu0 0.0
        %412 = vmatpush1.msra.mxu0 0.0
        %413 = vmatprep.subr.mxu0 0.0
        %414 = vmatpush1.msra.mxu0 0.0
        %415 = vmatprep.subr.mxu0 0.0
        %416 = vmatpush1.msra.mxu0 0.0
        %417 = vmatprep.subr.mxu0 0.0
        %418 = vmatpush1.msra.mxu0 0.0
        %419 = vmatprep.subr.mxu0 0.0
        %420 = vmatpush1.msra.mxu0 0.0
        %421 = vmatprep.subr.mxu0 0.0
        %422 = vmatpush1.msra.mxu0 0.0
        %423 = vmatprep.subr.mxu0 0.0
        %424 = vmatpush1.msra.mxu0 0.0
        %425 = vmatprep.subr.mxu0 0.0
        %426 = vmatpush1.msra.mxu0 0.0
        %427 = vmatprep.subr.mxu0 0.0
        %428 = vmatpush1.msra.mxu0 0.0
        %429 = vmatprep.subr.mxu0 0.0
        %430 = vmatpush1.msra.mxu0 0.0
        %431 = vmatprep.subr.mxu0 0.0
        %432 = vmatpush1.msra.mxu0 0.0
        %433 = vmatprep.subr.mxu0 0.0
        %434 = vmatpush1.msra.mxu0 0.0
        %435 = vmatprep.subr.mxu0 0.0
        %436 = vmatpush1.msra.mxu0 0.0
        %437 = vmatprep.subr.mxu0 0.0
        %438 = vmatpush1.msra.mxu0 0.0
        %439 = vmatprep.subr.mxu0 0.0
        %440 = vmatpush1.msra.mxu0 0.0
        %441 = vmatprep.subr.mxu0 0.0
        %442 = vmatpush1.msra.mxu0 0.0
        %443 = vmatprep.subr.mxu0 0.0
        %444 = vmatpush1.msra.mxu0 0.0
        %445 = vmatprep.subr.mxu0 0.0
        %446 = vmatpush1.msra.mxu0 0.0
        %447 = vmatprep.subr.mxu0 0.0
        %448 = vmatpush1.msra.mxu0 0.0
        %449 = vmatprep.subr.mxu0 0.0
        %450 = vmatpush1.msra.mxu0 0.0
        %451 = vmatprep.subr.mxu0 0.0
        %452 = vmatpush1.msra.mxu0 0.0
        %453 = vmatprep.subr.mxu0 0.0
        %454 = vmatpush1.msra.mxu0 0.0
        %455 = vmatprep.subr.mxu0 0.0
        %456 = vmatpush1.msra.mxu0 0.0
        %457 = vmatprep.subr.mxu0 0.0
        %458 = vmatpush1.msra.mxu0 0.0
        %459 = vmatprep.subr.mxu0 0.0
        %460 = vmatpush1.msra.mxu0 0.0
        %461 = vmatprep.subr.mxu0 0.0
        %462 = vmatpush1.msra.mxu0 0.0
        %463 = vmatprep.mubr.f32.mxu0 0.0
        %464 = vmatmul.mubr.f32.gmra.mrb[0].mxu0 %v394
        %v465 = vpop.f32.mrb[0].mxu0
        %v466 = vadd.f32 %v385, %v465
        %v467 = vpop.f32.mrb[0].mxu0
        %468 = vmatprep.mubr.f32.mxu0 0.0
        %469 = vmatmul.mubr.f32.gmra.mrb[0].mxu0 %v397
        %v470 = vpop.f32.mrb[0].mxu0
        %v471 = vadd.f32 %v390, %v470
        %v472 = vpop.f32.mrb[0].mxu0
        %473 = vdwg.mxu0
        %s474 = sld [smem:[#allocation3 + $0x2]]
        %v475 = vstv %s474
        %v476 = vmul.f32 %v214, %v475
        %v477 = vmul.f32 %v215, %v475
        %s478 = sld [smem:[#allocation3 + $0xa]]
        %v479 = vstv %s478
        %v480 = vmul.f32 %v217, %v479
        %v481 = vmul.f32 %v218, %v479
        %v482 = vadd.f32 %v476, %v480
        %v483 = vadd.f32 %v477, %v481
        %s484 = sld [smem:[#allocation3 + $0x12]]
        %v485 = vstv %s484
        %v486 = vmul.f32 %v220, %v485
        %v487 = vmul.f32 %v221, %v485
        %v488 = vadd.f32 %v482, %v486
        %v489 = vadd.f32 %v483, %v487
        %s490 = sld [smem:[#allocation3 + $0x1a]]
        %v491 = vstv %s490
        %v492 = vmul.f32 %v223, %v491
        %v493 = vmul.f32 %v224, %v491
        %v494 = vadd.f32 %v488, %v492
        %v495 = vadd.f32 %v489, %v493
        %s496 = sld [smem:[#allocation3 + $0x3]]
        %v497 = vstv %s496
        %v498 = vmul.f32 %v214, %v497
        %v499 = vmul.f32 %v215, %v497
        %s500 = sld [smem:[#allocation3 + $0xb]]
        %v501 = vstv %s500
        %v502 = vmul.f32 %v217, %v501
        %v503 = vmul.f32 %v218, %v501
        %v504 = vadd.f32 %v498, %v502
        %v505 = vadd.f32 %v499, %v503
        %s506 = sld [smem:[#allocation3 + $0x13]]
        %v507 = vstv %s506
        %v508 = vmul.f32 %v220, %v507
        %v509 = vmul.f32 %v221, %v507
        %v510 = vadd.f32 %v504, %v508
        %v511 = vadd.f32 %v505, %v509
        %s512 = sld [smem:[#allocation3 + $0x1b]]
        %v513 = vstv %s512
        %v514 = vmul.f32 %v223, %v513
        %v515 = vmul.f32 %v224, %v513
        %v516 = vadd.f32 %v510, %v514
        %v517 = vadd.f32 %v511, %v515
        %v519 = vsel %vm311, %v516, 0
        %v522 = vsel %vm311, %v517, 0
        %524 = vmatprep.subr.mxu0 0.0
        %525 = vmatpush1.msra.mxu0 %v265
        %526 = vmatprep.subr.mxu0 0.0
        %527 = vmatpush1.msra.mxu0 %v266
        %528 = vmatprep.subr.mxu0 0.0
        %529 = vmatpush1.msra.mxu0 0.0
        %530 = vmatprep.subr.mxu0 0.0
        %531 = vmatpush1.msra.mxu0 0.0
        %532 = vmatprep.subr.mxu0 0.0
        %533 = vmatpush1.msra.mxu0 0.0
        %534 = vmatprep.subr.mxu0 0.0
        %535 = vmatpush1.msra.mxu0 0.0
        %536 = vmatprep.subr.mxu0 0.0
        %537 = vmatpush1.msra.mxu0 0.0
        %538 = vmatprep.subr.mxu0 0.0
        %539 = vmatpush1.msra.mxu0 0.0
        %540 = vmatprep.subr.mxu0 0.0
        %541 = vmatpush1.msra.mxu0 0.0
        %542 = vmatprep.subr.mxu0 0.0
        %543 = vmatpush1.msra.mxu0 0.0
        %544 = vmatprep.subr.mxu0 0.0
        %545 = vmatpush1.msra.mxu0 0.0
        %546 = vmatprep.subr.mxu0 0.0
        %547 = vmatpush1.msra.mxu0 0.0
        %548 = vmatprep.subr.mxu0 0.0
        %549 = vmatpush1.msra.mxu0 0.0
        %550 = vmatprep.subr.mxu0 0.0
        %551 = vmatpush1.msra.mxu0 0.0
        %552 = vmatprep.subr.mxu0 0.0
        %553 = vmatpush1.msra.mxu0 0.0
        %554 = vmatprep.subr.mxu0 0.0
        %555 = vmatpush1.msra.mxu0 0.0
        %556 = vmatprep.subr.mxu0 0.0
        %557 = vmatpush1.msra.mxu0 0.0
        %558 = vmatprep.subr.mxu0 0.0
        %559 = vmatpush1.msra.mxu0 0.0
        %560 = vmatprep.subr.mxu0 0.0
        %561 = vmatpush1.msra.mxu0 0.0
        %562 = vmatprep.subr.mxu0 0.0
        %563 = vmatpush1.msra.mxu0 0.0
        %564 = vmatprep.subr.mxu0 0.0
        %565 = vmatpush1.msra.mxu0 0.0
        %566 = vmatprep.subr.mxu0 0.0
        %567 = vmatpush1.msra.mxu0 0.0
        %568 = vmatprep.subr.mxu0 0.0
        %569 = vmatpush1.msra.mxu0 0.0
        %570 = vmatprep.subr.mxu0 0.0
        %571 = vmatpush1.msra.mxu0 0.0
        %572 = vmatprep.subr.mxu0 0.0
        %573 = vmatpush1.msra.mxu0 0.0
        %574 = vmatprep.subr.mxu0 0.0
        %575 = vmatpush1.msra.mxu0 0.0
        %576 = vmatprep.subr.mxu0 0.0
        %577 = vmatpush1.msra.mxu0 0.0
        %578 = vmatprep.subr.mxu0 0.0
        %579 = vmatpush1.msra.mxu0 0.0
        %580 = vmatprep.subr.mxu0 0.0
        %581 = vmatpush1.msra.mxu0 0.0
        %582 = vmatprep.subr.mxu0 0.0
        %583 = vmatpush1.msra.mxu0 0.0
        %584 = vmatprep.subr.mxu0 0.0
        %585 = vmatpush1.msra.mxu0 0.0
        %586 = vmatprep.subr.mxu0 0.0
        %587 = vmatpush1.msra.mxu0 0.0
        %588 = vmatprep.mubr.f32.mxu0 0.0
        %589 = vmatmul.mubr.f32.gmra.mrb[0].mxu0 %v519
        %v590 = vpop.f32.mrb[0].mxu0
        %v591 = vadd.f32 0.0, %v590
        %v592 = vpop.f32.mrb[0].mxu0
        %593 = vmatprep.mubr.f32.mxu0 0.0
        %594 = vmatmul.mubr.f32.gmra.mrb[0].mxu0 %v522
        %v595 = vpop.f32.mrb[0].mxu0
        %v596 = vadd.f32 0.0, %v595
        %v597 = vpop.f32.mrb[0].mxu0
        %598 = vdwg.mxu0
        %v600 = vsel %vm311, %v494, 0
        %v603 = vsel %vm311, %v495, 0
        %605 = vmatprep.subr.mxu0 0.0
        %606 = vmatpush1.msra.mxu0 %v257
        %607 = vmatprep.subr.mxu0 0.0
        %608 = vmatpush1.msra.mxu0 %v258
        %609 = vmatprep.subr.mxu0 0.0
        %610 = vmatpush1.msra.mxu0 0.0
        %611 = vmatprep.subr.mxu0 0.0
        %612 = vmatpush1.msra.mxu0 0.0
        %613 = vmatprep.subr.mxu0 0.0
        %614 = vmatpush1.msra.mxu0 0.0
        %615 = vmatprep.subr.mxu0 0.0
        %616 = vmatpush1.msra.mxu0 0.0
        %617 = vmatprep.subr.mxu0 0.0
        %618 = vmatpush1.msra.mxu0 0.0
        %619 = vmatprep.subr.mxu0 0.0
        %620 = vmatpush1.msra.mxu0 0.0
        %621 = vmatprep.subr.mxu0 0.0
        %622 = vmatpush1.msra.mxu0 0.0
        %623 = vmatprep.subr.mxu0 0.0
        %624 = vmatpush1.msra.mxu0 0.0
        %625 = vmatprep.subr.mxu0 0.0
        %626 = vmatpush1.msra.mxu0 0.0
        %627 = vmatprep.subr.mxu0 0.0
        %628 = vmatpush1.msra.mxu0 0.0
        %629 = vmatprep.subr.mxu0 0.0
        %630 = vmatpush1.msra.mxu0 0.0
        %631 = vmatprep.subr.mxu0 0.0
        %632 = vmatpush1.msra.mxu0 0.0
        %633 = vmatprep.subr.mxu0 0.0
        %634 = vmatpush1.msra.mxu0 0.0
        %635 = vmatprep.subr.mxu0 0.0
        %636 = vmatpush1.msra.mxu0 0.0
        %637 = vmatprep.subr.mxu0 0.0
        %638 = vmatpush1.msra.mxu0 0.0
        %639 = vmatprep.subr.mxu0 0.0
        %640 = vmatpush1.msra.mxu0 0.0
        %641 = vmatprep.subr.mxu0 0.0
        %642 = vmatpush1.msra.mxu0 0.0
        %643 = vmatprep.subr.mxu0 0.0
        %644 = vmatpush1.msra.mxu0 0.0
        %645 = vmatprep.subr.mxu0 0.0
        %646 = vmatpush1.msra.mxu0 0.0
        %647 = vmatprep.subr.mxu0 0.0
        %648 = vmatpush1.msra.mxu0 0.0
        %649 = vmatprep.subr.mxu0 0.0
        %650 = vmatpush1.msra.mxu0 0.0
        %651 = vmatprep.subr.mxu0 0.0
        %652 = vmatpush1.msra.mxu0 0.0
        %653 = vmatprep.subr.mxu0 0.0
        %654 = vmatpush1.msra.mxu0 0.0
        %655 = vmatprep.subr.mxu0 0.0
        %656 = vmatpush1.msra.mxu0 0.0
        %657 = vmatprep.subr.mxu0 0.0
        %658 = vmatpush1.msra.mxu0 0.0
        %659 = vmatprep.subr.mxu0 0.0
        %660 = vmatpush1.msra.mxu0 0.0
        %661 = vmatprep.subr.mxu0 0.0
        %662 = vmatpush1.msra.mxu0 0.0
        %663 = vmatprep.subr.mxu0 0.0
        %664 = vmatpush1.msra.mxu0 0.0
        %665 = vmatprep.subr.mxu0 0.0
        %666 = vmatpush1.msra.mxu0 0.0
        %667 = vmatprep.subr.mxu0 0.0
        %668 = vmatpush1.msra.mxu0 0.0
        %669 = vmatprep.mubr.f32.mxu0 0.0
        %670 = vmatmul.mubr.f32.gmra.mrb[0].mxu0 %v600
        %v671 = vpop.f32.mrb[0].mxu0
        %v672 = vadd.f32 %v591, %v671
        %v673 = vpop.f32.mrb[0].mxu0
        %674 = vmatprep.mubr.f32.mxu0 0.0
        %675 = vmatmul.mubr.f32.gmra.mrb[0].mxu0 %v603
        %v676 = vpop.f32.mrb[0].mxu0
        %v677 = vadd.f32 %v596, %v676
        %v678 = vpop.f32.mrb[0].mxu0
        %679 = vdwg.mxu0
        %v681 = vsel %vm311, %v247, 0
        %v684 = vsel %vm311, %v248, 0
        %v687 = vsel %vm311, %v249, 0
        %v690 = vsel %vm311, %v250, 0
        %692 = vmatprep.subr.mxu0 0.0
        %693 = vmatpush1.msra.mxu0 %v672
        %694 = vmatprep.subr.mxu0 0.0
        %695 = vmatpush1.msra.mxu0 %v677
        %696 = vmatprep.subr.mxu0 0.0
        %697 = vmatpush1.msra.mxu0 0.0
        %698 = vmatprep.subr.mxu0 0.0
        %699 = vmatpush1.msra.mxu0 0.0
        %700 = vmatprep.subr.mxu0 0.0
        %701 = vmatpush1.msra.mxu0 0.0
        %702 = vmatprep.subr.mxu0 0.0
        %703 = vmatpush1.msra.mxu0 0.0
        %704 = vmatprep.subr.mxu0 0.0
        %705 = vmatpush1.msra.mxu0 0.0
        %706 = vmatprep.subr.mxu0 0.0
        %707 = vmatpush1.msra.mxu0 0.0
        %708 = vmatprep.subr.mxu0 0.0
        %709 = vmatpush1.msra.mxu0 0.0
        %710 = vmatprep.subr.mxu0 0.0
        %711 = vmatpush1.msra.mxu0 0.0
        %712 = vmatprep.subr.mxu0 0.0
        %713 = vmatpush1.msra.mxu0 0.0
        %714 = vmatprep.subr.mxu0 0.0
        %715 = vmatpush1.msra.mxu0 0.0
        %716 = vmatprep.subr.mxu0 0.0
        %717 = vmatpush1.msra.mxu0 0.0
        %718 = vmatprep.subr.mxu0 0.0
        %719 = vmatpush1.msra.mxu0 0.0
        %720 = vmatprep.subr.mxu0 0.0
        %721 = vmatpush1.msra.mxu0 0.0
        %722 = vmatprep.subr.mxu0 0.0
        %723 = vmatpush1.msra.mxu0 0.0
        %724 = vmatprep.subr.mxu0 0.0
        %725 = vmatpush1.msra.mxu0 0.0
        %726 = vmatprep.subr.mxu0 0.0
        %727 = vmatpush1.msra.mxu0 0.0
        %728 = vmatprep.subr.mxu0 0.0
        %729 = vmatpush1.msra.mxu0 0.0
        %730 = vmatprep.subr.mxu0 0.0
        %731 = vmatpush1.msra.mxu0 0.0
        %732 = vmatprep.subr.mxu0 0.0
        %733 = vmatpush1.msra.mxu0 0.0
        %734 = vmatprep.subr.mxu0 0.0
        %735 = vmatpush1.msra.mxu0 0.0
        %736 = vmatprep.subr.mxu0 0.0
        %737 = vmatpush1.msra.mxu0 0.0
        %738 = vmatprep.subr.mxu0 0.0
        %739 = vmatpush1.msra.mxu0 0.0
        %740 = vmatprep.subr.mxu0 0.0
        %741 = vmatpush1.msra.mxu0 0.0
        %742 = vmatprep.subr.mxu0 0.0
        %743 = vmatpush1.msra.mxu0 0.0
        %744 = vmatprep.subr.mxu0 0.0
        %745 = vmatpush1.msra.mxu0 0.0
        %746 = vmatprep.subr.mxu0 0.0
        %747 = vmatpush1.msra.mxu0 0.0
        %748 = vmatprep.subr.mxu0 0.0
        %749 = vmatpush1.msra.mxu0 0.0
        %750 = vmatprep.subr.mxu0 0.0
        %751 = vmatpush1.msra.mxu0 0.0
        %752 = vmatprep.subr.mxu0 0.0
        %753 = vmatpush1.msra.mxu0 0.0
        %754 = vmatprep.subr.mxu0 0.0
        %755 = vmatpush1.msra.mxu0 0.0
        %756 = vmatprep.mubr.f32.mxu0 0.0
        %757 = vmatmul.mubr.f32.gmra.mrb[0].mxu0 %v681
        %v758 = vpop.f32.mrb[0].mxu0
        %v759 = vadd.f32 0.0, %v758
        %v760 = vpop.f32.mrb[0].mxu0
        %761 = vmatprep.mubr.f32.mxu0 0.0
        %762 = vmatmul.mubr.f32.gmra.mrb[0].mxu0 %v684
        %v763 = vpop.f32.mrb[0].mxu0
        %v764 = vadd.f32 0.0, %v763
        %v765 = vpop.f32.mrb[0].mxu0
        %766 = vmatprep.mubr.f32.mxu0 0.0
        %767 = vmatmul.mubr.f32.gmra.mrb[0].mxu0 %v687
        %v768 = vpop.f32.mrb[0].mxu0
        %v769 = vadd.f32 0.0, %v768
        %v770 = vpop.f32.mrb[0].mxu0
        %771 = vmatprep.mubr.f32.mxu0 0.0
        %772 = vmatmul.mubr.f32.gmra.mrb[0].mxu0 %v690
        %v773 = vpop.f32.mrb[0].mxu0
        %v774 = vadd.f32 0.0, %v773
        %v775 = vpop.f32.mrb[0].mxu0
        %776 = vdwg.mxu0
        %v778 = vsel %vm311, %v234, 0
        %v781 = vsel %vm311, %v235, 0
        %v784 = vsel %vm311, %v236, 0
        %v787 = vsel %vm311, %v237, 0
        %789 = vmatprep.subr.mxu0 0.0
        %790 = vmatpush1.msra.mxu0 %v466
        %791 = vmatprep.subr.mxu0 0.0
        %792 = vmatpush1.msra.mxu0 %v471
        %793 = vmatprep.subr.mxu0 0.0
        %794 = vmatpush1.msra.mxu0 0.0
        %795 = vmatprep.subr.mxu0 0.0
        %796 = vmatpush1.msra.mxu0 0.0
        %797 = vmatprep.subr.mxu0 0.0
        %798 = vmatpush1.msra.mxu0 0.0
        %799 = vmatprep.subr.mxu0 0.0
        %800 = vmatpush1.msra.mxu0 0.0
        %801 = vmatprep.subr.mxu0 0.0
        %802 = vmatpush1.msra.mxu0 0.0
        %803 = vmatprep.subr.mxu0 0.0
        %804 = vmatpush1.msra.mxu0 0.0
        %805 = vmatprep.subr.mxu0 0.0
        %806 = vmatpush1.msra.mxu0 0.0
        %807 = vmatprep.subr.mxu0 0.0
        %808 = vmatpush1.msra.mxu0 0.0
        %809 = vmatprep.subr.mxu0 0.0
        %810 = vmatpush1.msra.mxu0 0.0
        %811 = vmatprep.subr.mxu0 0.0
        %812 = vmatpush1.msra.mxu0 0.0
        %813 = vmatprep.subr.mxu0 0.0
        %814 = vmatpush1.msra.mxu0 0.0
        %815 = vmatprep.subr.mxu0 0.0
        %816 = vmatpush1.msra.mxu0 0.0
        %817 = vmatprep.subr.mxu0 0.0
        %818 = vmatpush1.msra.mxu0 0.0
        %819 = vmatprep.subr.mxu0 0.0
        %820 = vmatpush1.msra.mxu0 0.0
        %821 = vmatprep.subr.mxu0 0.0
        %822 = vmatpush1.msra.mxu0 0.0
        %823 = vmatprep.subr.mxu0 0.0
        %824 = vmatpush1.msra.mxu0 0.0
        %825 = vmatprep.subr.mxu0 0.0
        %826 = vmatpush1.msra.mxu0 0.0
        %827 = vmatprep.subr.mxu0 0.0
        %828 = vmatpush1.msra.mxu0 0.0
        %829 = vmatprep.subr.mxu0 0.0
        %830 = vmatpush1.msra.mxu0 0.0
        %831 = vmatprep.subr.mxu0 0.0
        %832 = vmatpush1.msra.mxu0 0.0
        %833 = vmatprep.subr.mxu0 0.0
        %834 = vmatpush1.msra.mxu0 0.0
        %835 = vmatprep.subr.mxu0 0.0
        %836 = vmatpush1.msra.mxu0 0.0
        %837 = vmatprep.subr.mxu0 0.0
        %838 = vmatpush1.msra.mxu0 0.0
        %839 = vmatprep.subr.mxu0 0.0
        %840 = vmatpush1.msra.mxu0 0.0
        %841 = vmatprep.subr.mxu0 0.0
        %842 = vmatpush1.msra.mxu0 0.0
        %843 = vmatprep.subr.mxu0 0.0
        %844 = vmatpush1.msra.mxu0 0.0
        %845 = vmatprep.subr.mxu0 0.0
        %846 = vmatpush1.msra.mxu0 0.0
        %847 = vmatprep.subr.mxu0 0.0
        %848 = vmatpush1.msra.mxu0 0.0
        %849 = vmatprep.subr.mxu0 0.0
        %850 = vmatpush1.msra.mxu0 0.0
        %851 = vmatprep.subr.mxu0 0.0
        %852 = vmatpush1.msra.mxu0 0.0
        %853 = vmatprep.mubr.f32.mxu0 0.0
        %854 = vmatmul.mubr.f32.gmra.mrb[0].mxu0 %v778
        %v855 = vpop.f32.mrb[0].mxu0
        %v856 = vadd.f32 %v759, %v855
        %v857 = vpop.f32.mrb[0].mxu0
        %858 = vmatprep.mubr.f32.mxu0 0.0
        %859 = vmatmul.mubr.f32.gmra.mrb[0].mxu0 %v781
        %v860 = vpop.f32.mrb[0].mxu0
        %v861 = vadd.f32 %v764, %v860
        %v862 = vpop.f32.mrb[0].mxu0
        %863 = vmatprep.mubr.f32.mxu0 0.0
        %864 = vmatmul.mubr.f32.gmra.mrb[0].mxu0 %v784
        %v865 = vpop.f32.mrb[0].mxu0
        %v866 = vadd.f32 %v769, %v865
        %v867 = vpop.f32.mrb[0].mxu0
        %868 = vmatprep.mubr.f32.mxu0 0.0
        %869 = vmatmul.mubr.f32.gmra.mrb[0].mxu0 %v787
        %v870 = vpop.f32.mrb[0].mxu0
        %v871 = vadd.f32 %v774, %v870
        %v872 = vpop.f32.mrb[0].mxu0
        %873 = vdwg.mxu0
        %s874 = sld [smem:[#allocation3 + $0x20]]
        %v875 = vstv %s874
        %v876 = vadd.f32 %v856, %v875
        %v877 = vadd.f32 %v861, %v875
        %v878 = vadd.f32 %v866, %v875
        %v879 = vadd.f32 %v871, %v875
        %s880 = sld [smem:[#allocation3 + $0x4]]
        %v881 = vstv %s880
        %v882 = vmul.f32 %v214, %v881
        %v883 = vmul.f32 %v215, %v881
        %s884 = sld [smem:[#allocation3 + $0xc]]
        %v885 = vstv %s884
        %v886 = vmul.f32 %v217, %v885
        %v887 = vmul.f32 %v218, %v885
        %v888 = vadd.f32 %v882, %v886
        %v889 = vadd.f32 %v883, %v887
        %s890 = sld [smem:[#allocation3 + $0x14]]
        %v891 = vstv %s890
        %v892 = vmul.f32 %v220, %v891
        %v893 = vmul.f32 %v221, %v891
        %v894 = vadd.f32 %v888, %v892
        %v895 = vadd.f32 %v889, %v893
        %s896 = sld [smem:[#allocation3 + $0x1c]]
        %v897 = vstv %s896
        %v898 = vmul.f32 %v223, %v897
        %v899 = vmul.f32 %v224, %v897
        %v900 = vadd.f32 %v894, %v898
        %v901 = vadd.f32 %v895, %v899
        %s902 = sld [smem:[#allocation3 + $0x5]]
        %v903 = vstv %s902
        %v904 = vmul.f32 %v214, %v903
        %v905 = vmul.f32 %v215, %v903
        %s906 = sld [smem:[#allocation3 + $0xd]]
        %v907 = vstv %s906
        %v908 = vmul.f32 %v217, %v907
        %v909 = vmul.f32 %v218, %v907
        %v910 = vadd.f32 %v904, %v908
        %v911 = vadd.f32 %v905, %v909
        %s912 = sld [smem:[#allocation3 + $0x15]]
        %v913 = vstv %s912
        %v914 = vmul.f32 %v220, %v913
        %v915 = vmul.f32 %v221, %v913
        %v916 = vadd.f32 %v910, %v914
        %v917 = vadd.f32 %v911, %v915
        %s918 = sld [smem:[#allocation3 + $0x1d]]
        %v919 = vstv %s918
        %v920 = vmul.f32 %v223, %v919
        %v921 = vmul.f32 %v224, %v919
        %v922 = vadd.f32 %v916, %v920
        %v923 = vadd.f32 %v917, %v921
        %v925 = vsel %vm311, %v922, 0
        %v928 = vsel %vm311, %v923, 0
        %930 = vmatprep.subr.mxu0 0.0
        %931 = vmatpush1.msra.mxu0 %v265
        %932 = vmatprep.subr.mxu0 0.0
        %933 = vmatpush1.msra.mxu0 %v266
        %934 = vmatprep.subr.mxu0 0.0
        %935 = vmatpush1.msra.mxu0 0.0
        %936 = vmatprep.subr.mxu0 0.0
        %937 = vmatpush1.msra.mxu0 0.0
        %938 = vmatprep.subr.mxu0 0.0
        %939 = vmatpush1.msra.mxu0 0.0
        %940 = vmatprep.subr.mxu0 0.0
        %941 = vmatpush1.msra.mxu0 0.0
        %942 = vmatprep.subr.mxu0 0.0
        %943 = vmatpush1.msra.mxu0 0.0
        %944 = vmatprep.subr.mxu0 0.0
        %945 = vmatpush1.msra.mxu0 0.0
        %946 = vmatprep.subr.mxu0 0.0
        %947 = vmatpush1.msra.mxu0 0.0
        %948 = vmatprep.subr.mxu0 0.0
        %949 = vmatpush1.msra.mxu0 0.0
        %950 = vmatprep.subr.mxu0 0.0
        %951 = vmatpush1.msra.mxu0 0.0
        %952 = vmatprep.subr.mxu0 0.0
        %953 = vmatpush1.msra.mxu0 0.0
        %954 = vmatprep.subr.mxu0 0.0
        %955 = vmatpush1.msra.mxu0 0.0
        %956 = vmatprep.subr.mxu0 0.0
        %957 = vmatpush1.msra.mxu0 0.0
        %958 = vmatprep.subr.mxu0 0.0
        %959 = vmatpush1.msra.mxu0 0.0
        %960 = vmatprep.subr.mxu0 0.0
        %961 = vmatpush1.msra.mxu0 0.0
        %962 = vmatprep.subr.mxu0 0.0
        %963 = vmatpush1.msra.mxu0 0.0
        %964 = vmatprep.subr.mxu0 0.0
        %965 = vmatpush1.msra.mxu0 0.0
        %966 = vmatprep.subr.mxu0 0.0
        %967 = vmatpush1.msra.mxu0 0.0
        %968 = vmatprep.subr.mxu0 0.0
        %969 = vmatpush1.msra.mxu0 0.0
        %970 = vmatprep.subr.mxu0 0.0
        %971 = vmatpush1.msra.mxu0 0.0
        %972 = vmatprep.subr.mxu0 0.0
        %973 = vmatpush1.msra.mxu0 0.0
        %974 = vmatprep.subr.mxu0 0.0
        %975 = vmatpush1.msra.mxu0 0.0
        %976 = vmatprep.subr.mxu0 0.0
        %977 = vmatpush1.msra.mxu0 0.0
        %978 = vmatprep.subr.mxu0 0.0
        %979 = vmatpush1.msra.mxu0 0.0
        %980 = vmatprep.subr.mxu0 0.0
        %981 = vmatpush1.msra.mxu0 0.0
        %982 = vmatprep.subr.mxu0 0.0
        %983 = vmatpush1.msra.mxu0 0.0
        %984 = vmatprep.subr.mxu0 0.0
        %985 = vmatpush1.msra.mxu0 0.0
        %986 = vmatprep.subr.mxu0 0.0
        %987 = vmatpush1.msra.mxu0 0.0
        %988 = vmatprep.subr.mxu0 0.0
        %989 = vmatpush1.msra.mxu0 0.0
        %990 = vmatprep.subr.mxu0 0.0
        %991 = vmatpush1.msra.mxu0 0.0
        %992 = vmatprep.subr.mxu0 0.0
        %993 = vmatpush1.msra.mxu0 0.0
        %994 = vmatprep.mubr.f32.mxu0 0.0
        %995 = vmatmul.mubr.f32.gmra.mrb[0].mxu0 %v925
        %v996 = vpop.f32.mrb[0].mxu0
        %v997 = vadd.f32 0.0, %v996
        %v998 = vpop.f32.mrb[0].mxu0
        %999 = vmatprep.mubr.f32.mxu0 0.0
        %1000 = vmatmul.mubr.f32.gmra.mrb[0].mxu0 %v928
        %v1001 = vpop.f32.mrb[0].mxu0
        %v1002 = vadd.f32 0.0, %v1001
        %v1003 = vpop.f32.mrb[0].mxu0
        %1004 = vdwg.mxu0
        %v1006 = vsel %vm311, %v900, 0
        %v1009 = vsel %vm311, %v901, 0
        %1011 = vmatprep.subr.mxu0 0.0
        %1012 = vmatpush1.msra.mxu0 %v257
        %1013 = vmatprep.subr.mxu0 0.0
        %1014 = vmatpush1.msra.mxu0 %v258
        %1015 = vmatprep.subr.mxu0 0.0
        %1016 = vmatpush1.msra.mxu0 0.0
        %1017 = vmatprep.subr.mxu0 0.0
        %1018 = vmatpush1.msra.mxu0 0.0
        %1019 = vmatprep.subr.mxu0 0.0
        %1020 = vmatpush1.msra.mxu0 0.0
        %1021 = vmatprep.subr.mxu0 0.0
        %1022 = vmatpush1.msra.mxu0 0.0
        %1023 = vmatprep.subr.mxu0 0.0
        %1024 = vmatpush1.msra.mxu0 0.0
        %1025 = vmatprep.subr.mxu0 0.0
        %1026 = vmatpush1.msra.mxu0 0.0
        %1027 = vmatprep.subr.mxu0 0.0
        %1028 = vmatpush1.msra.mxu0 0.0
        %1029 = vmatprep.subr.mxu0 0.0
        %1030 = vmatpush1.msra.mxu0 0.0
        %1031 = vmatprep.subr.mxu0 0.0
        %1032 = vmatpush1.msra.mxu0 0.0
        %1033 = vmatprep.subr.mxu0 0.0
        %1034 = vmatpush1.msra.mxu0 0.0
        %1035 = vmatprep.subr.mxu0 0.0
        %1036 = vmatpush1.msra.mxu0 0.0
        %1037 = vmatprep.subr.mxu0 0.0
        %1038 = vmatpush1.msra.mxu0 0.0
        %1039 = vmatprep.subr.mxu0 0.0
        %1040 = vmatpush1.msra.mxu0 0.0
        %1041 = vmatprep.subr.mxu0 0.0
        %1042 = vmatpush1.msra.mxu0 0.0
        %1043 = vmatprep.subr.mxu0 0.0
        %1044 = vmatpush1.msra.mxu0 0.0
        %1045 = vmatprep.subr.mxu0 0.0
        %1046 = vmatpush1.msra.mxu0 0.0
        %1047 = vmatprep.subr.mxu0 0.0
        %1048 = vmatpush1.msra.mxu0 0.0
        %1049 = vmatprep.subr.mxu0 0.0
        %1050 = vmatpush1.msra.mxu0 0.0
        %1051 = vmatprep.subr.mxu0 0.0
        %1052 = vmatpush1.msra.mxu0 0.0
        %1053 = vmatprep.subr.mxu0 0.0
        %1054 = vmatpush1.msra.mxu0 0.0
        %1055 = vmatprep.subr.mxu0 0.0
        %1056 = vmatpush1.msra.mxu0 0.0
        %1057 = vmatprep.subr.mxu0 0.0
        %1058 = vmatpush1.msra.mxu0 0.0
        %1059 = vmatprep.subr.mxu0 0.0
        %1060 = vmatpush1.msra.mxu0 0.0
        %1061 = vmatprep.subr.mxu0 0.0
        %1062 = vmatpush1.msra.mxu0 0.0
        %1063 = vmatprep.subr.mxu0 0.0
        %1064 = vmatpush1.msra.mxu0 0.0
        %1065 = vmatprep.subr.mxu0 0.0
        %1066 = vmatpush1.msra.mxu0 0.0
        %1067 = vmatprep.subr.mxu0 0.0
        %1068 = vmatpush1.msra.mxu0 0.0
        %1069 = vmatprep.subr.mxu0 0.0
        %1070 = vmatpush1.msra.mxu0 0.0
        %1071 = vmatprep.subr.mxu0 0.0
        %1072 = vmatpush1.msra.mxu0 0.0
        %1073 = vmatprep.subr.mxu0 0.0
        %1074 = vmatpush1.msra.mxu0 0.0
        %1075 = vmatprep.mubr.f32.mxu0 0.0
        %1076 = vmatmul.mubr.f32.gmra.mrb[0].mxu0 %v1006
        %v1077 = vpop.f32.mrb[0].mxu0
        %v1078 = vadd.f32 %v997, %v1077
        %v1079 = vpop.f32.mrb[0].mxu0
        %1080 = vmatprep.mubr.f32.mxu0 0.0
        %1081 = vmatmul.mubr.f32.gmra.mrb[0].mxu0 %v1009
        %v1082 = vpop.f32.mrb[0].mxu0
        %v1083 = vadd.f32 %v1002, %v1082
        %v1084 = vpop.f32.mrb[0].mxu0
        %1085 = vdwg.mxu0
        %s1086 = sld [smem:[#allocation3 + $0x6]]
        %v1087 = vstv %s1086
        %v1088 = vmul.f32 %v214, %v1087
        %v1089 = vmul.f32 %v215, %v1087
        %s1090 = sld [smem:[#allocation3 + $0xe]]
        %v1091 = vstv %s1090
        %v1092 = vmul.f32 %v217, %v1091
        %v1093 = vmul.f32 %v218, %v1091
        %v1094 = vadd.f32 %v1088, %v1092
        %v1095 = vadd.f32 %v1089, %v1093
        %s1096 = sld [smem:[#allocation3 + $0x16]]
        %v1097 = vstv %s1096
        %v1098 = vmul.f32 %v220, %v1097
        %v1099 = vmul.f32 %v221, %v1097
        %v1100 = vadd.f32 %v1094, %v1098
        %v1101 = vadd.f32 %v1095, %v1099
        %s1102 = sld [smem:[#allocation3 + $0x1e]]
        %v1103 = vstv %s1102
        %v1104 = vmul.f32 %v223, %v1103
        %v1105 = vmul.f32 %v224, %v1103
        %v1106 = vadd.f32 %v1100, %v1104
        %v1107 = vadd.f32 %v1101, %v1105
        %s1108 = sld [smem:[#allocation3 + $0x7]]
        %v1109 = vstv %s1108
        %v1110 = vmul.f32 %v214, %v1109
        %v1111 = vmul.f32 %v215, %v1109
        %s1112 = sld [smem:[#allocation3 + $0xf]]
        %v1113 = vstv %s1112
        %v1114 = vmul.f32 %v217, %v1113
        %v1115 = vmul.f32 %v218, %v1113
        %v1116 = vadd.f32 %v1110, %v1114
        %v1117 = vadd.f32 %v1111, %v1115
        %s1118 = sld [smem:[#allocation3 + $0x17]]
        %v1119 = vstv %s1118
        %v1120 = vmul.f32 %v220, %v1119
        %v1121 = vmul.f32 %v221, %v1119
        %v1122 = vadd.f32 %v1116, %v1120
        %v1123 = vadd.f32 %v1117, %v1121
        %s1124 = sld [smem:[#allocation3 + $0x1f]]
        %v1125 = vstv %s1124
        %v1126 = vmul.f32 %v223, %v1125
        %v1127 = vmul.f32 %v224, %v1125
        %v1128 = vadd.f32 %v1122, %v1126
        %v1129 = vadd.f32 %v1123, %v1127
        %v1131 = vsel %vm311, %v1128, 0
        %v1134 = vsel %vm311, %v1129, 0
        %1136 = vmatprep.subr.mxu0 0.0
        %1137 = vmatpush1.msra.mxu0 %v265
        %1138 = vmatprep.subr.mxu0 0.0
        %1139 = vmatpush1.msra.mxu0 %v266
        %1140 = vmatprep.subr.mxu0 0.0
        %1141 = vmatpush1.msra.mxu0 0.0
        %1142 = vmatprep.subr.mxu0 0.0
        %1143 = vmatpush1.msra.mxu0 0.0
        %1144 = vmatprep.subr.mxu0 0.0
        %1145 = vmatpush1.msra.mxu0 0.0
        %1146 = vmatprep.subr.mxu0 0.0
        %1147 = vmatpush1.msra.mxu0 0.0
        %1148 = vmatprep.subr.mxu0 0.0
        %1149 = vmatpush1.msra.mxu0 0.0
        %1150 = vmatprep.subr.mxu0 0.0
        %1151 = vmatpush1.msra.mxu0 0.0
        %1152 = vmatprep.subr.mxu0 0.0
        %1153 = vmatpush1.msra.mxu0 0.0
        %1154 = vmatprep.subr.mxu0 0.0
        %1155 = vmatpush1.msra.mxu0 0.0
        %1156 = vmatprep.subr.mxu0 0.0
        %1157 = vmatpush1.msra.mxu0 0.0
        %1158 = vmatprep.subr.mxu0 0.0
        %1159 = vmatpush1.msra.mxu0 0.0
        %1160 = vmatprep.subr.mxu0 0.0
        %1161 = vmatpush1.msra.mxu0 0.0
        %1162 = vmatprep.subr.mxu0 0.0
        %1163 = vmatpush1.msra.mxu0 0.0
        %1164 = vmatprep.subr.mxu0 0.0
        %1165 = vmatpush1.msra.mxu0 0.0
        %1166 = vmatprep.subr.mxu0 0.0
        %1167 = vmatpush1.msra.mxu0 0.0
        %1168 = vmatprep.subr.mxu0 0.0
        %1169 = vmatpush1.msra.mxu0 0.0
        %1170 = vmatprep.subr.mxu0 0.0
        %1171 = vmatpush1.msra.mxu0 0.0
        %1172 = vmatprep.subr.mxu0 0.0
        %1173 = vmatpush1.msra.mxu0 0.0
        %1174 = vmatprep.subr.mxu0 0.0
        %1175 = vmatpush1.msra.mxu0 0.0
        %1176 = vmatprep.subr.mxu0 0.0
        %1177 = vmatpush1.msra.mxu0 0.0
        %1178 = vmatprep.subr.mxu0 0.0
        %1179 = vmatpush1.msra.mxu0 0.0
        %1180 = vmatprep.subr.mxu0 0.0
        %1181 = vmatpush1.msra.mxu0 0.0
        %1182 = vmatprep.subr.mxu0 0.0
        %1183 = vmatpush1.msra.mxu0 0.0
        %1184 = vmatprep.subr.mxu0 0.0
        %1185 = vmatpush1.msra.mxu0 0.0
        %1186 = vmatprep.subr.mxu0 0.0
        %1187 = vmatpush1.msra.mxu0 0.0
        %1188 = vmatprep.subr.mxu0 0.0
        %1189 = vmatpush1.msra.mxu0 0.0
        %1190 = vmatprep.subr.mxu0 0.0
        %1191 = vmatpush1.msra.mxu0 0.0
        %1192 = vmatprep.subr.mxu0 0.0
        %1193 = vmatpush1.msra.mxu0 0.0
        %1194 = vmatprep.subr.mxu0 0.0
        %1195 = vmatpush1.msra.mxu0 0.0
        %1196 = vmatprep.subr.mxu0 0.0
        %1197 = vmatpush1.msra.mxu0 0.0
        %1198 = vmatprep.subr.mxu0 0.0
        %1199 = vmatpush1.msra.mxu0 0.0
        %1200 = vmatprep.mubr.f32.mxu0 0.0
        %1201 = vmatmul.mubr.f32.gmra.mrb[0].mxu0 %v1131
        %v1202 = vpop.f32.mrb[0].mxu0
        %v1203 = vadd.f32 0.0, %v1202
        %v1204 = vpop.f32.mrb[0].mxu0
        %1205 = vmatprep.mubr.f32.mxu0 0.0
        %1206 = vmatmul.mubr.f32.gmra.mrb[0].mxu0 %v1134
        %v1207 = vpop.f32.mrb[0].mxu0
        %v1208 = vadd.f32 0.0, %v1207
        %v1209 = vpop.f32.mrb[0].mxu0
        %1210 = vdwg.mxu0
        %v1212 = vsel %vm311, %v1106, 0
        %v1215 = vsel %vm311, %v1107, 0
        %1217 = vmatprep.subr.mxu0 0.0
        %1218 = vmatpush1.msra.mxu0 %v257
        %1219 = vmatprep.subr.mxu0 0.0
        %1220 = vmatpush1.msra.mxu0 %v258
        %1221 = vmatprep.subr.mxu0 0.0
        %1222 = vmatpush1.msra.mxu0 0.0
        %1223 = vmatprep.subr.mxu0 0.0
        %1224 = vmatpush1.msra.mxu0 0.0
        %1225 = vmatprep.subr.mxu0 0.0
        %1226 = vmatpush1.msra.mxu0 0.0
        %1227 = vmatprep.subr.mxu0 0.0
        %1228 = vmatpush1.msra.mxu0 0.0
        %1229 = vmatprep.subr.mxu0 0.0
        %1230 = vmatpush1.msra.mxu0 0.0
        %1231 = vmatprep.subr.mxu0 0.0
        %1232 = vmatpush1.msra.mxu0 0.0
        %1233 = vmatprep.subr.mxu0 0.0
        %1234 = vmatpush1.msra.mxu0 0.0
        %1235 = vmatprep.subr.mxu0 0.0
        %1236 = vmatpush1.msra.mxu0 0.0
        %1237 = vmatprep.subr.mxu0 0.0
        %1238 = vmatpush1.msra.mxu0 0.0
        %1239 = vmatprep.subr.mxu0 0.0
        %1240 = vmatpush1.msra.mxu0 0.0
        %1241 = vmatprep.subr.mxu0 0.0
        %1242 = vmatpush1.msra.mxu0 0.0
        %1243 = vmatprep.subr.mxu0 0.0
        %1244 = vmatpush1.msra.mxu0 0.0
        %1245 = vmatprep.subr.mxu0 0.0
        %1246 = vmatpush1.msra.mxu0 0.0
        %1247 = vmatprep.subr.mxu0 0.0
        %1248 = vmatpush1.msra.mxu0 0.0
        %1249 = vmatprep.subr.mxu0 0.0
        %1250 = vmatpush1.msra.mxu0 0.0
        %1251 = vmatprep.subr.mxu0 0.0
        %1252 = vmatpush1.msra.mxu0 0.0
        %1253 = vmatprep.subr.mxu0 0.0
        %1254 = vmatpush1.msra.mxu0 0.0
        %1255 = vmatprep.subr.mxu0 0.0
        %1256 = vmatpush1.msra.mxu0 0.0
        %1257 = vmatprep.subr.mxu0 0.0
        %1258 = vmatpush1.msra.mxu0 0.0
        %1259 = vmatprep.subr.mxu0 0.0
        %1260 = vmatpush1.msra.mxu0 0.0
        %1261 = vmatprep.subr.mxu0 0.0
        %1262 = vmatpush1.msra.mxu0 0.0
        %1263 = vmatprep.subr.mxu0 0.0
        %1264 = vmatpush1.msra.mxu0 0.0
        %1265 = vmatprep.subr.mxu0 0.0
        %1266 = vmatpush1.msra.mxu0 0.0
        %1267 = vmatprep.subr.mxu0 0.0
        %1268 = vmatpush1.msra.mxu0 0.0
        %1269 = vmatprep.subr.mxu0 0.0
        %1270 = vmatpush1.msra.mxu0 0.0
        %1271 = vmatprep.subr.mxu0 0.0
        %1272 = vmatpush1.msra.mxu0 0.0
        %1273 = vmatprep.subr.mxu0 0.0
        %1274 = vmatpush1.msra.mxu0 0.0
        %1275 = vmatprep.subr.mxu0 0.0
        %1276 = vmatpush1.msra.mxu0 0.0
        %1277 = vmatprep.subr.mxu0 0.0
        %1278 = vmatpush1.msra.mxu0 0.0
        %1279 = vmatprep.subr.mxu0 0.0
        %1280 = vmatpush1.msra.mxu0 0.0
        %1281 = vmatprep.mubr.f32.mxu0 0.0
        %1282 = vmatmul.mubr.f32.gmra.mrb[0].mxu0 %v1212
        %v1283 = vpop.f32.mrb[0].mxu0
        %v1284 = vadd.f32 %v1203, %v1283
        %v1285 = vpop.f32.mrb[0].mxu0
        %1286 = vmatprep.mubr.f32.mxu0 0.0
        %1287 = vmatmul.mubr.f32.gmra.mrb[0].mxu0 %v1215
        %v1288 = vpop.f32.mrb[0].mxu0
        %v1289 = vadd.f32 %v1208, %v1288
        %v1290 = vpop.f32.mrb[0].mxu0
        %1291 = vdwg.mxu0
        %1292 = vmatprep.subr.mxu0 0.0
        %1293 = vmatpush1.msra.mxu0 %v1284
        %1294 = vmatprep.subr.mxu0 0.0
        %1295 = vmatpush1.msra.mxu0 %v1289
        %1296 = vmatprep.subr.mxu0 0.0
        %1297 = vmatpush1.msra.mxu0 0.0
        %1298 = vmatprep.subr.mxu0 0.0
        %1299 = vmatpush1.msra.mxu0 0.0
        %1300 = vmatprep.subr.mxu0 0.0
        %1301 = vmatpush1.msra.mxu0 0.0
        %1302 = vmatprep.subr.mxu0 0.0
        %1303 = vmatpush1.msra.mxu0 0.0
        %1304 = vmatprep.subr.mxu0 0.0
        %1305 = vmatpush1.msra.mxu0 0.0
        %1306 = vmatprep.subr.mxu0 0.0
        %1307 = vmatpush1.msra.mxu0 0.0
        %1308 = vmatprep.subr.mxu0 0.0
        %1309 = vmatpush1.msra.mxu0 0.0
        %1310 = vmatprep.subr.mxu0 0.0
        %1311 = vmatpush1.msra.mxu0 0.0
        %1312 = vmatprep.subr.mxu0 0.0
        %1313 = vmatpush1.msra.mxu0 0.0
        %1314 = vmatprep.subr.mxu0 0.0
        %1315 = vmatpush1.msra.mxu0 0.0
        %1316 = vmatprep.subr.mxu0 0.0
        %1317 = vmatpush1.msra.mxu0 0.0
        %1318 = vmatprep.subr.mxu0 0.0
        %1319 = vmatpush1.msra.mxu0 0.0
        %1320 = vmatprep.subr.mxu0 0.0
        %1321 = vmatpush1.msra.mxu0 0.0
        %1322 = vmatprep.subr.mxu0 0.0
        %1323 = vmatpush1.msra.mxu0 0.0
        %1324 = vmatprep.subr.mxu0 0.0
        %1325 = vmatpush1.msra.mxu0 0.0
        %1326 = vmatprep.subr.mxu0 0.0
        %1327 = vmatpush1.msra.mxu0 0.0
        %1328 = vmatprep.subr.mxu0 0.0
        %1329 = vmatpush1.msra.mxu0 0.0
        %1330 = vmatprep.subr.mxu0 0.0
        %1331 = vmatpush1.msra.mxu0 0.0
        %1332 = vmatprep.subr.mxu0 0.0
        %1333 = vmatpush1.msra.mxu0 0.0
        %1334 = vmatprep.subr.mxu0 0.0
        %1335 = vmatpush1.msra.mxu0 0.0
        %1336 = vmatprep.subr.mxu0 0.0
        %1337 = vmatpush1.msra.mxu0 0.0
        %1338 = vmatprep.subr.mxu0 0.0
        %1339 = vmatpush1.msra.mxu0 0.0
        %1340 = vmatprep.subr.mxu0 0.0
        %1341 = vmatpush1.msra.mxu0 0.0
        %1342 = vmatprep.subr.mxu0 0.0
        %1343 = vmatpush1.msra.mxu0 0.0
        %1344 = vmatprep.subr.mxu0 0.0
        %1345 = vmatpush1.msra.mxu0 0.0
        %1346 = vmatprep.subr.mxu0 0.0
        %1347 = vmatpush1.msra.mxu0 0.0
        %1348 = vmatprep.subr.mxu0 0.0
        %1349 = vmatpush1.msra.mxu0 0.0
        %1350 = vmatprep.subr.mxu0 0.0
        %1351 = vmatpush1.msra.mxu0 0.0
        %1352 = vmatprep.subr.mxu0 0.0
        %1353 = vmatpush1.msra.mxu0 0.0
        %1354 = vmatprep.subr.mxu0 0.0
        %1355 = vmatpush1.msra.mxu0 0.0
        %1356 = vmatprep.mubr.f32.mxu0 0.0
        %1357 = vmatmul.mubr.f32.gmra.mrb[0].mxu0 %v681
        %v1358 = vpop.f32.mrb[0].mxu0
        %v1359 = vadd.f32 0.0, %v1358
        %v1360 = vpop.f32.mrb[0].mxu0
        %1361 = vmatprep.mubr.f32.mxu0 0.0
        %1362 = vmatmul.mubr.f32.gmra.mrb[0].mxu0 %v684
        %v1363 = vpop.f32.mrb[0].mxu0
        %v1364 = vadd.f32 0.0, %v1363
        %v1365 = vpop.f32.mrb[0].mxu0
        %1366 = vmatprep.mubr.f32.mxu0 0.0
        %1367 = vmatmul.mubr.f32.gmra.mrb[0].mxu0 %v687
        %v1368 = vpop.f32.mrb[0].mxu0
        %v1369 = vadd.f32 0.0, %v1368
        %v1370 = vpop.f32.mrb[0].mxu0
        %1371 = vmatprep.mubr.f32.mxu0 0.0
        %1372 = vmatmul.mubr.f32.gmra.mrb[0].mxu0 %v690
        %v1373 = vpop.f32.mrb[0].mxu0
        %v1374 = vadd.f32 0.0, %v1373
        %v1375 = vpop.f32.mrb[0].mxu0
        %1376 = vdwg.mxu0
        %1377 = vmatprep.subr.mxu0 0.0
        %1378 = vmatpush1.msra.mxu0 %v1078
        %1379 = vmatprep.subr.mxu0 0.0
        %1380 = vmatpush1.msra.mxu0 %v1083
        %1381 = vmatprep.subr.mxu0 0.0
        %1382 = vmatpush1.msra.mxu0 0.0
        %1383 = vmatprep.subr.mxu0 0.0
        %1384 = vmatpush1.msra.mxu0 0.0
        %1385 = vmatprep.subr.mxu0 0.0
        %1386 = vmatpush1.msra.mxu0 0.0
        %1387 = vmatprep.subr.mxu0 0.0
        %1388 = vmatpush1.msra.mxu0 0.0
        %1389 = vmatprep.subr.mxu0 0.0
        %1390 = vmatpush1.msra.mxu0 0.0
        %1391 = vmatprep.subr.mxu0 0.0
        %1392 = vmatpush1.msra.mxu0 0.0
        %1393 = vmatprep.subr.mxu0 0.0
        %1394 = vmatpush1.msra.mxu0 0.0
        %1395 = vmatprep.subr.mxu0 0.0
        %1396 = vmatpush1.msra.mxu0 0.0
        %1397 = vmatprep.subr.mxu0 0.0
        %1398 = vmatpush1.msra.mxu0 0.0
        %1399 = vmatprep.subr.mxu0 0.0
        %1400 = vmatpush1.msra.mxu0 0.0
        %1401 = vmatprep.subr.mxu0 0.0
        %1402 = vmatpush1.msra.mxu0 0.0
        %1403 = vmatprep.subr.mxu0 0.0
        %1404 = vmatpush1.msra.mxu0 0.0
        %1405 = vmatprep.subr.mxu0 0.0
        %1406 = vmatpush1.msra.mxu0 0.0
        %1407 = vmatprep.subr.mxu0 0.0
        %1408 = vmatpush1.msra.mxu0 0.0
        %1409 = vmatprep.subr.mxu0 0.0
        %1410 = vmatpush1.msra.mxu0 0.0
        %1411 = vmatprep.subr.mxu0 0.0
        %1412 = vmatpush1.msra.mxu0 0.0
        %1413 = vmatprep.subr.mxu0 0.0
        %1414 = vmatpush1.msra.mxu0 0.0
        %1415 = vmatprep.subr.mxu0 0.0
        %1416 = vmatpush1.msra.mxu0 0.0
        %1417 = vmatprep.subr.mxu0 0.0
        %1418 = vmatpush1.msra.mxu0 0.0
        %1419 = vmatprep.subr.mxu0 0.0
        %1420 = vmatpush1.msra.mxu0 0.0
        %1421 = vmatprep.subr.mxu0 0.0
        %1422 = vmatpush1.msra.mxu0 0.0
        %1423 = vmatprep.subr.mxu0 0.0
        %1424 = vmatpush1.msra.mxu0 0.0
        %1425 = vmatprep.subr.mxu0 0.0
        %1426 = vmatpush1.msra.mxu0 0.0
        %1427 = vmatprep.subr.mxu0 0.0
        %1428 = vmatpush1.msra.mxu0 0.0
        %1429 = vmatprep.subr.mxu0 0.0
        %1430 = vmatpush1.msra.mxu0 0.0
        %1431 = vmatprep.subr.mxu0 0.0
        %1432 = vmatpush1.msra.mxu0 0.0
        %1433 = vmatprep.subr.mxu0 0.0
        %1434 = vmatpush1.msra.mxu0 0.0
        %1435 = vmatprep.subr.mxu0 0.0
        %1436 = vmatpush1.msra.mxu0 0.0
        %1437 = vmatprep.subr.mxu0 0.0
        %1438 = vmatpush1.msra.mxu0 0.0
        %1439 = vmatprep.subr.mxu0 0.0
        %1440 = vmatpush1.msra.mxu0 0.0
        %1441 = vmatprep.mubr.f32.mxu0 0.0
        %1442 = vmatmul.mubr.f32.gmra.mrb[0].mxu0 %v778
        %v1443 = vpop.f32.mrb[0].mxu0
        %v1444 = vadd.f32 %v1359, %v1443
        %v1445 = vpop.f32.mrb[0].mxu0
        %1446 = vmatprep.mubr.f32.mxu0 0.0
        %1447 = vmatmul.mubr.f32.gmra.mrb[0].mxu0 %v781
        %v1448 = vpop.f32.mrb[0].mxu0
        %v1449 = vadd.f32 %v1364, %v1448
        %v1450 = vpop.f32.mrb[0].mxu0
        %1451 = vmatprep.mubr.f32.mxu0 0.0
        %1452 = vmatmul.mubr.f32.gmra.mrb[0].mxu0 %v784
        %v1453 = vpop.f32.mrb[0].mxu0
        %v1454 = vadd.f32 %v1369, %v1453
        %v1455 = vpop.f32.mrb[0].mxu0
        %1456 = vmatprep.mubr.f32.mxu0 0.0
        %1457 = vmatmul.mubr.f32.gmra.mrb[0].mxu0 %v787
        %v1458 = vpop.f32.mrb[0].mxu0
        %v1459 = vadd.f32 %v1374, %v1458
        %v1460 = vpop.f32.mrb[0].mxu0
        %1461 = vdwg.mxu0
        %s1462 = sld [smem:[#allocation3 + $0x21]]
        %v1463 = vstv %s1462
        %v1464 = vadd.f32 %v1444, %v1463
        %v1465 = vadd.f32 %v1449, %v1463
        %v1466 = vadd.f32 %v1454, %v1463
        %v1467 = vadd.f32 %v1459, %v1463
        %vm1468 = vcmask 261120
        %v1470 = vsel %vm1468, %v876, 0
        %v1473 = vsel %vm1468, %v877, 0
        %v1476 = vsel %vm1468, %v878, 0
        %v1479 = vsel %vm1468, %v879, 0
        %1481 = vmatprep.subr.mxu0 0.0
        %1482 = vmatpush1.msra.mxu0 %v210
        %1483 = vmatprep.subr.mxu0 0.0
        %1484 = vmatpush1.msra.mxu0 %v211
        %1485 = vmatprep.subr.mxu0 0.0
        %1486 = vmatpush1.msra.mxu0 %v212
        %1487 = vmatprep.subr.mxu0 0.0
        %1488 = vmatpush1.msra.mxu0 %v213
        %1489 = vmatprep.subr.mxu0 0.0
        %1490 = vmatpush1.msra.mxu0 0.0
        %1491 = vmatprep.subr.mxu0 0.0
        %1492 = vmatpush1.msra.mxu0 0.0
        %1493 = vmatprep.subr.mxu0 0.0
        %1494 = vmatpush1.msra.mxu0 0.0
        %1495 = vmatprep.subr.mxu0 0.0
        %1496 = vmatpush1.msra.mxu0 0.0
        %1497 = vmatprep.subr.mxu0 0.0
        %1498 = vmatpush1.msra.mxu0 0.0
        %1499 = vmatprep.subr.mxu0 0.0
        %1500 = vmatpush1.msra.mxu0 0.0
        %1501 = vmatprep.subr.mxu0 0.0
        %1502 = vmatpush1.msra.mxu0 0.0
        %1503 = vmatprep.subr.mxu0 0.0
        %1504 = vmatpush1.msra.mxu0 0.0
        %1505 = vmatprep.subr.mxu0 0.0
        %1506 = vmatpush1.msra.mxu0 0.0
        %1507 = vmatprep.subr.mxu0 0.0
        %1508 = vmatpush1.msra.mxu0 0.0
        %1509 = vmatprep.subr.mxu0 0.0
        %1510 = vmatpush1.msra.mxu0 0.0
        %1511 = vmatprep.subr.mxu0 0.0
        %1512 = vmatpush1.msra.mxu0 0.0
        %1513 = vmatprep.subr.mxu0 0.0
        %1514 = vmatpush1.msra.mxu0 0.0
        %1515 = vmatprep.subr.mxu0 0.0
        %1516 = vmatpush1.msra.mxu0 0.0
        %1517 = vmatprep.subr.mxu0 0.0
        %1518 = vmatpush1.msra.mxu0 0.0
        %1519 = vmatprep.subr.mxu0 0.0
        %1520 = vmatpush1.msra.mxu0 0.0
        %1521 = vmatprep.subr.mxu0 0.0
        %1522 = vmatpush1.msra.mxu0 0.0
        %1523 = vmatprep.subr.mxu0 0.0
        %1524 = vmatpush1.msra.mxu0 0.0
        %1525 = vmatprep.subr.mxu0 0.0
        %1526 = vmatpush1.msra.mxu0 0.0
        %1527 = vmatprep.subr.mxu0 0.0
        %1528 = vmatpush1.msra.mxu0 0.0
        %1529 = vmatprep.subr.mxu0 0.0
        %1530 = vmatpush1.msra.mxu0 0.0
        %1531 = vmatprep.subr.mxu0 0.0
        %1532 = vmatpush1.msra.mxu0 0.0
        %1533 = vmatprep.subr.mxu0 0.0
        %1534 = vmatpush1.msra.mxu0 0.0
        %1535 = vmatprep.subr.mxu0 0.0
        %1536 = vmatpush1.msra.mxu0 0.0
        %1537 = vmatprep.subr.mxu0 0.0
        %1538 = vmatpush1.msra.mxu0 0.0
        %1539 = vmatprep.subr.mxu0 0.0
        %1540 = vmatpush1.msra.mxu0 0.0
        %1541 = vmatprep.subr.mxu0 0.0
        %1542 = vmatpush1.msra.mxu0 0.0
        %1543 = vmatprep.subr.mxu0 0.0
        %1544 = vmatpush1.msra.mxu0 0.0
        %1545 = vmatprep.mubr.f32.mxu0 0.0
        %1546 = vmatmul.mubr.f32.gmra.mrb[0].mxu0 %v1470
        %v1547 = vpop.f32.mrb[0].mxu0
        %v1548 = vadd.f32 0.0, %v1547
        %v1549 = vpop.f32.mrb[0].mxu0
        %1550 = vmatprep.mubr.f32.mxu0 0.0
        %1551 = vmatmul.mubr.f32.gmra.mrb[0].mxu0 %v1473
        %v1552 = vpop.f32.mrb[0].mxu0
        %v1553 = vadd.f32 0.0, %v1552
        %v1554 = vpop.f32.mrb[0].mxu0
        %1555 = vmatprep.mubr.f32.mxu0 0.0
        %1556 = vmatmul.mubr.f32.gmra.mrb[0].mxu0 %v1476
        %v1557 = vpop.f32.mrb[0].mxu0
        %v1558 = vadd.f32 0.0, %v1557
        %v1559 = vpop.f32.mrb[0].mxu0
        %1560 = vmatprep.mubr.f32.mxu0 0.0
        %1561 = vmatmul.mubr.f32.gmra.mrb[0].mxu0 %v1479
        %v1562 = vpop.f32.mrb[0].mxu0
        %v1563 = vadd.f32 0.0, %v1562
        %v1564 = vpop.f32.mrb[0].mxu0
        %1565 = vdwg.mxu0
        %v1567 = vsel %vm1468, %v193, 0
        %v1570 = vsel %vm1468, %v194, 0
        %v1573 = vsel %vm1468, %v195, 0
        %v1576 = vsel %vm1468, %v196, 0
        %v1579 = vsel %vm1468, %v197, 0
        %1581 = vmatprep.subr.mxu0 0.0
        %1582 = vmatpush1.msra.mxu0 %v1548
        %1583 = vmatprep.subr.mxu0 0.0
        %1584 = vmatpush1.msra.mxu0 %v1553
        %1585 = vmatprep.subr.mxu0 0.0
        %1586 = vmatpush1.msra.mxu0 %v1558
        %1587 = vmatprep.subr.mxu0 0.0
        %1588 = vmatpush1.msra.mxu0 %v1563
        %1589 = vmatprep.subr.mxu0 0.0
        %1590 = vmatpush1.msra.mxu0 0.0
        %1591 = vmatprep.subr.mxu0 0.0
        %1592 = vmatpush1.msra.mxu0 0.0
        %1593 = vmatprep.subr.mxu0 0.0
        %1594 = vmatpush1.msra.mxu0 0.0
        %1595 = vmatprep.subr.mxu0 0.0
        %1596 = vmatpush1.msra.mxu0 0.0
        %1597 = vmatprep.subr.mxu0 0.0
        %1598 = vmatpush1.msra.mxu0 0.0
        %1599 = vmatprep.subr.mxu0 0.0
        %1600 = vmatpush1.msra.mxu0 0.0
        %1601 = vmatprep.subr.mxu0 0.0
        %1602 = vmatpush1.msra.mxu0 0.0
        %1603 = vmatprep.subr.mxu0 0.0
        %1604 = vmatpush1.msra.mxu0 0.0
        %1605 = vmatprep.subr.mxu0 0.0
        %1606 = vmatpush1.msra.mxu0 0.0
        %1607 = vmatprep.subr.mxu0 0.0
        %1608 = vmatpush1.msra.mxu0 0.0
        %1609 = vmatprep.subr.mxu0 0.0
        %1610 = vmatpush1.msra.mxu0 0.0
        %1611 = vmatprep.subr.mxu0 0.0
        %1612 = vmatpush1.msra.mxu0 0.0
        %1613 = vmatprep.subr.mxu0 0.0
        %1614 = vmatpush1.msra.mxu0 0.0
        %1615 = vmatprep.subr.mxu0 0.0
        %1616 = vmatpush1.msra.mxu0 0.0
        %1617 = vmatprep.subr.mxu0 0.0
        %1618 = vmatpush1.msra.mxu0 0.0
        %1619 = vmatprep.subr.mxu0 0.0
        %1620 = vmatpush1.msra.mxu0 0.0
        %1621 = vmatprep.subr.mxu0 0.0
        %1622 = vmatpush1.msra.mxu0 0.0
        %1623 = vmatprep.subr.mxu0 0.0
        %1624 = vmatpush1.msra.mxu0 0.0
        %1625 = vmatprep.subr.mxu0 0.0
        %1626 = vmatpush1.msra.mxu0 0.0
        %1627 = vmatprep.subr.mxu0 0.0
        %1628 = vmatpush1.msra.mxu0 0.0
        %1629 = vmatprep.subr.mxu0 0.0
        %1630 = vmatpush1.msra.mxu0 0.0
        %1631 = vmatprep.subr.mxu0 0.0
        %1632 = vmatpush1.msra.mxu0 0.0
        %1633 = vmatprep.subr.mxu0 0.0
        %1634 = vmatpush1.msra.mxu0 0.0
        %1635 = vmatprep.subr.mxu0 0.0
        %1636 = vmatpush1.msra.mxu0 0.0
        %1637 = vmatprep.subr.mxu0 0.0
        %1638 = vmatpush1.msra.mxu0 0.0
        %1639 = vmatprep.subr.mxu0 0.0
        %1640 = vmatpush1.msra.mxu0 0.0
        %1641 = vmatprep.subr.mxu0 0.0
        %1642 = vmatpush1.msra.mxu0 0.0
        %1643 = vmatprep.subr.mxu0 0.0
        %1644 = vmatpush1.msra.mxu0 0.0
        %1645 = vmatprep.mubr.f32.mxu0 0.0
        %1646 = vmatmul.mubr.f32.gmra.mrb[0].mxu0 %v1567
        %v1647 = vpop.f32.mrb[0].mxu0
        %v1648 = vadd.f32 0.0, %v1647
        %v1649 = vpop.f32.mrb[0].mxu0
        %1650 = vmatprep.mubr.f32.mxu0 0.0
        %1651 = vmatmul.mubr.f32.gmra.mrb[0].mxu0 %v1570
        %v1652 = vpop.f32.mrb[0].mxu0
        %v1653 = vadd.f32 0.0, %v1652
        %v1654 = vpop.f32.mrb[0].mxu0
        %1655 = vmatprep.mubr.f32.mxu0 0.0
        %1656 = vmatmul.mubr.f32.gmra.mrb[0].mxu0 %v1573
        %v1657 = vpop.f32.mrb[0].mxu0
        %v1658 = vadd.f32 0.0, %v1657
        %v1659 = vpop.f32.mrb[0].mxu0
        %1660 = vmatprep.mubr.f32.mxu0 0.0
        %1661 = vmatmul.mubr.f32.gmra.mrb[0].mxu0 %v1576
        %v1662 = vpop.f32.mrb[0].mxu0
        %v1663 = vadd.f32 0.0, %v1662
        %v1664 = vpop.f32.mrb[0].mxu0
        %1665 = vmatprep.mubr.f32.mxu0 0.0
        %1666 = vmatmul.mubr.f32.gmra.mrb[0].mxu0 %v1579
        %v1667 = vpop.f32.mrb[0].mxu0
        %v1668 = vadd.f32 0.0, %v1667
        %v1669 = vpop.f32.mrb[0].mxu0
        %1670 = vdwg.mxu0
        %vm1671 = vcmask 277504
        %1672 = vst.msk [vmem:[#allocation2] sm:$0xff] %vm1671, %v1648
        %1673 = vst.msk [vmem:[#allocation2 + $0x8] sm:$0xff] %vm1671, %v1653
        %1674 = vst.msk [vmem:[#allocation2 + $0x10] sm:$0xff] %vm1671, %v1658
        %1675 = vst.msk [vmem:[#allocation2 + $0x18] sm:$0xff] %vm1671, %v1663
        %vm1676 = vcmask 271360
        %1677 = vst.msk [vmem:[#allocation2 + $0x20] sm:$0x3] %vm1676, %v1668
        %v1679 = vsel %vm1468, %v1464, 0
        %v1682 = vsel %vm1468, %v1465, 0
        %v1685 = vsel %vm1468, %v1466, 0
        %v1688 = vsel %vm1468, %v1467, 0
        %1690 = vmatprep.subr.mxu0 0.0
        %1691 = vmatpush1.msra.mxu0 %v210
        %1692 = vmatprep.subr.mxu0 0.0
        %1693 = vmatpush1.msra.mxu0 %v211
        %1694 = vmatprep.subr.mxu0 0.0
        %1695 = vmatpush1.msra.mxu0 %v212
        %1696 = vmatprep.subr.mxu0 0.0
        %1697 = vmatpush1.msra.mxu0 %v213
        %1698 = vmatprep.subr.mxu0 0.0
        %1699 = vmatpush1.msra.mxu0 0.0
        %1700 = vmatprep.subr.mxu0 0.0
        %1701 = vmatpush1.msra.mxu0 0.0
        %1702 = vmatprep.subr.mxu0 0.0
        %1703 = vmatpush1.msra.mxu0 0.0
        %1704 = vmatprep.subr.mxu0 0.0
        %1705 = vmatpush1.msra.mxu0 0.0
        %1706 = vmatprep.subr.mxu0 0.0
        %1707 = vmatpush1.msra.mxu0 0.0
        %1708 = vmatprep.subr.mxu0 0.0
        %1709 = vmatpush1.msra.mxu0 0.0
        %1710 = vmatprep.subr.mxu0 0.0
        %1711 = vmatpush1.msra.mxu0 0.0
        %1712 = vmatprep.subr.mxu0 0.0
        %1713 = vmatpush1.msra.mxu0 0.0
        %1714 = vmatprep.subr.mxu0 0.0
        %1715 = vmatpush1.msra.mxu0 0.0
        %1716 = vmatprep.subr.mxu0 0.0
        %1717 = vmatpush1.msra.mxu0 0.0
        %1718 = vmatprep.subr.mxu0 0.0
        %1719 = vmatpush1.msra.mxu0 0.0
        %1720 = vmatprep.subr.mxu0 0.0
        %1721 = vmatpush1.msra.mxu0 0.0
        %1722 = vmatprep.subr.mxu0 0.0
        %1723 = vmatpush1.msra.mxu0 0.0
        %1724 = vmatprep.subr.mxu0 0.0
        %1725 = vmatpush1.msra.mxu0 0.0
        %1726 = vmatprep.subr.mxu0 0.0
        %1727 = vmatpush1.msra.mxu0 0.0
        %1728 = vmatprep.subr.mxu0 0.0
        %1729 = vmatpush1.msra.mxu0 0.0
        %1730 = vmatprep.subr.mxu0 0.0
        %1731 = vmatpush1.msra.mxu0 0.0
        %1732 = vmatprep.subr.mxu0 0.0
        %1733 = vmatpush1.msra.mxu0 0.0
        %1734 = vmatprep.subr.mxu0 0.0
        %1735 = vmatpush1.msra.mxu0 0.0
        %1736 = vmatprep.subr.mxu0 0.0
        %1737 = vmatpush1.msra.mxu0 0.0
        %1738 = vmatprep.subr.mxu0 0.0
        %1739 = vmatpush1.msra.mxu0 0.0
        %1740 = vmatprep.subr.mxu0 0.0
        %1741 = vmatpush1.msra.mxu0 0.0
        %1742 = vmatprep.subr.mxu0 0.0
        %1743 = vmatpush1.msra.mxu0 0.0
        %1744 = vmatprep.subr.mxu0 0.0
        %1745 = vmatpush1.msra.mxu0 0.0
        %1746 = vmatprep.subr.mxu0 0.0
        %1747 = vmatpush1.msra.mxu0 0.0
        %1748 = vmatprep.subr.mxu0 0.0
        %1749 = vmatpush1.msra.mxu0 0.0
        %1750 = vmatprep.subr.mxu0 0.0
        %1751 = vmatpush1.msra.mxu0 0.0
        %1752 = vmatprep.subr.mxu0 0.0
        %1753 = vmatpush1.msra.mxu0 0.0
        %1754 = vmatprep.mubr.f32.mxu0 0.0
        %1755 = vmatmul.mubr.f32.gmra.mrb[0].mxu0 %v1679
        %v1756 = vpop.f32.mrb[0].mxu0
        %v1757 = vadd.f32 0.0, %v1756
        %v1758 = vpop.f32.mrb[0].mxu0
        %1759 = vmatprep.mubr.f32.mxu0 0.0
        %1760 = vmatmul.mubr.f32.gmra.mrb[0].mxu0 %v1682
        %v1761 = vpop.f32.mrb[0].mxu0
        %v1762 = vadd.f32 0.0, %v1761
        %v1763 = vpop.f32.mrb[0].mxu0
        %1764 = vmatprep.mubr.f32.mxu0 0.0
        %1765 = vmatmul.mubr.f32.gmra.mrb[0].mxu0 %v1685
        %v1766 = vpop.f32.mrb[0].mxu0
        %v1767 = vadd.f32 0.0, %v1766
        %v1768 = vpop.f32.mrb[0].mxu0
        %1769 = vmatprep.mubr.f32.mxu0 0.0
        %1770 = vmatmul.mubr.f32.gmra.mrb[0].mxu0 %v1688
        %v1771 = vpop.f32.mrb[0].mxu0
        %v1772 = vadd.f32 0.0, %v1771
        %v1773 = vpop.f32.mrb[0].mxu0
        %1774 = vdwg.mxu0
        %1775 = vmatprep.subr.mxu0 0.0
        %1776 = vmatpush1.msra.mxu0 %v1757
        %1777 = vmatprep.subr.mxu0 0.0
        %1778 = vmatpush1.msra.mxu0 %v1762
        %1779 = vmatprep.subr.mxu0 0.0
        %1780 = vmatpush1.msra.mxu0 %v1767
        %1781 = vmatprep.subr.mxu0 0.0
        %1782 = vmatpush1.msra.mxu0 %v1772
        %1783 = vmatprep.subr.mxu0 0.0
        %1784 = vmatpush1.msra.mxu0 0.0
        %1785 = vmatprep.subr.mxu0 0.0
        %1786 = vmatpush1.msra.mxu0 0.0
        %1787 = vmatprep.subr.mxu0 0.0
        %1788 = vmatpush1.msra.mxu0 0.0
        %1789 = vmatprep.subr.mxu0 0.0
        %1790 = vmatpush1.msra.mxu0 0.0
        %1791 = vmatprep.subr.mxu0 0.0
        %1792 = vmatpush1.msra.mxu0 0.0
        %1793 = vmatprep.subr.mxu0 0.0
        %1794 = vmatpush1.msra.mxu0 0.0
        %1795 = vmatprep.subr.mxu0 0.0
        %1796 = vmatpush1.msra.mxu0 0.0
        %1797 = vmatprep.subr.mxu0 0.0
        %1798 = vmatpush1.msra.mxu0 0.0
        %1799 = vmatprep.subr.mxu0 0.0
        %1800 = vmatpush1.msra.mxu0 0.0
        %1801 = vmatprep.subr.mxu0 0.0
        %1802 = vmatpush1.msra.mxu0 0.0
        %1803 = vmatprep.subr.mxu0 0.0
        %1804 = vmatpush1.msra.mxu0 0.0
        %1805 = vmatprep.subr.mxu0 0.0
        %1806 = vmatpush1.msra.mxu0 0.0
        %1807 = vmatprep.subr.mxu0 0.0
        %1808 = vmatpush1.msra.mxu0 0.0
        %1809 = vmatprep.subr.mxu0 0.0
        %1810 = vmatpush1.msra.mxu0 0.0
        %1811 = vmatprep.subr.mxu0 0.0
        %1812 = vmatpush1.msra.mxu0 0.0
        %1813 = vmatprep.subr.mxu0 0.0
        %1814 = vmatpush1.msra.mxu0 0.0
        %1815 = vmatprep.subr.mxu0 0.0
        %1816 = vmatpush1.msra.mxu0 0.0
        %1817 = vmatprep.subr.mxu0 0.0
        %1818 = vmatpush1.msra.mxu0 0.0
        %1819 = vmatprep.subr.mxu0 0.0
        %1820 = vmatpush1.msra.mxu0 0.0
        %1821 = vmatprep.subr.mxu0 0.0
        %1822 = vmatpush1.msra.mxu0 0.0
        %1823 = vmatprep.subr.mxu0 0.0
        %1824 = vmatpush1.msra.mxu0 0.0
        %1825 = vmatprep.subr.mxu0 0.0
        %1826 = vmatpush1.msra.mxu0 0.0
        %1827 = vmatprep.subr.mxu0 0.0
        %1828 = vmatpush1.msra.mxu0 0.0
        %1829 = vmatprep.subr.mxu0 0.0
        %1830 = vmatpush1.msra.mxu0 0.0
        %1831 = vmatprep.subr.mxu0 0.0
        %1832 = vmatpush1.msra.mxu0 0.0
        %1833 = vmatprep.subr.mxu0 0.0
        %1834 = vmatpush1.msra.mxu0 0.0
        %1835 = vmatprep.subr.mxu0 0.0
        %1836 = vmatpush1.msra.mxu0 0.0
        %1837 = vmatprep.subr.mxu0 0.0
        %1838 = vmatpush1.msra.mxu0 0.0
        %1839 = vmatprep.mubr.f32.mxu0 0.0
        %1840 = vmatmul.mubr.f32.gmra.mrb[0].mxu0 %v1567
        %v1841 = vpop.f32.mrb[0].mxu0
        %v1842 = vadd.f32 0.0, %v1841
        %v1843 = vpop.f32.mrb[0].mxu0
        %1844 = vmatprep.mubr.f32.mxu0 0.0
        %1845 = vmatmul.mubr.f32.gmra.mrb[0].mxu0 %v1570
        %v1846 = vpop.f32.mrb[0].mxu0
        %v1847 = vadd.f32 0.0, %v1846
        %v1848 = vpop.f32.mrb[0].mxu0
        %1849 = vmatprep.mubr.f32.mxu0 0.0
        %1850 = vmatmul.mubr.f32.gmra.mrb[0].mxu0 %v1573
        %v1851 = vpop.f32.mrb[0].mxu0
        %v1852 = vadd.f32 0.0, %v1851
        %v1853 = vpop.f32.mrb[0].mxu0
        %1854 = vmatprep.mubr.f32.mxu0 0.0
        %1855 = vmatmul.mubr.f32.gmra.mrb[0].mxu0 %v1576
        %v1856 = vpop.f32.mrb[0].mxu0
        %v1857 = vadd.f32 0.0, %v1856
        %v1858 = vpop.f32.mrb[0].mxu0
        %1859 = vmatprep.mubr.f32.mxu0 0.0
        %1860 = vmatmul.mubr.f32.gmra.mrb[0].mxu0 %v1579
        %v1861 = vpop.f32.mrb[0].mxu0
        %v1862 = vadd.f32 0.0, %v1861
        %v1863 = vpop.f32.mrb[0].mxu0
        %1864 = vdwg.mxu0
        %s1865 = scalar_lea.vmem [#allocation2], 40
        %1866 = vst.msk [vmem:[%s1865] sm:$0xff] %vm1671, %v1842
        %1867 = vst.msk [vmem:[%s1865 + $0x8] sm:$0xff] %vm1671, %v1847
        %1868 = vst.msk [vmem:[%s1865 + $0x10] sm:$0xff] %vm1671, %v1852
        %1869 = vst.msk [vmem:[%s1865 + $0x18] sm:$0xff] %vm1671, %v1857
        %1870 = vst.msk [vmem:[%s1865 + $0x20] sm:$0x3] %vm1676, %v1862
        %s1871 = sld [smem:[#allocation3 + $0x6a]]
        %v1872 = vstv %s1871
        %s1873 = sld [smem:[#allocation3 + $0x6b]]
        %v1874 = vstv %s1873
        %s1875 = sld [smem:[#allocation3 + $0x6c]]
        %v1876 = vstv %s1875
        %s1877 = sld [smem:[#allocation3 + $0x6d]]
        %v1878 = vstv %s1877
        %v1879 = vld [vmem:[#allocation2] sm:$0xff]
        %v1880 = vld [vmem:[#allocation2 + $0x8] sm:$0xff]
        %v1881 = vld [vmem:[#allocation2 + $0x10] sm:$0xff]
        %v1882 = vld [vmem:[#allocation2 + $0x18] sm:$0xff]
        %s1883 = sld [smem:[#allocation3 + $0x22]]
        %v1884 = vstv %s1883
        %v1885 = vmul.f32 %v1879, %v1884
        %v1886 = vmul.f32 %v1880, %v1884
        %v1887 = vmul.f32 %v1881, %v1884
        %v1888 = vmul.f32 %v1882, %v1884
        %v1889 = vadd.f32 %v1872, %v1885
        %v1890 = vadd.f32 %v1872, %v1886
        %v1891 = vadd.f32 %v1872, %v1887
        %v1892 = vadd.f32 %v1872, %v1888
        %s1893 = sld [smem:[#allocation3 + $0x23]]
        %v1894 = vstv %s1893
        %v1895 = vmul.f32 %v1879, %v1894
        %v1896 = vmul.f32 %v1880, %v1894
        %v1897 = vmul.f32 %v1881, %v1894
        %v1898 = vmul.f32 %v1882, %v1894
        %v1899 = vadd.f32 %v1874, %v1895
        %v1900 = vadd.f32 %v1874, %v1896
        %v1901 = vadd.f32 %v1874, %v1897
        %v1902 = vadd.f32 %v1874, %v1898
        %s1903 = sld [smem:[#allocation3 + $0x24]]
        %v1904 = vstv %s1903
        %v1905 = vmul.f32 %v1879, %v1904
        %v1906 = vmul.f32 %v1880, %v1904
        %v1907 = vmul.f32 %v1881, %v1904
        %v1908 = vmul.f32 %v1882, %v1904
        %v1909 = vadd.f32 %v1876, %v1905
        %v1910 = vadd.f32 %v1876, %v1906
        %v1911 = vadd.f32 %v1876, %v1907
        %v1912 = vadd.f32 %v1876, %v1908
        %s1913 = sld [smem:[#allocation3 + $0x25]]
        %v1914 = vstv %s1913
        %v1915 = vmul.f32 %v1879, %v1914
        %v1916 = vmul.f32 %v1880, %v1914
        %v1917 = vmul.f32 %v1881, %v1914
        %v1918 = vmul.f32 %v1882, %v1914
        %v1919 = vadd.f32 %v1878, %v1915
        %v1920 = vadd.f32 %v1878, %v1916
        %v1921 = vadd.f32 %v1878, %v1917
        %v1922 = vadd.f32 %v1878, %v1918
        %s1923 = sld [smem:[#allocation3 + $0x2a]]
        %v1924 = vstv %s1923
        %v1925 = vmul.f32 %v1879, %v1924
        %v1926 = vmul.f32 %v1880, %v1924
        %v1927 = vmul.f32 %v1881, %v1924
        %v1928 = vmul.f32 %v1882, %v1924
        %1933 = vrot.lane.b32.xlu0 %v1925, 127
        %v1934 = vpop.permute.xlu0 %1933
        %1935 = vrot.lane.b32.xlu0 %v1926, 127
        %v1936 = vpop.permute.xlu0 %1935
        %1937 = vrot.lane.b32.xlu0 %v1927, 127
        %v1938 = vpop.permute.xlu0 %1937
        %1939 = vrot.lane.b32.xlu0 %v1928, 127
        %v1940 = vpop.permute.xlu0 %1939
        %v1945 = vadd.f32 %v1889, %v1934
        %v1946 = vadd.f32 %v1890, %v1936
        %v1947 = vadd.f32 %v1891, %v1938
        %v1948 = vadd.f32 %v1892, %v1940
        %s1949 = sld [smem:[#allocation3 + $0x2b]]
        %v1950 = vstv %s1949
        %v1951 = vmul.f32 %v1879, %v1950
        %v1952 = vmul.f32 %v1880, %v1950
        %v1953 = vmul.f32 %v1881, %v1950
        %v1954 = vmul.f32 %v1882, %v1950
        %1959 = vrot.lane.b32.xlu0 %v1951, 127
        %v1960 = vpop.permute.xlu0 %1959
        %1961 = vrot.lane.b32.xlu0 %v1952, 127
        %v1962 = vpop.permute.xlu0 %1961
        %1963 = vrot.lane.b32.xlu0 %v1953, 127
        %v1964 = vpop.permute.xlu0 %1963
        %1965 = vrot.lane.b32.xlu0 %v1954, 127
        %v1966 = vpop.permute.xlu0 %1965
        %v1971 = vadd.f32 %v1899, %v1960
        %v1972 = vadd.f32 %v1900, %v1962
        %v1973 = vadd.f32 %v1901, %v1964
        %v1974 = vadd.f32 %v1902, %v1966
        %s1975 = sld [smem:[#allocation3 + $0x2c]]
        %v1976 = vstv %s1975
        %v1977 = vmul.f32 %v1879, %v1976
        %v1978 = vmul.f32 %v1880, %v1976
        %v1979 = vmul.f32 %v1881, %v1976
        %v1980 = vmul.f32 %v1882, %v1976
        %1985 = vrot.lane.b32.xlu0 %v1977, 127
        %v1986 = vpop.permute.xlu0 %1985
        %1987 = vrot.lane.b32.xlu0 %v1978, 127
        %v1988 = vpop.permute.xlu0 %1987
        %1989 = vrot.lane.b32.xlu0 %v1979, 127
        %v1990 = vpop.permute.xlu0 %1989
        %1991 = vrot.lane.b32.xlu0 %v1980, 127
        %v1992 = vpop.permute.xlu0 %1991
        %v1997 = vadd.f32 %v1909, %v1986
        %v1998 = vadd.f32 %v1910, %v1988
        %v1999 = vadd.f32 %v1911, %v1990
        %v2000 = vadd.f32 %v1912, %v1992
        %s2001 = sld [smem:[#allocation3 + $0x2d]]
        %v2002 = vstv %s2001
        %v2003 = vmul.f32 %v1879, %v2002
        %v2004 = vmul.f32 %v1880, %v2002
        %v2005 = vmul.f32 %v1881, %v2002
        %v2006 = vmul.f32 %v1882, %v2002
        %2011 = vrot.lane.b32.xlu0 %v2003, 127
        %v2012 = vpop.permute.xlu0 %2011
        %2013 = vrot.lane.b32.xlu0 %v2004, 127
        %v2014 = vpop.permute.xlu0 %2013
        %2015 = vrot.lane.b32.xlu0 %v2005, 127
        %v2016 = vpop.permute.xlu0 %2015
        %2017 = vrot.lane.b32.xlu0 %v2006, 127
        %v2018 = vpop.permute.xlu0 %2017
        %v2023 = vadd.f32 %v1919, %v2012
        %v2024 = vadd.f32 %v1920, %v2014
        %v2025 = vadd.f32 %v1921, %v2016
        %v2026 = vadd.f32 %v1922, %v2018
        %s2027 = sld [smem:[#allocation3 + $0x32]]
        %v2028 = vstv %s2027
        %v2029 = vmul.f32 %v1879, %v2028
        %v2030 = vmul.f32 %v1880, %v2028
        %v2031 = vmul.f32 %v1881, %v2028
        %v2032 = vmul.f32 %v1882, %v2028
        %2037 = vrot.lane.b32.xlu0 %v2029, 126
        %v2038 = vpop.permute.xlu0 %2037
        %2039 = vrot.lane.b32.xlu0 %v2030, 126
        %v2040 = vpop.permute.xlu0 %2039
        %2041 = vrot.lane.b32.xlu0 %v2031, 126
        %v2042 = vpop.permute.xlu0 %2041
        %2043 = vrot.lane.b32.xlu0 %v2032, 126
        %v2044 = vpop.permute.xlu0 %2043
        %v2049 = vadd.f32 %v1945, %v2038
        %v2050 = vadd.f32 %v1946, %v2040
        %v2051 = vadd.f32 %v1947, %v2042
        %v2052 = vadd.f32 %v1948, %v2044
        %s2053 = sld [smem:[#allocation3 + $0x33]]
        %v2054 = vstv %s2053
        %v2055 = vmul.f32 %v1879, %v2054
        %v2056 = vmul.f32 %v1880, %v2054
        %v2057 = vmul.f32 %v1881, %v2054
        %v2058 = vmul.f32 %v1882, %v2054
        %2063 = vrot.lane.b32.xlu0 %v2055, 126
        %v2064 = vpop.permute.xlu0 %2063
        %2065 = vrot.lane.b32.xlu0 %v2056, 126
        %v2066 = vpop.permute.xlu0 %2065
        %2067 = vrot.lane.b32.xlu0 %v2057, 126
        %v2068 = vpop.permute.xlu0 %2067
        %2069 = vrot.lane.b32.xlu0 %v2058, 126
        %v2070 = vpop.permute.xlu0 %2069
        %v2075 = vadd.f32 %v1971, %v2064
        %v2076 = vadd.f32 %v1972, %v2066
        %v2077 = vadd.f32 %v1973, %v2068
        %v2078 = vadd.f32 %v1974, %v2070
        %s2079 = sld [smem:[#allocation3 + $0x34]]
        %v2080 = vstv %s2079
        %v2081 = vmul.f32 %v1879, %v2080
        %v2082 = vmul.f32 %v1880, %v2080
        %v2083 = vmul.f32 %v1881, %v2080
        %v2084 = vmul.f32 %v1882, %v2080
        %2089 = vrot.lane.b32.xlu0 %v2081, 126
        %v2090 = vpop.permute.xlu0 %2089
        %2091 = vrot.lane.b32.xlu0 %v2082, 126
        %v2092 = vpop.permute.xlu0 %2091
        %2093 = vrot.lane.b32.xlu0 %v2083, 126
        %v2094 = vpop.permute.xlu0 %2093
        %2095 = vrot.lane.b32.xlu0 %v2084, 126
        %v2096 = vpop.permute.xlu0 %2095
        %v2101 = vadd.f32 %v1997, %v2090
        %v2102 = vadd.f32 %v1998, %v2092
        %v2103 = vadd.f32 %v1999, %v2094
        %v2104 = vadd.f32 %v2000, %v2096
        %s2105 = sld [smem:[#allocation3 + $0x35]]
        %v2106 = vstv %s2105
        %v2107 = vmul.f32 %v1879, %v2106
        %v2108 = vmul.f32 %v1880, %v2106
        %v2109 = vmul.f32 %v1881, %v2106
        %v2110 = vmul.f32 %v1882, %v2106
        %2115 = vrot.lane.b32.xlu0 %v2107, 126
        %v2116 = vpop.permute.xlu0 %2115
        %2117 = vrot.lane.b32.xlu0 %v2108, 126
        %v2118 = vpop.permute.xlu0 %2117
        %2119 = vrot.lane.b32.xlu0 %v2109, 126
        %v2120 = vpop.permute.xlu0 %2119
        %2121 = vrot.lane.b32.xlu0 %v2110, 126
        %v2122 = vpop.permute.xlu0 %2121
        %v2127 = vadd.f32 %v2023, %v2116
        %v2128 = vadd.f32 %v2024, %v2118
        %v2129 = vadd.f32 %v2025, %v2120
        %v2130 = vadd.f32 %v2026, %v2122
        %v2131 = vld [vmem:[#allocation2 + $0x1] sm:$0xff]
        %v2132 = vld [vmem:[#allocation2 + $0x9] sm:$0xff]
        %v2133 = vld [vmem:[#allocation2 + $0x11] sm:$0xff]
        %v2134 = vld [vmem:[#allocation2 + $0x19] sm:$0xff]
        %s2135 = sld [smem:[#allocation3 + $0x3a]]
        %v2136 = vstv %s2135
        %v2137 = vmul.f32 %v2131, %v2136
        %v2138 = vmul.f32 %v2132, %v2136
        %v2139 = vmul.f32 %v2133, %v2136
        %v2140 = vmul.f32 %v2134, %v2136
        %v2141 = vadd.f32 %v2049, %v2137
        %v2142 = vadd.f32 %v2050, %v2138
        %v2143 = vadd.f32 %v2051, %v2139
        %v2144 = vadd.f32 %v2052, %v2140
        %s2145 = sld [smem:[#allocation3 + $0x3b]]
        %v2146 = vstv %s2145
        %v2147 = vmul.f32 %v2131, %v2146
        %v2148 = vmul.f32 %v2132, %v2146
        %v2149 = vmul.f32 %v2133, %v2146
        %v2150 = vmul.f32 %v2134, %v2146
        %v2151 = vadd.f32 %v2075, %v2147
        %v2152 = vadd.f32 %v2076, %v2148
        %v2153 = vadd.f32 %v2077, %v2149
        %v2154 = vadd.f32 %v2078, %v2150
        %s2155 = sld [smem:[#allocation3 + $0x3c]]
        %v2156 = vstv %s2155
        %v2157 = vmul.f32 %v2131, %v2156
        %v2158 = vmul.f32 %v2132, %v2156
        %v2159 = vmul.f32 %v2133, %v2156
        %v2160 = vmul.f32 %v2134, %v2156
        %v2161 = vadd.f32 %v2101, %v2157
        %v2162 = vadd.f32 %v2102, %v2158
        %v2163 = vadd.f32 %v2103, %v2159
        %v2164 = vadd.f32 %v2104, %v2160
        %s2165 = sld [smem:[#allocation3 + $0x3d]]
        %v2166 = vstv %s2165
        %v2167 = vmul.f32 %v2131, %v2166
        %v2168 = vmul.f32 %v2132, %v2166
        %v2169 = vmul.f32 %v2133, %v2166
        %v2170 = vmul.f32 %v2134, %v2166
        %v2171 = vadd.f32 %v2127, %v2167
        %v2172 = vadd.f32 %v2128, %v2168
        %v2173 = vadd.f32 %v2129, %v2169
        %v2174 = vadd.f32 %v2130, %v2170
        %s2175 = sld [smem:[#allocation3 + $0x42]]
        %v2176 = vstv %s2175
        %v2177 = vmul.f32 %v2131, %v2176
        %v2178 = vmul.f32 %v2132, %v2176
        %v2179 = vmul.f32 %v2133, %v2176
        %v2180 = vmul.f32 %v2134, %v2176
        %2185 = vrot.lane.b32.xlu0 %v2177, 127
        %v2186 = vpop.permute.xlu0 %2185
        %2187 = vrot.lane.b32.xlu0 %v2178, 127
        %v2188 = vpop.permute.xlu0 %2187
        %2189 = vrot.lane.b32.xlu0 %v2179, 127
        %v2190 = vpop.permute.xlu0 %2189
        %2191 = vrot.lane.b32.xlu0 %v2180, 127
        %v2192 = vpop.permute.xlu0 %2191
        %v2197 = vadd.f32 %v2141, %v2186
        %v2198 = vadd.f32 %v2142, %v2188
        %v2199 = vadd.f32 %v2143, %v2190
        %v2200 = vadd.f32 %v2144, %v2192
        %s2201 = sld [smem:[#allocation3 + $0x43]]
        %v2202 = vstv %s2201
        %v2203 = vmul.f32 %v2131, %v2202
        %v2204 = vmul.f32 %v2132, %v2202
        %v2205 = vmul.f32 %v2133, %v2202
        %v2206 = vmul.f32 %v2134, %v2202
        %2211 = vrot.lane.b32.xlu0 %v2203, 127
        %v2212 = vpop.permute.xlu0 %2211
        %2213 = vrot.lane.b32.xlu0 %v2204, 127
        %v2214 = vpop.permute.xlu0 %2213
        %2215 = vrot.lane.b32.xlu0 %v2205, 127
        %v2216 = vpop.permute.xlu0 %2215
        %2217 = vrot.lane.b32.xlu0 %v2206, 127
        %v2218 = vpop.permute.xlu0 %2217
        %v2223 = vadd.f32 %v2151, %v2212
        %v2224 = vadd.f32 %v2152, %v2214
        %v2225 = vadd.f32 %v2153, %v2216
        %v2226 = vadd.f32 %v2154, %v2218
        %s2227 = sld [smem:[#allocation3 + $0x44]]
        %v2228 = vstv %s2227
        %v2229 = vmul.f32 %v2131, %v2228
        %v2230 = vmul.f32 %v2132, %v2228
        %v2231 = vmul.f32 %v2133, %v2228
        %v2232 = vmul.f32 %v2134, %v2228
        %2237 = vrot.lane.b32.xlu0 %v2229, 127
        %v2238 = vpop.permute.xlu0 %2237
        %2239 = vrot.lane.b32.xlu0 %v2230, 127
        %v2240 = vpop.permute.xlu0 %2239
        %2241 = vrot.lane.b32.xlu0 %v2231, 127
        %v2242 = vpop.permute.xlu0 %2241
        %2243 = vrot.lane.b32.xlu0 %v2232, 127
        %v2244 = vpop.permute.xlu0 %2243
        %v2249 = vadd.f32 %v2161, %v2238
        %v2250 = vadd.f32 %v2162, %v2240
        %v2251 = vadd.f32 %v2163, %v2242
        %v2252 = vadd.f32 %v2164, %v2244
        %s2253 = sld [smem:[#allocation3 + $0x45]]
        %v2254 = vstv %s2253
        %v2255 = vmul.f32 %v2131, %v2254
        %v2256 = vmul.f32 %v2132, %v2254
        %v2257 = vmul.f32 %v2133, %v2254
        %v2258 = vmul.f32 %v2134, %v2254
        %2263 = vrot.lane.b32.xlu0 %v2255, 127
        %v2264 = vpop.permute.xlu0 %2263
        %2265 = vrot.lane.b32.xlu0 %v2256, 127
        %v2266 = vpop.permute.xlu0 %2265
        %2267 = vrot.lane.b32.xlu0 %v2257, 127
        %v2268 = vpop.permute.xlu0 %2267
        %2269 = vrot.lane.b32.xlu0 %v2258, 127
        %v2270 = vpop.permute.xlu0 %2269
        %v2275 = vadd.f32 %v2171, %v2264
        %v2276 = vadd.f32 %v2172, %v2266
        %v2277 = vadd.f32 %v2173, %v2268
        %v2278 = vadd.f32 %v2174, %v2270
        %s2279 = sld [smem:[#allocation3 + $0x4a]]
        %v2280 = vstv %s2279
        %v2281 = vmul.f32 %v2131, %v2280
        %v2282 = vmul.f32 %v2132, %v2280
        %v2283 = vmul.f32 %v2133, %v2280
        %v2284 = vmul.f32 %v2134, %v2280
        %2289 = vrot.lane.b32.xlu0 %v2281, 126
        %v2290 = vpop.permute.xlu0 %2289
        %2291 = vrot.lane.b32.xlu0 %v2282, 126
        %v2292 = vpop.permute.xlu0 %2291
        %2293 = vrot.lane.b32.xlu0 %v2283, 126
        %v2294 = vpop.permute.xlu0 %2293
        %2295 = vrot.lane.b32.xlu0 %v2284, 126
        %v2296 = vpop.permute.xlu0 %2295
        %v2301 = vadd.f32 %v2197, %v2290
        %v2302 = vadd.f32 %v2198, %v2292
        %v2303 = vadd.f32 %v2199, %v2294
        %v2304 = vadd.f32 %v2200, %v2296
        %s2305 = sld [smem:[#allocation3 + $0x4b]]
        %v2306 = vstv %s2305
        %v2307 = vmul.f32 %v2131, %v2306
        %v2308 = vmul.f32 %v2132, %v2306
        %v2309 = vmul.f32 %v2133, %v2306
        %v2310 = vmul.f32 %v2134, %v2306
        %2315 = vrot.lane.b32.xlu0 %v2307, 126
        %v2316 = vpop.permute.xlu0 %2315
        %2317 = vrot.lane.b32.xlu0 %v2308, 126
        %v2318 = vpop.permute.xlu0 %2317
        %2319 = vrot.lane.b32.xlu0 %v2309, 126
        %v2320 = vpop.permute.xlu0 %2319
        %2321 = vrot.lane.b32.xlu0 %v2310, 126
        %v2322 = vpop.permute.xlu0 %2321
        %v2327 = vadd.f32 %v2223, %v2316
        %v2328 = vadd.f32 %v2224, %v2318
        %v2329 = vadd.f32 %v2225, %v2320
        %v2330 = vadd.f32 %v2226, %v2322
        %s2331 = sld [smem:[#allocation3 + $0x4c]]
        %v2332 = vstv %s2331
        %v2333 = vmul.f32 %v2131, %v2332
        %v2334 = vmul.f32 %v2132, %v2332
        %v2335 = vmul.f32 %v2133, %v2332
        %v2336 = vmul.f32 %v2134, %v2332
        %2341 = vrot.lane.b32.xlu0 %v2333, 126
        %v2342 = vpop.permute.xlu0 %2341
        %2343 = vrot.lane.b32.xlu0 %v2334, 126
        %v2344 = vpop.permute.xlu0 %2343
        %2345 = vrot.lane.b32.xlu0 %v2335, 126
        %v2346 = vpop.permute.xlu0 %2345
        %2347 = vrot.lane.b32.xlu0 %v2336, 126
        %v2348 = vpop.permute.xlu0 %2347
        %v2353 = vadd.f32 %v2249, %v2342
        %v2354 = vadd.f32 %v2250, %v2344
        %v2355 = vadd.f32 %v2251, %v2346
        %v2356 = vadd.f32 %v2252, %v2348
        %s2357 = sld [smem:[#allocation3 + $0x4d]]
        %v2358 = vstv %s2357
        %v2359 = vmul.f32 %v2131, %v2358
        %v2360 = vmul.f32 %v2132, %v2358
        %v2361 = vmul.f32 %v2133, %v2358
        %v2362 = vmul.f32 %v2134, %v2358
        %2367 = vrot.lane.b32.xlu0 %v2359, 126
        %v2368 = vpop.permute.xlu0 %2367
        %2369 = vrot.lane.b32.xlu0 %v2360, 126
        %v2370 = vpop.permute.xlu0 %2369
        %2371 = vrot.lane.b32.xlu0 %v2361, 126
        %v2372 = vpop.permute.xlu0 %2371
        %2373 = vrot.lane.b32.xlu0 %v2362, 126
        %v2374 = vpop.permute.xlu0 %2373
        %v2379 = vadd.f32 %v2275, %v2368
        %v2380 = vadd.f32 %v2276, %v2370
        %v2381 = vadd.f32 %v2277, %v2372
        %v2382 = vadd.f32 %v2278, %v2374
        %v2383 = vld [vmem:[#allocation2 + $0x2] sm:$0xff]
        %v2384 = vld [vmem:[#allocation2 + $0xa] sm:$0xff]
        %v2385 = vld [vmem:[#allocation2 + $0x12] sm:$0xff]
        %v2386 = vld [vmem:[#allocation2 + $0x1a] sm:$0xff]
        %s2387 = sld [smem:[#allocation3 + $0x52]]
        %v2388 = vstv %s2387
        %v2389 = vmul.f32 %v2383, %v2388
        %v2390 = vmul.f32 %v2384, %v2388
        %v2391 = vmul.f32 %v2385, %v2388
        %v2392 = vmul.f32 %v2386, %v2388
        %v2393 = vadd.f32 %v2301, %v2389
        %v2394 = vadd.f32 %v2302, %v2390
        %v2395 = vadd.f32 %v2303, %v2391
        %v2396 = vadd.f32 %v2304, %v2392
        %s2397 = sld [smem:[#allocation3 + $0x53]]
        %v2398 = vstv %s2397
        %v2399 = vmul.f32 %v2383, %v2398
        %v2400 = vmul.f32 %v2384, %v2398
        %v2401 = vmul.f32 %v2385, %v2398
        %v2402 = vmul.f32 %v2386, %v2398
        %v2403 = vadd.f32 %v2327, %v2399
        %v2404 = vadd.f32 %v2328, %v2400
        %v2405 = vadd.f32 %v2329, %v2401
        %v2406 = vadd.f32 %v2330, %v2402
        %s2407 = sld [smem:[#allocation3 + $0x54]]
        %v2408 = vstv %s2407
        %v2409 = vmul.f32 %v2383, %v2408
        %v2410 = vmul.f32 %v2384, %v2408
        %v2411 = vmul.f32 %v2385, %v2408
        %v2412 = vmul.f32 %v2386, %v2408
        %v2413 = vadd.f32 %v2353, %v2409
        %v2414 = vadd.f32 %v2354, %v2410
        %v2415 = vadd.f32 %v2355, %v2411
        %v2416 = vadd.f32 %v2356, %v2412
        %s2417 = sld [smem:[#allocation3 + $0x55]]
        %v2418 = vstv %s2417
        %v2419 = vmul.f32 %v2383, %v2418
        %v2420 = vmul.f32 %v2384, %v2418
        %v2421 = vmul.f32 %v2385, %v2418
        %v2422 = vmul.f32 %v2386, %v2418
        %v2423 = vadd.f32 %v2379, %v2419
        %v2424 = vadd.f32 %v2380, %v2420
        %v2425 = vadd.f32 %v2381, %v2421
        %v2426 = vadd.f32 %v2382, %v2422
        %s2427 = sld [smem:[#allocation3 + $0x5a]]
        %v2428 = vstv %s2427
        %v2429 = vmul.f32 %v2383, %v2428
        %v2430 = vmul.f32 %v2384, %v2428
        %v2431 = vmul.f32 %v2385, %v2428
        %v2432 = vmul.f32 %v2386, %v2428
        %2437 = vrot.lane.b32.xlu0 %v2429, 127
        %v2438 = vpop.permute.xlu0 %2437
        %2439 = vrot.lane.b32.xlu0 %v2430, 127
        %v2440 = vpop.permute.xlu0 %2439
        %2441 = vrot.lane.b32.xlu0 %v2431, 127
        %v2442 = vpop.permute.xlu0 %2441
        %2443 = vrot.lane.b32.xlu0 %v2432, 127
        %v2444 = vpop.permute.xlu0 %2443
        %v2449 = vadd.f32 %v2393, %v2438
        %v2450 = vadd.f32 %v2394, %v2440
        %v2451 = vadd.f32 %v2395, %v2442
        %v2452 = vadd.f32 %v2396, %v2444
        %s2453 = sld [smem:[#allocation3 + $0x5b]]
        %v2454 = vstv %s2453
        %v2455 = vmul.f32 %v2383, %v2454
        %v2456 = vmul.f32 %v2384, %v2454
        %v2457 = vmul.f32 %v2385, %v2454
        %v2458 = vmul.f32 %v2386, %v2454
        %2463 = vrot.lane.b32.xlu0 %v2455, 127
        %v2464 = vpop.permute.xlu0 %2463
        %2465 = vrot.lane.b32.xlu0 %v2456, 127
        %v2466 = vpop.permute.xlu0 %2465
        %2467 = vrot.lane.b32.xlu0 %v2457, 127
        %v2468 = vpop.permute.xlu0 %2467
        %2469 = vrot.lane.b32.xlu0 %v2458, 127
        %v2470 = vpop.permute.xlu0 %2469
        %v2475 = vadd.f32 %v2403, %v2464
        %v2476 = vadd.f32 %v2404, %v2466
        %v2477 = vadd.f32 %v2405, %v2468
        %v2478 = vadd.f32 %v2406, %v2470
        %s2479 = sld [smem:[#allocation3 + $0x5c]]
        %v2480 = vstv %s2479
        %v2481 = vmul.f32 %v2383, %v2480
        %v2482 = vmul.f32 %v2384, %v2480
        %v2483 = vmul.f32 %v2385, %v2480
        %v2484 = vmul.f32 %v2386, %v2480
        %2489 = vrot.lane.b32.xlu0 %v2481, 127
        %v2490 = vpop.permute.xlu0 %2489
        %2491 = vrot.lane.b32.xlu0 %v2482, 127
        %v2492 = vpop.permute.xlu0 %2491
        %2493 = vrot.lane.b32.xlu0 %v2483, 127
        %v2494 = vpop.permute.xlu0 %2493
        %2495 = vrot.lane.b32.xlu0 %v2484, 127
        %v2496 = vpop.permute.xlu0 %2495
        %v2501 = vadd.f32 %v2413, %v2490
        %v2502 = vadd.f32 %v2414, %v2492
        %v2503 = vadd.f32 %v2415, %v2494
        %v2504 = vadd.f32 %v2416, %v2496
        %s2505 = sld [smem:[#allocation3 + $0x5d]]
        %v2506 = vstv %s2505
        %v2507 = vmul.f32 %v2383, %v2506
        %v2508 = vmul.f32 %v2384, %v2506
        %v2509 = vmul.f32 %v2385, %v2506
        %v2510 = vmul.f32 %v2386, %v2506
        %2515 = vrot.lane.b32.xlu0 %v2507, 127
        %v2516 = vpop.permute.xlu0 %2515
        %2517 = vrot.lane.b32.xlu0 %v2508, 127
        %v2518 = vpop.permute.xlu0 %2517
        %2519 = vrot.lane.b32.xlu0 %v2509, 127
        %v2520 = vpop.permute.xlu0 %2519
        %2521 = vrot.lane.b32.xlu0 %v2510, 127
        %v2522 = vpop.permute.xlu0 %2521
        %v2527 = vadd.f32 %v2423, %v2516
        %v2528 = vadd.f32 %v2424, %v2518
        %v2529 = vadd.f32 %v2425, %v2520
        %v2530 = vadd.f32 %v2426, %v2522
        %s2531 = sld [smem:[#allocation3 + $0x62]]
        %v2532 = vstv %s2531
        %v2533 = vmul.f32 %v2383, %v2532
        %v2534 = vmul.f32 %v2384, %v2532
        %v2535 = vmul.f32 %v2385, %v2532
        %v2536 = vmul.f32 %v2386, %v2532
        %2541 = vrot.lane.b32.xlu0 %v2533, 126
        %v2542 = vpop.permute.xlu0 %2541
        %2543 = vrot.lane.b32.xlu0 %v2534, 126
        %v2544 = vpop.permute.xlu0 %2543
        %2545 = vrot.lane.b32.xlu0 %v2535, 126
        %v2546 = vpop.permute.xlu0 %2545
        %2547 = vrot.lane.b32.xlu0 %v2536, 126
        %v2548 = vpop.permute.xlu0 %2547
        %v2553 = vadd.f32 %v2449, %v2542
        %v2554 = vadd.f32 %v2450, %v2544
        %v2555 = vadd.f32 %v2451, %v2546
        %v2556 = vadd.f32 %v2452, %v2548
        %s2557 = sld [smem:[#allocation3 + $0x63]]
        %v2558 = vstv %s2557
        %v2559 = vmul.f32 %v2383, %v2558
        %v2560 = vmul.f32 %v2384, %v2558
        %v2561 = vmul.f32 %v2385, %v2558
        %v2562 = vmul.f32 %v2386, %v2558
        %2567 = vrot.lane.b32.xlu0 %v2559, 126
        %v2568 = vpop.permute.xlu0 %2567
        %2569 = vrot.lane.b32.xlu0 %v2560, 126
        %v2570 = vpop.permute.xlu0 %2569
        %2571 = vrot.lane.b32.xlu0 %v2561, 126
        %v2572 = vpop.permute.xlu0 %2571
        %2573 = vrot.lane.b32.xlu0 %v2562, 126
        %v2574 = vpop.permute.xlu0 %2573
        %v2579 = vadd.f32 %v2475, %v2568
        %v2580 = vadd.f32 %v2476, %v2570
        %v2581 = vadd.f32 %v2477, %v2572
        %v2582 = vadd.f32 %v2478, %v2574
        %s2583 = sld [smem:[#allocation3 + $0x64]]
        %v2584 = vstv %s2583
        %v2585 = vmul.f32 %v2383, %v2584
        %v2586 = vmul.f32 %v2384, %v2584
        %v2587 = vmul.f32 %v2385, %v2584
        %v2588 = vmul.f32 %v2386, %v2584
        %2593 = vrot.lane.b32.xlu0 %v2585, 126
        %v2594 = vpop.permute.xlu0 %2593
        %2595 = vrot.lane.b32.xlu0 %v2586, 126
        %v2596 = vpop.permute.xlu0 %2595
        %2597 = vrot.lane.b32.xlu0 %v2587, 126
        %v2598 = vpop.permute.xlu0 %2597
        %2599 = vrot.lane.b32.xlu0 %v2588, 126
        %v2600 = vpop.permute.xlu0 %2599
        %v2605 = vadd.f32 %v2501, %v2594
        %v2606 = vadd.f32 %v2502, %v2596
        %v2607 = vadd.f32 %v2503, %v2598
        %v2608 = vadd.f32 %v2504, %v2600
        %s2609 = sld [smem:[#allocation3 + $0x65]]
        %v2610 = vstv %s2609
        %v2611 = vmul.f32 %v2383, %v2610
        %v2612 = vmul.f32 %v2384, %v2610
        %v2613 = vmul.f32 %v2385, %v2610
        %v2614 = vmul.f32 %v2386, %v2610
        %2619 = vrot.lane.b32.xlu0 %v2611, 126
        %v2620 = vpop.permute.xlu0 %2619
        %2621 = vrot.lane.b32.xlu0 %v2612, 126
        %v2622 = vpop.permute.xlu0 %2621
        %2623 = vrot.lane.b32.xlu0 %v2613, 126
        %v2624 = vpop.permute.xlu0 %2623
        %2625 = vrot.lane.b32.xlu0 %v2614, 126
        %v2626 = vpop.permute.xlu0 %2625
        %v2631 = vadd.f32 %v2527, %v2620
        %v2632 = vadd.f32 %v2528, %v2622
        %v2633 = vadd.f32 %v2529, %v2624
        %v2634 = vadd.f32 %v2530, %v2626
        %v2635 = vld [vmem:[%s1865] sm:$0xff]
        %v2636 = vld [vmem:[%s1865 + $0x8] sm:$0xff]
        %v2637 = vld [vmem:[%s1865 + $0x10] sm:$0xff]
        %v2638 = vld [vmem:[%s1865 + $0x18] sm:$0xff]
        %s2639 = sld [smem:[#allocation3 + $0x26]]
        %v2640 = vstv %s2639
        %v2641 = vmul.f32 %v2635, %v2640
        %v2642 = vmul.f32 %v2636, %v2640
        %v2643 = vmul.f32 %v2637, %v2640
        %v2644 = vmul.f32 %v2638, %v2640
        %v2645 = vadd.f32 %v2553, %v2641
        %v2646 = vadd.f32 %v2554, %v2642
        %v2647 = vadd.f32 %v2555, %v2643
        %v2648 = vadd.f32 %v2556, %v2644
        %s2649 = sld [smem:[#allocation3 + $0x27]]
        %v2650 = vstv %s2649
        %v2651 = vmul.f32 %v2635, %v2650
        %v2652 = vmul.f32 %v2636, %v2650
        %v2653 = vmul.f32 %v2637, %v2650
        %v2654 = vmul.f32 %v2638, %v2650
        %v2655 = vadd.f32 %v2579, %v2651
        %v2656 = vadd.f32 %v2580, %v2652
        %v2657 = vadd.f32 %v2581, %v2653
        %v2658 = vadd.f32 %v2582, %v2654
        %s2659 = sld [smem:[#allocation3 + $0x28]]
        %v2660 = vstv %s2659
        %v2661 = vmul.f32 %v2635, %v2660
        %v2662 = vmul.f32 %v2636, %v2660
        %v2663 = vmul.f32 %v2637, %v2660
        %v2664 = vmul.f32 %v2638, %v2660
        %v2665 = vadd.f32 %v2605, %v2661
        %v2666 = vadd.f32 %v2606, %v2662
        %v2667 = vadd.f32 %v2607, %v2663
        %v2668 = vadd.f32 %v2608, %v2664
        %s2669 = sld [smem:[#allocation3 + $0x29]]
        %v2670 = vstv %s2669
        %v2671 = vmul.f32 %v2635, %v2670
        %v2672 = vmul.f32 %v2636, %v2670
        %v2673 = vmul.f32 %v2637, %v2670
        %v2674 = vmul.f32 %v2638, %v2670
        %v2675 = vadd.f32 %v2631, %v2671
        %v2676 = vadd.f32 %v2632, %v2672
        %v2677 = vadd.f32 %v2633, %v2673
        %v2678 = vadd.f32 %v2634, %v2674
        %s2679 = sld [smem:[#allocation3 + $0x2e]]
        %v2680 = vstv %s2679
        %v2681 = vmul.f32 %v2635, %v2680
        %v2682 = vmul.f32 %v2636, %v2680
        %v2683 = vmul.f32 %v2637, %v2680
        %v2684 = vmul.f32 %v2638, %v2680
        %2689 = vrot.lane.b32.xlu0 %v2681, 127
        %v2690 = vpop.permute.xlu0 %2689
        %2691 = vrot.lane.b32.xlu0 %v2682, 127
        %v2692 = vpop.permute.xlu0 %2691
        %2693 = vrot.lane.b32.xlu0 %v2683, 127
        %v2694 = vpop.permute.xlu0 %2693
        %2695 = vrot.lane.b32.xlu0 %v2684, 127
        %v2696 = vpop.permute.xlu0 %2695
        %v2701 = vadd.f32 %v2645, %v2690
        %v2702 = vadd.f32 %v2646, %v2692
        %v2703 = vadd.f32 %v2647, %v2694
        %v2704 = vadd.f32 %v2648, %v2696
        %s2705 = sld [smem:[#allocation3 + $0x2f]]
        %v2706 = vstv %s2705
        %v2707 = vmul.f32 %v2635, %v2706
        %v2708 = vmul.f32 %v2636, %v2706
        %v2709 = vmul.f32 %v2637, %v2706
        %v2710 = vmul.f32 %v2638, %v2706
        %2715 = vrot.lane.b32.xlu0 %v2707, 127
        %v2716 = vpop.permute.xlu0 %2715
        %2717 = vrot.lane.b32.xlu0 %v2708, 127
        %v2718 = vpop.permute.xlu0 %2717
        %2719 = vrot.lane.b32.xlu0 %v2709, 127
        %v2720 = vpop.permute.xlu0 %2719
        %2721 = vrot.lane.b32.xlu0 %v2710, 127
        %v2722 = vpop.permute.xlu0 %2721
        %v2727 = vadd.f32 %v2655, %v2716
        %v2728 = vadd.f32 %v2656, %v2718
        %v2729 = vadd.f32 %v2657, %v2720
        %v2730 = vadd.f32 %v2658, %v2722
        %s2731 = sld [smem:[#allocation3 + $0x30]]
        %v2732 = vstv %s2731
        %v2733 = vmul.f32 %v2635, %v2732
        %v2734 = vmul.f32 %v2636, %v2732
        %v2735 = vmul.f32 %v2637, %v2732
        %v2736 = vmul.f32 %v2638, %v2732
        %2741 = vrot.lane.b32.xlu0 %v2733, 127
        %v2742 = vpop.permute.xlu0 %2741
        %2743 = vrot.lane.b32.xlu0 %v2734, 127
        %v2744 = vpop.permute.xlu0 %2743
        %2745 = vrot.lane.b32.xlu0 %v2735, 127
        %v2746 = vpop.permute.xlu0 %2745
        %2747 = vrot.lane.b32.xlu0 %v2736, 127
        %v2748 = vpop.permute.xlu0 %2747
        %v2753 = vadd.f32 %v2665, %v2742
        %v2754 = vadd.f32 %v2666, %v2744
        %v2755 = vadd.f32 %v2667, %v2746
        %v2756 = vadd.f32 %v2668, %v2748
        %s2757 = sld [smem:[#allocation3 + $0x31]]
        %v2758 = vstv %s2757
        %v2759 = vmul.f32 %v2635, %v2758
        %v2760 = vmul.f32 %v2636, %v2758
        %v2761 = vmul.f32 %v2637, %v2758
        %v2762 = vmul.f32 %v2638, %v2758
        %2767 = vrot.lane.b32.xlu0 %v2759, 127
        %v2768 = vpop.permute.xlu0 %2767
        %2769 = vrot.lane.b32.xlu0 %v2760, 127
        %v2770 = vpop.permute.xlu0 %2769
        %2771 = vrot.lane.b32.xlu0 %v2761, 127
        %v2772 = vpop.permute.xlu0 %2771
        %2773 = vrot.lane.b32.xlu0 %v2762, 127
        %v2774 = vpop.permute.xlu0 %2773
        %v2779 = vadd.f32 %v2675, %v2768
        %v2780 = vadd.f32 %v2676, %v2770
        %v2781 = vadd.f32 %v2677, %v2772
        %v2782 = vadd.f32 %v2678, %v2774
        %s2783 = sld [smem:[#allocation3 + $0x36]]
        %v2784 = vstv %s2783
        %v2785 = vmul.f32 %v2635, %v2784
        %v2786 = vmul.f32 %v2636, %v2784
        %v2787 = vmul.f32 %v2637, %v2784
        %v2788 = vmul.f32 %v2638, %v2784
        %2793 = vrot.lane.b32.xlu0 %v2785, 126
        %v2794 = vpop.permute.xlu0 %2793
        %2795 = vrot.lane.b32.xlu0 %v2786, 126
        %v2796 = vpop.permute.xlu0 %2795
        %2797 = vrot.lane.b32.xlu0 %v2787, 126
        %v2798 = vpop.permute.xlu0 %2797
        %2799 = vrot.lane.b32.xlu0 %v2788, 126
        %v2800 = vpop.permute.xlu0 %2799
        %v2805 = vadd.f32 %v2701, %v2794
        %v2806 = vadd.f32 %v2702, %v2796
        %v2807 = vadd.f32 %v2703, %v2798
        %v2808 = vadd.f32 %v2704, %v2800
        %s2809 = sld [smem:[#allocation3 + $0x37]]
        %v2810 = vstv %s2809
        %v2811 = vmul.f32 %v2635, %v2810
        %v2812 = vmul.f32 %v2636, %v2810
        %v2813 = vmul.f32 %v2637, %v2810
        %v2814 = vmul.f32 %v2638, %v2810
        %2819 = vrot.lane.b32.xlu0 %v2811, 126
        %v2820 = vpop.permute.xlu0 %2819
        %2821 = vrot.lane.b32.xlu0 %v2812, 126
        %v2822 = vpop.permute.xlu0 %2821
        %2823 = vrot.lane.b32.xlu0 %v2813, 126
        %v2824 = vpop.permute.xlu0 %2823
        %2825 = vrot.lane.b32.xlu0 %v2814, 126
        %v2826 = vpop.permute.xlu0 %2825
        %v2831 = vadd.f32 %v2727, %v2820
        %v2832 = vadd.f32 %v2728, %v2822
        %v2833 = vadd.f32 %v2729, %v2824
        %v2834 = vadd.f32 %v2730, %v2826
        %s2835 = sld [smem:[#allocation3 + $0x38]]
        %v2836 = vstv %s2835
        %v2837 = vmul.f32 %v2635, %v2836
        %v2838 = vmul.f32 %v2636, %v2836
        %v2839 = vmul.f32 %v2637, %v2836
        %v2840 = vmul.f32 %v2638, %v2836
        %2845 = vrot.lane.b32.xlu0 %v2837, 126
        %v2846 = vpop.permute.xlu0 %2845
        %2847 = vrot.lane.b32.xlu0 %v2838, 126
        %v2848 = vpop.permute.xlu0 %2847
        %2849 = vrot.lane.b32.xlu0 %v2839, 126
        %v2850 = vpop.permute.xlu0 %2849
        %2851 = vrot.lane.b32.xlu0 %v2840, 126
        %v2852 = vpop.permute.xlu0 %2851
        %v2857 = vadd.f32 %v2753, %v2846
        %v2858 = vadd.f32 %v2754, %v2848
        %v2859 = vadd.f32 %v2755, %v2850
        %v2860 = vadd.f32 %v2756, %v2852
        %s2861 = sld [smem:[#allocation3 + $0x39]]
        %v2862 = vstv %s2861
        %v2863 = vmul.f32 %v2635, %v2862
        %v2864 = vmul.f32 %v2636, %v2862
        %v2865 = vmul.f32 %v2637, %v2862
        %v2866 = vmul.f32 %v2638, %v2862
        %2871 = vrot.lane.b32.xlu0 %v2863, 126
        %v2872 = vpop.permute.xlu0 %2871
        %2873 = vrot.lane.b32.xlu0 %v2864, 126
        %v2874 = vpop.permute.xlu0 %2873
        %2875 = vrot.lane.b32.xlu0 %v2865, 126
        %v2876 = vpop.permute.xlu0 %2875
        %2877 = vrot.lane.b32.xlu0 %v2866, 126
        %v2878 = vpop.permute.xlu0 %2877
        %v2883 = vadd.f32 %v2779, %v2872
        %v2884 = vadd.f32 %v2780, %v2874
        %v2885 = vadd.f32 %v2781, %v2876
        %v2886 = vadd.f32 %v2782, %v2878
        %v2887 = vld [vmem:[%s1865 + $0x1] sm:$0xff]
        %v2888 = vld [vmem:[%s1865 + $0x9] sm:$0xff]
        %v2889 = vld [vmem:[%s1865 + $0x11] sm:$0xff]
        %v2890 = vld [vmem:[%s1865 + $0x19] sm:$0xff]
        %s2891 = sld [smem:[#allocation3 + $0x3e]]
        %v2892 = vstv %s2891
        %v2893 = vmul.f32 %v2887, %v2892
        %v2894 = vmul.f32 %v2888, %v2892
        %v2895 = vmul.f32 %v2889, %v2892
        %v2896 = vmul.f32 %v2890, %v2892
        %v2897 = vadd.f32 %v2805, %v2893
        %v2898 = vadd.f32 %v2806, %v2894
        %v2899 = vadd.f32 %v2807, %v2895
        %v2900 = vadd.f32 %v2808, %v2896
        %s2901 = sld [smem:[#allocation3 + $0x3f]]
        %v2902 = vstv %s2901
        %v2903 = vmul.f32 %v2887, %v2902
        %v2904 = vmul.f32 %v2888, %v2902
        %v2905 = vmul.f32 %v2889, %v2902
        %v2906 = vmul.f32 %v2890, %v2902
        %v2907 = vadd.f32 %v2831, %v2903
        %v2908 = vadd.f32 %v2832, %v2904
        %v2909 = vadd.f32 %v2833, %v2905
        %v2910 = vadd.f32 %v2834, %v2906
        %s2911 = sld [smem:[#allocation3 + $0x40]]
        %v2912 = vstv %s2911
        %v2913 = vmul.f32 %v2887, %v2912
        %v2914 = vmul.f32 %v2888, %v2912
        %v2915 = vmul.f32 %v2889, %v2912
        %v2916 = vmul.f32 %v2890, %v2912
        %v2917 = vadd.f32 %v2857, %v2913
        %v2918 = vadd.f32 %v2858, %v2914
        %v2919 = vadd.f32 %v2859, %v2915
        %v2920 = vadd.f32 %v2860, %v2916
        %s2921 = sld [smem:[#allocation3 + $0x41]]
        %v2922 = vstv %s2921
        %v2923 = vmul.f32 %v2887, %v2922
        %v2924 = vmul.f32 %v2888, %v2922
        %v2925 = vmul.f32 %v2889, %v2922
        %v2926 = vmul.f32 %v2890, %v2922
        %v2927 = vadd.f32 %v2883, %v2923
        %v2928 = vadd.f32 %v2884, %v2924
        %v2929 = vadd.f32 %v2885, %v2925
        %v2930 = vadd.f32 %v2886, %v2926
        %s2931 = sld [smem:[#allocation3 + $0x46]]
        %v2932 = vstv %s2931
        %v2933 = vmul.f32 %v2887, %v2932
        %v2934 = vmul.f32 %v2888, %v2932
        %v2935 = vmul.f32 %v2889, %v2932
        %v2936 = vmul.f32 %v2890, %v2932
        %2941 = vrot.lane.b32.xlu0 %v2933, 127
        %v2942 = vpop.permute.xlu0 %2941
        %2943 = vrot.lane.b32.xlu0 %v2934, 127
        %v2944 = vpop.permute.xlu0 %2943
        %2945 = vrot.lane.b32.xlu0 %v2935, 127
        %v2946 = vpop.permute.xlu0 %2945
        %2947 = vrot.lane.b32.xlu0 %v2936, 127
        %v2948 = vpop.permute.xlu0 %2947
        %v2953 = vadd.f32 %v2897, %v2942
        %v2954 = vadd.f32 %v2898, %v2944
        %v2955 = vadd.f32 %v2899, %v2946
        %v2956 = vadd.f32 %v2900, %v2948
        %s2957 = sld [smem:[#allocation3 + $0x47]]
        %v2958 = vstv %s2957
        %v2959 = vmul.f32 %v2887, %v2958
        %v2960 = vmul.f32 %v2888, %v2958
        %v2961 = vmul.f32 %v2889, %v2958
        %v2962 = vmul.f32 %v2890, %v2958
        %2967 = vrot.lane.b32.xlu0 %v2959, 127
        %v2968 = vpop.permute.xlu0 %2967
        %2969 = vrot.lane.b32.xlu0 %v2960, 127
        %v2970 = vpop.permute.xlu0 %2969
        %2971 = vrot.lane.b32.xlu0 %v2961, 127
        %v2972 = vpop.permute.xlu0 %2971
        %2973 = vrot.lane.b32.xlu0 %v2962, 127
        %v2974 = vpop.permute.xlu0 %2973
        %v2979 = vadd.f32 %v2907, %v2968
        %v2980 = vadd.f32 %v2908, %v2970
        %v2981 = vadd.f32 %v2909, %v2972
        %v2982 = vadd.f32 %v2910, %v2974
        %s2983 = sld [smem:[#allocation3 + $0x48]]
        %v2984 = vstv %s2983
        %v2985 = vmul.f32 %v2887, %v2984
        %v2986 = vmul.f32 %v2888, %v2984
        %v2987 = vmul.f32 %v2889, %v2984
        %v2988 = vmul.f32 %v2890, %v2984
        %2993 = vrot.lane.b32.xlu0 %v2985, 127
        %v2994 = vpop.permute.xlu0 %2993
        %2995 = vrot.lane.b32.xlu0 %v2986, 127
        %v2996 = vpop.permute.xlu0 %2995
        %2997 = vrot.lane.b32.xlu0 %v2987, 127
        %v2998 = vpop.permute.xlu0 %2997
        %2999 = vrot.lane.b32.xlu0 %v2988, 127
        %v3000 = vpop.permute.xlu0 %2999
        %v3005 = vadd.f32 %v2917, %v2994
        %v3006 = vadd.f32 %v2918, %v2996
        %v3007 = vadd.f32 %v2919, %v2998
        %v3008 = vadd.f32 %v2920, %v3000
        %s3009 = sld [smem:[#allocation3 + $0x49]]
        %v3010 = vstv %s3009
        %v3011 = vmul.f32 %v2887, %v3010
        %v3012 = vmul.f32 %v2888, %v3010
        %v3013 = vmul.f32 %v2889, %v3010
        %v3014 = vmul.f32 %v2890, %v3010
        %3019 = vrot.lane.b32.xlu0 %v3011, 127
        %v3020 = vpop.permute.xlu0 %3019
        %3021 = vrot.lane.b32.xlu0 %v3012, 127
        %v3022 = vpop.permute.xlu0 %3021
        %3023 = vrot.lane.b32.xlu0 %v3013, 127
        %v3024 = vpop.permute.xlu0 %3023
        %3025 = vrot.lane.b32.xlu0 %v3014, 127
        %v3026 = vpop.permute.xlu0 %3025
        %v3031 = vadd.f32 %v2927, %v3020
        %v3032 = vadd.f32 %v2928, %v3022
        %v3033 = vadd.f32 %v2929, %v3024
        %v3034 = vadd.f32 %v2930, %v3026
        %s3035 = sld [smem:[#allocation3 + $0x4e]]
        %v3036 = vstv %s3035
        %v3037 = vmul.f32 %v2887, %v3036
        %v3038 = vmul.f32 %v2888, %v3036
        %v3039 = vmul.f32 %v2889, %v3036
        %v3040 = vmul.f32 %v2890, %v3036
        %3045 = vrot.lane.b32.xlu0 %v3037, 126
        %v3046 = vpop.permute.xlu0 %3045
        %3047 = vrot.lane.b32.xlu0 %v3038, 126
        %v3048 = vpop.permute.xlu0 %3047
        %3049 = vrot.lane.b32.xlu0 %v3039, 126
        %v3050 = vpop.permute.xlu0 %3049
        %3051 = vrot.lane.b32.xlu0 %v3040, 126
        %v3052 = vpop.permute.xlu0 %3051
        %v3057 = vadd.f32 %v2953, %v3046
        %v3058 = vadd.f32 %v2954, %v3048
        %v3059 = vadd.f32 %v2955, %v3050
        %v3060 = vadd.f32 %v2956, %v3052
        %s3061 = sld [smem:[#allocation3 + $0x4f]]
        %v3062 = vstv %s3061
        %v3063 = vmul.f32 %v2887, %v3062
        %v3064 = vmul.f32 %v2888, %v3062
        %v3065 = vmul.f32 %v2889, %v3062
        %v3066 = vmul.f32 %v2890, %v3062
        %3071 = vrot.lane.b32.xlu0 %v3063, 126
        %v3072 = vpop.permute.xlu0 %3071
        %3073 = vrot.lane.b32.xlu0 %v3064, 126
        %v3074 = vpop.permute.xlu0 %3073
        %3075 = vrot.lane.b32.xlu0 %v3065, 126
        %v3076 = vpop.permute.xlu0 %3075
        %3077 = vrot.lane.b32.xlu0 %v3066, 126
        %v3078 = vpop.permute.xlu0 %3077
        %v3083 = vadd.f32 %v2979, %v3072
        %v3084 = vadd.f32 %v2980, %v3074
        %v3085 = vadd.f32 %v2981, %v3076
        %v3086 = vadd.f32 %v2982, %v3078
        %s3087 = sld [smem:[#allocation3 + $0x50]]
        %v3088 = vstv %s3087
        %v3089 = vmul.f32 %v2887, %v3088
        %v3090 = vmul.f32 %v2888, %v3088
        %v3091 = vmul.f32 %v2889, %v3088
        %v3092 = vmul.f32 %v2890, %v3088
        %3097 = vrot.lane.b32.xlu0 %v3089, 126
        %v3098 = vpop.permute.xlu0 %3097
        %3099 = vrot.lane.b32.xlu0 %v3090, 126
        %v3100 = vpop.permute.xlu0 %3099
        %3101 = vrot.lane.b32.xlu0 %v3091, 126
        %v3102 = vpop.permute.xlu0 %3101
        %3103 = vrot.lane.b32.xlu0 %v3092, 126
        %v3104 = vpop.permute.xlu0 %3103
        %v3109 = vadd.f32 %v3005, %v3098
        %v3110 = vadd.f32 %v3006, %v3100
        %v3111 = vadd.f32 %v3007, %v3102
        %v3112 = vadd.f32 %v3008, %v3104
        %s3113 = sld [smem:[#allocation3 + $0x51]]
        %v3114 = vstv %s3113
        %v3115 = vmul.f32 %v2887, %v3114
        %v3116 = vmul.f32 %v2888, %v3114
        %v3117 = vmul.f32 %v2889, %v3114
        %v3118 = vmul.f32 %v2890, %v3114
        %3123 = vrot.lane.b32.xlu0 %v3115, 126
        %v3124 = vpop.permute.xlu0 %3123
        %3125 = vrot.lane.b32.xlu0 %v3116, 126
        %v3126 = vpop.permute.xlu0 %3125
        %3127 = vrot.lane.b32.xlu0 %v3117, 126
        %v3128 = vpop.permute.xlu0 %3127
        %3129 = vrot.lane.b32.xlu0 %v3118, 126
        %v3130 = vpop.permute.xlu0 %3129
        %v3135 = vadd.f32 %v3031, %v3124
        %v3136 = vadd.f32 %v3032, %v3126
        %v3137 = vadd.f32 %v3033, %v3128
        %v3138 = vadd.f32 %v3034, %v3130
        %v3139 = vld [vmem:[%s1865 + $0x2] sm:$0xff]
        %v3140 = vld [vmem:[%s1865 + $0xa] sm:$0xff]
        %v3141 = vld [vmem:[%s1865 + $0x12] sm:$0xff]
        %v3142 = vld [vmem:[%s1865 + $0x1a] sm:$0xff]
        %s3143 = sld [smem:[#allocation3 + $0x56]]
        %v3144 = vstv %s3143
        %v3145 = vmul.f32 %v3139, %v3144
        %v3146 = vmul.f32 %v3140, %v3144
        %v3147 = vmul.f32 %v3141, %v3144
        %v3148 = vmul.f32 %v3142, %v3144
        %v3149 = vadd.f32 %v3057, %v3145
        %v3150 = vadd.f32 %v3058, %v3146
        %v3151 = vadd.f32 %v3059, %v3147
        %v3152 = vadd.f32 %v3060, %v3148
        %s3153 = sld [smem:[#allocation3 + $0x57]]
        %v3154 = vstv %s3153
        %v3155 = vmul.f32 %v3139, %v3154
        %v3156 = vmul.f32 %v3140, %v3154
        %v3157 = vmul.f32 %v3141, %v3154
        %v3158 = vmul.f32 %v3142, %v3154
        %v3159 = vadd.f32 %v3083, %v3155
        %v3160 = vadd.f32 %v3084, %v3156
        %v3161 = vadd.f32 %v3085, %v3157
        %v3162 = vadd.f32 %v3086, %v3158
        %s3163 = sld [smem:[#allocation3 + $0x58]]
        %v3164 = vstv %s3163
        %v3165 = vmul.f32 %v3139, %v3164
        %v3166 = vmul.f32 %v3140, %v3164
        %v3167 = vmul.f32 %v3141, %v3164
        %v3168 = vmul.f32 %v3142, %v3164
        %v3169 = vadd.f32 %v3109, %v3165
        %v3170 = vadd.f32 %v3110, %v3166
        %v3171 = vadd.f32 %v3111, %v3167
        %v3172 = vadd.f32 %v3112, %v3168
        %s3173 = sld [smem:[#allocation3 + $0x59]]
        %v3174 = vstv %s3173
        %v3175 = vmul.f32 %v3139, %v3174
        %v3176 = vmul.f32 %v3140, %v3174
        %v3177 = vmul.f32 %v3141, %v3174
        %v3178 = vmul.f32 %v3142, %v3174
        %v3179 = vadd.f32 %v3135, %v3175
        %v3180 = vadd.f32 %v3136, %v3176
        %v3181 = vadd.f32 %v3137, %v3177
        %v3182 = vadd.f32 %v3138, %v3178
        %s3183 = sld [smem:[#allocation3 + $0x5e]]
        %v3184 = vstv %s3183
        %v3185 = vmul.f32 %v3139, %v3184
        %v3186 = vmul.f32 %v3140, %v3184
        %v3187 = vmul.f32 %v3141, %v3184
        %v3188 = vmul.f32 %v3142, %v3184
        %3193 = vrot.lane.b32.xlu0 %v3185, 127
        %v3194 = vpop.permute.xlu0 %3193
        %3195 = vrot.lane.b32.xlu0 %v3186, 127
        %v3196 = vpop.permute.xlu0 %3195
        %3197 = vrot.lane.b32.xlu0 %v3187, 127
        %v3198 = vpop.permute.xlu0 %3197
        %3199 = vrot.lane.b32.xlu0 %v3188, 127
        %v3200 = vpop.permute.xlu0 %3199
        %v3205 = vadd.f32 %v3149, %v3194
        %v3206 = vadd.f32 %v3150, %v3196
        %v3207 = vadd.f32 %v3151, %v3198
        %v3208 = vadd.f32 %v3152, %v3200
        %s3209 = sld [smem:[#allocation3 + $0x5f]]
        %v3210 = vstv %s3209
        %v3211 = vmul.f32 %v3139, %v3210
        %v3212 = vmul.f32 %v3140, %v3210
        %v3213 = vmul.f32 %v3141, %v3210
        %v3214 = vmul.f32 %v3142, %v3210
        %3219 = vrot.lane.b32.xlu0 %v3211, 127
        %v3220 = vpop.permute.xlu0 %3219
        %3221 = vrot.lane.b32.xlu0 %v3212, 127
        %v3222 = vpop.permute.xlu0 %3221
        %3223 = vrot.lane.b32.xlu0 %v3213, 127
        %v3224 = vpop.permute.xlu0 %3223
        %3225 = vrot.lane.b32.xlu0 %v3214, 127
        %v3226 = vpop.permute.xlu0 %3225
        %v3231 = vadd.f32 %v3159, %v3220
        %v3232 = vadd.f32 %v3160, %v3222
        %v3233 = vadd.f32 %v3161, %v3224
        %v3234 = vadd.f32 %v3162, %v3226
        %s3235 = sld [smem:[#allocation3 + $0x60]]
        %v3236 = vstv %s3235
        %v3237 = vmul.f32 %v3139, %v3236
        %v3238 = vmul.f32 %v3140, %v3236
        %v3239 = vmul.f32 %v3141, %v3236
        %v3240 = vmul.f32 %v3142, %v3236
        %3245 = vrot.lane.b32.xlu0 %v3237, 127
        %v3246 = vpop.permute.xlu0 %3245
        %3247 = vrot.lane.b32.xlu0 %v3238, 127
        %v3248 = vpop.permute.xlu0 %3247
        %3249 = vrot.lane.b32.xlu0 %v3239, 127
        %v3250 = vpop.permute.xlu0 %3249
        %3251 = vrot.lane.b32.xlu0 %v3240, 127
        %v3252 = vpop.permute.xlu0 %3251
        %v3257 = vadd.f32 %v3169, %v3246
        %v3258 = vadd.f32 %v3170, %v3248
        %v3259 = vadd.f32 %v3171, %v3250
        %v3260 = vadd.f32 %v3172, %v3252
        %s3261 = sld [smem:[#allocation3 + $0x61]]
        %v3262 = vstv %s3261
        %v3263 = vmul.f32 %v3139, %v3262
        %v3264 = vmul.f32 %v3140, %v3262
        %v3265 = vmul.f32 %v3141, %v3262
        %v3266 = vmul.f32 %v3142, %v3262
        %3271 = vrot.lane.b32.xlu0 %v3263, 127
        %v3272 = vpop.permute.xlu0 %3271
        %3273 = vrot.lane.b32.xlu0 %v3264, 127
        %v3274 = vpop.permute.xlu0 %3273
        %3275 = vrot.lane.b32.xlu0 %v3265, 127
        %v3276 = vpop.permute.xlu0 %3275
        %3277 = vrot.lane.b32.xlu0 %v3266, 127
        %v3278 = vpop.permute.xlu0 %3277
        %v3283 = vadd.f32 %v3179, %v3272
        %v3284 = vadd.f32 %v3180, %v3274
        %v3285 = vadd.f32 %v3181, %v3276
        %v3286 = vadd.f32 %v3182, %v3278
        %s3287 = sld [smem:[#allocation3 + $0x66]]
        %v3288 = vstv %s3287
        %v3289 = vmul.f32 %v3139, %v3288
        %v3290 = vmul.f32 %v3140, %v3288
        %v3291 = vmul.f32 %v3141, %v3288
        %v3292 = vmul.f32 %v3142, %v3288
        %3297 = vrot.lane.b32.xlu0 %v3289, 126
        %v3298 = vpop.permute.xlu0 %3297
        %3299 = vrot.lane.b32.xlu0 %v3290, 126
        %v3300 = vpop.permute.xlu0 %3299
        %3301 = vrot.lane.b32.xlu0 %v3291, 126
        %v3302 = vpop.permute.xlu0 %3301
        %3303 = vrot.lane.b32.xlu0 %v3292, 126
        %v3304 = vpop.permute.xlu0 %3303
        %v3309 = vadd.f32 %v3205, %v3298
        %v3310 = vadd.f32 %v3206, %v3300
        %v3311 = vadd.f32 %v3207, %v3302
        %v3312 = vadd.f32 %v3208, %v3304
        %s3313 = sld [smem:[#allocation3 + $0x67]]
        %v3314 = vstv %s3313
        %v3315 = vmul.f32 %v3139, %v3314
        %v3316 = vmul.f32 %v3140, %v3314
        %v3317 = vmul.f32 %v3141, %v3314
        %v3318 = vmul.f32 %v3142, %v3314
        %3323 = vrot.lane.b32.xlu0 %v3315, 126
        %v3324 = vpop.permute.xlu0 %3323
        %3325 = vrot.lane.b32.xlu0 %v3316, 126
        %v3326 = vpop.permute.xlu0 %3325
        %3327 = vrot.lane.b32.xlu0 %v3317, 126
        %v3328 = vpop.permute.xlu0 %3327
        %3329 = vrot.lane.b32.xlu0 %v3318, 126
        %v3330 = vpop.permute.xlu0 %3329
        %v3335 = vadd.f32 %v3231, %v3324
        %v3336 = vadd.f32 %v3232, %v3326
        %v3337 = vadd.f32 %v3233, %v3328
        %v3338 = vadd.f32 %v3234, %v3330
        %s3339 = sld [smem:[#allocation3 + $0x68]]
        %v3340 = vstv %s3339
        %v3341 = vmul.f32 %v3139, %v3340
        %v3342 = vmul.f32 %v3140, %v3340
        %v3343 = vmul.f32 %v3141, %v3340
        %v3344 = vmul.f32 %v3142, %v3340
        %3349 = vrot.lane.b32.xlu0 %v3341, 126
        %v3350 = vpop.permute.xlu0 %3349
        %3351 = vrot.lane.b32.xlu0 %v3342, 126
        %v3352 = vpop.permute.xlu0 %3351
        %3353 = vrot.lane.b32.xlu0 %v3343, 126
        %v3354 = vpop.permute.xlu0 %3353
        %3355 = vrot.lane.b32.xlu0 %v3344, 126
        %v3356 = vpop.permute.xlu0 %3355
        %v3361 = vadd.f32 %v3257, %v3350
        %v3362 = vadd.f32 %v3258, %v3352
        %v3363 = vadd.f32 %v3259, %v3354
        %v3364 = vadd.f32 %v3260, %v3356
        %s3365 = sld [smem:[#allocation3 + $0x69]]
        %v3366 = vstv %s3365
        %v3367 = vmul.f32 %v3139, %v3366
        %v3368 = vmul.f32 %v3140, %v3366
        %v3369 = vmul.f32 %v3141, %v3366
        %v3370 = vmul.f32 %v3142, %v3366
        %3375 = vrot.lane.b32.xlu0 %v3367, 126
        %v3376 = vpop.permute.xlu0 %3375
        %3377 = vrot.lane.b32.xlu0 %v3368, 126
        %v3378 = vpop.permute.xlu0 %3377
        %3379 = vrot.lane.b32.xlu0 %v3369, 126
        %v3380 = vpop.permute.xlu0 %3379
        %3381 = vrot.lane.b32.xlu0 %v3370, 126
        %v3382 = vpop.permute.xlu0 %3381
        %v3387 = vadd.f32 %v3283, %v3376
        %v3388 = vadd.f32 %v3284, %v3378
        %v3389 = vadd.f32 %v3285, %v3380
        %v3390 = vadd.f32 %v3286, %v3382
        %v3391 = vsel %vm1468, %v3309, 0.0
        %v3392 = vsel %vm1468, %v3310, 0.0
        %v3393 = vadd.f32 %v3391, %v3392
        %v3394 = vsel %vm1468, %v3311, 0.0
        %v3395 = vadd.f32 %v3393, %v3394
        %v3396 = vsel %vm1468, %v3312, 0.0
        %v3397 = vadd.f32 %v3395, %v3396
        %3398 = vadd.xlane.f32.xlu0 %v3397
        %v3399 = vpop.xlane.xlu0 %3398
        %v3400 = vrot.slane %v3399, 4
        %v3401 = vadd.f32 %v3399, %v3400
        %v3402 = vrot.slane %v3401, 2
        %v3403 = vadd.f32 %v3401, %v3402
        %v3404 = vrot.slane %v3403, 1
        %v3405 = vadd.f32 %v3403, %v3404
        %s3406 = vtos %v3405
        %v3407 = vstv %s3406
        %v3408 = vmul.f32 %v3309, %v3309
        %v3409 = vmul.f32 %v3310, %v3310
        %v3410 = vmul.f32 %v3311, %v3311
        %v3411 = vmul.f32 %v3312, %v3312
        %v3412 = vsel %vm1468, %v3408, 0.0
        %v3413 = vsel %vm1468, %v3409, 0.0
        %v3414 = vadd.f32 %v3412, %v3413
        %v3415 = vsel %vm1468, %v3410, 0.0
        %v3416 = vadd.f32 %v3414, %v3415
        %v3417 = vsel %vm1468, %v3411, 0.0
        %v3418 = vadd.f32 %v3416, %v3417
        %3419 = vadd.xlane.f32.xlu0 %v3418
        %v3420 = vpop.xlane.xlu0 %3419
        %v3421 = vrot.slane %v3420, 4
        %v3422 = vadd.f32 %v3420, %v3421
        %v3423 = vrot.slane %v3422, 2
        %v3424 = vadd.f32 %v3422, %v3423
        %v3425 = vrot.slane %v3424, 1
        %v3426 = vadd.f32 %v3424, %v3425
        %s3427 = vtos %v3426
        %v3428 = vstv %s3427
        %v3429 = vmul.f32 %v3407, 0.0009765625
        %v3430 = vmul.f32 %v3428, 0.0009765625
        %v3431 = vmul.f32 %v3429, %v3429
        %v3432 = vsub.f32 %v3430, %v3431
        %s3433 = sld [smem:[#allocation3 + $0x6e]]
        %v3434 = vadd.f32 %v3432, 1e-05
        %v3435 = vrsqrt.pop %v3434
        %v3436 = vstv %s3433
        %v3437 = vmul.f32 %v3436, %v3435
        %v3438 = vsub.f32 %v3309, %v3429
        %v3439 = vsub.f32 %v3310, %v3429
        %v3440 = vsub.f32 %v3311, %v3429
        %v3441 = vsub.f32 %v3312, %v3429
        %v3442 = vmul.f32 %v3438, %v3437
        %v3443 = vmul.f32 %v3439, %v3437
        %v3444 = vmul.f32 %v3440, %v3437
        %v3445 = vmul.f32 %v3441, %v3437
        %s3446 = sld [smem:[#allocation3 + $0x72]]
        %v3447 = vstv %s3446
        %v3448 = vadd.f32 %v3442, %v3447
        %v3449 = vadd.f32 %v3443, %v3447
        %v3450 = vadd.f32 %v3444, %v3447
        %v3451 = vadd.f32 %v3445, %v3447
        %vm3452 = vcmp.gt.f32.partialorder %v3448, 0.0
        %vm3453 = vcmp.gt.f32.partialorder %v3449, 0.0
        %vm3454 = vcmp.gt.f32.partialorder %v3450, 0.0
        %vm3455 = vcmp.gt.f32.partialorder %v3451, 0.0
        %v3456 = vmul.f32 %v3448, 0.1
        %v3457 = vmul.f32 %v3449, 0.1
        %v3458 = vmul.f32 %v3450, 0.1
        %v3459 = vmul.f32 %v3451, 0.1
        %v3460 = vsel %vm3452, %v3448, %v3456
        %v3461 = vsel %vm3453, %v3449, %v3457
        %v3462 = vsel %vm3454, %v3450, %v3458
        %v3463 = vsel %vm3455, %v3451, %v3459
        %v3464 = vsel %vm1468, %v3335, 0.0
        %v3465 = vsel %vm1468, %v3336, 0.0
        %v3466 = vadd.f32 %v3464, %v3465
        %v3467 = vsel %vm1468, %v3337, 0.0
        %v3468 = vadd.f32 %v3466, %v3467
        %v3469 = vsel %vm1468, %v3338, 0.0
        %v3470 = vadd.f32 %v3468, %v3469
        %3471 = vadd.xlane.f32.xlu0 %v3470
        %v3472 = vpop.xlane.xlu0 %3471
        %v3473 = vrot.slane %v3472, 4
        %v3474 = vadd.f32 %v3472, %v3473
        %v3475 = vrot.slane %v3474, 2
        %v3476 = vadd.f32 %v3474, %v3475
        %v3477 = vrot.slane %v3476, 1
        %v3478 = vadd.f32 %v3476, %v3477
        %s3479 = vtos %v3478
        %v3480 = vstv %s3479
        %v3481 = vmul.f32 %v3335, %v3335
        %v3482 = vmul.f32 %v3336, %v3336
        %v3483 = vmul.f32 %v3337, %v3337
        %v3484 = vmul.f32 %v3338, %v3338
        %v3485 = vsel %vm1468, %v3481, 0.0
        %v3486 = vsel %vm1468, %v3482, 0.0
        %v3487 = vadd.f32 %v3485, %v3486
        %v3488 = vsel %vm1468, %v3483, 0.0
        %v3489 = vadd.f32 %v3487, %v3488
        %v3490 = vsel %vm1468, %v3484, 0.0
        %v3491 = vadd.f32 %v3489, %v3490
        %3492 = vadd.xlane.f32.xlu0 %v3491
        %v3493 = vpop.xlane.xlu0 %3492
        %v3494 = vrot.slane %v3493, 4
        %v3495 = vadd.f32 %v3493, %v3494
        %v3496 = vrot.slane %v3495, 2
        %v3497 = vadd.f32 %v3495, %v3496
        %v3498 = vrot.slane %v3497, 1
        %v3499 = vadd.f32 %v3497, %v3498
        %s3500 = vtos %v3499
        %v3501 = vstv %s3500
        %v3502 = vmul.f32 %v3480, 0.0009765625
        %v3503 = vmul.f32 %v3501, 0.0009765625
        %v3504 = vmul.f32 %v3502, %v3502
        %v3505 = vsub.f32 %v3503, %v3504
        %s3506 = sld [smem:[#allocation3 + $0x6f]]
        %v3507 = vadd.f32 %v3505, 1e-05
        %v3508 = vrsqrt.pop %v3507
        %v3509 = vstv %s3506
        %v3510 = vmul.f32 %v3509, %v3508
        %v3511 = vsub.f32 %v3335, %v3502
        %v3512 = vsub.f32 %v3336, %v3502
        %v3513 = vsub.f32 %v3337, %v3502
        %v3514 = vsub.f32 %v3338, %v3502
        %v3515 = vmul.f32 %v3511, %v3510
        %v3516 = vmul.f32 %v3512, %v3510
        %v3517 = vmul.f32 %v3513, %v3510
        %v3518 = vmul.f32 %v3514, %v3510
        %s3519 = sld [smem:[#allocation3 + $0x73]]
        %v3520 = vstv %s3519
        %v3521 = vadd.f32 %v3515, %v3520
        %v3522 = vadd.f32 %v3516, %v3520
        %v3523 = vadd.f32 %v3517, %v3520
        %v3524 = vadd.f32 %v3518, %v3520
        %vm3525 = vcmp.gt.f32.partialorder %v3521, 0.0
        %vm3526 = vcmp.gt.f32.partialorder %v3522, 0.0
        %vm3527 = vcmp.gt.f32.partialorder %v3523, 0.0
        %vm3528 = vcmp.gt.f32.partialorder %v3524, 0.0
        %v3529 = vmul.f32 %v3521, 0.1
        %v3530 = vmul.f32 %v3522, 0.1
        %v3531 = vmul.f32 %v3523, 0.1
        %v3532 = vmul.f32 %v3524, 0.1
        %v3533 = vsel %vm3525, %v3521, %v3529
        %v3534 = vsel %vm3526, %v3522, %v3530
        %v3535 = vsel %vm3527, %v3523, %v3531
        %v3536 = vsel %vm3528, %v3524, %v3532
        %v3537 = vsel %vm1468, %v3361, 0.0
        %v3538 = vsel %vm1468, %v3362, 0.0
        %v3539 = vadd.f32 %v3537, %v3538
        %v3540 = vsel %vm1468, %v3363, 0.0
        %v3541 = vadd.f32 %v3539, %v3540
        %v3542 = vsel %vm1468, %v3364, 0.0
        %v3543 = vadd.f32 %v3541, %v3542
        %3544 = vadd.xlane.f32.xlu0 %v3543
        %v3545 = vpop.xlane.xlu0 %3544
        %v3546 = vrot.slane %v3545, 4
        %v3547 = vadd.f32 %v3545, %v3546
        %v3548 = vrot.slane %v3547, 2
        %v3549 = vadd.f32 %v3547, %v3548
        %v3550 = vrot.slane %v3549, 1
        %v3551 = vadd.f32 %v3549, %v3550
        %s3552 = vtos %v3551
        %v3553 = vstv %s3552
        %v3554 = vmul.f32 %v3361, %v3361
        %v3555 = vmul.f32 %v3362, %v3362
        %v3556 = vmul.f32 %v3363, %v3363
        %v3557 = vmul.f32 %v3364, %v3364
        %v3558 = vsel %vm1468, %v3554, 0.0
        %v3559 = vsel %vm1468, %v3555, 0.0
        %v3560 = vadd.f32 %v3558, %v3559
        %v3561 = vsel %vm1468, %v3556, 0.0
        %v3562 = vadd.f32 %v3560, %v3561
        %v3563 = vsel %vm1468, %v3557, 0.0
        %v3564 = vadd.f32 %v3562, %v3563
        %3565 = vadd.xlane.f32.xlu0 %v3564
        %v3566 = vpop.xlane.xlu0 %3565
        %v3567 = vrot.slane %v3566, 4
        %v3568 = vadd.f32 %v3566, %v3567
        %v3569 = vrot.slane %v3568, 2
        %v3570 = vadd.f32 %v3568, %v3569
        %v3571 = vrot.slane %v3570, 1
        %v3572 = vadd.f32 %v3570, %v3571
        %s3573 = vtos %v3572
        %v3574 = vstv %s3573
        %v3575 = vmul.f32 %v3553, 0.0009765625
        %v3576 = vmul.f32 %v3574, 0.0009765625
        %v3577 = vmul.f32 %v3575, %v3575
        %v3578 = vsub.f32 %v3576, %v3577
        %s3579 = sld [smem:[#allocation3 + $0x70]]
        %v3580 = vadd.f32 %v3578, 1e-05
        %v3581 = vrsqrt.pop %v3580
        %v3582 = vstv %s3579
        %v3583 = vmul.f32 %v3582, %v3581
        %v3584 = vsub.f32 %v3361, %v3575
        %v3585 = vsub.f32 %v3362, %v3575
        %v3586 = vsub.f32 %v3363, %v3575
        %v3587 = vsub.f32 %v3364, %v3575
        %v3588 = vmul.f32 %v3584, %v3583
        %v3589 = vmul.f32 %v3585, %v3583
        %v3590 = vmul.f32 %v3586, %v3583
        %v3591 = vmul.f32 %v3587, %v3583
        %s3592 = sld [smem:[#allocation3 + $0x74]]
        %v3593 = vstv %s3592
        %v3594 = vadd.f32 %v3588, %v3593
        %v3595 = vadd.f32 %v3589, %v3593
        %v3596 = vadd.f32 %v3590, %v3593
        %v3597 = vadd.f32 %v3591, %v3593
        %vm3598 = vcmp.gt.f32.partialorder %v3594, 0.0
        %vm3599 = vcmp.gt.f32.partialorder %v3595, 0.0
        %vm3600 = vcmp.gt.f32.partialorder %v3596, 0.0
        %vm3601 = vcmp.gt.f32.partialorder %v3597, 0.0
        %v3602 = vmul.f32 %v3594, 0.1
        %v3603 = vmul.f32 %v3595, 0.1
        %v3604 = vmul.f32 %v3596, 0.1
        %v3605 = vmul.f32 %v3597, 0.1
        %v3606 = vsel %vm3598, %v3594, %v3602
        %v3607 = vsel %vm3599, %v3595, %v3603
        %v3608 = vsel %vm3600, %v3596, %v3604
        %v3609 = vsel %vm3601, %v3597, %v3605
        %v3610 = vsel %vm1468, %v3387, 0.0
        %v3611 = vsel %vm1468, %v3388, 0.0
        %v3612 = vadd.f32 %v3610, %v3611
        %v3613 = vsel %vm1468, %v3389, 0.0
        %v3614 = vadd.f32 %v3612, %v3613
        %v3615 = vsel %vm1468, %v3390, 0.0
        %v3616 = vadd.f32 %v3614, %v3615
        %3617 = vadd.xlane.f32.xlu0 %v3616
        %v3618 = vpop.xlane.xlu0 %3617
        %v3619 = vrot.slane %v3618, 4
        %v3620 = vadd.f32 %v3618, %v3619
        %v3621 = vrot.slane %v3620, 2
        %v3622 = vadd.f32 %v3620, %v3621
        %v3623 = vrot.slane %v3622, 1
        %v3624 = vadd.f32 %v3622, %v3623
        %s3625 = vtos %v3624
        %v3626 = vstv %s3625
        %v3627 = vmul.f32 %v3387, %v3387
        %v3628 = vmul.f32 %v3388, %v3388
        %v3629 = vmul.f32 %v3389, %v3389
        %v3630 = vmul.f32 %v3390, %v3390
        %v3631 = vsel %vm1468, %v3627, 0.0
        %v3632 = vsel %vm1468, %v3628, 0.0
        %v3633 = vadd.f32 %v3631, %v3632
        %v3634 = vsel %vm1468, %v3629, 0.0
        %v3635 = vadd.f32 %v3633, %v3634
        %v3636 = vsel %vm1468, %v3630, 0.0
        %v3637 = vadd.f32 %v3635, %v3636
        %3638 = vadd.xlane.f32.xlu0 %v3637
        %v3639 = vpop.xlane.xlu0 %3638
        %v3640 = vrot.slane %v3639, 4
        %v3641 = vadd.f32 %v3639, %v3640
        %v3642 = vrot.slane %v3641, 2
        %v3643 = vadd.f32 %v3641, %v3642
        %v3644 = vrot.slane %v3643, 1
        %v3645 = vadd.f32 %v3643, %v3644
        %s3646 = vtos %v3645
        %v3647 = vstv %s3646
        %v3648 = vmul.f32 %v3626, 0.0009765625
        %v3649 = vmul.f32 %v3647, 0.0009765625
        %v3650 = vmul.f32 %v3648, %v3648
        %v3651 = vsub.f32 %v3649, %v3650
        %s3652 = sld [smem:[#allocation3 + $0x71]]
        %v3653 = vadd.f32 %v3651, 1e-05
        %v3654 = vrsqrt.pop %v3653
        %v3655 = vstv %s3652
        %v3656 = vmul.f32 %v3655, %v3654
        %v3657 = vsub.f32 %v3387, %v3648
        %v3658 = vsub.f32 %v3388, %v3648
        %v3659 = vsub.f32 %v3389, %v3648
        %v3660 = vsub.f32 %v3390, %v3648
        %v3661 = vmul.f32 %v3657, %v3656
        %v3662 = vmul.f32 %v3658, %v3656
        %v3663 = vmul.f32 %v3659, %v3656
        %v3664 = vmul.f32 %v3660, %v3656
        %s3665 = sld [smem:[#allocation3 + $0x75]]
        %v3666 = vstv %s3665
        %v3667 = vadd.f32 %v3661, %v3666
        %v3668 = vadd.f32 %v3662, %v3666
        %v3669 = vadd.f32 %v3663, %v3666
        %v3670 = vadd.f32 %v3664, %v3666
        %vm3671 = vcmp.gt.f32.partialorder %v3667, 0.0
        %vm3672 = vcmp.gt.f32.partialorder %v3668, 0.0
        %vm3673 = vcmp.gt.f32.partialorder %v3669, 0.0
        %vm3674 = vcmp.gt.f32.partialorder %v3670, 0.0
        %v3675 = vmul.f32 %v3667, 0.1
        %v3676 = vmul.f32 %v3668, 0.1
        %v3677 = vmul.f32 %v3669, 0.1
        %v3678 = vmul.f32 %v3670, 0.1
        %v3679 = vsel %vm3671, %v3667, %v3675
        %v3680 = vsel %vm3672, %v3668, %v3676
        %v3681 = vsel %vm3673, %v3669, %v3677
        %v3682 = vsel %vm3674, %v3670, %v3678
        %v3684 = vsel %vm1468, %v3460, 0
        %v3687 = vsel %vm1468, %v3461, 0
        %v3690 = vsel %vm1468, %v3462, 0
        %v3693 = vsel %vm1468, %v3463, 0
        %3695 = vmatprep.subr.mxu0 0.0
        %3696 = vmatpush1.msra.mxu0 %v210
        %3697 = vmatprep.subr.mxu0 0.0
        %3698 = vmatpush1.msra.mxu0 %v211
        %3699 = vmatprep.subr.mxu0 0.0
        %3700 = vmatpush1.msra.mxu0 %v212
        %3701 = vmatprep.subr.mxu0 0.0
        %3702 = vmatpush1.msra.mxu0 %v213
        %3703 = vmatprep.subr.mxu0 0.0
        %3704 = vmatpush1.msra.mxu0 0.0
        %3705 = vmatprep.subr.mxu0 0.0
        %3706 = vmatpush1.msra.mxu0 0.0
        %3707 = vmatprep.subr.mxu0 0.0
        %3708 = vmatpush1.msra.mxu0 0.0
        %3709 = vmatprep.subr.mxu0 0.0
        %3710 = vmatpush1.msra.mxu0 0.0
        %3711 = vmatprep.subr.mxu0 0.0
        %3712 = vmatpush1.msra.mxu0 0.0
        %3713 = vmatprep.subr.mxu0 0.0
        %3714 = vmatpush1.msra.mxu0 0.0
        %3715 = vmatprep.subr.mxu0 0.0
        %3716 = vmatpush1.msra.mxu0 0.0
        %3717 = vmatprep.subr.mxu0 0.0
        %3718 = vmatpush1.msra.mxu0 0.0
        %3719 = vmatprep.subr.mxu0 0.0
        %3720 = vmatpush1.msra.mxu0 0.0
        %3721 = vmatprep.subr.mxu0 0.0
        %3722 = vmatpush1.msra.mxu0 0.0
        %3723 = vmatprep.subr.mxu0 0.0
        %3724 = vmatpush1.msra.mxu0 0.0
        %3725 = vmatprep.subr.mxu0 0.0
        %3726 = vmatpush1.msra.mxu0 0.0
        %3727 = vmatprep.subr.mxu0 0.0
        %3728 = vmatpush1.msra.mxu0 0.0
        %3729 = vmatprep.subr.mxu0 0.0
        %3730 = vmatpush1.msra.mxu0 0.0
        %3731 = vmatprep.subr.mxu0 0.0
        %3732 = vmatpush1.msra.mxu0 0.0
        %3733 = vmatprep.subr.mxu0 0.0
        %3734 = vmatpush1.msra.mxu0 0.0
        %3735 = vmatprep.subr.mxu0 0.0
        %3736 = vmatpush1.msra.mxu0 0.0
        %3737 = vmatprep.subr.mxu0 0.0
        %3738 = vmatpush1.msra.mxu0 0.0
        %3739 = vmatprep.subr.mxu0 0.0
        %3740 = vmatpush1.msra.mxu0 0.0
        %3741 = vmatprep.subr.mxu0 0.0
        %3742 = vmatpush1.msra.mxu0 0.0
        %3743 = vmatprep.subr.mxu0 0.0
        %3744 = vmatpush1.msra.mxu0 0.0
        %3745 = vmatprep.subr.mxu0 0.0
        %3746 = vmatpush1.msra.mxu0 0.0
        %3747 = vmatprep.subr.mxu0 0.0
        %3748 = vmatpush1.msra.mxu0 0.0
        %3749 = vmatprep.subr.mxu0 0.0
        %3750 = vmatpush1.msra.mxu0 0.0
        %3751 = vmatprep.subr.mxu0 0.0
        %3752 = vmatpush1.msra.mxu0 0.0
        %3753 = vmatprep.subr.mxu0 0.0
        %3754 = vmatpush1.msra.mxu0 0.0
        %3755 = vmatprep.subr.mxu0 0.0
        %3756 = vmatpush1.msra.mxu0 0.0
        %3757 = vmatprep.subr.mxu0 0.0
        %3758 = vmatpush1.msra.mxu0 0.0
        %3759 = vmatprep.mubr.f32.mxu0 0.0
        %3760 = vmatmul.mubr.f32.gmra.mrb[0].mxu0 %v3684
        %v3761 = vpop.f32.mrb[0].mxu0
        %v3762 = vadd.f32 0.0, %v3761
        %v3763 = vpop.f32.mrb[0].mxu0
        %3764 = vmatprep.mubr.f32.mxu0 0.0
        %3765 = vmatmul.mubr.f32.gmra.mrb[0].mxu0 %v3687
        %v3766 = vpop.f32.mrb[0].mxu0
        %v3767 = vadd.f32 0.0, %v3766
        %v3768 = vpop.f32.mrb[0].mxu0
        %3769 = vmatprep.mubr.f32.mxu0 0.0
        %3770 = vmatmul.mubr.f32.gmra.mrb[0].mxu0 %v3690
        %v3771 = vpop.f32.mrb[0].mxu0
        %v3772 = vadd.f32 0.0, %v3771
        %v3773 = vpop.f32.mrb[0].mxu0
        %3774 = vmatprep.mubr.f32.mxu0 0.0
        %3775 = vmatmul.mubr.f32.gmra.mrb[0].mxu0 %v3693
        %v3776 = vpop.f32.mrb[0].mxu0
        %v3777 = vadd.f32 0.0, %v3776
        %v3778 = vpop.f32.mrb[0].mxu0
        %3779 = vdwg.mxu0
        %3780 = vmatprep.subr.mxu0 0.0
        %3781 = vmatpush1.msra.mxu0 %v3762
        %3782 = vmatprep.subr.mxu0 0.0
        %3783 = vmatpush1.msra.mxu0 %v3767
        %3784 = vmatprep.subr.mxu0 0.0
        %3785 = vmatpush1.msra.mxu0 %v3772
        %3786 = vmatprep.subr.mxu0 0.0
        %3787 = vmatpush1.msra.mxu0 %v3777
        %3788 = vmatprep.subr.mxu0 0.0
        %3789 = vmatpush1.msra.mxu0 0.0
        %3790 = vmatprep.subr.mxu0 0.0
        %3791 = vmatpush1.msra.mxu0 0.0
        %3792 = vmatprep.subr.mxu0 0.0
        %3793 = vmatpush1.msra.mxu0 0.0
        %3794 = vmatprep.subr.mxu0 0.0
        %3795 = vmatpush1.msra.mxu0 0.0
        %3796 = vmatprep.subr.mxu0 0.0
        %3797 = vmatpush1.msra.mxu0 0.0
        %3798 = vmatprep.subr.mxu0 0.0
        %3799 = vmatpush1.msra.mxu0 0.0
        %3800 = vmatprep.subr.mxu0 0.0
        %3801 = vmatpush1.msra.mxu0 0.0
        %3802 = vmatprep.subr.mxu0 0.0
        %3803 = vmatpush1.msra.mxu0 0.0
        %3804 = vmatprep.subr.mxu0 0.0
        %3805 = vmatpush1.msra.mxu0 0.0
        %3806 = vmatprep.subr.mxu0 0.0
        %3807 = vmatpush1.msra.mxu0 0.0
        %3808 = vmatprep.subr.mxu0 0.0
        %3809 = vmatpush1.msra.mxu0 0.0
        %3810 = vmatprep.subr.mxu0 0.0
        %3811 = vmatpush1.msra.mxu0 0.0
        %3812 = vmatprep.subr.mxu0 0.0
        %3813 = vmatpush1.msra.mxu0 0.0
        %3814 = vmatprep.subr.mxu0 0.0
        %3815 = vmatpush1.msra.mxu0 0.0
        %3816 = vmatprep.subr.mxu0 0.0
        %3817 = vmatpush1.msra.mxu0 0.0
        %3818 = vmatprep.subr.mxu0 0.0
        %3819 = vmatpush1.msra.mxu0 0.0
        %3820 = vmatprep.subr.mxu0 0.0
        %3821 = vmatpush1.msra.mxu0 0.0
        %3822 = vmatprep.subr.mxu0 0.0
        %3823 = vmatpush1.msra.mxu0 0.0
        %3824 = vmatprep.subr.mxu0 0.0
        %3825 = vmatpush1.msra.mxu0 0.0
        %3826 = vmatprep.subr.mxu0 0.0
        %3827 = vmatpush1.msra.mxu0 0.0
        %3828 = vmatprep.subr.mxu0 0.0
        %3829 = vmatpush1.msra.mxu0 0.0
        %3830 = vmatprep.subr.mxu0 0.0
        %3831 = vmatpush1.msra.mxu0 0.0
        %3832 = vmatprep.subr.mxu0 0.0
        %3833 = vmatpush1.msra.mxu0 0.0
        %3834 = vmatprep.subr.mxu0 0.0
        %3835 = vmatpush1.msra.mxu0 0.0
        %3836 = vmatprep.subr.mxu0 0.0
        %3837 = vmatpush1.msra.mxu0 0.0
        %3838 = vmatprep.subr.mxu0 0.0
        %3839 = vmatpush1.msra.mxu0 0.0
        %3840 = vmatprep.subr.mxu0 0.0
        %3841 = vmatpush1.msra.mxu0 0.0
        %3842 = vmatprep.subr.mxu0 0.0
        %3843 = vmatpush1.msra.mxu0 0.0
        %3844 = vmatprep.mubr.f32.mxu0 0.0
        %3845 = vmatmul.mubr.f32.gmra.mrb[0].mxu0 %v1567
        %v3846 = vpop.f32.mrb[0].mxu0
        %v3847 = vadd.f32 0.0, %v3846
        %v3848 = vpop.f32.mrb[0].mxu0
        %3849 = vmatprep.mubr.f32.mxu0 0.0
        %3850 = vmatmul.mubr.f32.gmra.mrb[0].mxu0 %v1570
        %v3851 = vpop.f32.mrb[0].mxu0
        %v3852 = vadd.f32 0.0, %v3851
        %v3853 = vpop.f32.mrb[0].mxu0
        %3854 = vmatprep.mubr.f32.mxu0 0.0
        %3855 = vmatmul.mubr.f32.gmra.mrb[0].mxu0 %v1573
        %v3856 = vpop.f32.mrb[0].mxu0
        %v3857 = vadd.f32 0.0, %v3856
        %v3858 = vpop.f32.mrb[0].mxu0
        %3859 = vmatprep.mubr.f32.mxu0 0.0
        %3860 = vmatmul.mubr.f32.gmra.mrb[0].mxu0 %v1576
        %v3861 = vpop.f32.mrb[0].mxu0
        %v3862 = vadd.f32 0.0, %v3861
        %v3863 = vpop.f32.mrb[0].mxu0
        %3864 = vmatprep.mubr.f32.mxu0 0.0
        %3865 = vmatmul.mubr.f32.gmra.mrb[0].mxu0 %v1579
        %v3866 = vpop.f32.mrb[0].mxu0
        %v3867 = vadd.f32 0.0, %v3866
        %v3868 = vpop.f32.mrb[0].mxu0
        %3869 = vdwg.mxu0
        %3870 = vst.msk [vmem:[#allocation2] sm:$0xff] %vm1671, %v3847
        %3871 = vst.msk [vmem:[#allocation2 + $0x8] sm:$0xff] %vm1671, %v3852
        %3872 = vst.msk [vmem:[#allocation2 + $0x10] sm:$0xff] %vm1671, %v3857
        %3873 = vst.msk [vmem:[#allocation2 + $0x18] sm:$0xff] %vm1671, %v3862
        %3874 = vst.msk [vmem:[#allocation2 + $0x20] sm:$0x3] %vm1676, %v3867
        %v3876 = vsel %vm1468, %v3533, 0
        %v3879 = vsel %vm1468, %v3534, 0
        %v3882 = vsel %vm1468, %v3535, 0
        %v3885 = vsel %vm1468, %v3536, 0
        %3887 = vmatprep.subr.mxu0 0.0
        %3888 = vmatpush1.msra.mxu0 %v210
        %3889 = vmatprep.subr.mxu0 0.0
        %3890 = vmatpush1.msra.mxu0 %v211
        %3891 = vmatprep.subr.mxu0 0.0
        %3892 = vmatpush1.msra.mxu0 %v212
        %3893 = vmatprep.subr.mxu0 0.0
        %3894 = vmatpush1.msra.mxu0 %v213
        %3895 = vmatprep.subr.mxu0 0.0
        %3896 = vmatpush1.msra.mxu0 0.0
        %3897 = vmatprep.subr.mxu0 0.0
        %3898 = vmatpush1.msra.mxu0 0.0
        %3899 = vmatprep.subr.mxu0 0.0
        %3900 = vmatpush1.msra.mxu0 0.0
        %3901 = vmatprep.subr.mxu0 0.0
        %3902 = vmatpush1.msra.mxu0 0.0
        %3903 = vmatprep.subr.mxu0 0.0
        %3904 = vmatpush1.msra.mxu0 0.0
        %3905 = vmatprep.subr.mxu0 0.0
        %3906 = vmatpush1.msra.mxu0 0.0
        %3907 = vmatprep.subr.mxu0 0.0
        %3908 = vmatpush1.msra.mxu0 0.0
        %3909 = vmatprep.subr.mxu0 0.0
        %3910 = vmatpush1.msra.mxu0 0.0
        %3911 = vmatprep.subr.mxu0 0.0
        %3912 = vmatpush1.msra.mxu0 0.0
        %3913 = vmatprep.subr.mxu0 0.0
        %3914 = vmatpush1.msra.mxu0 0.0
        %3915 = vmatprep.subr.mxu0 0.0
        %3916 = vmatpush1.msra.mxu0 0.0
        %3917 = vmatprep.subr.mxu0 0.0
        %3918 = vmatpush1.msra.mxu0 0.0
        %3919 = vmatprep.subr.mxu0 0.0
        %3920 = vmatpush1.msra.mxu0 0.0
        %3921 = vmatprep.subr.mxu0 0.0
        %3922 = vmatpush1.msra.mxu0 0.0
        %3923 = vmatprep.subr.mxu0 0.0
        %3924 = vmatpush1.msra.mxu0 0.0
        %3925 = vmatprep.subr.mxu0 0.0
        %3926 = vmatpush1.msra.mxu0 0.0
        %3927 = vmatprep.subr.mxu0 0.0
        %3928 = vmatpush1.msra.mxu0 0.0
        %3929 = vmatprep.subr.mxu0 0.0
        %3930 = vmatpush1.msra.mxu0 0.0
        %3931 = vmatprep.subr.mxu0 0.0
        %3932 = vmatpush1.msra.mxu0 0.0
        %3933 = vmatprep.subr.mxu0 0.0
        %3934 = vmatpush1.msra.mxu0 0.0
        %3935 = vmatprep.subr.mxu0 0.0
        %3936 = vmatpush1.msra.mxu0 0.0
        %3937 = vmatprep.subr.mxu0 0.0
        %3938 = vmatpush1.msra.mxu0 0.0
        %3939 = vmatprep.subr.mxu0 0.0
        %3940 = vmatpush1.msra.mxu0 0.0
        %3941 = vmatprep.subr.mxu0 0.0
        %3942 = vmatpush1.msra.mxu0 0.0
        %3943 = vmatprep.subr.mxu0 0.0
        %3944 = vmatpush1.msra.mxu0 0.0
        %3945 = vmatprep.subr.mxu0 0.0
        %3946 = vmatpush1.msra.mxu0 0.0
        %3947 = vmatprep.subr.mxu0 0.0
        %3948 = vmatpush1.msra.mxu0 0.0
        %3949 = vmatprep.subr.mxu0 0.0
        %3950 = vmatpush1.msra.mxu0 0.0
        %3951 = vmatprep.mubr.f32.mxu0 0.0
        %3952 = vmatmul.mubr.f32.gmra.mrb[0].mxu0 %v3876
        %v3953 = vpop.f32.mrb[0].mxu0
        %v3954 = vadd.f32 0.0, %v3953
        %v3955 = vpop.f32.mrb[0].mxu0
        %3956 = vmatprep.mubr.f32.mxu0 0.0
        %3957 = vmatmul.mubr.f32.gmra.mrb[0].mxu0 %v3879
        %v3958 = vpop.f32.mrb[0].mxu0
        %v3959 = vadd.f32 0.0, %v3958
        %v3960 = vpop.f32.mrb[0].mxu0
        %3961 = vmatprep.mubr.f32.mxu0 0.0
        %3962 = vmatmul.mubr.f32.gmra.mrb[0].mxu0 %v3882
        %v3963 = vpop.f32.mrb[0].mxu0
        %v3964 = vadd.f32 0.0, %v3963
        %v3965 = vpop.f32.mrb[0].mxu0
        %3966 = vmatprep.mubr.f32.mxu0 0.0
        %3967 = vmatmul.mubr.f32.gmra.mrb[0].mxu0 %v3885
        %v3968 = vpop.f32.mrb[0].mxu0
        %v3969 = vadd.f32 0.0, %v3968
        %v3970 = vpop.f32.mrb[0].mxu0
        %3971 = vdwg.mxu0
        %3972 = vmatprep.subr.mxu0 0.0
        %3973 = vmatpush1.msra.mxu0 %v3954
        %3974 = vmatprep.subr.mxu0 0.0
        %3975 = vmatpush1.msra.mxu0 %v3959
        %3976 = vmatprep.subr.mxu0 0.0
        %3977 = vmatpush1.msra.mxu0 %v3964
        %3978 = vmatprep.subr.mxu0 0.0
        %3979 = vmatpush1.msra.mxu0 %v3969
        %3980 = vmatprep.subr.mxu0 0.0
        %3981 = vmatpush1.msra.mxu0 0.0
        %3982 = vmatprep.subr.mxu0 0.0
        %3983 = vmatpush1.msra.mxu0 0.0
        %3984 = vmatprep.subr.mxu0 0.0
        %3985 = vmatpush1.msra.mxu0 0.0
        %3986 = vmatprep.subr.mxu0 0.0
        %3987 = vmatpush1.msra.mxu0 0.0
        %3988 = vmatprep.subr.mxu0 0.0
        %3989 = vmatpush1.msra.mxu0 0.0
        %3990 = vmatprep.subr.mxu0 0.0
        %3991 = vmatpush1.msra.mxu0 0.0
        %3992 = vmatprep.subr.mxu0 0.0
        %3993 = vmatpush1.msra.mxu0 0.0
        %3994 = vmatprep.subr.mxu0 0.0
        %3995 = vmatpush1.msra.mxu0 0.0
        %3996 = vmatprep.subr.mxu0 0.0
        %3997 = vmatpush1.msra.mxu0 0.0
        %3998 = vmatprep.subr.mxu0 0.0
        %3999 = vmatpush1.msra.mxu0 0.0
        %4000 = vmatprep.subr.mxu0 0.0
        %4001 = vmatpush1.msra.mxu0 0.0
        %4002 = vmatprep.subr.mxu0 0.0
        %4003 = vmatpush1.msra.mxu0 0.0
        %4004 = vmatprep.subr.mxu0 0.0
        %4005 = vmatpush1.msra.mxu0 0.0
        %4006 = vmatprep.subr.mxu0 0.0
        %4007 = vmatpush1.msra.mxu0 0.0
        %4008 = vmatprep.subr.mxu0 0.0
        %4009 = vmatpush1.msra.mxu0 0.0
        %4010 = vmatprep.subr.mxu0 0.0
        %4011 = vmatpush1.msra.mxu0 0.0
        %4012 = vmatprep.subr.mxu0 0.0
        %4013 = vmatpush1.msra.mxu0 0.0
        %4014 = vmatprep.subr.mxu0 0.0
        %4015 = vmatpush1.msra.mxu0 0.0
        %4016 = vmatprep.subr.mxu0 0.0
        %4017 = vmatpush1.msra.mxu0 0.0
        %4018 = vmatprep.subr.mxu0 0.0
        %4019 = vmatpush1.msra.mxu0 0.0
        %4020 = vmatprep.subr.mxu0 0.0
        %4021 = vmatpush1.msra.mxu0 0.0
        %4022 = vmatprep.subr.mxu0 0.0
        %4023 = vmatpush1.msra.mxu0 0.0
        %4024 = vmatprep.subr.mxu0 0.0
        %4025 = vmatpush1.msra.mxu0 0.0
        %4026 = vmatprep.subr.mxu0 0.0
        %4027 = vmatpush1.msra.mxu0 0.0
        %4028 = vmatprep.subr.mxu0 0.0
        %4029 = vmatpush1.msra.mxu0 0.0
        %4030 = vmatprep.subr.mxu0 0.0
        %4031 = vmatpush1.msra.mxu0 0.0
        %4032 = vmatprep.subr.mxu0 0.0
        %4033 = vmatpush1.msra.mxu0 0.0
        %4034 = vmatprep.subr.mxu0 0.0
        %4035 = vmatpush1.msra.mxu0 0.0
        %4036 = vmatprep.mubr.f32.mxu0 0.0
        %4037 = vmatmul.mubr.f32.gmra.mrb[0].mxu0 %v1567
        %v4038 = vpop.f32.mrb[0].mxu0
        %v4039 = vadd.f32 0.0, %v4038
        %v4040 = vpop.f32.mrb[0].mxu0
        %4041 = vmatprep.mubr.f32.mxu0 0.0
        %4042 = vmatmul.mubr.f32.gmra.mrb[0].mxu0 %v1570
        %v4043 = vpop.f32.mrb[0].mxu0
        %v4044 = vadd.f32 0.0, %v4043
        %v4045 = vpop.f32.mrb[0].mxu0
        %4046 = vmatprep.mubr.f32.mxu0 0.0
        %4047 = vmatmul.mubr.f32.gmra.mrb[0].mxu0 %v1573
        %v4048 = vpop.f32.mrb[0].mxu0
        %v4049 = vadd.f32 0.0, %v4048
        %v4050 = vpop.f32.mrb[0].mxu0
        %4051 = vmatprep.mubr.f32.mxu0 0.0
        %4052 = vmatmul.mubr.f32.gmra.mrb[0].mxu0 %v1576
        %v4053 = vpop.f32.mrb[0].mxu0
        %v4054 = vadd.f32 0.0, %v4053
        %v4055 = vpop.f32.mrb[0].mxu0
        %4056 = vmatprep.mubr.f32.mxu0 0.0
        %4057 = vmatmul.mubr.f32.gmra.mrb[0].mxu0 %v1579
        %v4058 = vpop.f32.mrb[0].mxu0
        %v4059 = vadd.f32 0.0, %v4058
        %v4060 = vpop.f32.mrb[0].mxu0
        %4061 = vdwg.mxu0
        %4062 = vst.msk [vmem:[%s1865] sm:$0xff] %vm1671, %v4039
        %4063 = vst.msk [vmem:[%s1865 + $0x8] sm:$0xff] %vm1671, %v4044
        %4064 = vst.msk [vmem:[%s1865 + $0x10] sm:$0xff] %vm1671, %v4049
        %4065 = vst.msk [vmem:[%s1865 + $0x18] sm:$0xff] %vm1671, %v4054
        %4066 = vst.msk [vmem:[%s1865 + $0x20] sm:$0x3] %vm1676, %v4059
        %v4068 = vsel %vm1468, %v3606, 0
        %v4071 = vsel %vm1468, %v3607, 0
        %v4074 = vsel %vm1468, %v3608, 0
        %v4077 = vsel %vm1468, %v3609, 0
        %4079 = vmatprep.subr.mxu0 0.0
        %4080 = vmatpush1.msra.mxu0 %v210
        %4081 = vmatprep.subr.mxu0 0.0
        %4082 = vmatpush1.msra.mxu0 %v211
        %4083 = vmatprep.subr.mxu0 0.0
        %4084 = vmatpush1.msra.mxu0 %v212
        %4085 = vmatprep.subr.mxu0 0.0
        %4086 = vmatpush1.msra.mxu0 %v213
        %4087 = vmatprep.subr.mxu0 0.0
        %4088 = vmatpush1.msra.mxu0 0.0
        %4089 = vmatprep.subr.mxu0 0.0
        %4090 = vmatpush1.msra.mxu0 0.0
        %4091 = vmatprep.subr.mxu0 0.0
        %4092 = vmatpush1.msra.mxu0 0.0
        %4093 = vmatprep.subr.mxu0 0.0
        %4094 = vmatpush1.msra.mxu0 0.0
        %4095 = vmatprep.subr.mxu0 0.0
        %4096 = vmatpush1.msra.mxu0 0.0
        %4097 = vmatprep.subr.mxu0 0.0
        %4098 = vmatpush1.msra.mxu0 0.0
        %4099 = vmatprep.subr.mxu0 0.0
        %4100 = vmatpush1.msra.mxu0 0.0
        %4101 = vmatprep.subr.mxu0 0.0
        %4102 = vmatpush1.msra.mxu0 0.0
        %4103 = vmatprep.subr.mxu0 0.0
        %4104 = vmatpush1.msra.mxu0 0.0
        %4105 = vmatprep.subr.mxu0 0.0
        %4106 = vmatpush1.msra.mxu0 0.0
        %4107 = vmatprep.subr.mxu0 0.0
        %4108 = vmatpush1.msra.mxu0 0.0
        %4109 = vmatprep.subr.mxu0 0.0
        %4110 = vmatpush1.msra.mxu0 0.0
        %4111 = vmatprep.subr.mxu0 0.0
        %4112 = vmatpush1.msra.mxu0 0.0
        %4113 = vmatprep.subr.mxu0 0.0
        %4114 = vmatpush1.msra.mxu0 0.0
        %4115 = vmatprep.subr.mxu0 0.0
        %4116 = vmatpush1.msra.mxu0 0.0
        %4117 = vmatprep.subr.mxu0 0.0
        %4118 = vmatpush1.msra.mxu0 0.0
        %4119 = vmatprep.subr.mxu0 0.0
        %4120 = vmatpush1.msra.mxu0 0.0
        %4121 = vmatprep.subr.mxu0 0.0
        %4122 = vmatpush1.msra.mxu0 0.0
        %4123 = vmatprep.subr.mxu0 0.0
        %4124 = vmatpush1.msra.mxu0 0.0
        %4125 = vmatprep.subr.mxu0 0.0
        %4126 = vmatpush1.msra.mxu0 0.0
        %4127 = vmatprep.subr.mxu0 0.0
        %4128 = vmatpush1.msra.mxu0 0.0
        %4129 = vmatprep.subr.mxu0 0.0
        %4130 = vmatpush1.msra.mxu0 0.0
        %4131 = vmatprep.subr.mxu0 0.0
        %4132 = vmatpush1.msra.mxu0 0.0
        %4133 = vmatprep.subr.mxu0 0.0
        %4134 = vmatpush1.msra.mxu0 0.0
        %4135 = vmatprep.subr.mxu0 0.0
        %4136 = vmatpush1.msra.mxu0 0.0
        %4137 = vmatprep.subr.mxu0 0.0
        %4138 = vmatpush1.msra.mxu0 0.0
        %4139 = vmatprep.subr.mxu0 0.0
        %4140 = vmatpush1.msra.mxu0 0.0
        %4141 = vmatprep.subr.mxu0 0.0
        %4142 = vmatpush1.msra.mxu0 0.0
        %4143 = vmatprep.mubr.f32.mxu0 0.0
        %4144 = vmatmul.mubr.f32.gmra.mrb[0].mxu0 %v4068
        %v4145 = vpop.f32.mrb[0].mxu0
        %v4146 = vadd.f32 0.0, %v4145
        %v4147 = vpop.f32.mrb[0].mxu0
        %4148 = vmatprep.mubr.f32.mxu0 0.0
        %4149 = vmatmul.mubr.f32.gmra.mrb[0].mxu0 %v4071
        %v4150 = vpop.f32.mrb[0].mxu0
        %v4151 = vadd.f32 0.0, %v4150
        %v4152 = vpop.f32.mrb[0].mxu0
        %4153 = vmatprep.mubr.f32.mxu0 0.0
        %4154 = vmatmul.mubr.f32.gmra.mrb[0].mxu0 %v4074
        %v4155 = vpop.f32.mrb[0].mxu0
        %v4156 = vadd.f32 0.0, %v4155
        %v4157 = vpop.f32.mrb[0].mxu0
        %4158 = vmatprep.mubr.f32.mxu0 0.0
        %4159 = vmatmul.mubr.f32.gmra.mrb[0].mxu0 %v4077
        %v4160 = vpop.f32.mrb[0].mxu0
        %v4161 = vadd.f32 0.0, %v4160
        %v4162 = vpop.f32.mrb[0].mxu0
        %4163 = vdwg.mxu0
        %4164 = vmatprep.subr.mxu0 0.0
        %4165 = vmatpush1.msra.mxu0 %v4146
        %4166 = vmatprep.subr.mxu0 0.0
        %4167 = vmatpush1.msra.mxu0 %v4151
        %4168 = vmatprep.subr.mxu0 0.0
        %4169 = vmatpush1.msra.mxu0 %v4156
        %4170 = vmatprep.subr.mxu0 0.0
        %4171 = vmatpush1.msra.mxu0 %v4161
        %4172 = vmatprep.subr.mxu0 0.0
        %4173 = vmatpush1.msra.mxu0 0.0
        %4174 = vmatprep.subr.mxu0 0.0
        %4175 = vmatpush1.msra.mxu0 0.0
        %4176 = vmatprep.subr.mxu0 0.0
        %4177 = vmatpush1.msra.mxu0 0.0
        %4178 = vmatprep.subr.mxu0 0.0
        %4179 = vmatpush1.msra.mxu0 0.0
        %4180 = vmatprep.subr.mxu0 0.0
        %4181 = vmatpush1.msra.mxu0 0.0
        %4182 = vmatprep.subr.mxu0 0.0
        %4183 = vmatpush1.msra.mxu0 0.0
        %4184 = vmatprep.subr.mxu0 0.0
        %4185 = vmatpush1.msra.mxu0 0.0
        %4186 = vmatprep.subr.mxu0 0.0
        %4187 = vmatpush1.msra.mxu0 0.0
        %4188 = vmatprep.subr.mxu0 0.0
        %4189 = vmatpush1.msra.mxu0 0.0
        %4190 = vmatprep.subr.mxu0 0.0
        %4191 = vmatpush1.msra.mxu0 0.0
        %4192 = vmatprep.subr.mxu0 0.0
        %4193 = vmatpush1.msra.mxu0 0.0
        %4194 = vmatprep.subr.mxu0 0.0
        %4195 = vmatpush1.msra.mxu0 0.0
        %4196 = vmatprep.subr.mxu0 0.0
        %4197 = vmatpush1.msra.mxu0 0.0
        %4198 = vmatprep.subr.mxu0 0.0
        %4199 = vmatpush1.msra.mxu0 0.0
        %4200 = vmatprep.subr.mxu0 0.0
        %4201 = vmatpush1.msra.mxu0 0.0
        %4202 = vmatprep.subr.mxu0 0.0
        %4203 = vmatpush1.msra.mxu0 0.0
        %4204 = vmatprep.subr.mxu0 0.0
        %4205 = vmatpush1.msra.mxu0 0.0
        %4206 = vmatprep.subr.mxu0 0.0
        %4207 = vmatpush1.msra.mxu0 0.0
        %4208 = vmatprep.subr.mxu0 0.0
        %4209 = vmatpush1.msra.mxu0 0.0
        %4210 = vmatprep.subr.mxu0 0.0
        %4211 = vmatpush1.msra.mxu0 0.0
        %4212 = vmatprep.subr.mxu0 0.0
        %4213 = vmatpush1.msra.mxu0 0.0
        %4214 = vmatprep.subr.mxu0 0.0
        %4215 = vmatpush1.msra.mxu0 0.0
        %4216 = vmatprep.subr.mxu0 0.0
        %4217 = vmatpush1.msra.mxu0 0.0
        %4218 = vmatprep.subr.mxu0 0.0
        %4219 = vmatpush1.msra.mxu0 0.0
        %4220 = vmatprep.subr.mxu0 0.0
        %4221 = vmatpush1.msra.mxu0 0.0
        %4222 = vmatprep.subr.mxu0 0.0
        %4223 = vmatpush1.msra.mxu0 0.0
        %4224 = vmatprep.subr.mxu0 0.0
        %4225 = vmatpush1.msra.mxu0 0.0
        %4226 = vmatprep.subr.mxu0 0.0
        %4227 = vmatpush1.msra.mxu0 0.0
        %4228 = vmatprep.mubr.f32.mxu0 0.0
        %4229 = vmatmul.mubr.f32.gmra.mrb[0].mxu0 %v1567
        %v4230 = vpop.f32.mrb[0].mxu0
        %v4231 = vadd.f32 0.0, %v4230
        %v4232 = vpop.f32.mrb[0].mxu0
        %4233 = vmatprep.mubr.f32.mxu0 0.0
        %4234 = vmatmul.mubr.f32.gmra.mrb[0].mxu0 %v1570
        %v4235 = vpop.f32.mrb[0].mxu0
        %v4236 = vadd.f32 0.0, %v4235
        %v4237 = vpop.f32.mrb[0].mxu0
        %4238 = vmatprep.mubr.f32.mxu0 0.0
        %4239 = vmatmul.mubr.f32.gmra.mrb[0].mxu0 %v1573
        %v4240 = vpop.f32.mrb[0].mxu0
        %v4241 = vadd.f32 0.0, %v4240
        %v4242 = vpop.f32.mrb[0].mxu0
        %4243 = vmatprep.mubr.f32.mxu0 0.0
        %4244 = vmatmul.mubr.f32.gmra.mrb[0].mxu0 %v1576
        %v4245 = vpop.f32.mrb[0].mxu0
        %v4246 = vadd.f32 0.0, %v4245
        %v4247 = vpop.f32.mrb[0].mxu0
        %4248 = vmatprep.mubr.f32.mxu0 0.0
        %4249 = vmatmul.mubr.f32.gmra.mrb[0].mxu0 %v1579
        %v4250 = vpop.f32.mrb[0].mxu0
        %v4251 = vadd.f32 0.0, %v4250
        %v4252 = vpop.f32.mrb[0].mxu0
        %4253 = vdwg.mxu0
        %s4254 = scalar_lea.vmem [#allocation2], 80
        %4255 = vst.msk [vmem:[%s4254] sm:$0xff] %vm1671, %v4231
        %4256 = vst.msk [vmem:[%s4254 + $0x8] sm:$0xff] %vm1671, %v4236
        %4257 = vst.msk [vmem:[%s4254 + $0x10] sm:$0xff] %vm1671, %v4241
        %4258 = vst.msk [vmem:[%s4254 + $0x18] sm:$0xff] %vm1671, %v4246
        %4259 = vst.msk [vmem:[%s4254 + $0x20] sm:$0x3] %vm1676, %v4251
        %v4261 = vsel %vm1468, %v3679, 0
        %v4264 = vsel %vm1468, %v3680, 0
        %v4267 = vsel %vm1468, %v3681, 0
        %v4270 = vsel %vm1468, %v3682, 0
        %4272 = vmatprep.subr.mxu0 0.0
        %4273 = vmatpush1.msra.mxu0 %v210
        %4274 = vmatprep.subr.mxu0 0.0
        %4275 = vmatpush1.msra.mxu0 %v211
        %4276 = vmatprep.subr.mxu0 0.0
        %4277 = vmatpush1.msra.mxu0 %v212
        %4278 = vmatprep.subr.mxu0 0.0
        %4279 = vmatpush1.msra.mxu0 %v213
        %4280 = vmatprep.subr.mxu0 0.0
        %4281 = vmatpush1.msra.mxu0 0.0
        %4282 = vmatprep.subr.mxu0 0.0
        %4283 = vmatpush1.msra.mxu0 0.0
        %4284 = vmatprep.subr.mxu0 0.0
        %4285 = vmatpush1.msra.mxu0 0.0
        %4286 = vmatprep.subr.mxu0 0.0
        %4287 = vmatpush1.msra.mxu0 0.0
        %4288 = vmatprep.subr.mxu0 0.0
        %4289 = vmatpush1.msra.mxu0 0.0
        %4290 = vmatprep.subr.mxu0 0.0
        %4291 = vmatpush1.msra.mxu0 0.0
        %4292 = vmatprep.subr.mxu0 0.0
        %4293 = vmatpush1.msra.mxu0 0.0
        %4294 = vmatprep.subr.mxu0 0.0
        %4295 = vmatpush1.msra.mxu0 0.0
        %4296 = vmatprep.subr.mxu0 0.0
        %4297 = vmatpush1.msra.mxu0 0.0
        %4298 = vmatprep.subr.mxu0 0.0
        %4299 = vmatpush1.msra.mxu0 0.0
        %4300 = vmatprep.subr.mxu0 0.0
        %4301 = vmatpush1.msra.mxu0 0.0
        %4302 = vmatprep.subr.mxu0 0.0
        %4303 = vmatpush1.msra.mxu0 0.0
        %4304 = vmatprep.subr.mxu0 0.0
        %4305 = vmatpush1.msra.mxu0 0.0
        %4306 = vmatprep.subr.mxu0 0.0
        %4307 = vmatpush1.msra.mxu0 0.0
        %4308 = vmatprep.subr.mxu0 0.0
        %4309 = vmatpush1.msra.mxu0 0.0
        %4310 = vmatprep.subr.mxu0 0.0
        %4311 = vmatpush1.msra.mxu0 0.0
        %4312 = vmatprep.subr.mxu0 0.0
        %4313 = vmatpush1.msra.mxu0 0.0
        %4314 = vmatprep.subr.mxu0 0.0
        %4315 = vmatpush1.msra.mxu0 0.0
        %4316 = vmatprep.subr.mxu0 0.0
        %4317 = vmatpush1.msra.mxu0 0.0
        %4318 = vmatprep.subr.mxu0 0.0
        %4319 = vmatpush1.msra.mxu0 0.0
        %4320 = vmatprep.subr.mxu0 0.0
        %4321 = vmatpush1.msra.mxu0 0.0
        %4322 = vmatprep.subr.mxu0 0.0
        %4323 = vmatpush1.msra.mxu0 0.0
        %4324 = vmatprep.subr.mxu0 0.0
        %4325 = vmatpush1.msra.mxu0 0.0
        %4326 = vmatprep.subr.mxu0 0.0
        %4327 = vmatpush1.msra.mxu0 0.0
        %4328 = vmatprep.subr.mxu0 0.0
        %4329 = vmatpush1.msra.mxu0 0.0
        %4330 = vmatprep.subr.mxu0 0.0
        %4331 = vmatpush1.msra.mxu0 0.0
        %4332 = vmatprep.subr.mxu0 0.0
        %4333 = vmatpush1.msra.mxu0 0.0
        %4334 = vmatprep.subr.mxu0 0.0
        %4335 = vmatpush1.msra.mxu0 0.0
        %4336 = vmatprep.mubr.f32.mxu0 0.0
        %4337 = vmatmul.mubr.f32.gmra.mrb[0].mxu0 %v4261
        %v4338 = vpop.f32.mrb[0].mxu0
        %v4339 = vadd.f32 0.0, %v4338
        %v4340 = vpop.f32.mrb[0].mxu0
        %4341 = vmatprep.mubr.f32.mxu0 0.0
        %4342 = vmatmul.mubr.f32.gmra.mrb[0].mxu0 %v4264
        %v4343 = vpop.f32.mrb[0].mxu0
        %v4344 = vadd.f32 0.0, %v4343
        %v4345 = vpop.f32.mrb[0].mxu0
        %4346 = vmatprep.mubr.f32.mxu0 0.0
        %4347 = vmatmul.mubr.f32.gmra.mrb[0].mxu0 %v4267
        %v4348 = vpop.f32.mrb[0].mxu0
        %v4349 = vadd.f32 0.0, %v4348
        %v4350 = vpop.f32.mrb[0].mxu0
        %4351 = vmatprep.mubr.f32.mxu0 0.0
        %4352 = vmatmul.mubr.f32.gmra.mrb[0].mxu0 %v4270
        %v4353 = vpop.f32.mrb[0].mxu0
        %v4354 = vadd.f32 0.0, %v4353
        %v4355 = vpop.f32.mrb[0].mxu0
        %4356 = vdwg.mxu0
        %4357 = vmatprep.subr.mxu0 0.0
        %4358 = vmatpush1.msra.mxu0 %v4339
        %4359 = vmatprep.subr.mxu0 0.0
        %4360 = vmatpush1.msra.mxu0 %v4344
        %4361 = vmatprep.subr.mxu0 0.0
        %4362 = vmatpush1.msra.mxu0 %v4349
        %4363 = vmatprep.subr.mxu0 0.0
        %4364 = vmatpush1.msra.mxu0 %v4354
        %4365 = vmatprep.subr.mxu0 0.0
        %4366 = vmatpush1.msra.mxu0 0.0
        %4367 = vmatprep.subr.mxu0 0.0
        %4368 = vmatpush1.msra.mxu0 0.0
        %4369 = vmatprep.subr.mxu0 0.0
        %4370 = vmatpush1.msra.mxu0 0.0
        %4371 = vmatprep.subr.mxu0 0.0
        %4372 = vmatpush1.msra.mxu0 0.0
        %4373 = vmatprep.subr.mxu0 0.0
        %4374 = vmatpush1.msra.mxu0 0.0
        %4375 = vmatprep.subr.mxu0 0.0
        %4376 = vmatpush1.msra.mxu0 0.0
        %4377 = vmatprep.subr.mxu0 0.0
        %4378 = vmatpush1.msra.mxu0 0.0
        %4379 = vmatprep.subr.mxu0 0.0
        %4380 = vmatpush1.msra.mxu0 0.0
        %4381 = vmatprep.subr.mxu0 0.0
        %4382 = vmatpush1.msra.mxu0 0.0
        %4383 = vmatprep.subr.mxu0 0.0
        %4384 = vmatpush1.msra.mxu0 0.0
        %4385 = vmatprep.subr.mxu0 0.0
        %4386 = vmatpush1.msra.mxu0 0.0
        %4387 = vmatprep.subr.mxu0 0.0
        %4388 = vmatpush1.msra.mxu0 0.0
        %4389 = vmatprep.subr.mxu0 0.0
        %4390 = vmatpush1.msra.mxu0 0.0
        %4391 = vmatprep.subr.mxu0 0.0
        %4392 = vmatpush1.msra.mxu0 0.0
        %4393 = vmatprep.subr.mxu0 0.0
        %4394 = vmatpush1.msra.mxu0 0.0
        %4395 = vmatprep.subr.mxu0 0.0
        %4396 = vmatpush1.msra.mxu0 0.0
        %4397 = vmatprep.subr.mxu0 0.0
        %4398 = vmatpush1.msra.mxu0 0.0
        %4399 = vmatprep.subr.mxu0 0.0
        %4400 = vmatpush1.msra.mxu0 0.0
        %4401 = vmatprep.subr.mxu0 0.0
        %4402 = vmatpush1.msra.mxu0 0.0
        %4403 = vmatprep.subr.mxu0 0.0
        %4404 = vmatpush1.msra.mxu0 0.0
        %4405 = vmatprep.subr.mxu0 0.0
        %4406 = vmatpush1.msra.mxu0 0.0
        %4407 = vmatprep.subr.mxu0 0.0
        %4408 = vmatpush1.msra.mxu0 0.0
        %4409 = vmatprep.subr.mxu0 0.0
        %4410 = vmatpush1.msra.mxu0 0.0
        %4411 = vmatprep.subr.mxu0 0.0
        %4412 = vmatpush1.msra.mxu0 0.0
        %4413 = vmatprep.subr.mxu0 0.0
        %4414 = vmatpush1.msra.mxu0 0.0
        %4415 = vmatprep.subr.mxu0 0.0
        %4416 = vmatpush1.msra.mxu0 0.0
        %4417 = vmatprep.subr.mxu0 0.0
        %4418 = vmatpush1.msra.mxu0 0.0
        %4419 = vmatprep.subr.mxu0 0.0
        %4420 = vmatpush1.msra.mxu0 0.0
        %4421 = vmatprep.mubr.f32.mxu0 0.0
        %4422 = vmatmul.mubr.f32.gmra.mrb[0].mxu0 %v1567
        %v4423 = vpop.f32.mrb[0].mxu0
        %v4424 = vadd.f32 0.0, %v4423
        %v4425 = vpop.f32.mrb[0].mxu0
        %4426 = vmatprep.mubr.f32.mxu0 0.0
        %4427 = vmatmul.mubr.f32.gmra.mrb[0].mxu0 %v1570
        %v4428 = vpop.f32.mrb[0].mxu0
        %v4429 = vadd.f32 0.0, %v4428
        %v4430 = vpop.f32.mrb[0].mxu0
        %4431 = vmatprep.mubr.f32.mxu0 0.0
        %4432 = vmatmul.mubr.f32.gmra.mrb[0].mxu0 %v1573
        %v4433 = vpop.f32.mrb[0].mxu0
        %v4434 = vadd.f32 0.0, %v4433
        %v4435 = vpop.f32.mrb[0].mxu0
        %4436 = vmatprep.mubr.f32.mxu0 0.0
        %4437 = vmatmul.mubr.f32.gmra.mrb[0].mxu0 %v1576
        %v4438 = vpop.f32.mrb[0].mxu0
        %v4439 = vadd.f32 0.0, %v4438
        %v4440 = vpop.f32.mrb[0].mxu0
        %4441 = vmatprep.mubr.f32.mxu0 0.0
        %4442 = vmatmul.mubr.f32.gmra.mrb[0].mxu0 %v1579
        %v4443 = vpop.f32.mrb[0].mxu0
        %v4444 = vadd.f32 0.0, %v4443
        %v4445 = vpop.f32.mrb[0].mxu0
        %4446 = vdwg.mxu0
        %s4447 = scalar_lea.vmem [#allocation2], 120
        %4448 = vst.msk [vmem:[%s4447] sm:$0xff] %vm1671, %v4424
        %4449 = vst.msk [vmem:[%s4447 + $0x8] sm:$0xff] %vm1671, %v4429
        %4450 = vst.msk [vmem:[%s4447 + $0x10] sm:$0xff] %vm1671, %v4434
        %4451 = vst.msk [vmem:[%s4447 + $0x18] sm:$0xff] %vm1671, %v4439
        %4452 = vst.msk [vmem:[%s4447 + $0x20] sm:$0x3] %vm1676, %v4444
        %s4453 = sld [smem:[#allocation3 + $0x106]]
        %v4454 = vstv %s4453
        %s4455 = sld [smem:[#allocation3 + $0x107]]
        %v4456 = vstv %s4455
        %s4457 = sld [smem:[#allocation3 + $0x108]]
        %v4458 = vstv %s4457
        %s4459 = sld [smem:[#allocation3 + $0x109]]
        %v4460 = vstv %s4459
        %v4461 = vld [vmem:[#allocation2] sm:$0xff]
        %v4462 = vld [vmem:[#allocation2 + $0x8] sm:$0xff]
        %v4463 = vld [vmem:[#allocation2 + $0x10] sm:$0xff]
        %v4464 = vld [vmem:[#allocation2 + $0x18] sm:$0xff]
        %s4465 = sld [smem:[#allocation3 + $0x76]]
        %v4466 = vstv %s4465
        %v4467 = vmul.f32 %v4461, %v4466
        %v4468 = vmul.f32 %v4462, %v4466
        %v4469 = vmul.f32 %v4463, %v4466
        %v4470 = vmul.f32 %v4464, %v4466
        %v4471 = vadd.f32 %v4454, %v4467
        %v4472 = vadd.f32 %v4454, %v4468
        %v4473 = vadd.f32 %v4454, %v4469
        %v4474 = vadd.f32 %v4454, %v4470
        %s4475 = sld [smem:[#allocation3 + $0x77]]
        %v4476 = vstv %s4475
        %v4477 = vmul.f32 %v4461, %v4476
        %v4478 = vmul.f32 %v4462, %v4476
        %v4479 = vmul.f32 %v4463, %v4476
        %v4480 = vmul.f32 %v4464, %v4476
        %v4481 = vadd.f32 %v4456, %v4477
        %v4482 = vadd.f32 %v4456, %v4478
        %v4483 = vadd.f32 %v4456, %v4479
        %v4484 = vadd.f32 %v4456, %v4480
        %s4485 = sld [smem:[#allocation3 + $0x78]]
        %v4486 = vstv %s4485
        %v4487 = vmul.f32 %v4461, %v4486
        %v4488 = vmul.f32 %v4462, %v4486
        %v4489 = vmul.f32 %v4463, %v4486
        %v4490 = vmul.f32 %v4464, %v4486
        %v4491 = vadd.f32 %v4458, %v4487
        %v4492 = vadd.f32 %v4458, %v4488
        %v4493 = vadd.f32 %v4458, %v4489
        %v4494 = vadd.f32 %v4458, %v4490
        %s4495 = sld [smem:[#allocation3 + $0x79]]
        %v4496 = vstv %s4495
        %v4497 = vmul.f32 %v4461, %v4496
        %v4498 = vmul.f32 %v4462, %v4496
        %v4499 = vmul.f32 %v4463, %v4496
        %v4500 = vmul.f32 %v4464, %v4496
        %v4501 = vadd.f32 %v4460, %v4497
        %v4502 = vadd.f32 %v4460, %v4498
        %v4503 = vadd.f32 %v4460, %v4499
        %v4504 = vadd.f32 %v4460, %v4500
        %s4505 = sld [smem:[#allocation3 + $0x86]]
        %v4506 = vstv %s4505
        %v4507 = vmul.f32 %v4461, %v4506
        %v4508 = vmul.f32 %v4462, %v4506
        %v4509 = vmul.f32 %v4463, %v4506
        %v4510 = vmul.f32 %v4464, %v4506
        %4515 = vrot.lane.b32.xlu0 %v4507, 127
        %v4516 = vpop.permute.xlu0 %4515
        %4517 = vrot.lane.b32.xlu0 %v4508, 127
        %v4518 = vpop.permute.xlu0 %4517
        %4519 = vrot.lane.b32.xlu0 %v4509, 127
        %v4520 = vpop.permute.xlu0 %4519
        %4521 = vrot.lane.b32.xlu0 %v4510, 127
        %v4522 = vpop.permute.xlu0 %4521
        %v4527 = vadd.f32 %v4471, %v4516
        %v4528 = vadd.f32 %v4472, %v4518
        %v4529 = vadd.f32 %v4473, %v4520
        %v4530 = vadd.f32 %v4474, %v4522
        %s4531 = sld [smem:[#allocation3 + $0x87]]
        %v4532 = vstv %s4531
        %v4533 = vmul.f32 %v4461, %v4532
        %v4534 = vmul.f32 %v4462, %v4532
        %v4535 = vmul.f32 %v4463, %v4532
        %v4536 = vmul.f32 %v4464, %v4532
        %4541 = vrot.lane.b32.xlu0 %v4533, 127
        %v4542 = vpop.permute.xlu0 %4541
        %4543 = vrot.lane.b32.xlu0 %v4534, 127
        %v4544 = vpop.permute.xlu0 %4543
        %4545 = vrot.lane.b32.xlu0 %v4535, 127
        %v4546 = vpop.permute.xlu0 %4545
        %4547 = vrot.lane.b32.xlu0 %v4536, 127
        %v4548 = vpop.permute.xlu0 %4547
        %v4553 = vadd.f32 %v4481, %v4542
        %v4554 = vadd.f32 %v4482, %v4544
        %v4555 = vadd.f32 %v4483, %v4546
        %v4556 = vadd.f32 %v4484, %v4548
        %s4557 = sld [smem:[#allocation3 + $0x88]]
        %v4558 = vstv %s4557
        %v4559 = vmul.f32 %v4461, %v4558
        %v4560 = vmul.f32 %v4462, %v4558
        %v4561 = vmul.f32 %v4463, %v4558
        %v4562 = vmul.f32 %v4464, %v4558
        %4567 = vrot.lane.b32.xlu0 %v4559, 127
        %v4568 = vpop.permute.xlu0 %4567
        %4569 = vrot.lane.b32.xlu0 %v4560, 127
        %v4570 = vpop.permute.xlu0 %4569
        %4571 = vrot.lane.b32.xlu0 %v4561, 127
        %v4572 = vpop.permute.xlu0 %4571
        %4573 = vrot.lane.b32.xlu0 %v4562, 127
        %v4574 = vpop.permute.xlu0 %4573
        %v4579 = vadd.f32 %v4491, %v4568
        %v4580 = vadd.f32 %v4492, %v4570
        %v4581 = vadd.f32 %v4493, %v4572
        %v4582 = vadd.f32 %v4494, %v4574
        %s4583 = sld [smem:[#allocation3 + $0x89]]
        %v4584 = vstv %s4583
        %v4585 = vmul.f32 %v4461, %v4584
        %v4586 = vmul.f32 %v4462, %v4584
        %v4587 = vmul.f32 %v4463, %v4584
        %v4588 = vmul.f32 %v4464, %v4584
        %4593 = vrot.lane.b32.xlu0 %v4585, 127
        %v4594 = vpop.permute.xlu0 %4593
        %4595 = vrot.lane.b32.xlu0 %v4586, 127
        %v4596 = vpop.permute.xlu0 %4595
        %4597 = vrot.lane.b32.xlu0 %v4587, 127
        %v4598 = vpop.permute.xlu0 %4597
        %4599 = vrot.lane.b32.xlu0 %v4588, 127
        %v4600 = vpop.permute.xlu0 %4599
        %v4605 = vadd.f32 %v4501, %v4594
        %v4606 = vadd.f32 %v4502, %v4596
        %v4607 = vadd.f32 %v4503, %v4598
        %v4608 = vadd.f32 %v4504, %v4600
        %s4609 = sld [smem:[#allocation3 + $0x96]]
        %v4610 = vstv %s4609
        %v4611 = vmul.f32 %v4461, %v4610
        %v4612 = vmul.f32 %v4462, %v4610
        %v4613 = vmul.f32 %v4463, %v4610
        %v4614 = vmul.f32 %v4464, %v4610
        %4619 = vrot.lane.b32.xlu0 %v4611, 126
        %v4620 = vpop.permute.xlu0 %4619
        %4621 = vrot.lane.b32.xlu0 %v4612, 126
        %v4622 = vpop.permute.xlu0 %4621
        %4623 = vrot.lane.b32.xlu0 %v4613, 126
        %v4624 = vpop.permute.xlu0 %4623
        %4625 = vrot.lane.b32.xlu0 %v4614, 126
        %v4626 = vpop.permute.xlu0 %4625
        %v4631 = vadd.f32 %v4527, %v4620
        %v4632 = vadd.f32 %v4528, %v4622
        %v4633 = vadd.f32 %v4529, %v4624
        %v4634 = vadd.f32 %v4530, %v4626
        %s4635 = sld [smem:[#allocation3 + $0x97]]
        %v4636 = vstv %s4635
        %v4637 = vmul.f32 %v4461, %v4636
        %v4638 = vmul.f32 %v4462, %v4636
        %v4639 = vmul.f32 %v4463, %v4636
        %v4640 = vmul.f32 %v4464, %v4636
        %4645 = vrot.lane.b32.xlu0 %v4637, 126
        %v4646 = vpop.permute.xlu0 %4645
        %4647 = vrot.lane.b32.xlu0 %v4638, 126
        %v4648 = vpop.permute.xlu0 %4647
        %4649 = vrot.lane.b32.xlu0 %v4639, 126
        %v4650 = vpop.permute.xlu0 %4649
        %4651 = vrot.lane.b32.xlu0 %v4640, 126
        %v4652 = vpop.permute.xlu0 %4651
        %v4657 = vadd.f32 %v4553, %v4646
        %v4658 = vadd.f32 %v4554, %v4648
        %v4659 = vadd.f32 %v4555, %v4650
        %v4660 = vadd.f32 %v4556, %v4652
        %s4661 = sld [smem:[#allocation3 + $0x98]]
        %v4662 = vstv %s4661
        %v4663 = vmul.f32 %v4461, %v4662
        %v4664 = vmul.f32 %v4462, %v4662
        %v4665 = vmul.f32 %v4463, %v4662
        %v4666 = vmul.f32 %v4464, %v4662
        %4671 = vrot.lane.b32.xlu0 %v4663, 126
        %v4672 = vpop.permute.xlu0 %4671
        %4673 = vrot.lane.b32.xlu0 %v4664, 126
        %v4674 = vpop.permute.xlu0 %4673
        %4675 = vrot.lane.b32.xlu0 %v4665, 126
        %v4676 = vpop.permute.xlu0 %4675
        %4677 = vrot.lane.b32.xlu0 %v4666, 126
        %v4678 = vpop.permute.xlu0 %4677
        %v4683 = vadd.f32 %v4579, %v4672
        %v4684 = vadd.f32 %v4580, %v4674
        %v4685 = vadd.f32 %v4581, %v4676
        %v4686 = vadd.f32 %v4582, %v4678
        %s4687 = sld [smem:[#allocation3 + $0x99]]
        %v4688 = vstv %s4687
        %v4689 = vmul.f32 %v4461, %v4688
        %v4690 = vmul.f32 %v4462, %v4688
        %v4691 = vmul.f32 %v4463, %v4688
        %v4692 = vmul.f32 %v4464, %v4688
        %4697 = vrot.lane.b32.xlu0 %v4689, 126
        %v4698 = vpop.permute.xlu0 %4697
        %4699 = vrot.lane.b32.xlu0 %v4690, 126
        %v4700 = vpop.permute.xlu0 %4699
        %4701 = vrot.lane.b32.xlu0 %v4691, 126
        %v4702 = vpop.permute.xlu0 %4701
        %4703 = vrot.lane.b32.xlu0 %v4692, 126
        %v4704 = vpop.permute.xlu0 %4703
        %v4709 = vadd.f32 %v4605, %v4698
        %v4710 = vadd.f32 %v4606, %v4700
        %v4711 = vadd.f32 %v4607, %v4702
        %v4712 = vadd.f32 %v4608, %v4704
        %v4713 = vld [vmem:[#allocation2 + $0x1] sm:$0xff]
        %v4714 = vld [vmem:[#allocation2 + $0x9] sm:$0xff]
        %v4715 = vld [vmem:[#allocation2 + $0x11] sm:$0xff]
        %v4716 = vld [vmem:[#allocation2 + $0x19] sm:$0xff]
        %s4717 = sld [smem:[#allocation3 + $0xa6]]
        %v4718 = vstv %s4717
        %v4719 = vmul.f32 %v4713, %v4718
        %v4720 = vmul.f32 %v4714, %v4718
        %v4721 = vmul.f32 %v4715, %v4718
        %v4722 = vmul.f32 %v4716, %v4718
        %v4723 = vadd.f32 %v4631, %v4719
        %v4724 = vadd.f32 %v4632, %v4720
        %v4725 = vadd.f32 %v4633, %v4721
        %v4726 = vadd.f32 %v4634, %v4722
        %s4727 = sld [smem:[#allocation3 + $0xa7]]
        %v4728 = vstv %s4727
        %v4729 = vmul.f32 %v4713, %v4728
        %v4730 = vmul.f32 %v4714, %v4728
        %v4731 = vmul.f32 %v4715, %v4728
        %v4732 = vmul.f32 %v4716, %v4728
        %v4733 = vadd.f32 %v4657, %v4729
        %v4734 = vadd.f32 %v4658, %v4730
        %v4735 = vadd.f32 %v4659, %v4731
        %v4736 = vadd.f32 %v4660, %v4732
        %s4737 = sld [smem:[#allocation3 + $0xa8]]
        %v4738 = vstv %s4737
        %v4739 = vmul.f32 %v4713, %v4738
        %v4740 = vmul.f32 %v4714, %v4738
        %v4741 = vmul.f32 %v4715, %v4738
        %v4742 = vmul.f32 %v4716, %v4738
        %v4743 = vadd.f32 %v4683, %v4739
        %v4744 = vadd.f32 %v4684, %v4740
        %v4745 = vadd.f32 %v4685, %v4741
        %v4746 = vadd.f32 %v4686, %v4742
        %s4747 = sld [smem:[#allocation3 + $0xa9]]
        %v4748 = vstv %s4747
        %v4749 = vmul.f32 %v4713, %v4748
        %v4750 = vmul.f32 %v4714, %v4748
        %v4751 = vmul.f32 %v4715, %v4748
        %v4752 = vmul.f32 %v4716, %v4748
        %v4753 = vadd.f32 %v4709, %v4749
        %v4754 = vadd.f32 %v4710, %v4750
        %v4755 = vadd.f32 %v4711, %v4751
        %v4756 = vadd.f32 %v4712, %v4752
        %s4757 = sld [smem:[#allocation3 + $0xb6]]
        %v4758 = vstv %s4757
        %v4759 = vmul.f32 %v4713, %v4758
        %v4760 = vmul.f32 %v4714, %v4758
        %v4761 = vmul.f32 %v4715, %v4758
        %v4762 = vmul.f32 %v4716, %v4758
        %4767 = vrot.lane.b32.xlu0 %v4759, 127
        %v4768 = vpop.permute.xlu0 %4767
        %4769 = vrot.lane.b32.xlu0 %v4760, 127
        %v4770 = vpop.permute.xlu0 %4769
        %4771 = vrot.lane.b32.xlu0 %v4761, 127
        %v4772 = vpop.permute.xlu0 %4771
        %4773 = vrot.lane.b32.xlu0 %v4762, 127
        %v4774 = vpop.permute.xlu0 %4773
        %v4779 = vadd.f32 %v4723, %v4768
        %v4780 = vadd.f32 %v4724, %v4770
        %v4781 = vadd.f32 %v4725, %v4772
        %v4782 = vadd.f32 %v4726, %v4774
        %s4783 = sld [smem:[#allocation3 + $0xb7]]
        %v4784 = vstv %s4783
        %v4785 = vmul.f32 %v4713, %v4784
        %v4786 = vmul.f32 %v4714, %v4784
        %v4787 = vmul.f32 %v4715, %v4784
        %v4788 = vmul.f32 %v4716, %v4784
        %4793 = vrot.lane.b32.xlu0 %v4785, 127
        %v4794 = vpop.permute.xlu0 %4793
        %4795 = vrot.lane.b32.xlu0 %v4786, 127
        %v4796 = vpop.permute.xlu0 %4795
        %4797 = vrot.lane.b32.xlu0 %v4787, 127
        %v4798 = vpop.permute.xlu0 %4797
        %4799 = vrot.lane.b32.xlu0 %v4788, 127
        %v4800 = vpop.permute.xlu0 %4799
        %v4805 = vadd.f32 %v4733, %v4794
        %v4806 = vadd.f32 %v4734, %v4796
        %v4807 = vadd.f32 %v4735, %v4798
        %v4808 = vadd.f32 %v4736, %v4800
        %s4809 = sld [smem:[#allocation3 + $0xb8]]
        %v4810 = vstv %s4809
        %v4811 = vmul.f32 %v4713, %v4810
        %v4812 = vmul.f32 %v4714, %v4810
        %v4813 = vmul.f32 %v4715, %v4810
        %v4814 = vmul.f32 %v4716, %v4810
        %4819 = vrot.lane.b32.xlu0 %v4811, 127
        %v4820 = vpop.permute.xlu0 %4819
        %4821 = vrot.lane.b32.xlu0 %v4812, 127
        %v4822 = vpop.permute.xlu0 %4821
        %4823 = vrot.lane.b32.xlu0 %v4813, 127
        %v4824 = vpop.permute.xlu0 %4823
        %4825 = vrot.lane.b32.xlu0 %v4814, 127
        %v4826 = vpop.permute.xlu0 %4825
        %v4831 = vadd.f32 %v4743, %v4820
        %v4832 = vadd.f32 %v4744, %v4822
        %v4833 = vadd.f32 %v4745, %v4824
        %v4834 = vadd.f32 %v4746, %v4826
        %s4835 = sld [smem:[#allocation3 + $0xb9]]
        %v4836 = vstv %s4835
        %v4837 = vmul.f32 %v4713, %v4836
        %v4838 = vmul.f32 %v4714, %v4836
        %v4839 = vmul.f32 %v4715, %v4836
        %v4840 = vmul.f32 %v4716, %v4836
        %4845 = vrot.lane.b32.xlu0 %v4837, 127
        %v4846 = vpop.permute.xlu0 %4845
        %4847 = vrot.lane.b32.xlu0 %v4838, 127
        %v4848 = vpop.permute.xlu0 %4847
        %4849 = vrot.lane.b32.xlu0 %v4839, 127
        %v4850 = vpop.permute.xlu0 %4849
        %4851 = vrot.lane.b32.xlu0 %v4840, 127
        %v4852 = vpop.permute.xlu0 %4851
        %v4857 = vadd.f32 %v4753, %v4846
        %v4858 = vadd.f32 %v4754, %v4848
        %v4859 = vadd.f32 %v4755, %v4850
        %v4860 = vadd.f32 %v4756, %v4852
        %s4861 = sld [smem:[#allocation3 + $0xc6]]
        %v4862 = vstv %s4861
        %v4863 = vmul.f32 %v4713, %v4862
        %v4864 = vmul.f32 %v4714, %v4862
        %v4865 = vmul.f32 %v4715, %v4862
        %v4866 = vmul.f32 %v4716, %v4862
        %4871 = vrot.lane.b32.xlu0 %v4863, 126
        %v4872 = vpop.permute.xlu0 %4871
        %4873 = vrot.lane.b32.xlu0 %v4864, 126
        %v4874 = vpop.permute.xlu0 %4873
        %4875 = vrot.lane.b32.xlu0 %v4865, 126
        %v4876 = vpop.permute.xlu0 %4875
        %4877 = vrot.lane.b32.xlu0 %v4866, 126
        %v4878 = vpop.permute.xlu0 %4877
        %v4883 = vadd.f32 %v4779, %v4872
        %v4884 = vadd.f32 %v4780, %v4874
        %v4885 = vadd.f32 %v4781, %v4876
        %v4886 = vadd.f32 %v4782, %v4878
        %s4887 = sld [smem:[#allocation3 + $0xc7]]
        %v4888 = vstv %s4887
        %v4889 = vmul.f32 %v4713, %v4888
        %v4890 = vmul.f32 %v4714, %v4888
        %v4891 = vmul.f32 %v4715, %v4888
        %v4892 = vmul.f32 %v4716, %v4888
        %4897 = vrot.lane.b32.xlu0 %v4889, 126
        %v4898 = vpop.permute.xlu0 %4897
        %4899 = vrot.lane.b32.xlu0 %v4890, 126
        %v4900 = vpop.permute.xlu0 %4899
        %4901 = vrot.lane.b32.xlu0 %v4891, 126
        %v4902 = vpop.permute.xlu0 %4901
        %4903 = vrot.lane.b32.xlu0 %v4892, 126
        %v4904 = vpop.permute.xlu0 %4903
        %v4909 = vadd.f32 %v4805, %v4898
        %v4910 = vadd.f32 %v4806, %v4900
        %v4911 = vadd.f32 %v4807, %v4902
        %v4912 = vadd.f32 %v4808, %v4904
        %s4913 = sld [smem:[#allocation3 + $0xc8]]
        %v4914 = vstv %s4913
        %v4915 = vmul.f32 %v4713, %v4914
        %v4916 = vmul.f32 %v4714, %v4914
        %v4917 = vmul.f32 %v4715, %v4914
        %v4918 = vmul.f32 %v4716, %v4914
        %4923 = vrot.lane.b32.xlu0 %v4915, 126
        %v4924 = vpop.permute.xlu0 %4923
        %4925 = vrot.lane.b32.xlu0 %v4916, 126
        %v4926 = vpop.permute.xlu0 %4925
        %4927 = vrot.lane.b32.xlu0 %v4917, 126
        %v4928 = vpop.permute.xlu0 %4927
        %4929 = vrot.lane.b32.xlu0 %v4918, 126
        %v4930 = vpop.permute.xlu0 %4929
        %v4935 = vadd.f32 %v4831, %v4924
        %v4936 = vadd.f32 %v4832, %v4926
        %v4937 = vadd.f32 %v4833, %v4928
        %v4938 = vadd.f32 %v4834, %v4930
        %s4939 = sld [smem:[#allocation3 + $0xc9]]
        %v4940 = vstv %s4939
        %v4941 = vmul.f32 %v4713, %v4940
        %v4942 = vmul.f32 %v4714, %v4940
        %v4943 = vmul.f32 %v4715, %v4940
        %v4944 = vmul.f32 %v4716, %v4940
        %4949 = vrot.lane.b32.xlu0 %v4941, 126
        %v4950 = vpop.permute.xlu0 %4949
        %4951 = vrot.lane.b32.xlu0 %v4942, 126
        %v4952 = vpop.permute.xlu0 %4951
        %4953 = vrot.lane.b32.xlu0 %v4943, 126
        %v4954 = vpop.permute.xlu0 %4953
        %4955 = vrot.lane.b32.xlu0 %v4944, 126
        %v4956 = vpop.permute.xlu0 %4955
        %v4961 = vadd.f32 %v4857, %v4950
        %v4962 = vadd.f32 %v4858, %v4952
        %v4963 = vadd.f32 %v4859, %v4954
        %v4964 = vadd.f32 %v4860, %v4956
        %v4965 = vld [vmem:[#allocation2 + $0x2] sm:$0xff]
        %v4966 = vld [vmem:[#allocation2 + $0xa] sm:$0xff]
        %v4967 = vld [vmem:[#allocation2 + $0x12] sm:$0xff]
        %v4968 = vld [vmem:[#allocation2 + $0x1a] sm:$0xff]
        %s4969 = sld [smem:[#allocation3 + $0xd6]]
        %v4970 = vstv %s4969
        %v4971 = vmul.f32 %v4965, %v4970
        %v4972 = vmul.f32 %v4966, %v4970
        %v4973 = vmul.f32 %v4967, %v4970
        %v4974 = vmul.f32 %v4968, %v4970
        %v4975 = vadd.f32 %v4883, %v4971
        %v4976 = vadd.f32 %v4884, %v4972
        %v4977 = vadd.f32 %v4885, %v4973
        %v4978 = vadd.f32 %v4886, %v4974
        %s4979 = sld [smem:[#allocation3 + $0xd7]]
        %v4980 = vstv %s4979
        %v4981 = vmul.f32 %v4965, %v4980
        %v4982 = vmul.f32 %v4966, %v4980
        %v4983 = vmul.f32 %v4967, %v4980
        %v4984 = vmul.f32 %v4968, %v4980
        %v4985 = vadd.f32 %v4909, %v4981
        %v4986 = vadd.f32 %v4910, %v4982
        %v4987 = vadd.f32 %v4911, %v4983
        %v4988 = vadd.f32 %v4912, %v4984
        %s4989 = sld [smem:[#allocation3 + $0xd8]]
        %v4990 = vstv %s4989
        %v4991 = vmul.f32 %v4965, %v4990
        %v4992 = vmul.f32 %v4966, %v4990
        %v4993 = vmul.f32 %v4967, %v4990
        %v4994 = vmul.f32 %v4968, %v4990
        %v4995 = vadd.f32 %v4935, %v4991
        %v4996 = vadd.f32 %v4936, %v4992
        %v4997 = vadd.f32 %v4937, %v4993
        %v4998 = vadd.f32 %v4938, %v4994
        %s4999 = sld [smem:[#allocation3 + $0xd9]]
        %v5000 = vstv %s4999
        %v5001 = vmul.f32 %v4965, %v5000
        %v5002 = vmul.f32 %v4966, %v5000
        %v5003 = vmul.f32 %v4967, %v5000
        %v5004 = vmul.f32 %v4968, %v5000
        %v5005 = vadd.f32 %v4961, %v5001
        %v5006 = vadd.f32 %v4962, %v5002
        %v5007 = vadd.f32 %v4963, %v5003
        %v5008 = vadd.f32 %v4964, %v5004
        %s5009 = sld [smem:[#allocation3 + $0xe6]]
        %v5010 = vstv %s5009
        %v5011 = vmul.f32 %v4965, %v5010
        %v5012 = vmul.f32 %v4966, %v5010
        %v5013 = vmul.f32 %v4967, %v5010
        %v5014 = vmul.f32 %v4968, %v5010
        %5019 = vrot.lane.b32.xlu0 %v5011, 127
        %v5020 = vpop.permute.xlu0 %5019
        %5021 = vrot.lane.b32.xlu0 %v5012, 127
        %v5022 = vpop.permute.xlu0 %5021
        %5023 = vrot.lane.b32.xlu0 %v5013, 127
        %v5024 = vpop.permute.xlu0 %5023
        %5025 = vrot.lane.b32.xlu0 %v5014, 127
        %v5026 = vpop.permute.xlu0 %5025
        %v5031 = vadd.f32 %v4975, %v5020
        %v5032 = vadd.f32 %v4976, %v5022
        %v5033 = vadd.f32 %v4977, %v5024
        %v5034 = vadd.f32 %v4978, %v5026
        %s5035 = sld [smem:[#allocation3 + $0xe7]]
        %v5036 = vstv %s5035
        %v5037 = vmul.f32 %v4965, %v5036
        %v5038 = vmul.f32 %v4966, %v5036
        %v5039 = vmul.f32 %v4967, %v5036
        %v5040 = vmul.f32 %v4968, %v5036
        %5045 = vrot.lane.b32.xlu0 %v5037, 127
        %v5046 = vpop.permute.xlu0 %5045
        %5047 = vrot.lane.b32.xlu0 %v5038, 127
        %v5048 = vpop.permute.xlu0 %5047
        %5049 = vrot.lane.b32.xlu0 %v5039, 127
        %v5050 = vpop.permute.xlu0 %5049
        %5051 = vrot.lane.b32.xlu0 %v5040, 127
        %v5052 = vpop.permute.xlu0 %5051
        %v5057 = vadd.f32 %v4985, %v5046
        %v5058 = vadd.f32 %v4986, %v5048
        %v5059 = vadd.f32 %v4987, %v5050
        %v5060 = vadd.f32 %v4988, %v5052
        %s5061 = sld [smem:[#allocation3 + $0xe8]]
        %v5062 = vstv %s5061
        %v5063 = vmul.f32 %v4965, %v5062
        %v5064 = vmul.f32 %v4966, %v5062
        %v5065 = vmul.f32 %v4967, %v5062
        %v5066 = vmul.f32 %v4968, %v5062
        %5071 = vrot.lane.b32.xlu0 %v5063, 127
        %v5072 = vpop.permute.xlu0 %5071
        %5073 = vrot.lane.b32.xlu0 %v5064, 127
        %v5074 = vpop.permute.xlu0 %5073
        %5075 = vrot.lane.b32.xlu0 %v5065, 127
        %v5076 = vpop.permute.xlu0 %5075
        %5077 = vrot.lane.b32.xlu0 %v5066, 127
        %v5078 = vpop.permute.xlu0 %5077
        %v5083 = vadd.f32 %v4995, %v5072
        %v5084 = vadd.f32 %v4996, %v5074
        %v5085 = vadd.f32 %v4997, %v5076
        %v5086 = vadd.f32 %v4998, %v5078
        %s5087 = sld [smem:[#allocation3 + $0xe9]]
        %v5088 = vstv %s5087
        %v5089 = vmul.f32 %v4965, %v5088
        %v5090 = vmul.f32 %v4966, %v5088
        %v5091 = vmul.f32 %v4967, %v5088
        %v5092 = vmul.f32 %v4968, %v5088
        %5097 = vrot.lane.b32.xlu0 %v5089, 127
        %v5098 = vpop.permute.xlu0 %5097
        %5099 = vrot.lane.b32.xlu0 %v5090, 127
        %v5100 = vpop.permute.xlu0 %5099
        %5101 = vrot.lane.b32.xlu0 %v5091, 127
        %v5102 = vpop.permute.xlu0 %5101
        %5103 = vrot.lane.b32.xlu0 %v5092, 127
        %v5104 = vpop.permute.xlu0 %5103
        %v5109 = vadd.f32 %v5005, %v5098
        %v5110 = vadd.f32 %v5006, %v5100
        %v5111 = vadd.f32 %v5007, %v5102
        %v5112 = vadd.f32 %v5008, %v5104
        %s5113 = sld [smem:[#allocation3 + $0xf6]]
        %v5114 = vstv %s5113
        %v5115 = vmul.f32 %v4965, %v5114
        %v5116 = vmul.f32 %v4966, %v5114
        %v5117 = vmul.f32 %v4967, %v5114
        %v5118 = vmul.f32 %v4968, %v5114
        %5123 = vrot.lane.b32.xlu0 %v5115, 126
        %v5124 = vpop.permute.xlu0 %5123
        %5125 = vrot.lane.b32.xlu0 %v5116, 126
        %v5126 = vpop.permute.xlu0 %5125
        %5127 = vrot.lane.b32.xlu0 %v5117, 126
        %v5128 = vpop.permute.xlu0 %5127
        %5129 = vrot.lane.b32.xlu0 %v5118, 126
        %v5130 = vpop.permute.xlu0 %5129
        %v5135 = vadd.f32 %v5031, %v5124
        %v5136 = vadd.f32 %v5032, %v5126
        %v5137 = vadd.f32 %v5033, %v5128
        %v5138 = vadd.f32 %v5034, %v5130
        %s5139 = sld [smem:[#allocation3 + $0xf7]]
        %v5140 = vstv %s5139
        %v5141 = vmul.f32 %v4965, %v5140
        %v5142 = vmul.f32 %v4966, %v5140
        %v5143 = vmul.f32 %v4967, %v5140
        %v5144 = vmul.f32 %v4968, %v5140
        %5149 = vrot.lane.b32.xlu0 %v5141, 126
        %v5150 = vpop.permute.xlu0 %5149
        %5151 = vrot.lane.b32.xlu0 %v5142, 126
        %v5152 = vpop.permute.xlu0 %5151
        %5153 = vrot.lane.b32.xlu0 %v5143, 126
        %v5154 = vpop.permute.xlu0 %5153
        %5155 = vrot.lane.b32.xlu0 %v5144, 126
        %v5156 = vpop.permute.xlu0 %5155
        %v5161 = vadd.f32 %v5057, %v5150
        %v5162 = vadd.f32 %v5058, %v5152
        %v5163 = vadd.f32 %v5059, %v5154
        %v5164 = vadd.f32 %v5060, %v5156
        %s5165 = sld [smem:[#allocation3 + $0xf8]]
        %v5166 = vstv %s5165
        %v5167 = vmul.f32 %v4965, %v5166
        %v5168 = vmul.f32 %v4966, %v5166
        %v5169 = vmul.f32 %v4967, %v5166
        %v5170 = vmul.f32 %v4968, %v5166
        %5175 = vrot.lane.b32.xlu0 %v5167, 126
        %v5176 = vpop.permute.xlu0 %5175
        %5177 = vrot.lane.b32.xlu0 %v5168, 126
        %v5178 = vpop.permute.xlu0 %5177
        %5179 = vrot.lane.b32.xlu0 %v5169, 126
        %v5180 = vpop.permute.xlu0 %5179
        %5181 = vrot.lane.b32.xlu0 %v5170, 126
        %v5182 = vpop.permute.xlu0 %5181
        %v5187 = vadd.f32 %v5083, %v5176
        %v5188 = vadd.f32 %v5084, %v5178
        %v5189 = vadd.f32 %v5085, %v5180
        %v5190 = vadd.f32 %v5086, %v5182
        %s5191 = sld [smem:[#allocation3 + $0xf9]]
        %v5192 = vstv %s5191
        %v5193 = vmul.f32 %v4965, %v5192
        %v5194 = vmul.f32 %v4966, %v5192
        %v5195 = vmul.f32 %v4967, %v5192
        %v5196 = vmul.f32 %v4968, %v5192
        %5201 = vrot.lane.b32.xlu0 %v5193, 126
        %v5202 = vpop.permute.xlu0 %5201
        %5203 = vrot.lane.b32.xlu0 %v5194, 126
        %v5204 = vpop.permute.xlu0 %5203
        %5205 = vrot.lane.b32.xlu0 %v5195, 126
        %v5206 = vpop.permute.xlu0 %5205
        %5207 = vrot.lane.b32.xlu0 %v5196, 126
        %v5208 = vpop.permute.xlu0 %5207
        %v5213 = vadd.f32 %v5109, %v5202
        %v5214 = vadd.f32 %v5110, %v5204
        %v5215 = vadd.f32 %v5111, %v5206
        %v5216 = vadd.f32 %v5112, %v5208
        %v5217 = vld [vmem:[%s1865] sm:$0xff]
        %v5218 = vld [vmem:[%s1865 + $0x8] sm:$0xff]
        %v5219 = vld [vmem:[%s1865 + $0x10] sm:$0xff]
        %v5220 = vld [vmem:[%s1865 + $0x18] sm:$0xff]
        %s5221 = sld [smem:[#allocation3 + $0x7a]]
        %v5222 = vstv %s5221
        %v5223 = vmul.f32 %v5217, %v5222
        %v5224 = vmul.f32 %v5218, %v5222
        %v5225 = vmul.f32 %v5219, %v5222
        %v5226 = vmul.f32 %v5220, %v5222
        %v5227 = vadd.f32 %v5135, %v5223
        %v5228 = vadd.f32 %v5136, %v5224
        %v5229 = vadd.f32 %v5137, %v5225
        %v5230 = vadd.f32 %v5138, %v5226
        %s5231 = sld [smem:[#allocation3 + $0x7b]]
        %v5232 = vstv %s5231
        %v5233 = vmul.f32 %v5217, %v5232
        %v5234 = vmul.f32 %v5218, %v5232
        %v5235 = vmul.f32 %v5219, %v5232
        %v5236 = vmul.f32 %v5220, %v5232
        %v5237 = vadd.f32 %v5161, %v5233
        %v5238 = vadd.f32 %v5162, %v5234
        %v5239 = vadd.f32 %v5163, %v5235
        %v5240 = vadd.f32 %v5164, %v5236
        %s5241 = sld [smem:[#allocation3 + $0x7c]]
        %v5242 = vstv %s5241
        %v5243 = vmul.f32 %v5217, %v5242
        %v5244 = vmul.f32 %v5218, %v5242
        %v5245 = vmul.f32 %v5219, %v5242
        %v5246 = vmul.f32 %v5220, %v5242
        %v5247 = vadd.f32 %v5187, %v5243
        %v5248 = vadd.f32 %v5188, %v5244
        %v5249 = vadd.f32 %v5189, %v5245
        %v5250 = vadd.f32 %v5190, %v5246
        %s5251 = sld [smem:[#allocation3 + $0x7d]]
        %v5252 = vstv %s5251
        %v5253 = vmul.f32 %v5217, %v5252
        %v5254 = vmul.f32 %v5218, %v5252
        %v5255 = vmul.f32 %v5219, %v5252
        %v5256 = vmul.f32 %v5220, %v5252
        %v5257 = vadd.f32 %v5213, %v5253
        %v5258 = vadd.f32 %v5214, %v5254
        %v5259 = vadd.f32 %v5215, %v5255
        %v5260 = vadd.f32 %v5216, %v5256
        %s5261 = sld [smem:[#allocation3 + $0x8a]]
        %v5262 = vstv %s5261
        %v5263 = vmul.f32 %v5217, %v5262
        %v5264 = vmul.f32 %v5218, %v5262
        %v5265 = vmul.f32 %v5219, %v5262
        %v5266 = vmul.f32 %v5220, %v5262
        %5271 = vrot.lane.b32.xlu0 %v5263, 127
        %v5272 = vpop.permute.xlu0 %5271
        %5273 = vrot.lane.b32.xlu0 %v5264, 127
        %v5274 = vpop.permute.xlu0 %5273
        %5275 = vrot.lane.b32.xlu0 %v5265, 127
        %v5276 = vpop.permute.xlu0 %5275
        %5277 = vrot.lane.b32.xlu0 %v5266, 127
        %v5278 = vpop.permute.xlu0 %5277
        %v5283 = vadd.f32 %v5227, %v5272
        %v5284 = vadd.f32 %v5228, %v5274
        %v5285 = vadd.f32 %v5229, %v5276
        %v5286 = vadd.f32 %v5230, %v5278
        %s5287 = sld [smem:[#allocation3 + $0x8b]]
        %v5288 = vstv %s5287
        %v5289 = vmul.f32 %v5217, %v5288
        %v5290 = vmul.f32 %v5218, %v5288
        %v5291 = vmul.f32 %v5219, %v5288
        %v5292 = vmul.f32 %v5220, %v5288
        %5297 = vrot.lane.b32.xlu0 %v5289, 127
        %v5298 = vpop.permute.xlu0 %5297
        %5299 = vrot.lane.b32.xlu0 %v5290, 127
        %v5300 = vpop.permute.xlu0 %5299
        %5301 = vrot.lane.b32.xlu0 %v5291, 127
        %v5302 = vpop.permute.xlu0 %5301
        %5303 = vrot.lane.b32.xlu0 %v5292, 127
        %v5304 = vpop.permute.xlu0 %5303
        %v5309 = vadd.f32 %v5237, %v5298
        %v5310 = vadd.f32 %v5238, %v5300
        %v5311 = vadd.f32 %v5239, %v5302
        %v5312 = vadd.f32 %v5240, %v5304
        %s5313 = sld [smem:[#allocation3 + $0x8c]]
        %v5314 = vstv %s5313
        %v5315 = vmul.f32 %v5217, %v5314
        %v5316 = vmul.f32 %v5218, %v5314
        %v5317 = vmul.f32 %v5219, %v5314
        %v5318 = vmul.f32 %v5220, %v5314
        %5323 = vrot.lane.b32.xlu0 %v5315, 127
        %v5324 = vpop.permute.xlu0 %5323
        %5325 = vrot.lane.b32.xlu0 %v5316, 127
        %v5326 = vpop.permute.xlu0 %5325
        %5327 = vrot.lane.b32.xlu0 %v5317, 127
        %v5328 = vpop.permute.xlu0 %5327
        %5329 = vrot.lane.b32.xlu0 %v5318, 127
        %v5330 = vpop.permute.xlu0 %5329
        %v5335 = vadd.f32 %v5247, %v5324
        %v5336 = vadd.f32 %v5248, %v5326
        %v5337 = vadd.f32 %v5249, %v5328
        %v5338 = vadd.f32 %v5250, %v5330
        %s5339 = sld [smem:[#allocation3 + $0x8d]]
        %v5340 = vstv %s5339
        %v5341 = vmul.f32 %v5217, %v5340
        %v5342 = vmul.f32 %v5218, %v5340
        %v5343 = vmul.f32 %v5219, %v5340
        %v5344 = vmul.f32 %v5220, %v5340
        %5349 = vrot.lane.b32.xlu0 %v5341, 127
        %v5350 = vpop.permute.xlu0 %5349
        %5351 = vrot.lane.b32.xlu0 %v5342, 127
        %v5352 = vpop.permute.xlu0 %5351
        %5353 = vrot.lane.b32.xlu0 %v5343, 127
        %v5354 = vpop.permute.xlu0 %5353
        %5355 = vrot.lane.b32.xlu0 %v5344, 127
        %v5356 = vpop.permute.xlu0 %5355
        %v5361 = vadd.f32 %v5257, %v5350
        %v5362 = vadd.f32 %v5258, %v5352
        %v5363 = vadd.f32 %v5259, %v5354
        %v5364 = vadd.f32 %v5260, %v5356
        %s5365 = sld [smem:[#allocation3 + $0x9a]]
        %v5366 = vstv %s5365
        %v5367 = vmul.f32 %v5217, %v5366
        %v5368 = vmul.f32 %v5218, %v5366
        %v5369 = vmul.f32 %v5219, %v5366
        %v5370 = vmul.f32 %v5220, %v5366
        %5375 = vrot.lane.b32.xlu0 %v5367, 126
        %v5376 = vpop.permute.xlu0 %5375
        %5377 = vrot.lane.b32.xlu0 %v5368, 126
        %v5378 = vpop.permute.xlu0 %5377
        %5379 = vrot.lane.b32.xlu0 %v5369, 126
        %v5380 = vpop.permute.xlu0 %5379
        %5381 = vrot.lane.b32.xlu0 %v5370, 126
        %v5382 = vpop.permute.xlu0 %5381
        %v5387 = vadd.f32 %v5283, %v5376
        %v5388 = vadd.f32 %v5284, %v5378
        %v5389 = vadd.f32 %v5285, %v5380
        %v5390 = vadd.f32 %v5286, %v5382
        %s5391 = sld [smem:[#allocation3 + $0x9b]]
        %v5392 = vstv %s5391
        %v5393 = vmul.f32 %v5217, %v5392
        %v5394 = vmul.f32 %v5218, %v5392
        %v5395 = vmul.f32 %v5219, %v5392
        %v5396 = vmul.f32 %v5220, %v5392
        %5401 = vrot.lane.b32.xlu0 %v5393, 126
        %v5402 = vpop.permute.xlu0 %5401
        %5403 = vrot.lane.b32.xlu0 %v5394, 126
        %v5404 = vpop.permute.xlu0 %5403
        %5405 = vrot.lane.b32.xlu0 %v5395, 126
        %v5406 = vpop.permute.xlu0 %5405
        %5407 = vrot.lane.b32.xlu0 %v5396, 126
        %v5408 = vpop.permute.xlu0 %5407
        %v5413 = vadd.f32 %v5309, %v5402
        %v5414 = vadd.f32 %v5310, %v5404
        %v5415 = vadd.f32 %v5311, %v5406
        %v5416 = vadd.f32 %v5312, %v5408
        %s5417 = sld [smem:[#allocation3 + $0x9c]]
        %v5418 = vstv %s5417
        %v5419 = vmul.f32 %v5217, %v5418
        %v5420 = vmul.f32 %v5218, %v5418
        %v5421 = vmul.f32 %v5219, %v5418
        %v5422 = vmul.f32 %v5220, %v5418
        %5427 = vrot.lane.b32.xlu0 %v5419, 126
        %v5428 = vpop.permute.xlu0 %5427
        %5429 = vrot.lane.b32.xlu0 %v5420, 126
        %v5430 = vpop.permute.xlu0 %5429
        %5431 = vrot.lane.b32.xlu0 %v5421, 126
        %v5432 = vpop.permute.xlu0 %5431
        %5433 = vrot.lane.b32.xlu0 %v5422, 126
        %v5434 = vpop.permute.xlu0 %5433
        %v5439 = vadd.f32 %v5335, %v5428
        %v5440 = vadd.f32 %v5336, %v5430
        %v5441 = vadd.f32 %v5337, %v5432
        %v5442 = vadd.f32 %v5338, %v5434
        %s5443 = sld [smem:[#allocation3 + $0x9d]]
        %v5444 = vstv %s5443
        %v5445 = vmul.f32 %v5217, %v5444
        %v5446 = vmul.f32 %v5218, %v5444
        %v5447 = vmul.f32 %v5219, %v5444
        %v5448 = vmul.f32 %v5220, %v5444
        %5453 = vrot.lane.b32.xlu0 %v5445, 126
        %v5454 = vpop.permute.xlu0 %5453
        %5455 = vrot.lane.b32.xlu0 %v5446, 126
        %v5456 = vpop.permute.xlu0 %5455
        %5457 = vrot.lane.b32.xlu0 %v5447, 126
        %v5458 = vpop.permute.xlu0 %5457
        %5459 = vrot.lane.b32.xlu0 %v5448, 126
        %v5460 = vpop.permute.xlu0 %5459
        %v5465 = vadd.f32 %v5361, %v5454
        %v5466 = vadd.f32 %v5362, %v5456
        %v5467 = vadd.f32 %v5363, %v5458
        %v5468 = vadd.f32 %v5364, %v5460
        %v5469 = vld [vmem:[%s1865 + $0x1] sm:$0xff]
        %v5470 = vld [vmem:[%s1865 + $0x9] sm:$0xff]
        %v5471 = vld [vmem:[%s1865 + $0x11] sm:$0xff]
        %v5472 = vld [vmem:[%s1865 + $0x19] sm:$0xff]
        %s5473 = sld [smem:[#allocation3 + $0xaa]]
        %v5474 = vstv %s5473
        %v5475 = vmul.f32 %v5469, %v5474
        %v5476 = vmul.f32 %v5470, %v5474
        %v5477 = vmul.f32 %v5471, %v5474
        %v5478 = vmul.f32 %v5472, %v5474
        %v5479 = vadd.f32 %v5387, %v5475
        %v5480 = vadd.f32 %v5388, %v5476
        %v5481 = vadd.f32 %v5389, %v5477
        %v5482 = vadd.f32 %v5390, %v5478
        %s5483 = sld [smem:[#allocation3 + $0xab]]
        %v5484 = vstv %s5483
        %v5485 = vmul.f32 %v5469, %v5484
        %v5486 = vmul.f32 %v5470, %v5484
        %v5487 = vmul.f32 %v5471, %v5484
        %v5488 = vmul.f32 %v5472, %v5484
        %v5489 = vadd.f32 %v5413, %v5485
        %v5490 = vadd.f32 %v5414, %v5486
        %v5491 = vadd.f32 %v5415, %v5487
        %v5492 = vadd.f32 %v5416, %v5488
        %s5493 = sld [smem:[#allocation3 + $0xac]]
        %v5494 = vstv %s5493
        %v5495 = vmul.f32 %v5469, %v5494
        %v5496 = vmul.f32 %v5470, %v5494
        %v5497 = vmul.f32 %v5471, %v5494
        %v5498 = vmul.f32 %v5472, %v5494
        %v5499 = vadd.f32 %v5439, %v5495
        %v5500 = vadd.f32 %v5440, %v5496
        %v5501 = vadd.f32 %v5441, %v5497
        %v5502 = vadd.f32 %v5442, %v5498
        %s5503 = sld [smem:[#allocation3 + $0xad]]
        %v5504 = vstv %s5503
        %v5505 = vmul.f32 %v5469, %v5504
        %v5506 = vmul.f32 %v5470, %v5504
        %v5507 = vmul.f32 %v5471, %v5504
        %v5508 = vmul.f32 %v5472, %v5504
        %v5509 = vadd.f32 %v5465, %v5505
        %v5510 = vadd.f32 %v5466, %v5506
        %v5511 = vadd.f32 %v5467, %v5507
        %v5512 = vadd.f32 %v5468, %v5508
        %s5513 = sld [smem:[#allocation3 + $0xba]]
        %v5514 = vstv %s5513
        %v5515 = vmul.f32 %v5469, %v5514
        %v5516 = vmul.f32 %v5470, %v5514
        %v5517 = vmul.f32 %v5471, %v5514
        %v5518 = vmul.f32 %v5472, %v5514
        %5523 = vrot.lane.b32.xlu0 %v5515, 127
        %v5524 = vpop.permute.xlu0 %5523
        %5525 = vrot.lane.b32.xlu0 %v5516, 127
        %v5526 = vpop.permute.xlu0 %5525
        %5527 = vrot.lane.b32.xlu0 %v5517, 127
        %v5528 = vpop.permute.xlu0 %5527
        %5529 = vrot.lane.b32.xlu0 %v5518, 127
        %v5530 = vpop.permute.xlu0 %5529
        %v5535 = vadd.f32 %v5479, %v5524
        %v5536 = vadd.f32 %v5480, %v5526
        %v5537 = vadd.f32 %v5481, %v5528
        %v5538 = vadd.f32 %v5482, %v5530
        %s5539 = sld [smem:[#allocation3 + $0xbb]]
        %v5540 = vstv %s5539
        %v5541 = vmul.f32 %v5469, %v5540
        %v5542 = vmul.f32 %v5470, %v5540
        %v5543 = vmul.f32 %v5471, %v5540
        %v5544 = vmul.f32 %v5472, %v5540
        %5549 = vrot.lane.b32.xlu0 %v5541, 127
        %v5550 = vpop.permute.xlu0 %5549
        %5551 = vrot.lane.b32.xlu0 %v5542, 127
        %v5552 = vpop.permute.xlu0 %5551
        %5553 = vrot.lane.b32.xlu0 %v5543, 127
        %v5554 = vpop.permute.xlu0 %5553
        %5555 = vrot.lane.b32.xlu0 %v5544, 127
        %v5556 = vpop.permute.xlu0 %5555
        %v5561 = vadd.f32 %v5489, %v5550
        %v5562 = vadd.f32 %v5490, %v5552
        %v5563 = vadd.f32 %v5491, %v5554
        %v5564 = vadd.f32 %v5492, %v5556
        %s5565 = sld [smem:[#allocation3 + $0xbc]]
        %v5566 = vstv %s5565
        %v5567 = vmul.f32 %v5469, %v5566
        %v5568 = vmul.f32 %v5470, %v5566
        %v5569 = vmul.f32 %v5471, %v5566
        %v5570 = vmul.f32 %v5472, %v5566
        %5575 = vrot.lane.b32.xlu0 %v5567, 127
        %v5576 = vpop.permute.xlu0 %5575
        %5577 = vrot.lane.b32.xlu0 %v5568, 127
        %v5578 = vpop.permute.xlu0 %5577
        %5579 = vrot.lane.b32.xlu0 %v5569, 127
        %v5580 = vpop.permute.xlu0 %5579
        %5581 = vrot.lane.b32.xlu0 %v5570, 127
        %v5582 = vpop.permute.xlu0 %5581
        %v5587 = vadd.f32 %v5499, %v5576
        %v5588 = vadd.f32 %v5500, %v5578
        %v5589 = vadd.f32 %v5501, %v5580
        %v5590 = vadd.f32 %v5502, %v5582
        %s5591 = sld [smem:[#allocation3 + $0xbd]]
        %v5592 = vstv %s5591
        %v5593 = vmul.f32 %v5469, %v5592
        %v5594 = vmul.f32 %v5470, %v5592
        %v5595 = vmul.f32 %v5471, %v5592
        %v5596 = vmul.f32 %v5472, %v5592
        %5601 = vrot.lane.b32.xlu0 %v5593, 127
        %v5602 = vpop.permute.xlu0 %5601
        %5603 = vrot.lane.b32.xlu0 %v5594, 127
        %v5604 = vpop.permute.xlu0 %5603
        %5605 = vrot.lane.b32.xlu0 %v5595, 127
        %v5606 = vpop.permute.xlu0 %5605
        %5607 = vrot.lane.b32.xlu0 %v5596, 127
        %v5608 = vpop.permute.xlu0 %5607
        %v5613 = vadd.f32 %v5509, %v5602
        %v5614 = vadd.f32 %v5510, %v5604
        %v5615 = vadd.f32 %v5511, %v5606
        %v5616 = vadd.f32 %v5512, %v5608
        %s5617 = sld [smem:[#allocation3 + $0xca]]
        %v5618 = vstv %s5617
        %v5619 = vmul.f32 %v5469, %v5618
        %v5620 = vmul.f32 %v5470, %v5618
        %v5621 = vmul.f32 %v5471, %v5618
        %v5622 = vmul.f32 %v5472, %v5618
        %5627 = vrot.lane.b32.xlu0 %v5619, 126
        %v5628 = vpop.permute.xlu0 %5627
        %5629 = vrot.lane.b32.xlu0 %v5620, 126
        %v5630 = vpop.permute.xlu0 %5629
        %5631 = vrot.lane.b32.xlu0 %v5621, 126
        %v5632 = vpop.permute.xlu0 %5631
        %5633 = vrot.lane.b32.xlu0 %v5622, 126
        %v5634 = vpop.permute.xlu0 %5633
        %v5639 = vadd.f32 %v5535, %v5628
        %v5640 = vadd.f32 %v5536, %v5630
        %v5641 = vadd.f32 %v5537, %v5632
        %v5642 = vadd.f32 %v5538, %v5634
        %s5643 = sld [smem:[#allocation3 + $0xcb]]
        %v5644 = vstv %s5643
        %v5645 = vmul.f32 %v5469, %v5644
        %v5646 = vmul.f32 %v5470, %v5644
        %v5647 = vmul.f32 %v5471, %v5644
        %v5648 = vmul.f32 %v5472, %v5644
        %5653 = vrot.lane.b32.xlu0 %v5645, 126
        %v5654 = vpop.permute.xlu0 %5653
        %5655 = vrot.lane.b32.xlu0 %v5646, 126
        %v5656 = vpop.permute.xlu0 %5655
        %5657 = vrot.lane.b32.xlu0 %v5647, 126
        %v5658 = vpop.permute.xlu0 %5657
        %5659 = vrot.lane.b32.xlu0 %v5648, 126
        %v5660 = vpop.permute.xlu0 %5659
        %v5665 = vadd.f32 %v5561, %v5654
        %v5666 = vadd.f32 %v5562, %v5656
        %v5667 = vadd.f32 %v5563, %v5658
        %v5668 = vadd.f32 %v5564, %v5660
        %s5669 = sld [smem:[#allocation3 + $0xcc]]
        %v5670 = vstv %s5669
        %v5671 = vmul.f32 %v5469, %v5670
        %v5672 = vmul.f32 %v5470, %v5670
        %v5673 = vmul.f32 %v5471, %v5670
        %v5674 = vmul.f32 %v5472, %v5670
        %5679 = vrot.lane.b32.xlu0 %v5671, 126
        %v5680 = vpop.permute.xlu0 %5679
        %5681 = vrot.lane.b32.xlu0 %v5672, 126
        %v5682 = vpop.permute.xlu0 %5681
        %5683 = vrot.lane.b32.xlu0 %v5673, 126
        %v5684 = vpop.permute.xlu0 %5683
        %5685 = vrot.lane.b32.xlu0 %v5674, 126
        %v5686 = vpop.permute.xlu0 %5685
        %v5691 = vadd.f32 %v5587, %v5680
        %v5692 = vadd.f32 %v5588, %v5682
        %v5693 = vadd.f32 %v5589, %v5684
        %v5694 = vadd.f32 %v5590, %v5686
        %s5695 = sld [smem:[#allocation3 + $0xcd]]
        %v5696 = vstv %s5695
        %v5697 = vmul.f32 %v5469, %v5696
        %v5698 = vmul.f32 %v5470, %v5696
        %v5699 = vmul.f32 %v5471, %v5696
        %v5700 = vmul.f32 %v5472, %v5696
        %5705 = vrot.lane.b32.xlu0 %v5697, 126
        %v5706 = vpop.permute.xlu0 %5705
        %5707 = vrot.lane.b32.xlu0 %v5698, 126
        %v5708 = vpop.permute.xlu0 %5707
        %5709 = vrot.lane.b32.xlu0 %v5699, 126
        %v5710 = vpop.permute.xlu0 %5709
        %5711 = vrot.lane.b32.xlu0 %v5700, 126
        %v5712 = vpop.permute.xlu0 %5711
        %v5717 = vadd.f32 %v5613, %v5706
        %v5718 = vadd.f32 %v5614, %v5708
        %v5719 = vadd.f32 %v5615, %v5710
        %v5720 = vadd.f32 %v5616, %v5712
        %v5721 = vld [vmem:[%s1865 + $0x2] sm:$0xff]
        %v5722 = vld [vmem:[%s1865 + $0xa] sm:$0xff]
        %v5723 = vld [vmem:[%s1865 + $0x12] sm:$0xff]
        %v5724 = vld [vmem:[%s1865 + $0x1a] sm:$0xff]
        %s5725 = sld [smem:[#allocation3 + $0xda]]
        %v5726 = vstv %s5725
        %v5727 = vmul.f32 %v5721, %v5726
        %v5728 = vmul.f32 %v5722, %v5726
        %v5729 = vmul.f32 %v5723, %v5726
        %v5730 = vmul.f32 %v5724, %v5726
        %v5731 = vadd.f32 %v5639, %v5727
        %v5732 = vadd.f32 %v5640, %v5728
        %v5733 = vadd.f32 %v5641, %v5729
        %v5734 = vadd.f32 %v5642, %v5730
        %s5735 = sld [smem:[#allocation3 + $0xdb]]
        %v5736 = vstv %s5735
        %v5737 = vmul.f32 %v5721, %v5736
        %v5738 = vmul.f32 %v5722, %v5736
        %v5739 = vmul.f32 %v5723, %v5736
        %v5740 = vmul.f32 %v5724, %v5736
        %v5741 = vadd.f32 %v5665, %v5737
        %v5742 = vadd.f32 %v5666, %v5738
        %v5743 = vadd.f32 %v5667, %v5739
        %v5744 = vadd.f32 %v5668, %v5740
        %s5745 = sld [smem:[#allocation3 + $0xdc]]
        %v5746 = vstv %s5745
        %v5747 = vmul.f32 %v5721, %v5746
        %v5748 = vmul.f32 %v5722, %v5746
        %v5749 = vmul.f32 %v5723, %v5746
        %v5750 = vmul.f32 %v5724, %v5746
        %v5751 = vadd.f32 %v5691, %v5747
        %v5752 = vadd.f32 %v5692, %v5748
        %v5753 = vadd.f32 %v5693, %v5749
        %v5754 = vadd.f32 %v5694, %v5750
        %s5755 = sld [smem:[#allocation3 + $0xdd]]
        %v5756 = vstv %s5755
        %v5757 = vmul.f32 %v5721, %v5756
        %v5758 = vmul.f32 %v5722, %v5756
        %v5759 = vmul.f32 %v5723, %v5756
        %v5760 = vmul.f32 %v5724, %v5756
        %v5761 = vadd.f32 %v5717, %v5757
        %v5762 = vadd.f32 %v5718, %v5758
        %v5763 = vadd.f32 %v5719, %v5759
        %v5764 = vadd.f32 %v5720, %v5760
        %s5765 = sld [smem:[#allocation3 + $0xea]]
        %v5766 = vstv %s5765
        %v5767 = vmul.f32 %v5721, %v5766
        %v5768 = vmul.f32 %v5722, %v5766
        %v5769 = vmul.f32 %v5723, %v5766
        %v5770 = vmul.f32 %v5724, %v5766
        %5775 = vrot.lane.b32.xlu0 %v5767, 127
        %v5776 = vpop.permute.xlu0 %5775
        %5777 = vrot.lane.b32.xlu0 %v5768, 127
        %v5778 = vpop.permute.xlu0 %5777
        %5779 = vrot.lane.b32.xlu0 %v5769, 127
        %v5780 = vpop.permute.xlu0 %5779
        %5781 = vrot.lane.b32.xlu0 %v5770, 127
        %v5782 = vpop.permute.xlu0 %5781
        %v5787 = vadd.f32 %v5731, %v5776
        %v5788 = vadd.f32 %v5732, %v5778
        %v5789 = vadd.f32 %v5733, %v5780
        %v5790 = vadd.f32 %v5734, %v5782
        %s5791 = sld [smem:[#allocation3 + $0xeb]]
        %v5792 = vstv %s5791
        %v5793 = vmul.f32 %v5721, %v5792
        %v5794 = vmul.f32 %v5722, %v5792
        %v5795 = vmul.f32 %v5723, %v5792
        %v5796 = vmul.f32 %v5724, %v5792
        %5801 = vrot.lane.b32.xlu0 %v5793, 127
        %v5802 = vpop.permute.xlu0 %5801
        %5803 = vrot.lane.b32.xlu0 %v5794, 127
        %v5804 = vpop.permute.xlu0 %5803
        %5805 = vrot.lane.b32.xlu0 %v5795, 127
        %v5806 = vpop.permute.xlu0 %5805
        %5807 = vrot.lane.b32.xlu0 %v5796, 127
        %v5808 = vpop.permute.xlu0 %5807
        %v5813 = vadd.f32 %v5741, %v5802
        %v5814 = vadd.f32 %v5742, %v5804
        %v5815 = vadd.f32 %v5743, %v5806
        %v5816 = vadd.f32 %v5744, %v5808
        %s5817 = sld [smem:[#allocation3 + $0xec]]
        %v5818 = vstv %s5817
        %v5819 = vmul.f32 %v5721, %v5818
        %v5820 = vmul.f32 %v5722, %v5818
        %v5821 = vmul.f32 %v5723, %v5818
        %v5822 = vmul.f32 %v5724, %v5818
        %5827 = vrot.lane.b32.xlu0 %v5819, 127
        %v5828 = vpop.permute.xlu0 %5827
        %5829 = vrot.lane.b32.xlu0 %v5820, 127
        %v5830 = vpop.permute.xlu0 %5829
        %5831 = vrot.lane.b32.xlu0 %v5821, 127
        %v5832 = vpop.permute.xlu0 %5831
        %5833 = vrot.lane.b32.xlu0 %v5822, 127
        %v5834 = vpop.permute.xlu0 %5833
        %v5839 = vadd.f32 %v5751, %v5828
        %v5840 = vadd.f32 %v5752, %v5830
        %v5841 = vadd.f32 %v5753, %v5832
        %v5842 = vadd.f32 %v5754, %v5834
        %s5843 = sld [smem:[#allocation3 + $0xed]]
        %v5844 = vstv %s5843
        %v5845 = vmul.f32 %v5721, %v5844
        %v5846 = vmul.f32 %v5722, %v5844
        %v5847 = vmul.f32 %v5723, %v5844
        %v5848 = vmul.f32 %v5724, %v5844
        %5853 = vrot.lane.b32.xlu0 %v5845, 127
        %v5854 = vpop.permute.xlu0 %5853
        %5855 = vrot.lane.b32.xlu0 %v5846, 127
        %v5856 = vpop.permute.xlu0 %5855
        %5857 = vrot.lane.b32.xlu0 %v5847, 127
        %v5858 = vpop.permute.xlu0 %5857
        %5859 = vrot.lane.b32.xlu0 %v5848, 127
        %v5860 = vpop.permute.xlu0 %5859
        %v5865 = vadd.f32 %v5761, %v5854
        %v5866 = vadd.f32 %v5762, %v5856
        %v5867 = vadd.f32 %v5763, %v5858
        %v5868 = vadd.f32 %v5764, %v5860
        %s5869 = sld [smem:[#allocation3 + $0xfa]]
        %v5870 = vstv %s5869
        %v5871 = vmul.f32 %v5721, %v5870
        %v5872 = vmul.f32 %v5722, %v5870
        %v5873 = vmul.f32 %v5723, %v5870
        %v5874 = vmul.f32 %v5724, %v5870
        %5879 = vrot.lane.b32.xlu0 %v5871, 126
        %v5880 = vpop.permute.xlu0 %5879
        %5881 = vrot.lane.b32.xlu0 %v5872, 126
        %v5882 = vpop.permute.xlu0 %5881
        %5883 = vrot.lane.b32.xlu0 %v5873, 126
        %v5884 = vpop.permute.xlu0 %5883
        %5885 = vrot.lane.b32.xlu0 %v5874, 126
        %v5886 = vpop.permute.xlu0 %5885
        %v5891 = vadd.f32 %v5787, %v5880
        %v5892 = vadd.f32 %v5788, %v5882
        %v5893 = vadd.f32 %v5789, %v5884
        %v5894 = vadd.f32 %v5790, %v5886
        %s5895 = sld [smem:[#allocation3 + $0xfb]]
        %v5896 = vstv %s5895
        %v5897 = vmul.f32 %v5721, %v5896
        %v5898 = vmul.f32 %v5722, %v5896
        %v5899 = vmul.f32 %v5723, %v5896
        %v5900 = vmul.f32 %v5724, %v5896
        %5905 = vrot.lane.b32.xlu0 %v5897, 126
        %v5906 = vpop.permute.xlu0 %5905
        %5907 = vrot.lane.b32.xlu0 %v5898, 126
        %v5908 = vpop.permute.xlu0 %5907
        %5909 = vrot.lane.b32.xlu0 %v5899, 126
        %v5910 = vpop.permute.xlu0 %5909
        %5911 = vrot.lane.b32.xlu0 %v5900, 126
        %v5912 = vpop.permute.xlu0 %5911
        %v5917 = vadd.f32 %v5813, %v5906
        %v5918 = vadd.f32 %v5814, %v5908
        %v5919 = vadd.f32 %v5815, %v5910
        %v5920 = vadd.f32 %v5816, %v5912
        %s5921 = sld [smem:[#allocation3 + $0xfc]]
        %v5922 = vstv %s5921
        %v5923 = vmul.f32 %v5721, %v5922
        %v5924 = vmul.f32 %v5722, %v5922
        %v5925 = vmul.f32 %v5723, %v5922
        %v5926 = vmul.f32 %v5724, %v5922
        %5931 = vrot.lane.b32.xlu0 %v5923, 126
        %v5932 = vpop.permute.xlu0 %5931
        %5933 = vrot.lane.b32.xlu0 %v5924, 126
        %v5934 = vpop.permute.xlu0 %5933
        %5935 = vrot.lane.b32.xlu0 %v5925, 126
        %v5936 = vpop.permute.xlu0 %5935
        %5937 = vrot.lane.b32.xlu0 %v5926, 126
        %v5938 = vpop.permute.xlu0 %5937
        %v5943 = vadd.f32 %v5839, %v5932
        %v5944 = vadd.f32 %v5840, %v5934
        %v5945 = vadd.f32 %v5841, %v5936
        %v5946 = vadd.f32 %v5842, %v5938
        %s5947 = sld [smem:[#allocation3 + $0xfd]]
        %v5948 = vstv %s5947
        %v5949 = vmul.f32 %v5721, %v5948
        %v5950 = vmul.f32 %v5722, %v5948
        %v5951 = vmul.f32 %v5723, %v5948
        %v5952 = vmul.f32 %v5724, %v5948
        %5957 = vrot.lane.b32.xlu0 %v5949, 126
        %v5958 = vpop.permute.xlu0 %5957
        %5959 = vrot.lane.b32.xlu0 %v5950, 126
        %v5960 = vpop.permute.xlu0 %5959
        %5961 = vrot.lane.b32.xlu0 %v5951, 126
        %v5962 = vpop.permute.xlu0 %5961
        %5963 = vrot.lane.b32.xlu0 %v5952, 126
        %v5964 = vpop.permute.xlu0 %5963
        %v5969 = vadd.f32 %v5865, %v5958
        %v5970 = vadd.f32 %v5866, %v5960
        %v5971 = vadd.f32 %v5867, %v5962
        %v5972 = vadd.f32 %v5868, %v5964
        %v5973 = vld [vmem:[%s4254] sm:$0xff]
        %v5974 = vld [vmem:[%s4254 + $0x8] sm:$0xff]
        %v5975 = vld [vmem:[%s4254 + $0x10] sm:$0xff]
        %v5976 = vld [vmem:[%s4254 + $0x18] sm:$0xff]
        %s5977 = sld [smem:[#allocation3 + $0x7e]]
        %v5978 = vstv %s5977
        %v5979 = vmul.f32 %v5973, %v5978
        %v5980 = vmul.f32 %v5974, %v5978
        %v5981 = vmul.f32 %v5975, %v5978
        %v5982 = vmul.f32 %v5976, %v5978
        %v5983 = vadd.f32 %v5891, %v5979
        %v5984 = vadd.f32 %v5892, %v5980
        %v5985 = vadd.f32 %v5893, %v5981
        %v5986 = vadd.f32 %v5894, %v5982
        %s5987 = sld [smem:[#allocation3 + $0x7f]]
        %v5988 = vstv %s5987
        %v5989 = vmul.f32 %v5973, %v5988
        %v5990 = vmul.f32 %v5974, %v5988
        %v5991 = vmul.f32 %v5975, %v5988
        %v5992 = vmul.f32 %v5976, %v5988
        %v5993 = vadd.f32 %v5917, %v5989
        %v5994 = vadd.f32 %v5918, %v5990
        %v5995 = vadd.f32 %v5919, %v5991
        %v5996 = vadd.f32 %v5920, %v5992
        %s5997 = sld [smem:[#allocation3 + $0x80]]
        %v5998 = vstv %s5997
        %v5999 = vmul.f32 %v5973, %v5998
        %v6000 = vmul.f32 %v5974, %v5998
        %v6001 = vmul.f32 %v5975, %v5998
        %v6002 = vmul.f32 %v5976, %v5998
        %v6003 = vadd.f32 %v5943, %v5999
        %v6004 = vadd.f32 %v5944, %v6000
        %v6005 = vadd.f32 %v5945, %v6001
        %v6006 = vadd.f32 %v5946, %v6002
        %s6007 = sld [smem:[#allocation3 + $0x81]]
        %v6008 = vstv %s6007
        %v6009 = vmul.f32 %v5973, %v6008
        %v6010 = vmul.f32 %v5974, %v6008
        %v6011 = vmul.f32 %v5975, %v6008
        %v6012 = vmul.f32 %v5976, %v6008
        %v6013 = vadd.f32 %v5969, %v6009
        %v6014 = vadd.f32 %v5970, %v6010
        %v6015 = vadd.f32 %v5971, %v6011
        %v6016 = vadd.f32 %v5972, %v6012
        %s6017 = sld [smem:[#allocation3 + $0x8e]]
        %v6018 = vstv %s6017
        %v6019 = vmul.f32 %v5973, %v6018
        %v6020 = vmul.f32 %v5974, %v6018
        %v6021 = vmul.f32 %v5975, %v6018
        %v6022 = vmul.f32 %v5976, %v6018
        %6027 = vrot.lane.b32.xlu0 %v6019, 127
        %v6028 = vpop.permute.xlu0 %6027
        %6029 = vrot.lane.b32.xlu0 %v6020, 127
        %v6030 = vpop.permute.xlu0 %6029
        %6031 = vrot.lane.b32.xlu0 %v6021, 127
        %v6032 = vpop.permute.xlu0 %6031
        %6033 = vrot.lane.b32.xlu0 %v6022, 127
        %v6034 = vpop.permute.xlu0 %6033
        %v6039 = vadd.f32 %v5983, %v6028
        %v6040 = vadd.f32 %v5984, %v6030
        %v6041 = vadd.f32 %v5985, %v6032
        %v6042 = vadd.f32 %v5986, %v6034
        %s6043 = sld [smem:[#allocation3 + $0x8f]]
        %v6044 = vstv %s6043
        %v6045 = vmul.f32 %v5973, %v6044
        %v6046 = vmul.f32 %v5974, %v6044
        %v6047 = vmul.f32 %v5975, %v6044
        %v6048 = vmul.f32 %v5976, %v6044
        %6053 = vrot.lane.b32.xlu0 %v6045, 127
        %v6054 = vpop.permute.xlu0 %6053
        %6055 = vrot.lane.b32.xlu0 %v6046, 127
        %v6056 = vpop.permute.xlu0 %6055
        %6057 = vrot.lane.b32.xlu0 %v6047, 127
        %v6058 = vpop.permute.xlu0 %6057
        %6059 = vrot.lane.b32.xlu0 %v6048, 127
        %v6060 = vpop.permute.xlu0 %6059
        %v6065 = vadd.f32 %v5993, %v6054
        %v6066 = vadd.f32 %v5994, %v6056
        %v6067 = vadd.f32 %v5995, %v6058
        %v6068 = vadd.f32 %v5996, %v6060
        %s6069 = sld [smem:[#allocation3 + $0x90]]
        %v6070 = vstv %s6069
        %v6071 = vmul.f32 %v5973, %v6070
        %v6072 = vmul.f32 %v5974, %v6070
        %v6073 = vmul.f32 %v5975, %v6070
        %v6074 = vmul.f32 %v5976, %v6070
        %6079 = vrot.lane.b32.xlu0 %v6071, 127
        %v6080 = vpop.permute.xlu0 %6079
        %6081 = vrot.lane.b32.xlu0 %v6072, 127
        %v6082 = vpop.permute.xlu0 %6081
        %6083 = vrot.lane.b32.xlu0 %v6073, 127
        %v6084 = vpop.permute.xlu0 %6083
        %6085 = vrot.lane.b32.xlu0 %v6074, 127
        %v6086 = vpop.permute.xlu0 %6085
        %v6091 = vadd.f32 %v6003, %v6080
        %v6092 = vadd.f32 %v6004, %v6082
        %v6093 = vadd.f32 %v6005, %v6084
        %v6094 = vadd.f32 %v6006, %v6086
        %s6095 = sld [smem:[#allocation3 + $0x91]]
        %v6096 = vstv %s6095
        %v6097 = vmul.f32 %v5973, %v6096
        %v6098 = vmul.f32 %v5974, %v6096
        %v6099 = vmul.f32 %v5975, %v6096
        %v6100 = vmul.f32 %v5976, %v6096
        %6105 = vrot.lane.b32.xlu0 %v6097, 127
        %v6106 = vpop.permute.xlu0 %6105
        %6107 = vrot.lane.b32.xlu0 %v6098, 127
        %v6108 = vpop.permute.xlu0 %6107
        %6109 = vrot.lane.b32.xlu0 %v6099, 127
        %v6110 = vpop.permute.xlu0 %6109
        %6111 = vrot.lane.b32.xlu0 %v6100, 127
        %v6112 = vpop.permute.xlu0 %6111
        %v6117 = vadd.f32 %v6013, %v6106
        %v6118 = vadd.f32 %v6014, %v6108
        %v6119 = vadd.f32 %v6015, %v6110
        %v6120 = vadd.f32 %v6016, %v6112
        %s6121 = sld [smem:[#allocation3 + $0x9e]]
        %v6122 = vstv %s6121
        %v6123 = vmul.f32 %v5973, %v6122
        %v6124 = vmul.f32 %v5974, %v6122
        %v6125 = vmul.f32 %v5975, %v6122
        %v6126 = vmul.f32 %v5976, %v6122
        %6131 = vrot.lane.b32.xlu0 %v6123, 126
        %v6132 = vpop.permute.xlu0 %6131
        %6133 = vrot.lane.b32.xlu0 %v6124, 126
        %v6134 = vpop.permute.xlu0 %6133
        %6135 = vrot.lane.b32.xlu0 %v6125, 126
        %v6136 = vpop.permute.xlu0 %6135
        %6137 = vrot.lane.b32.xlu0 %v6126, 126
        %v6138 = vpop.permute.xlu0 %6137
        %v6143 = vadd.f32 %v6039, %v6132
        %v6144 = vadd.f32 %v6040, %v6134
        %v6145 = vadd.f32 %v6041, %v6136
        %v6146 = vadd.f32 %v6042, %v6138
        %s6147 = sld [smem:[#allocation3 + $0x9f]]
        %v6148 = vstv %s6147
        %v6149 = vmul.f32 %v5973, %v6148
        %v6150 = vmul.f32 %v5974, %v6148
        %v6151 = vmul.f32 %v5975, %v6148
        %v6152 = vmul.f32 %v5976, %v6148
        %6157 = vrot.lane.b32.xlu0 %v6149, 126
        %v6158 = vpop.permute.xlu0 %6157
        %6159 = vrot.lane.b32.xlu0 %v6150, 126
        %v6160 = vpop.permute.xlu0 %6159
        %6161 = vrot.lane.b32.xlu0 %v6151, 126
        %v6162 = vpop.permute.xlu0 %6161
        %6163 = vrot.lane.b32.xlu0 %v6152, 126
        %v6164 = vpop.permute.xlu0 %6163
        %v6169 = vadd.f32 %v6065, %v6158
        %v6170 = vadd.f32 %v6066, %v6160
        %v6171 = vadd.f32 %v6067, %v6162
        %v6172 = vadd.f32 %v6068, %v6164
        %s6173 = sld [smem:[#allocation3 + $0xa0]]
        %v6174 = vstv %s6173
        %v6175 = vmul.f32 %v5973, %v6174
        %v6176 = vmul.f32 %v5974, %v6174
        %v6177 = vmul.f32 %v5975, %v6174
        %v6178 = vmul.f32 %v5976, %v6174
        %6183 = vrot.lane.b32.xlu0 %v6175, 126
        %v6184 = vpop.permute.xlu0 %6183
        %6185 = vrot.lane.b32.xlu0 %v6176, 126
        %v6186 = vpop.permute.xlu0 %6185
        %6187 = vrot.lane.b32.xlu0 %v6177, 126
        %v6188 = vpop.permute.xlu0 %6187
        %6189 = vrot.lane.b32.xlu0 %v6178, 126
        %v6190 = vpop.permute.xlu0 %6189
        %v6195 = vadd.f32 %v6091, %v6184
        %v6196 = vadd.f32 %v6092, %v6186
        %v6197 = vadd.f32 %v6093, %v6188
        %v6198 = vadd.f32 %v6094, %v6190
        %s6199 = sld [smem:[#allocation3 + $0xa1]]
        %v6200 = vstv %s6199
        %v6201 = vmul.f32 %v5973, %v6200
        %v6202 = vmul.f32 %v5974, %v6200
        %v6203 = vmul.f32 %v5975, %v6200
        %v6204 = vmul.f32 %v5976, %v6200
        %6209 = vrot.lane.b32.xlu0 %v6201, 126
        %v6210 = vpop.permute.xlu0 %6209
        %6211 = vrot.lane.b32.xlu0 %v6202, 126
        %v6212 = vpop.permute.xlu0 %6211
        %6213 = vrot.lane.b32.xlu0 %v6203, 126
        %v6214 = vpop.permute.xlu0 %6213
        %6215 = vrot.lane.b32.xlu0 %v6204, 126
        %v6216 = vpop.permute.xlu0 %6215
        %v6221 = vadd.f32 %v6117, %v6210
        %v6222 = vadd.f32 %v6118, %v6212
        %v6223 = vadd.f32 %v6119, %v6214
        %v6224 = vadd.f32 %v6120, %v6216
        %v6225 = vld [vmem:[%s4254 + $0x1] sm:$0xff]
        %v6226 = vld [vmem:[%s4254 + $0x9] sm:$0xff]
        %v6227 = vld [vmem:[%s4254 + $0x11] sm:$0xff]
        %v6228 = vld [vmem:[%s4254 + $0x19] sm:$0xff]
        %s6229 = sld [smem:[#allocation3 + $0xae]]
        %v6230 = vstv %s6229
        %v6231 = vmul.f32 %v6225, %v6230
        %v6232 = vmul.f32 %v6226, %v6230
        %v6233 = vmul.f32 %v6227, %v6230
        %v6234 = vmul.f32 %v6228, %v6230
        %v6235 = vadd.f32 %v6143, %v6231
        %v6236 = vadd.f32 %v6144, %v6232
        %v6237 = vadd.f32 %v6145, %v6233
        %v6238 = vadd.f32 %v6146, %v6234
        %s6239 = sld [smem:[#allocation3 + $0xaf]]
        %v6240 = vstv %s6239
        %v6241 = vmul.f32 %v6225, %v6240
        %v6242 = vmul.f32 %v6226, %v6240
        %v6243 = vmul.f32 %v6227, %v6240
        %v6244 = vmul.f32 %v6228, %v6240
        %v6245 = vadd.f32 %v6169, %v6241
        %v6246 = vadd.f32 %v6170, %v6242
        %v6247 = vadd.f32 %v6171, %v6243
        %v6248 = vadd.f32 %v6172, %v6244
        %s6249 = sld [smem:[#allocation3 + $0xb0]]
        %v6250 = vstv %s6249
        %v6251 = vmul.f32 %v6225, %v6250
        %v6252 = vmul.f32 %v6226, %v6250
        %v6253 = vmul.f32 %v6227, %v6250
        %v6254 = vmul.f32 %v6228, %v6250
        %v6255 = vadd.f32 %v6195, %v6251
        %v6256 = vadd.f32 %v6196, %v6252
        %v6257 = vadd.f32 %v6197, %v6253
        %v6258 = vadd.f32 %v6198, %v6254
        %s6259 = sld [smem:[#allocation3 + $0xb1]]
        %v6260 = vstv %s6259
        %v6261 = vmul.f32 %v6225, %v6260
        %v6262 = vmul.f32 %v6226, %v6260
        %v6263 = vmul.f32 %v6227, %v6260
        %v6264 = vmul.f32 %v6228, %v6260
        %v6265 = vadd.f32 %v6221, %v6261
        %v6266 = vadd.f32 %v6222, %v6262
        %v6267 = vadd.f32 %v6223, %v6263
        %v6268 = vadd.f32 %v6224, %v6264
        %s6269 = sld [smem:[#allocation3 + $0xbe]]
        %v6270 = vstv %s6269
        %v6271 = vmul.f32 %v6225, %v6270
        %v6272 = vmul.f32 %v6226, %v6270
        %v6273 = vmul.f32 %v6227, %v6270
        %v6274 = vmul.f32 %v6228, %v6270
        %6279 = vrot.lane.b32.xlu0 %v6271, 127
        %v6280 = vpop.permute.xlu0 %6279
        %6281 = vrot.lane.b32.xlu0 %v6272, 127
        %v6282 = vpop.permute.xlu0 %6281
        %6283 = vrot.lane.b32.xlu0 %v6273, 127
        %v6284 = vpop.permute.xlu0 %6283
        %6285 = vrot.lane.b32.xlu0 %v6274, 127
        %v6286 = vpop.permute.xlu0 %6285
        %v6291 = vadd.f32 %v6235, %v6280
        %v6292 = vadd.f32 %v6236, %v6282
        %v6293 = vadd.f32 %v6237, %v6284
        %v6294 = vadd.f32 %v6238, %v6286
        %s6295 = sld [smem:[#allocation3 + $0xbf]]
        %v6296 = vstv %s6295
        %v6297 = vmul.f32 %v6225, %v6296
        %v6298 = vmul.f32 %v6226, %v6296
        %v6299 = vmul.f32 %v6227, %v6296
        %v6300 = vmul.f32 %v6228, %v6296
        %6305 = vrot.lane.b32.xlu0 %v6297, 127
        %v6306 = vpop.permute.xlu0 %6305
        %6307 = vrot.lane.b32.xlu0 %v6298, 127
        %v6308 = vpop.permute.xlu0 %6307
        %6309 = vrot.lane.b32.xlu0 %v6299, 127
        %v6310 = vpop.permute.xlu0 %6309
        %6311 = vrot.lane.b32.xlu0 %v6300, 127
        %v6312 = vpop.permute.xlu0 %6311
        %v6317 = vadd.f32 %v6245, %v6306
        %v6318 = vadd.f32 %v6246, %v6308
        %v6319 = vadd.f32 %v6247, %v6310
        %v6320 = vadd.f32 %v6248, %v6312
        %s6321 = sld [smem:[#allocation3 + $0xc0]]
        %v6322 = vstv %s6321
        %v6323 = vmul.f32 %v6225, %v6322
        %v6324 = vmul.f32 %v6226, %v6322
        %v6325 = vmul.f32 %v6227, %v6322
        %v6326 = vmul.f32 %v6228, %v6322
        %6331 = vrot.lane.b32.xlu0 %v6323, 127
        %v6332 = vpop.permute.xlu0 %6331
        %6333 = vrot.lane.b32.xlu0 %v6324, 127
        %v6334 = vpop.permute.xlu0 %6333
        %6335 = vrot.lane.b32.xlu0 %v6325, 127
        %v6336 = vpop.permute.xlu0 %6335
        %6337 = vrot.lane.b32.xlu0 %v6326, 127
        %v6338 = vpop.permute.xlu0 %6337
        %v6343 = vadd.f32 %v6255, %v6332
        %v6344 = vadd.f32 %v6256, %v6334
        %v6345 = vadd.f32 %v6257, %v6336
        %v6346 = vadd.f32 %v6258, %v6338
        %s6347 = sld [smem:[#allocation3 + $0xc1]]
        %v6348 = vstv %s6347
        %v6349 = vmul.f32 %v6225, %v6348
        %v6350 = vmul.f32 %v6226, %v6348
        %v6351 = vmul.f32 %v6227, %v6348
        %v6352 = vmul.f32 %v6228, %v6348
        %6357 = vrot.lane.b32.xlu0 %v6349, 127
        %v6358 = vpop.permute.xlu0 %6357
        %6359 = vrot.lane.b32.xlu0 %v6350, 127
        %v6360 = vpop.permute.xlu0 %6359
        %6361 = vrot.lane.b32.xlu0 %v6351, 127
        %v6362 = vpop.permute.xlu0 %6361
        %6363 = vrot.lane.b32.xlu0 %v6352, 127
        %v6364 = vpop.permute.xlu0 %6363
        %v6369 = vadd.f32 %v6265, %v6358
        %v6370 = vadd.f32 %v6266, %v6360
        %v6371 = vadd.f32 %v6267, %v6362
        %v6372 = vadd.f32 %v6268, %v6364
        %s6373 = sld [smem:[#allocation3 + $0xce]]
        %v6374 = vstv %s6373
        %v6375 = vmul.f32 %v6225, %v6374
        %v6376 = vmul.f32 %v6226, %v6374
        %v6377 = vmul.f32 %v6227, %v6374
        %v6378 = vmul.f32 %v6228, %v6374
        %6383 = vrot.lane.b32.xlu0 %v6375, 126
        %v6384 = vpop.permute.xlu0 %6383
        %6385 = vrot.lane.b32.xlu0 %v6376, 126
        %v6386 = vpop.permute.xlu0 %6385
        %6387 = vrot.lane.b32.xlu0 %v6377, 126
        %v6388 = vpop.permute.xlu0 %6387
        %6389 = vrot.lane.b32.xlu0 %v6378, 126
        %v6390 = vpop.permute.xlu0 %6389
        %v6395 = vadd.f32 %v6291, %v6384
        %v6396 = vadd.f32 %v6292, %v6386
        %v6397 = vadd.f32 %v6293, %v6388
        %v6398 = vadd.f32 %v6294, %v6390
        %s6399 = sld [smem:[#allocation3 + $0xcf]]
        %v6400 = vstv %s6399
        %v6401 = vmul.f32 %v6225, %v6400
        %v6402 = vmul.f32 %v6226, %v6400
        %v6403 = vmul.f32 %v6227, %v6400
        %v6404 = vmul.f32 %v6228, %v6400
        %6409 = vrot.lane.b32.xlu0 %v6401, 126
        %v6410 = vpop.permute.xlu0 %6409
        %6411 = vrot.lane.b32.xlu0 %v6402, 126
        %v6412 = vpop.permute.xlu0 %6411
        %6413 = vrot.lane.b32.xlu0 %v6403, 126
        %v6414 = vpop.permute.xlu0 %6413
        %6415 = vrot.lane.b32.xlu0 %v6404, 126
        %v6416 = vpop.permute.xlu0 %6415
        %v6421 = vadd.f32 %v6317, %v6410
        %v6422 = vadd.f32 %v6318, %v6412
        %v6423 = vadd.f32 %v6319, %v6414
        %v6424 = vadd.f32 %v6320, %v6416
        %s6425 = sld [smem:[#allocation3 + $0xd0]]
        %v6426 = vstv %s6425
        %v6427 = vmul.f32 %v6225, %v6426
        %v6428 = vmul.f32 %v6226, %v6426
        %v6429 = vmul.f32 %v6227, %v6426
        %v6430 = vmul.f32 %v6228, %v6426
        %6435 = vrot.lane.b32.xlu0 %v6427, 126
        %v6436 = vpop.permute.xlu0 %6435
        %6437 = vrot.lane.b32.xlu0 %v6428, 126
        %v6438 = vpop.permute.xlu0 %6437
        %6439 = vrot.lane.b32.xlu0 %v6429, 126
        %v6440 = vpop.permute.xlu0 %6439
        %6441 = vrot.lane.b32.xlu0 %v6430, 126
        %v6442 = vpop.permute.xlu0 %6441
        %v6447 = vadd.f32 %v6343, %v6436
        %v6448 = vadd.f32 %v6344, %v6438
        %v6449 = vadd.f32 %v6345, %v6440
        %v6450 = vadd.f32 %v6346, %v6442
        %s6451 = sld [smem:[#allocation3 + $0xd1]]
        %v6452 = vstv %s6451
        %v6453 = vmul.f32 %v6225, %v6452
        %v6454 = vmul.f32 %v6226, %v6452
        %v6455 = vmul.f32 %v6227, %v6452
        %v6456 = vmul.f32 %v6228, %v6452
        %6461 = vrot.lane.b32.xlu0 %v6453, 126
        %v6462 = vpop.permute.xlu0 %6461
        %6463 = vrot.lane.b32.xlu0 %v6454, 126
        %v6464 = vpop.permute.xlu0 %6463
        %6465 = vrot.lane.b32.xlu0 %v6455, 126
        %v6466 = vpop.permute.xlu0 %6465
        %6467 = vrot.lane.b32.xlu0 %v6456, 126
        %v6468 = vpop.permute.xlu0 %6467
        %v6473 = vadd.f32 %v6369, %v6462
        %v6474 = vadd.f32 %v6370, %v6464
        %v6475 = vadd.f32 %v6371, %v6466
        %v6476 = vadd.f32 %v6372, %v6468
        %v6477 = vld [vmem:[%s4254 + $0x2] sm:$0xff]
        %v6478 = vld [vmem:[%s4254 + $0xa] sm:$0xff]
        %v6479 = vld [vmem:[%s4254 + $0x12] sm:$0xff]
        %v6480 = vld [vmem:[%s4254 + $0x1a] sm:$0xff]
        %s6481 = sld [smem:[#allocation3 + $0xde]]
        %v6482 = vstv %s6481
        %v6483 = vmul.f32 %v6477, %v6482
        %v6484 = vmul.f32 %v6478, %v6482
        %v6485 = vmul.f32 %v6479, %v6482
        %v6486 = vmul.f32 %v6480, %v6482
        %v6487 = vadd.f32 %v6395, %v6483
        %v6488 = vadd.f32 %v6396, %v6484
        %v6489 = vadd.f32 %v6397, %v6485
        %v6490 = vadd.f32 %v6398, %v6486
        %s6491 = sld [smem:[#allocation3 + $0xdf]]
        %v6492 = vstv %s6491
        %v6493 = vmul.f32 %v6477, %v6492
        %v6494 = vmul.f32 %v6478, %v6492
        %v6495 = vmul.f32 %v6479, %v6492
        %v6496 = vmul.f32 %v6480, %v6492
        %v6497 = vadd.f32 %v6421, %v6493
        %v6498 = vadd.f32 %v6422, %v6494
        %v6499 = vadd.f32 %v6423, %v6495
        %v6500 = vadd.f32 %v6424, %v6496
        %s6501 = sld [smem:[#allocation3 + $0xe0]]
        %v6502 = vstv %s6501
        %v6503 = vmul.f32 %v6477, %v6502
        %v6504 = vmul.f32 %v6478, %v6502
        %v6505 = vmul.f32 %v6479, %v6502
        %v6506 = vmul.f32 %v6480, %v6502
        %v6507 = vadd.f32 %v6447, %v6503
        %v6508 = vadd.f32 %v6448, %v6504
        %v6509 = vadd.f32 %v6449, %v6505
        %v6510 = vadd.f32 %v6450, %v6506
        %s6511 = sld [smem:[#allocation3 + $0xe1]]
        %v6512 = vstv %s6511
        %v6513 = vmul.f32 %v6477, %v6512
        %v6514 = vmul.f32 %v6478, %v6512
        %v6515 = vmul.f32 %v6479, %v6512
        %v6516 = vmul.f32 %v6480, %v6512
        %v6517 = vadd.f32 %v6473, %v6513
        %v6518 = vadd.f32 %v6474, %v6514
        %v6519 = vadd.f32 %v6475, %v6515
        %v6520 = vadd.f32 %v6476, %v6516
        %s6521 = sld [smem:[#allocation3 + $0xee]]
        %v6522 = vstv %s6521
        %v6523 = vmul.f32 %v6477, %v6522
        %v6524 = vmul.f32 %v6478, %v6522
        %v6525 = vmul.f32 %v6479, %v6522
        %v6526 = vmul.f32 %v6480, %v6522
        %6531 = vrot.lane.b32.xlu0 %v6523, 127
        %v6532 = vpop.permute.xlu0 %6531
        %6533 = vrot.lane.b32.xlu0 %v6524, 127
        %v6534 = vpop.permute.xlu0 %6533
        %6535 = vrot.lane.b32.xlu0 %v6525, 127
        %v6536 = vpop.permute.xlu0 %6535
        %6537 = vrot.lane.b32.xlu0 %v6526, 127
        %v6538 = vpop.permute.xlu0 %6537
        %v6543 = vadd.f32 %v6487, %v6532
        %v6544 = vadd.f32 %v6488, %v6534
        %v6545 = vadd.f32 %v6489, %v6536
        %v6546 = vadd.f32 %v6490, %v6538
        %s6547 = sld [smem:[#allocation3 + $0xef]]
        %v6548 = vstv %s6547
        %v6549 = vmul.f32 %v6477, %v6548
        %v6550 = vmul.f32 %v6478, %v6548
        %v6551 = vmul.f32 %v6479, %v6548
        %v6552 = vmul.f32 %v6480, %v6548
        %6557 = vrot.lane.b32.xlu0 %v6549, 127
        %v6558 = vpop.permute.xlu0 %6557
        %6559 = vrot.lane.b32.xlu0 %v6550, 127
        %v6560 = vpop.permute.xlu0 %6559
        %6561 = vrot.lane.b32.xlu0 %v6551, 127
        %v6562 = vpop.permute.xlu0 %6561
        %6563 = vrot.lane.b32.xlu0 %v6552, 127
        %v6564 = vpop.permute.xlu0 %6563
        %v6569 = vadd.f32 %v6497, %v6558
        %v6570 = vadd.f32 %v6498, %v6560
        %v6571 = vadd.f32 %v6499, %v6562
        %v6572 = vadd.f32 %v6500, %v6564
        %s6573 = sld [smem:[#allocation3 + $0xf0]]
        %v6574 = vstv %s6573
        %v6575 = vmul.f32 %v6477, %v6574
        %v6576 = vmul.f32 %v6478, %v6574
        %v6577 = vmul.f32 %v6479, %v6574
        %v6578 = vmul.f32 %v6480, %v6574
        %6583 = vrot.lane.b32.xlu0 %v6575, 127
        %v6584 = vpop.permute.xlu0 %6583
        %6585 = vrot.lane.b32.xlu0 %v6576, 127
        %v6586 = vpop.permute.xlu0 %6585
        %6587 = vrot.lane.b32.xlu0 %v6577, 127
        %v6588 = vpop.permute.xlu0 %6587
        %6589 = vrot.lane.b32.xlu0 %v6578, 127
        %v6590 = vpop.permute.xlu0 %6589
        %v6595 = vadd.f32 %v6507, %v6584
        %v6596 = vadd.f32 %v6508, %v6586
        %v6597 = vadd.f32 %v6509, %v6588
        %v6598 = vadd.f32 %v6510, %v6590
        %s6599 = sld [smem:[#allocation3 + $0xf1]]
        %v6600 = vstv %s6599
        %v6601 = vmul.f32 %v6477, %v6600
        %v6602 = vmul.f32 %v6478, %v6600
        %v6603 = vmul.f32 %v6479, %v6600
        %v6604 = vmul.f32 %v6480, %v6600
        %6609 = vrot.lane.b32.xlu0 %v6601, 127
        %v6610 = vpop.permute.xlu0 %6609
        %6611 = vrot.lane.b32.xlu0 %v6602, 127
        %v6612 = vpop.permute.xlu0 %6611
        %6613 = vrot.lane.b32.xlu0 %v6603, 127
        %v6614 = vpop.permute.xlu0 %6613
        %6615 = vrot.lane.b32.xlu0 %v6604, 127
        %v6616 = vpop.permute.xlu0 %6615
        %v6621 = vadd.f32 %v6517, %v6610
        %v6622 = vadd.f32 %v6518, %v6612
        %v6623 = vadd.f32 %v6519, %v6614
        %v6624 = vadd.f32 %v6520, %v6616
        %s6625 = sld [smem:[#allocation3 + $0xfe]]
        %v6626 = vstv %s6625
        %v6627 = vmul.f32 %v6477, %v6626
        %v6628 = vmul.f32 %v6478, %v6626
        %v6629 = vmul.f32 %v6479, %v6626
        %v6630 = vmul.f32 %v6480, %v6626
        %6635 = vrot.lane.b32.xlu0 %v6627, 126
        %v6636 = vpop.permute.xlu0 %6635
        %6637 = vrot.lane.b32.xlu0 %v6628, 126
        %v6638 = vpop.permute.xlu0 %6637
        %6639 = vrot.lane.b32.xlu0 %v6629, 126
        %v6640 = vpop.permute.xlu0 %6639
        %6641 = vrot.lane.b32.xlu0 %v6630, 126
        %v6642 = vpop.permute.xlu0 %6641
        %v6647 = vadd.f32 %v6543, %v6636
        %v6648 = vadd.f32 %v6544, %v6638
        %v6649 = vadd.f32 %v6545, %v6640
        %v6650 = vadd.f32 %v6546, %v6642
        %s6651 = sld [smem:[#allocation3 + $0xff]]
        %v6652 = vstv %s6651
        %v6653 = vmul.f32 %v6477, %v6652
        %v6654 = vmul.f32 %v6478, %v6652
        %v6655 = vmul.f32 %v6479, %v6652
        %v6656 = vmul.f32 %v6480, %v6652
        %6661 = vrot.lane.b32.xlu0 %v6653, 126
        %v6662 = vpop.permute.xlu0 %6661
        %6663 = vrot.lane.b32.xlu0 %v6654, 126
        %v6664 = vpop.permute.xlu0 %6663
        %6665 = vrot.lane.b32.xlu0 %v6655, 126
        %v6666 = vpop.permute.xlu0 %6665
        %6667 = vrot.lane.b32.xlu0 %v6656, 126
        %v6668 = vpop.permute.xlu0 %6667
        %v6673 = vadd.f32 %v6569, %v6662
        %v6674 = vadd.f32 %v6570, %v6664
        %v6675 = vadd.f32 %v6571, %v6666
        %v6676 = vadd.f32 %v6572, %v6668
        %s6677 = sld [smem:[#allocation3 + $0x100]]
        %v6678 = vstv %s6677
        %v6679 = vmul.f32 %v6477, %v6678
        %v6680 = vmul.f32 %v6478, %v6678
        %v6681 = vmul.f32 %v6479, %v6678
        %v6682 = vmul.f32 %v6480, %v6678
        %6687 = vrot.lane.b32.xlu0 %v6679, 126
        %v6688 = vpop.permute.xlu0 %6687
        %6689 = vrot.lane.b32.xlu0 %v6680, 126
        %v6690 = vpop.permute.xlu0 %6689
        %6691 = vrot.lane.b32.xlu0 %v6681, 126
        %v6692 = vpop.permute.xlu0 %6691
        %6693 = vrot.lane.b32.xlu0 %v6682, 126
        %v6694 = vpop.permute.xlu0 %6693
        %v6699 = vadd.f32 %v6595, %v6688
        %v6700 = vadd.f32 %v6596, %v6690
        %v6701 = vadd.f32 %v6597, %v6692
        %v6702 = vadd.f32 %v6598, %v6694
        %s6703 = sld [smem:[#allocation3 + $0x101]]
        %v6704 = vstv %s6703
        %v6705 = vmul.f32 %v6477, %v6704
        %v6706 = vmul.f32 %v6478, %v6704
        %v6707 = vmul.f32 %v6479, %v6704
        %v6708 = vmul.f32 %v6480, %v6704
        %6713 = vrot.lane.b32.xlu0 %v6705, 126
        %v6714 = vpop.permute.xlu0 %6713
        %6715 = vrot.lane.b32.xlu0 %v6706, 126
        %v6716 = vpop.permute.xlu0 %6715
        %6717 = vrot.lane.b32.xlu0 %v6707, 126
        %v6718 = vpop.permute.xlu0 %6717
        %6719 = vrot.lane.b32.xlu0 %v6708, 126
        %v6720 = vpop.permute.xlu0 %6719
        %v6725 = vadd.f32 %v6621, %v6714
        %v6726 = vadd.f32 %v6622, %v6716
        %v6727 = vadd.f32 %v6623, %v6718
        %v6728 = vadd.f32 %v6624, %v6720
        %v6729 = vld [vmem:[%s4447] sm:$0xff]
        %v6730 = vld [vmem:[%s4447 + $0x8] sm:$0xff]
        %v6731 = vld [vmem:[%s4447 + $0x10] sm:$0xff]
        %v6732 = vld [vmem:[%s4447 + $0x18] sm:$0xff]
        %s6733 = sld [smem:[#allocation3 + $0x82]]
        %v6734 = vstv %s6733
        %v6735 = vmul.f32 %v6729, %v6734
        %v6736 = vmul.f32 %v6730, %v6734
        %v6737 = vmul.f32 %v6731, %v6734
        %v6738 = vmul.f32 %v6732, %v6734
        %v6739 = vadd.f32 %v6647, %v6735
        %v6740 = vadd.f32 %v6648, %v6736
        %v6741 = vadd.f32 %v6649, %v6737
        %v6742 = vadd.f32 %v6650, %v6738
        %s6743 = sld [smem:[#allocation3 + $0x83]]
        %v6744 = vstv %s6743
        %v6745 = vmul.f32 %v6729, %v6744
        %v6746 = vmul.f32 %v6730, %v6744
        %v6747 = vmul.f32 %v6731, %v6744
        %v6748 = vmul.f32 %v6732, %v6744
        %v6749 = vadd.f32 %v6673, %v6745
        %v6750 = vadd.f32 %v6674, %v6746
        %v6751 = vadd.f32 %v6675, %v6747
        %v6752 = vadd.f32 %v6676, %v6748
        %s6753 = sld [smem:[#allocation3 + $0x84]]
        %v6754 = vstv %s6753
        %v6755 = vmul.f32 %v6729, %v6754
        %v6756 = vmul.f32 %v6730, %v6754
        %v6757 = vmul.f32 %v6731, %v6754
        %v6758 = vmul.f32 %v6732, %v6754
        %v6759 = vadd.f32 %v6699, %v6755
        %v6760 = vadd.f32 %v6700, %v6756
        %v6761 = vadd.f32 %v6701, %v6757
        %v6762 = vadd.f32 %v6702, %v6758
        %s6763 = sld [smem:[#allocation3 + $0x85]]
        %v6764 = vstv %s6763
        %v6765 = vmul.f32 %v6729, %v6764
        %v6766 = vmul.f32 %v6730, %v6764
        %v6767 = vmul.f32 %v6731, %v6764
        %v6768 = vmul.f32 %v6732, %v6764
        %v6769 = vadd.f32 %v6725, %v6765
        %v6770 = vadd.f32 %v6726, %v6766
        %v6771 = vadd.f32 %v6727, %v6767
        %v6772 = vadd.f32 %v6728, %v6768
        %s6773 = sld [smem:[#allocation3 + $0x92]]
        %v6774 = vstv %s6773
        %v6775 = vmul.f32 %v6729, %v6774
        %v6776 = vmul.f32 %v6730, %v6774
        %v6777 = vmul.f32 %v6731, %v6774
        %v6778 = vmul.f32 %v6732, %v6774
        %6783 = vrot.lane.b32.xlu0 %v6775, 127
        %v6784 = vpop.permute.xlu0 %6783
        %6785 = vrot.lane.b32.xlu0 %v6776, 127
        %v6786 = vpop.permute.xlu0 %6785
        %6787 = vrot.lane.b32.xlu0 %v6777, 127
        %v6788 = vpop.permute.xlu0 %6787
        %6789 = vrot.lane.b32.xlu0 %v6778, 127
        %v6790 = vpop.permute.xlu0 %6789
        %v6795 = vadd.f32 %v6739, %v6784
        %v6796 = vadd.f32 %v6740, %v6786
        %v6797 = vadd.f32 %v6741, %v6788
        %v6798 = vadd.f32 %v6742, %v6790
        %s6799 = sld [smem:[#allocation3 + $0x93]]
        %v6800 = vstv %s6799
        %v6801 = vmul.f32 %v6729, %v6800
        %v6802 = vmul.f32 %v6730, %v6800
        %v6803 = vmul.f32 %v6731, %v6800
        %v6804 = vmul.f32 %v6732, %v6800
        %6809 = vrot.lane.b32.xlu0 %v6801, 127
        %v6810 = vpop.permute.xlu0 %6809
        %6811 = vrot.lane.b32.xlu0 %v6802, 127
        %v6812 = vpop.permute.xlu0 %6811
        %6813 = vrot.lane.b32.xlu0 %v6803, 127
        %v6814 = vpop.permute.xlu0 %6813
        %6815 = vrot.lane.b32.xlu0 %v6804, 127
        %v6816 = vpop.permute.xlu0 %6815
        %v6821 = vadd.f32 %v6749, %v6810
        %v6822 = vadd.f32 %v6750, %v6812
        %v6823 = vadd.f32 %v6751, %v6814
        %v6824 = vadd.f32 %v6752, %v6816
        %s6825 = sld [smem:[#allocation3 + $0x94]]
        %v6826 = vstv %s6825
        %v6827 = vmul.f32 %v6729, %v6826
        %v6828 = vmul.f32 %v6730, %v6826
        %v6829 = vmul.f32 %v6731, %v6826
        %v6830 = vmul.f32 %v6732, %v6826
        %6835 = vrot.lane.b32.xlu0 %v6827, 127
        %v6836 = vpop.permute.xlu0 %6835
        %6837 = vrot.lane.b32.xlu0 %v6828, 127
        %v6838 = vpop.permute.xlu0 %6837
        %6839 = vrot.lane.b32.xlu0 %v6829, 127
        %v6840 = vpop.permute.xlu0 %6839
        %6841 = vrot.lane.b32.xlu0 %v6830, 127
        %v6842 = vpop.permute.xlu0 %6841
        %v6847 = vadd.f32 %v6759, %v6836
        %v6848 = vadd.f32 %v6760, %v6838
        %v6849 = vadd.f32 %v6761, %v6840
        %v6850 = vadd.f32 %v6762, %v6842
        %s6851 = sld [smem:[#allocation3 + $0x95]]
        %v6852 = vstv %s6851
        %v6853 = vmul.f32 %v6729, %v6852
        %v6854 = vmul.f32 %v6730, %v6852
        %v6855 = vmul.f32 %v6731, %v6852
        %v6856 = vmul.f32 %v6732, %v6852
        %6861 = vrot.lane.b32.xlu0 %v6853, 127
        %v6862 = vpop.permute.xlu0 %6861
        %6863 = vrot.lane.b32.xlu0 %v6854, 127
        %v6864 = vpop.permute.xlu0 %6863
        %6865 = vrot.lane.b32.xlu0 %v6855, 127
        %v6866 = vpop.permute.xlu0 %6865
        %6867 = vrot.lane.b32.xlu0 %v6856, 127
        %v6868 = vpop.permute.xlu0 %6867
        %v6873 = vadd.f32 %v6769, %v6862
        %v6874 = vadd.f32 %v6770, %v6864
        %v6875 = vadd.f32 %v6771, %v6866
        %v6876 = vadd.f32 %v6772, %v6868
        %s6877 = sld [smem:[#allocation3 + $0xa2]]
        %v6878 = vstv %s6877
        %v6879 = vmul.f32 %v6729, %v6878
        %v6880 = vmul.f32 %v6730, %v6878
        %v6881 = vmul.f32 %v6731, %v6878
        %v6882 = vmul.f32 %v6732, %v6878
        %6887 = vrot.lane.b32.xlu0 %v6879, 126
        %v6888 = vpop.permute.xlu0 %6887
        %6889 = vrot.lane.b32.xlu0 %v6880, 126
        %v6890 = vpop.permute.xlu0 %6889
        %6891 = vrot.lane.b32.xlu0 %v6881, 126
        %v6892 = vpop.permute.xlu0 %6891
        %6893 = vrot.lane.b32.xlu0 %v6882, 126
        %v6894 = vpop.permute.xlu0 %6893
        %v6899 = vadd.f32 %v6795, %v6888
        %v6900 = vadd.f32 %v6796, %v6890
        %v6901 = vadd.f32 %v6797, %v6892
        %v6902 = vadd.f32 %v6798, %v6894
        %s6903 = sld [smem:[#allocation3 + $0xa3]]
        %v6904 = vstv %s6903
        %v6905 = vmul.f32 %v6729, %v6904
        %v6906 = vmul.f32 %v6730, %v6904
        %v6907 = vmul.f32 %v6731, %v6904
        %v6908 = vmul.f32 %v6732, %v6904
        %6913 = vrot.lane.b32.xlu0 %v6905, 126
        %v6914 = vpop.permute.xlu0 %6913
        %6915 = vrot.lane.b32.xlu0 %v6906, 126
        %v6916 = vpop.permute.xlu0 %6915
        %6917 = vrot.lane.b32.xlu0 %v6907, 126
        %v6918 = vpop.permute.xlu0 %6917
        %6919 = vrot.lane.b32.xlu0 %v6908, 126
        %v6920 = vpop.permute.xlu0 %6919
        %v6925 = vadd.f32 %v6821, %v6914
        %v6926 = vadd.f32 %v6822, %v6916
        %v6927 = vadd.f32 %v6823, %v6918
        %v6928 = vadd.f32 %v6824, %v6920
        %s6929 = sld [smem:[#allocation3 + $0xa4]]
        %v6930 = vstv %s6929
        %v6931 = vmul.f32 %v6729, %v6930
        %v6932 = vmul.f32 %v6730, %v6930
        %v6933 = vmul.f32 %v6731, %v6930
        %v6934 = vmul.f32 %v6732, %v6930
        %6939 = vrot.lane.b32.xlu0 %v6931, 126
        %v6940 = vpop.permute.xlu0 %6939
        %6941 = vrot.lane.b32.xlu0 %v6932, 126
        %v6942 = vpop.permute.xlu0 %6941
        %6943 = vrot.lane.b32.xlu0 %v6933, 126
        %v6944 = vpop.permute.xlu0 %6943
        %6945 = vrot.lane.b32.xlu0 %v6934, 126
        %v6946 = vpop.permute.xlu0 %6945
        %v6951 = vadd.f32 %v6847, %v6940
        %v6952 = vadd.f32 %v6848, %v6942
        %v6953 = vadd.f32 %v6849, %v6944
        %v6954 = vadd.f32 %v6850, %v6946
        %s6955 = sld [smem:[#allocation3 + $0xa5]]
        %v6956 = vstv %s6955
        %v6957 = vmul.f32 %v6729, %v6956
        %v6958 = vmul.f32 %v6730, %v6956
        %v6959 = vmul.f32 %v6731, %v6956
        %v6960 = vmul.f32 %v6732, %v6956
        %6965 = vrot.lane.b32.xlu0 %v6957, 126
        %v6966 = vpop.permute.xlu0 %6965
        %6967 = vrot.lane.b32.xlu0 %v6958, 126
        %v6968 = vpop.permute.xlu0 %6967
        %6969 = vrot.lane.b32.xlu0 %v6959, 126
        %v6970 = vpop.permute.xlu0 %6969
        %6971 = vrot.lane.b32.xlu0 %v6960, 126
        %v6972 = vpop.permute.xlu0 %6971
        %v6977 = vadd.f32 %v6873, %v6966
        %v6978 = vadd.f32 %v6874, %v6968
        %v6979 = vadd.f32 %v6875, %v6970
        %v6980 = vadd.f32 %v6876, %v6972
        %v6981 = vld [vmem:[%s4447 + $0x1] sm:$0xff]
        %v6982 = vld [vmem:[%s4447 + $0x9] sm:$0xff]
        %v6983 = vld [vmem:[%s4447 + $0x11] sm:$0xff]
        %v6984 = vld [vmem:[%s4447 + $0x19] sm:$0xff]
        %s6985 = sld [smem:[#allocation3 + $0xb2]]
        %v6986 = vstv %s6985
        %v6987 = vmul.f32 %v6981, %v6986
        %v6988 = vmul.f32 %v6982, %v6986
        %v6989 = vmul.f32 %v6983, %v6986
        %v6990 = vmul.f32 %v6984, %v6986
        %v6991 = vadd.f32 %v6899, %v6987
        %v6992 = vadd.f32 %v6900, %v6988
        %v6993 = vadd.f32 %v6901, %v6989
        %v6994 = vadd.f32 %v6902, %v6990
        %s6995 = sld [smem:[#allocation3 + $0xb3]]
        %v6996 = vstv %s6995
        %v6997 = vmul.f32 %v6981, %v6996
        %v6998 = vmul.f32 %v6982, %v6996
        %v6999 = vmul.f32 %v6983, %v6996
        %v7000 = vmul.f32 %v6984, %v6996
        %v7001 = vadd.f32 %v6925, %v6997
        %v7002 = vadd.f32 %v6926, %v6998
        %v7003 = vadd.f32 %v6927, %v6999
        %v7004 = vadd.f32 %v6928, %v7000
        %s7005 = sld [smem:[#allocation3 + $0xb4]]
        %v7006 = vstv %s7005
        %v7007 = vmul.f32 %v6981, %v7006
        %v7008 = vmul.f32 %v6982, %v7006
        %v7009 = vmul.f32 %v6983, %v7006
        %v7010 = vmul.f32 %v6984, %v7006
        %v7011 = vadd.f32 %v6951, %v7007
        %v7012 = vadd.f32 %v6952, %v7008
        %v7013 = vadd.f32 %v6953, %v7009
        %v7014 = vadd.f32 %v6954, %v7010
        %s7015 = sld [smem:[#allocation3 + $0xb5]]
        %v7016 = vstv %s7015
        %v7017 = vmul.f32 %v6981, %v7016
        %v7018 = vmul.f32 %v6982, %v7016
        %v7019 = vmul.f32 %v6983, %v7016
        %v7020 = vmul.f32 %v6984, %v7016
        %v7021 = vadd.f32 %v6977, %v7017
        %v7022 = vadd.f32 %v6978, %v7018
        %v7023 = vadd.f32 %v6979, %v7019
        %v7024 = vadd.f32 %v6980, %v7020
        %s7025 = sld [smem:[#allocation3 + $0xc2]]
        %v7026 = vstv %s7025
        %v7027 = vmul.f32 %v6981, %v7026
        %v7028 = vmul.f32 %v6982, %v7026
        %v7029 = vmul.f32 %v6983, %v7026
        %v7030 = vmul.f32 %v6984, %v7026
        %7035 = vrot.lane.b32.xlu0 %v7027, 127
        %v7036 = vpop.permute.xlu0 %7035
        %7037 = vrot.lane.b32.xlu0 %v7028, 127
        %v7038 = vpop.permute.xlu0 %7037
        %7039 = vrot.lane.b32.xlu0 %v7029, 127
        %v7040 = vpop.permute.xlu0 %7039
        %7041 = vrot.lane.b32.xlu0 %v7030, 127
        %v7042 = vpop.permute.xlu0 %7041
        %v7047 = vadd.f32 %v6991, %v7036
        %v7048 = vadd.f32 %v6992, %v7038
        %v7049 = vadd.f32 %v6993, %v7040
        %v7050 = vadd.f32 %v6994, %v7042
        %s7051 = sld [smem:[#allocation3 + $0xc3]]
        %v7052 = vstv %s7051
        %v7053 = vmul.f32 %v6981, %v7052
        %v7054 = vmul.f32 %v6982, %v7052
        %v7055 = vmul.f32 %v6983, %v7052
        %v7056 = vmul.f32 %v6984, %v7052
        %7061 = vrot.lane.b32.xlu0 %v7053, 127
        %v7062 = vpop.permute.xlu0 %7061
        %7063 = vrot.lane.b32.xlu0 %v7054, 127
        %v7064 = vpop.permute.xlu0 %7063
        %7065 = vrot.lane.b32.xlu0 %v7055, 127
        %v7066 = vpop.permute.xlu0 %7065
        %7067 = vrot.lane.b32.xlu0 %v7056, 127
        %v7068 = vpop.permute.xlu0 %7067
        %v7073 = vadd.f32 %v7001, %v7062
        %v7074 = vadd.f32 %v7002, %v7064
        %v7075 = vadd.f32 %v7003, %v7066
        %v7076 = vadd.f32 %v7004, %v7068
        %s7077 = sld [smem:[#allocation3 + $0xc4]]
        %v7078 = vstv %s7077
        %v7079 = vmul.f32 %v6981, %v7078
        %v7080 = vmul.f32 %v6982, %v7078
        %v7081 = vmul.f32 %v6983, %v7078
        %v7082 = vmul.f32 %v6984, %v7078
        %7087 = vrot.lane.b32.xlu0 %v7079, 127
        %v7088 = vpop.permute.xlu0 %7087
        %7089 = vrot.lane.b32.xlu0 %v7080, 127
        %v7090 = vpop.permute.xlu0 %7089
        %7091 = vrot.lane.b32.xlu0 %v7081, 127
        %v7092 = vpop.permute.xlu0 %7091
        %7093 = vrot.lane.b32.xlu0 %v7082, 127
        %v7094 = vpop.permute.xlu0 %7093
        %v7099 = vadd.f32 %v7011, %v7088
        %v7100 = vadd.f32 %v7012, %v7090
        %v7101 = vadd.f32 %v7013, %v7092
        %v7102 = vadd.f32 %v7014, %v7094
        %s7103 = sld [smem:[#allocation3 + $0xc5]]
        %v7104 = vstv %s7103
        %v7105 = vmul.f32 %v6981, %v7104
        %v7106 = vmul.f32 %v6982, %v7104
        %v7107 = vmul.f32 %v6983, %v7104
        %v7108 = vmul.f32 %v6984, %v7104
        %7113 = vrot.lane.b32.xlu0 %v7105, 127
        %v7114 = vpop.permute.xlu0 %7113
        %7115 = vrot.lane.b32.xlu0 %v7106, 127
        %v7116 = vpop.permute.xlu0 %7115
        %7117 = vrot.lane.b32.xlu0 %v7107, 127
        %v7118 = vpop.permute.xlu0 %7117
        %7119 = vrot.lane.b32.xlu0 %v7108, 127
        %v7120 = vpop.permute.xlu0 %7119
        %v7125 = vadd.f32 %v7021, %v7114
        %v7126 = vadd.f32 %v7022, %v7116
        %v7127 = vadd.f32 %v7023, %v7118
        %v7128 = vadd.f32 %v7024, %v7120
        %s7129 = sld [smem:[#allocation3 + $0xd2]]
        %v7130 = vstv %s7129
        %v7131 = vmul.f32 %v6981, %v7130
        %v7132 = vmul.f32 %v6982, %v7130
        %v7133 = vmul.f32 %v6983, %v7130
        %v7134 = vmul.f32 %v6984, %v7130
        %7139 = vrot.lane.b32.xlu0 %v7131, 126
        %v7140 = vpop.permute.xlu0 %7139
        %7141 = vrot.lane.b32.xlu0 %v7132, 126
        %v7142 = vpop.permute.xlu0 %7141
        %7143 = vrot.lane.b32.xlu0 %v7133, 126
        %v7144 = vpop.permute.xlu0 %7143
        %7145 = vrot.lane.b32.xlu0 %v7134, 126
        %v7146 = vpop.permute.xlu0 %7145
        %v7151 = vadd.f32 %v7047, %v7140
        %v7152 = vadd.f32 %v7048, %v7142
        %v7153 = vadd.f32 %v7049, %v7144
        %v7154 = vadd.f32 %v7050, %v7146
        %s7155 = sld [smem:[#allocation3 + $0xd3]]
        %v7156 = vstv %s7155
        %v7157 = vmul.f32 %v6981, %v7156
        %v7158 = vmul.f32 %v6982, %v7156
        %v7159 = vmul.f32 %v6983, %v7156
        %v7160 = vmul.f32 %v6984, %v7156
        %7165 = vrot.lane.b32.xlu0 %v7157, 126
        %v7166 = vpop.permute.xlu0 %7165
        %7167 = vrot.lane.b32.xlu0 %v7158, 126
        %v7168 = vpop.permute.xlu0 %7167
        %7169 = vrot.lane.b32.xlu0 %v7159, 126
        %v7170 = vpop.permute.xlu0 %7169
        %7171 = vrot.lane.b32.xlu0 %v7160, 126
        %v7172 = vpop.permute.xlu0 %7171
        %v7177 = vadd.f32 %v7073, %v7166
        %v7178 = vadd.f32 %v7074, %v7168
        %v7179 = vadd.f32 %v7075, %v7170
        %v7180 = vadd.f32 %v7076, %v7172
        %s7181 = sld [smem:[#allocation3 + $0xd4]]
        %v7182 = vstv %s7181
        %v7183 = vmul.f32 %v6981, %v7182
        %v7184 = vmul.f32 %v6982, %v7182
        %v7185 = vmul.f32 %v6983, %v7182
        %v7186 = vmul.f32 %v6984, %v7182
        %7191 = vrot.lane.b32.xlu0 %v7183, 126
        %v7192 = vpop.permute.xlu0 %7191
        %7193 = vrot.lane.b32.xlu0 %v7184, 126
        %v7194 = vpop.permute.xlu0 %7193
        %7195 = vrot.lane.b32.xlu0 %v7185, 126
        %v7196 = vpop.permute.xlu0 %7195
        %7197 = vrot.lane.b32.xlu0 %v7186, 126
        %v7198 = vpop.permute.xlu0 %7197
        %v7203 = vadd.f32 %v7099, %v7192
        %v7204 = vadd.f32 %v7100, %v7194
        %v7205 = vadd.f32 %v7101, %v7196
        %v7206 = vadd.f32 %v7102, %v7198
        %s7207 = sld [smem:[#allocation3 + $0xd5]]
        %v7208 = vstv %s7207
        %v7209 = vmul.f32 %v6981, %v7208
        %v7210 = vmul.f32 %v6982, %v7208
        %v7211 = vmul.f32 %v6983, %v7208
        %v7212 = vmul.f32 %v6984, %v7208
        %7217 = vrot.lane.b32.xlu0 %v7209, 126
        %v7218 = vpop.permute.xlu0 %7217
        %7219 = vrot.lane.b32.xlu0 %v7210, 126
        %v7220 = vpop.permute.xlu0 %7219
        %7221 = vrot.lane.b32.xlu0 %v7211, 126
        %v7222 = vpop.permute.xlu0 %7221
        %7223 = vrot.lane.b32.xlu0 %v7212, 126
        %v7224 = vpop.permute.xlu0 %7223
        %v7229 = vadd.f32 %v7125, %v7218
        %v7230 = vadd.f32 %v7126, %v7220
        %v7231 = vadd.f32 %v7127, %v7222
        %v7232 = vadd.f32 %v7128, %v7224
        %v7233 = vld [vmem:[%s4447 + $0x2] sm:$0xff]
        %v7234 = vld [vmem:[%s4447 + $0xa] sm:$0xff]
        %v7235 = vld [vmem:[%s4447 + $0x12] sm:$0xff]
        %v7236 = vld [vmem:[%s4447 + $0x1a] sm:$0xff]
        %s7237 = sld [smem:[#allocation3 + $0xe2]]
        %v7238 = vstv %s7237
        %v7239 = vmul.f32 %v7233, %v7238
        %v7240 = vmul.f32 %v7234, %v7238
        %v7241 = vmul.f32 %v7235, %v7238
        %v7242 = vmul.f32 %v7236, %v7238
        %v7243 = vadd.f32 %v7151, %v7239
        %v7244 = vadd.f32 %v7152, %v7240
        %v7245 = vadd.f32 %v7153, %v7241
        %v7246 = vadd.f32 %v7154, %v7242
        %s7247 = sld [smem:[#allocation3 + $0xe3]]
        %v7248 = vstv %s7247
        %v7249 = vmul.f32 %v7233, %v7248
        %v7250 = vmul.f32 %v7234, %v7248
        %v7251 = vmul.f32 %v7235, %v7248
        %v7252 = vmul.f32 %v7236, %v7248
        %v7253 = vadd.f32 %v7177, %v7249
        %v7254 = vadd.f32 %v7178, %v7250
        %v7255 = vadd.f32 %v7179, %v7251
        %v7256 = vadd.f32 %v7180, %v7252
        %s7257 = sld [smem:[#allocation3 + $0xe4]]
        %v7258 = vstv %s7257
        %v7259 = vmul.f32 %v7233, %v7258
        %v7260 = vmul.f32 %v7234, %v7258
        %v7261 = vmul.f32 %v7235, %v7258
        %v7262 = vmul.f32 %v7236, %v7258
        %v7263 = vadd.f32 %v7203, %v7259
        %v7264 = vadd.f32 %v7204, %v7260
        %v7265 = vadd.f32 %v7205, %v7261
        %v7266 = vadd.f32 %v7206, %v7262
        %s7267 = sld [smem:[#allocation3 + $0xe5]]
        %v7268 = vstv %s7267
        %v7269 = vmul.f32 %v7233, %v7268
        %v7270 = vmul.f32 %v7234, %v7268
        %v7271 = vmul.f32 %v7235, %v7268
        %v7272 = vmul.f32 %v7236, %v7268
        %v7273 = vadd.f32 %v7229, %v7269
        %v7274 = vadd.f32 %v7230, %v7270
        %v7275 = vadd.f32 %v7231, %v7271
        %v7276 = vadd.f32 %v7232, %v7272
        %s7277 = sld [smem:[#allocation3 + $0xf2]]
        %v7278 = vstv %s7277
        %v7279 = vmul.f32 %v7233, %v7278
        %v7280 = vmul.f32 %v7234, %v7278
        %v7281 = vmul.f32 %v7235, %v7278
        %v7282 = vmul.f32 %v7236, %v7278
        %7287 = vrot.lane.b32.xlu0 %v7279, 127
        %v7288 = vpop.permute.xlu0 %7287
        %7289 = vrot.lane.b32.xlu0 %v7280, 127
        %v7290 = vpop.permute.xlu0 %7289
        %7291 = vrot.lane.b32.xlu0 %v7281, 127
        %v7292 = vpop.permute.xlu0 %7291
        %7293 = vrot.lane.b32.xlu0 %v7282, 127
        %v7294 = vpop.permute.xlu0 %7293
        %v7299 = vadd.f32 %v7243, %v7288
        %v7300 = vadd.f32 %v7244, %v7290
        %v7301 = vadd.f32 %v7245, %v7292
        %v7302 = vadd.f32 %v7246, %v7294
        %s7303 = sld [smem:[#allocation3 + $0xf3]]
        %v7304 = vstv %s7303
        %v7305 = vmul.f32 %v7233, %v7304
        %v7306 = vmul.f32 %v7234, %v7304
        %v7307 = vmul.f32 %v7235, %v7304
        %v7308 = vmul.f32 %v7236, %v7304
        %7313 = vrot.lane.b32.xlu0 %v7305, 127
        %v7314 = vpop.permute.xlu0 %7313
        %7315 = vrot.lane.b32.xlu0 %v7306, 127
        %v7316 = vpop.permute.xlu0 %7315
        %7317 = vrot.lane.b32.xlu0 %v7307, 127
        %v7318 = vpop.permute.xlu0 %7317
        %7319 = vrot.lane.b32.xlu0 %v7308, 127
        %v7320 = vpop.permute.xlu0 %7319
        %v7325 = vadd.f32 %v7253, %v7314
        %v7326 = vadd.f32 %v7254, %v7316
        %v7327 = vadd.f32 %v7255, %v7318
        %v7328 = vadd.f32 %v7256, %v7320
        %s7329 = sld [smem:[#allocation3 + $0xf4]]
        %v7330 = vstv %s7329
        %v7331 = vmul.f32 %v7233, %v7330
        %v7332 = vmul.f32 %v7234, %v7330
        %v7333 = vmul.f32 %v7235, %v7330
        %v7334 = vmul.f32 %v7236, %v7330
        %7339 = vrot.lane.b32.xlu0 %v7331, 127
        %v7340 = vpop.permute.xlu0 %7339
        %7341 = vrot.lane.b32.xlu0 %v7332, 127
        %v7342 = vpop.permute.xlu0 %7341
        %7343 = vrot.lane.b32.xlu0 %v7333, 127
        %v7344 = vpop.permute.xlu0 %7343
        %7345 = vrot.lane.b32.xlu0 %v7334, 127
        %v7346 = vpop.permute.xlu0 %7345
        %v7351 = vadd.f32 %v7263, %v7340
        %v7352 = vadd.f32 %v7264, %v7342
        %v7353 = vadd.f32 %v7265, %v7344
        %v7354 = vadd.f32 %v7266, %v7346
        %s7355 = sld [smem:[#allocation3 + $0xf5]]
        %v7356 = vstv %s7355
        %v7357 = vmul.f32 %v7233, %v7356
        %v7358 = vmul.f32 %v7234, %v7356
        %v7359 = vmul.f32 %v7235, %v7356
        %v7360 = vmul.f32 %v7236, %v7356
        %7365 = vrot.lane.b32.xlu0 %v7357, 127
        %v7366 = vpop.permute.xlu0 %7365
        %7367 = vrot.lane.b32.xlu0 %v7358, 127
        %v7368 = vpop.permute.xlu0 %7367
        %7369 = vrot.lane.b32.xlu0 %v7359, 127
        %v7370 = vpop.permute.xlu0 %7369
        %7371 = vrot.lane.b32.xlu0 %v7360, 127
        %v7372 = vpop.permute.xlu0 %7371
        %v7377 = vadd.f32 %v7273, %v7366
        %v7378 = vadd.f32 %v7274, %v7368
        %v7379 = vadd.f32 %v7275, %v7370
        %v7380 = vadd.f32 %v7276, %v7372
        %s7381 = sld [smem:[#allocation3 + $0x102]]
        %v7382 = vstv %s7381
        %v7383 = vmul.f32 %v7233, %v7382
        %v7384 = vmul.f32 %v7234, %v7382
        %v7385 = vmul.f32 %v7235, %v7382
        %v7386 = vmul.f32 %v7236, %v7382
        %7391 = vrot.lane.b32.xlu0 %v7383, 126
        %v7392 = vpop.permute.xlu0 %7391
        %7393 = vrot.lane.b32.xlu0 %v7384, 126
        %v7394 = vpop.permute.xlu0 %7393
        %7395 = vrot.lane.b32.xlu0 %v7385, 126
        %v7396 = vpop.permute.xlu0 %7395
        %7397 = vrot.lane.b32.xlu0 %v7386, 126
        %v7398 = vpop.permute.xlu0 %7397
        %v7403 = vadd.f32 %v7299, %v7392
        %v7404 = vadd.f32 %v7300, %v7394
        %v7405 = vadd.f32 %v7301, %v7396
        %v7406 = vadd.f32 %v7302, %v7398
        %s7407 = sld [smem:[#allocation3 + $0x103]]
        %v7408 = vstv %s7407
        %v7409 = vmul.f32 %v7233, %v7408
        %v7410 = vmul.f32 %v7234, %v7408
        %v7411 = vmul.f32 %v7235, %v7408
        %v7412 = vmul.f32 %v7236, %v7408
        %7417 = vrot.lane.b32.xlu0 %v7409, 126
        %v7418 = vpop.permute.xlu0 %7417
        %7419 = vrot.lane.b32.xlu0 %v7410, 126
        %v7420 = vpop.permute.xlu0 %7419
        %7421 = vrot.lane.b32.xlu0 %v7411, 126
        %v7422 = vpop.permute.xlu0 %7421
        %7423 = vrot.lane.b32.xlu0 %v7412, 126
        %v7424 = vpop.permute.xlu0 %7423
        %v7429 = vadd.f32 %v7325, %v7418
        %v7430 = vadd.f32 %v7326, %v7420
        %v7431 = vadd.f32 %v7327, %v7422
        %v7432 = vadd.f32 %v7328, %v7424
        %s7433 = sld [smem:[#allocation3 + $0x104]]
        %v7434 = vstv %s7433
        %v7435 = vmul.f32 %v7233, %v7434
        %v7436 = vmul.f32 %v7234, %v7434
        %v7437 = vmul.f32 %v7235, %v7434
        %v7438 = vmul.f32 %v7236, %v7434
        %7443 = vrot.lane.b32.xlu0 %v7435, 126
        %v7444 = vpop.permute.xlu0 %7443
        %7445 = vrot.lane.b32.xlu0 %v7436, 126
        %v7446 = vpop.permute.xlu0 %7445
        %7447 = vrot.lane.b32.xlu0 %v7437, 126
        %v7448 = vpop.permute.xlu0 %7447
        %7449 = vrot.lane.b32.xlu0 %v7438, 126
        %v7450 = vpop.permute.xlu0 %7449
        %v7455 = vadd.f32 %v7351, %v7444
        %v7456 = vadd.f32 %v7352, %v7446
        %v7457 = vadd.f32 %v7353, %v7448
        %v7458 = vadd.f32 %v7354, %v7450
        %s7459 = sld [smem:[#allocation3 + $0x105]]
        %v7460 = vstv %s7459
        %v7461 = vmul.f32 %v7233, %v7460
        %v7462 = vmul.f32 %v7234, %v7460
        %v7463 = vmul.f32 %v7235, %v7460
        %v7464 = vmul.f32 %v7236, %v7460
        %7469 = vrot.lane.b32.xlu0 %v7461, 126
        %v7470 = vpop.permute.xlu0 %7469
        %7471 = vrot.lane.b32.xlu0 %v7462, 126
        %v7472 = vpop.permute.xlu0 %7471
        %7473 = vrot.lane.b32.xlu0 %v7463, 126
        %v7474 = vpop.permute.xlu0 %7473
        %7475 = vrot.lane.b32.xlu0 %v7464, 126
        %v7476 = vpop.permute.xlu0 %7475
        %v7481 = vadd.f32 %v7377, %v7470
        %v7482 = vadd.f32 %v7378, %v7472
        %v7483 = vadd.f32 %v7379, %v7474
        %v7484 = vadd.f32 %v7380, %v7476
        %v7485 = vsel %vm1468, %v7403, 0.0
        %v7486 = vsel %vm1468, %v7404, 0.0
        %v7487 = vadd.f32 %v7485, %v7486
        %v7488 = vsel %vm1468, %v7405, 0.0
        %v7489 = vadd.f32 %v7487, %v7488
        %v7490 = vsel %vm1468, %v7406, 0.0
        %v7491 = vadd.f32 %v7489, %v7490
        %7492 = vadd.xlane.f32.xlu0 %v7491
        %v7493 = vpop.xlane.xlu0 %7492
        %v7494 = vrot.slane %v7493, 4
        %v7495 = vadd.f32 %v7493, %v7494
        %v7496 = vrot.slane %v7495, 2
        %v7497 = vadd.f32 %v7495, %v7496
        %v7498 = vrot.slane %v7497, 1
        %v7499 = vadd.f32 %v7497, %v7498
        %s7500 = vtos %v7499
        %v7501 = vstv %s7500
        %v7502 = vmul.f32 %v7403, %v7403
        %v7503 = vmul.f32 %v7404, %v7404
        %v7504 = vmul.f32 %v7405, %v7405
        %v7505 = vmul.f32 %v7406, %v7406
        %v7506 = vsel %vm1468, %v7502, 0.0
        %v7507 = vsel %vm1468, %v7503, 0.0
        %v7508 = vadd.f32 %v7506, %v7507
        %v7509 = vsel %vm1468, %v7504, 0.0
        %v7510 = vadd.f32 %v7508, %v7509
        %v7511 = vsel %vm1468, %v7505, 0.0
        %v7512 = vadd.f32 %v7510, %v7511
        %7513 = vadd.xlane.f32.xlu0 %v7512
        %v7514 = vpop.xlane.xlu0 %7513
        %v7515 = vrot.slane %v7514, 4
        %v7516 = vadd.f32 %v7514, %v7515
        %v7517 = vrot.slane %v7516, 2
        %v7518 = vadd.f32 %v7516, %v7517
        %v7519 = vrot.slane %v7518, 1
        %v7520 = vadd.f32 %v7518, %v7519
        %s7521 = vtos %v7520
        %v7522 = vstv %s7521
        %v7523 = vmul.f32 %v7501, 0.0009765625
        %v7524 = vmul.f32 %v7522, 0.0009765625
        %v7525 = vmul.f32 %v7523, %v7523
        %v7526 = vsub.f32 %v7524, %v7525
        %s7527 = sld [smem:[#allocation3 + $0x10a]]
        %v7528 = vadd.f32 %v7526, 1e-05
        %v7529 = vrsqrt.pop %v7528
        %v7530 = vstv %s7527
        %v7531 = vmul.f32 %v7530, %v7529
        %v7532 = vsub.f32 %v7403, %v7523
        %v7533 = vsub.f32 %v7404, %v7523
        %v7534 = vsub.f32 %v7405, %v7523
        %v7535 = vsub.f32 %v7406, %v7523
        %v7536 = vmul.f32 %v7532, %v7531
        %v7537 = vmul.f32 %v7533, %v7531
        %v7538 = vmul.f32 %v7534, %v7531
        %v7539 = vmul.f32 %v7535, %v7531
        %s7540 = sld [smem:[#allocation3 + $0x10e]]
        %v7541 = vstv %s7540
        %v7542 = vadd.f32 %v7536, %v7541
        %v7543 = vadd.f32 %v7537, %v7541
        %v7544 = vadd.f32 %v7538, %v7541
        %v7545 = vadd.f32 %v7539, %v7541
        %vm7546 = vcmp.gt.f32.partialorder %v7542, 0.0
        %vm7547 = vcmp.gt.f32.partialorder %v7543, 0.0
        %vm7548 = vcmp.gt.f32.partialorder %v7544, 0.0
        %vm7549 = vcmp.gt.f32.partialorder %v7545, 0.0
        %v7550 = vmul.f32 %v7542, 0.1
        %v7551 = vmul.f32 %v7543, 0.1
        %v7552 = vmul.f32 %v7544, 0.1
        %v7553 = vmul.f32 %v7545, 0.1
        %v7554 = vsel %vm7546, %v7542, %v7550
        %v7555 = vsel %vm7547, %v7543, %v7551
        %v7556 = vsel %vm7548, %v7544, %v7552
        %v7557 = vsel %vm7549, %v7545, %v7553
        %v7558 = vsel %vm1468, %v7429, 0.0
        %v7559 = vsel %vm1468, %v7430, 0.0
        %v7560 = vadd.f32 %v7558, %v7559
        %v7561 = vsel %vm1468, %v7431, 0.0
        %v7562 = vadd.f32 %v7560, %v7561
        %v7563 = vsel %vm1468, %v7432, 0.0
        %v7564 = vadd.f32 %v7562, %v7563
        %7565 = vadd.xlane.f32.xlu0 %v7564
        %v7566 = vpop.xlane.xlu0 %7565
        %v7567 = vrot.slane %v7566, 4
        %v7568 = vadd.f32 %v7566, %v7567
        %v7569 = vrot.slane %v7568, 2
        %v7570 = vadd.f32 %v7568, %v7569
        %v7571 = vrot.slane %v7570, 1
        %v7572 = vadd.f32 %v7570, %v7571
        %s7573 = vtos %v7572
        %v7574 = vstv %s7573
        %v7575 = vmul.f32 %v7429, %v7429
        %v7576 = vmul.f32 %v7430, %v7430
        %v7577 = vmul.f32 %v7431, %v7431
        %v7578 = vmul.f32 %v7432, %v7432
        %v7579 = vsel %vm1468, %v7575, 0.0
        %v7580 = vsel %vm1468, %v7576, 0.0
        %v7581 = vadd.f32 %v7579, %v7580
        %v7582 = vsel %vm1468, %v7577, 0.0
        %v7583 = vadd.f32 %v7581, %v7582
        %v7584 = vsel %vm1468, %v7578, 0.0
        %v7585 = vadd.f32 %v7583, %v7584
        %7586 = vadd.xlane.f32.xlu0 %v7585
        %v7587 = vpop.xlane.xlu0 %7586
        %v7588 = vrot.slane %v7587, 4
        %v7589 = vadd.f32 %v7587, %v7588
        %v7590 = vrot.slane %v7589, 2
        %v7591 = vadd.f32 %v7589, %v7590
        %v7592 = vrot.slane %v7591, 1
        %v7593 = vadd.f32 %v7591, %v7592
        %s7594 = vtos %v7593
        %v7595 = vstv %s7594
        %v7596 = vmul.f32 %v7574, 0.0009765625
        %v7597 = vmul.f32 %v7595, 0.0009765625
        %v7598 = vmul.f32 %v7596, %v7596
        %v7599 = vsub.f32 %v7597, %v7598
        %s7600 = sld [smem:[#allocation3 + $0x10b]]
        %v7601 = vadd.f32 %v7599, 1e-05
        %v7602 = vrsqrt.pop %v7601
        %v7603 = vstv %s7600
        %v7604 = vmul.f32 %v7603, %v7602
        %v7605 = vsub.f32 %v7429, %v7596
        %v7606 = vsub.f32 %v7430, %v7596
        %v7607 = vsub.f32 %v7431, %v7596
        %v7608 = vsub.f32 %v7432, %v7596
        %v7609 = vmul.f32 %v7605, %v7604
        %v7610 = vmul.f32 %v7606, %v7604
        %v7611 = vmul.f32 %v7607, %v7604
        %v7612 = vmul.f32 %v7608, %v7604
        %s7613 = sld [smem:[#allocation3 + $0x10f]]
        %v7614 = vstv %s7613
        %v7615 = vadd.f32 %v7609, %v7614
        %v7616 = vadd.f32 %v7610, %v7614
        %v7617 = vadd.f32 %v7611, %v7614
        %v7618 = vadd.f32 %v7612, %v7614
        %vm7619 = vcmp.gt.f32.partialorder %v7615, 0.0
        %vm7620 = vcmp.gt.f32.partialorder %v7616, 0.0
        %vm7621 = vcmp.gt.f32.partialorder %v7617, 0.0
        %vm7622 = vcmp.gt.f32.partialorder %v7618, 0.0
        %v7623 = vmul.f32 %v7615, 0.1
        %v7624 = vmul.f32 %v7616, 0.1
        %v7625 = vmul.f32 %v7617, 0.1
        %v7626 = vmul.f32 %v7618, 0.1
        %v7627 = vsel %vm7619, %v7615, %v7623
        %v7628 = vsel %vm7620, %v7616, %v7624
        %v7629 = vsel %vm7621, %v7617, %v7625
        %v7630 = vsel %vm7622, %v7618, %v7626
        %v7631 = vsel %vm1468, %v7455, 0.0
        %v7632 = vsel %vm1468, %v7456, 0.0
        %v7633 = vadd.f32 %v7631, %v7632
        %v7634 = vsel %vm1468, %v7457, 0.0
        %v7635 = vadd.f32 %v7633, %v7634
        %v7636 = vsel %vm1468, %v7458, 0.0
        %v7637 = vadd.f32 %v7635, %v7636
        %7638 = vadd.xlane.f32.xlu0 %v7637
        %v7639 = vpop.xlane.xlu0 %7638
        %v7640 = vrot.slane %v7639, 4
        %v7641 = vadd.f32 %v7639, %v7640
        %v7642 = vrot.slane %v7641, 2
        %v7643 = vadd.f32 %v7641, %v7642
        %v7644 = vrot.slane %v7643, 1
        %v7645 = vadd.f32 %v7643, %v7644
        %s7646 = vtos %v7645
        %v7647 = vstv %s7646
        %v7648 = vmul.f32 %v7455, %v7455
        %v7649 = vmul.f32 %v7456, %v7456
        %v7650 = vmul.f32 %v7457, %v7457
        %v7651 = vmul.f32 %v7458, %v7458
        %v7652 = vsel %vm1468, %v7648, 0.0
        %v7653 = vsel %vm1468, %v7649, 0.0
        %v7654 = vadd.f32 %v7652, %v7653
        %v7655 = vsel %vm1468, %v7650, 0.0
        %v7656 = vadd.f32 %v7654, %v7655
        %v7657 = vsel %vm1468, %v7651, 0.0
        %v7658 = vadd.f32 %v7656, %v7657
        %7659 = vadd.xlane.f32.xlu0 %v7658
        %v7660 = vpop.xlane.xlu0 %7659
        %v7661 = vrot.slane %v7660, 4
        %v7662 = vadd.f32 %v7660, %v7661
        %v7663 = vrot.slane %v7662, 2
        %v7664 = vadd.f32 %v7662, %v7663
        %v7665 = vrot.slane %v7664, 1
        %v7666 = vadd.f32 %v7664, %v7665
        %s7667 = vtos %v7666
        %v7668 = vstv %s7667
        %v7669 = vmul.f32 %v7647, 0.0009765625
        %v7670 = vmul.f32 %v7668, 0.0009765625
        %v7671 = vmul.f32 %v7669, %v7669
        %v7672 = vsub.f32 %v7670, %v7671
        %s7673 = sld [smem:[#allocation3 + $0x10c]]
        %v7674 = vadd.f32 %v7672, 1e-05
        %v7675 = vrsqrt.pop %v7674
        %v7676 = vstv %s7673
        %v7677 = vmul.f32 %v7676, %v7675
        %v7678 = vsub.f32 %v7455, %v7669
        %v7679 = vsub.f32 %v7456, %v7669
        %v7680 = vsub.f32 %v7457, %v7669
        %v7681 = vsub.f32 %v7458, %v7669
        %v7682 = vmul.f32 %v7678, %v7677
        %v7683 = vmul.f32 %v7679, %v7677
        %v7684 = vmul.f32 %v7680, %v7677
        %v7685 = vmul.f32 %v7681, %v7677
        %s7686 = sld [smem:[#allocation3 + $0x110]]
        %v7687 = vstv %s7686
        %v7688 = vadd.f32 %v7682, %v7687
        %v7689 = vadd.f32 %v7683, %v7687
        %v7690 = vadd.f32 %v7684, %v7687
        %v7691 = vadd.f32 %v7685, %v7687
        %vm7692 = vcmp.gt.f32.partialorder %v7688, 0.0
        %vm7693 = vcmp.gt.f32.partialorder %v7689, 0.0
        %vm7694 = vcmp.gt.f32.partialorder %v7690, 0.0
        %vm7695 = vcmp.gt.f32.partialorder %v7691, 0.0
        %v7696 = vmul.f32 %v7688, 0.1
        %v7697 = vmul.f32 %v7689, 0.1
        %v7698 = vmul.f32 %v7690, 0.1
        %v7699 = vmul.f32 %v7691, 0.1
        %v7700 = vsel %vm7692, %v7688, %v7696
        %v7701 = vsel %vm7693, %v7689, %v7697
        %v7702 = vsel %vm7694, %v7690, %v7698
        %v7703 = vsel %vm7695, %v7691, %v7699
        %v7704 = vsel %vm1468, %v7481, 0.0
        %v7705 = vsel %vm1468, %v7482, 0.0
        %v7706 = vadd.f32 %v7704, %v7705
        %v7707 = vsel %vm1468, %v7483, 0.0
        %v7708 = vadd.f32 %v7706, %v7707
        %v7709 = vsel %vm1468, %v7484, 0.0
        %v7710 = vadd.f32 %v7708, %v7709
        %7711 = vadd.xlane.f32.xlu0 %v7710
        %v7712 = vpop.xlane.xlu0 %7711
        %v7713 = vrot.slane %v7712, 4
        %v7714 = vadd.f32 %v7712, %v7713
        %v7715 = vrot.slane %v7714, 2
        %v7716 = vadd.f32 %v7714, %v7715
        %v7717 = vrot.slane %v7716, 1
        %v7718 = vadd.f32 %v7716, %v7717
        %s7719 = vtos %v7718
        %v7720 = vstv %s7719
        %v7721 = vmul.f32 %v7481, %v7481
        %v7722 = vmul.f32 %v7482, %v7482
        %v7723 = vmul.f32 %v7483, %v7483
        %v7724 = vmul.f32 %v7484, %v7484
        %v7725 = vsel %vm1468, %v7721, 0.0
        %v7726 = vsel %vm1468, %v7722, 0.0
        %v7727 = vadd.f32 %v7725, %v7726
        %v7728 = vsel %vm1468, %v7723, 0.0
        %v7729 = vadd.f32 %v7727, %v7728
        %v7730 = vsel %vm1468, %v7724, 0.0
        %v7731 = vadd.f32 %v7729, %v7730
        %7732 = vadd.xlane.f32.xlu0 %v7731
        %v7733 = vpop.xlane.xlu0 %7732
        %v7734 = vrot.slane %v7733, 4
        %v7735 = vadd.f32 %v7733, %v7734
        %v7736 = vrot.slane %v7735, 2
        %v7737 = vadd.f32 %v7735, %v7736
        %v7738 = vrot.slane %v7737, 1
        %v7739 = vadd.f32 %v7737, %v7738
        %s7740 = vtos %v7739
        %v7741 = vstv %s7740
        %v7742 = vmul.f32 %v7720, 0.0009765625
        %v7743 = vmul.f32 %v7741, 0.0009765625
        %v7744 = vmul.f32 %v7742, %v7742
        %v7745 = vsub.f32 %v7743, %v7744
        %s7746 = sld [smem:[#allocation3 + $0x10d]]
        %v7747 = vadd.f32 %v7745, 1e-05
        %v7748 = vrsqrt.pop %v7747
        %v7749 = vstv %s7746
        %v7750 = vmul.f32 %v7749, %v7748
        %v7751 = vsub.f32 %v7481, %v7742
        %v7752 = vsub.f32 %v7482, %v7742
        %v7753 = vsub.f32 %v7483, %v7742
        %v7754 = vsub.f32 %v7484, %v7742
        %v7755 = vmul.f32 %v7751, %v7750
        %v7756 = vmul.f32 %v7752, %v7750
        %v7757 = vmul.f32 %v7753, %v7750
        %v7758 = vmul.f32 %v7754, %v7750
        %s7759 = sld [smem:[#allocation3 + $0x111]]
        %v7760 = vstv %s7759
        %v7761 = vadd.f32 %v7755, %v7760
        %v7762 = vadd.f32 %v7756, %v7760
        %v7763 = vadd.f32 %v7757, %v7760
        %v7764 = vadd.f32 %v7758, %v7760
        %vm7765 = vcmp.gt.f32.partialorder %v7761, 0.0
        %vm7766 = vcmp.gt.f32.partialorder %v7762, 0.0
        %vm7767 = vcmp.gt.f32.partialorder %v7763, 0.0
        %vm7768 = vcmp.gt.f32.partialorder %v7764, 0.0
        %v7769 = vmul.f32 %v7761, 0.1
        %v7770 = vmul.f32 %v7762, 0.1
        %v7771 = vmul.f32 %v7763, 0.1
        %v7772 = vmul.f32 %v7764, 0.1
        %v7773 = vsel %vm7765, %v7761, %v7769
        %v7774 = vsel %vm7766, %v7762, %v7770
        %v7775 = vsel %vm7767, %v7763, %v7771
        %v7776 = vsel %vm7768, %v7764, %v7772
        %v7777 = vmul.u32 %v175, 4
        %v7778 = vmul.u32 %v176, 4
        %v7779 = vmul.u32 %v177, 4
        %v7780 = vmul.u32 %v178, 4
        %vm7781 = vcmp.eq.s32.totalorder %v181, %v7777
        %vm7782 = vcmp.eq.s32.totalorder %v181, %v7778
        %vm7783 = vcmp.eq.s32.totalorder %v181, %v7779
        %vm7784 = vcmp.eq.s32.totalorder %v181, %v7780
        %v7785 = vsel %vm7781, 1, 0
        %v7786 = vsel %vm7782, 1, 0
        %v7787 = vsel %vm7783, 1, 0
        %v7788 = vsel %vm7784, 1, 0
        %v7789 = vcvt.s32.f32 %v7785
        %v7790 = vcvt.s32.f32 %v7786
        %v7791 = vcvt.s32.f32 %v7787
        %v7792 = vcvt.s32.f32 %v7788
        %v7793 = vadd.s32 %v7777, 1
        %v7794 = vadd.s32 %v7778, 1
        %v7795 = vadd.s32 %v7779, 1
        %v7796 = vadd.s32 %v7780, 1
        %vm7797 = vcmp.eq.s32.totalorder %v181, %v7793
        %vm7798 = vcmp.eq.s32.totalorder %v181, %v7794
        %vm7799 = vcmp.eq.s32.totalorder %v181, %v7795
        %vm7800 = vcmp.eq.s32.totalorder %v181, %v7796
        %v7801 = vsel %vm7797, 1, 0
        %v7802 = vsel %vm7798, 1, 0
        %v7803 = vsel %vm7799, 1, 0
        %v7804 = vsel %vm7800, 1, 0
        %v7805 = vcvt.s32.f32 %v7801
        %v7806 = vcvt.s32.f32 %v7802
        %v7807 = vcvt.s32.f32 %v7803
        %v7808 = vcvt.s32.f32 %v7804
        %v7810 = vsel %vm1468, %v7627, 0
        %v7813 = vsel %vm1468, %v7628, 0
        %v7816 = vsel %vm1468, %v7629, 0
        %v7819 = vsel %vm1468, %v7630, 0
        %7821 = vmatprep.subr.mxu0 0.0
        %7822 = vmatpush1.msra.mxu0 %v7805
        %7823 = vmatprep.subr.mxu0 0.0
        %7824 = vmatpush1.msra.mxu0 %v7806
        %7825 = vmatprep.subr.mxu0 0.0
        %7826 = vmatpush1.msra.mxu0 %v7807
        %7827 = vmatprep.subr.mxu0 0.0
        %7828 = vmatpush1.msra.mxu0 %v7808
        %7829 = vmatprep.subr.mxu0 0.0
        %7830 = vmatpush1.msra.mxu0 0.0
        %7831 = vmatprep.subr.mxu0 0.0
        %7832 = vmatpush1.msra.mxu0 0.0
        %7833 = vmatprep.subr.mxu0 0.0
        %7834 = vmatpush1.msra.mxu0 0.0
        %7835 = vmatprep.subr.mxu0 0.0
        %7836 = vmatpush1.msra.mxu0 0.0
        %7837 = vmatprep.subr.mxu0 0.0
        %7838 = vmatpush1.msra.mxu0 0.0
        %7839 = vmatprep.subr.mxu0 0.0
        %7840 = vmatpush1.msra.mxu0 0.0
        %7841 = vmatprep.subr.mxu0 0.0
        %7842 = vmatpush1.msra.mxu0 0.0
        %7843 = vmatprep.subr.mxu0 0.0
        %7844 = vmatpush1.msra.mxu0 0.0
        %7845 = vmatprep.subr.mxu0 0.0
        %7846 = vmatpush1.msra.mxu0 0.0
        %7847 = vmatprep.subr.mxu0 0.0
        %7848 = vmatpush1.msra.mxu0 0.0
        %7849 = vmatprep.subr.mxu0 0.0
        %7850 = vmatpush1.msra.mxu0 0.0
        %7851 = vmatprep.subr.mxu0 0.0
        %7852 = vmatpush1.msra.mxu0 0.0
        %7853 = vmatprep.subr.mxu0 0.0
        %7854 = vmatpush1.msra.mxu0 0.0
        %7855 = vmatprep.subr.mxu0 0.0
        %7856 = vmatpush1.msra.mxu0 0.0
        %7857 = vmatprep.subr.mxu0 0.0
        %7858 = vmatpush1.msra.mxu0 0.0
        %7859 = vmatprep.subr.mxu0 0.0
        %7860 = vmatpush1.msra.mxu0 0.0
        %7861 = vmatprep.subr.mxu0 0.0
        %7862 = vmatpush1.msra.mxu0 0.0
        %7863 = vmatprep.subr.mxu0 0.0
        %7864 = vmatpush1.msra.mxu0 0.0
        %7865 = vmatprep.subr.mxu0 0.0
        %7866 = vmatpush1.msra.mxu0 0.0
        %7867 = vmatprep.subr.mxu0 0.0
        %7868 = vmatpush1.msra.mxu0 0.0
        %7869 = vmatprep.subr.mxu0 0.0
        %7870 = vmatpush1.msra.mxu0 0.0
        %7871 = vmatprep.subr.mxu0 0.0
        %7872 = vmatpush1.msra.mxu0 0.0
        %7873 = vmatprep.subr.mxu0 0.0
        %7874 = vmatpush1.msra.mxu0 0.0
        %7875 = vmatprep.subr.mxu0 0.0
        %7876 = vmatpush1.msra.mxu0 0.0
        %7877 = vmatprep.subr.mxu0 0.0
        %7878 = vmatpush1.msra.mxu0 0.0
        %7879 = vmatprep.subr.mxu0 0.0
        %7880 = vmatpush1.msra.mxu0 0.0
        %7881 = vmatprep.subr.mxu0 0.0
        %7882 = vmatpush1.msra.mxu0 0.0
        %7883 = vmatprep.subr.mxu0 0.0
        %7884 = vmatpush1.msra.mxu0 0.0
        %7885 = vmatprep.mubr.f32.mxu0 0.0
        %7886 = vmatmul.mubr.f32.gmra.mrb[0].mxu0 %v7810
        %v7887 = vpop.f32.mrb[0].mxu0
        %v7888 = vadd.f32 0.0, %v7887
        %v7889 = vpop.f32.mrb[0].mxu0
        %7890 = vmatprep.mubr.f32.mxu0 0.0
        %7891 = vmatmul.mubr.f32.gmra.mrb[0].mxu0 %v7813
        %v7892 = vpop.f32.mrb[0].mxu0
        %v7893 = vadd.f32 0.0, %v7892
        %v7894 = vpop.f32.mrb[0].mxu0
        %7895 = vmatprep.mubr.f32.mxu0 0.0
        %7896 = vmatmul.mubr.f32.gmra.mrb[0].mxu0 %v7816
        %v7897 = vpop.f32.mrb[0].mxu0
        %v7898 = vadd.f32 0.0, %v7897
        %v7899 = vpop.f32.mrb[0].mxu0
        %7900 = vmatprep.mubr.f32.mxu0 0.0
        %7901 = vmatmul.mubr.f32.gmra.mrb[0].mxu0 %v7819
        %v7902 = vpop.f32.mrb[0].mxu0
        %v7903 = vadd.f32 0.0, %v7902
        %v7904 = vpop.f32.mrb[0].mxu0
        %7905 = vdwg.mxu0
        %v7907 = vsel %vm1468, %v7554, 0
        %v7910 = vsel %vm1468, %v7555, 0
        %v7913 = vsel %vm1468, %v7556, 0
        %v7916 = vsel %vm1468, %v7557, 0
        %7918 = vmatprep.subr.mxu0 0.0
        %7919 = vmatpush1.msra.mxu0 %v7789
        %7920 = vmatprep.subr.mxu0 0.0
        %7921 = vmatpush1.msra.mxu0 %v7790
        %7922 = vmatprep.subr.mxu0 0.0
        %7923 = vmatpush1.msra.mxu0 %v7791
        %7924 = vmatprep.subr.mxu0 0.0
        %7925 = vmatpush1.msra.mxu0 %v7792
        %7926 = vmatprep.subr.mxu0 0.0
        %7927 = vmatpush1.msra.mxu0 0.0
        %7928 = vmatprep.subr.mxu0 0.0
        %7929 = vmatpush1.msra.mxu0 0.0
        %7930 = vmatprep.subr.mxu0 0.0
        %7931 = vmatpush1.msra.mxu0 0.0
        %7932 = vmatprep.subr.mxu0 0.0
        %7933 = vmatpush1.msra.mxu0 0.0
        %7934 = vmatprep.subr.mxu0 0.0
        %7935 = vmatpush1.msra.mxu0 0.0
        %7936 = vmatprep.subr.mxu0 0.0
        %7937 = vmatpush1.msra.mxu0 0.0
        %7938 = vmatprep.subr.mxu0 0.0
        %7939 = vmatpush1.msra.mxu0 0.0
        %7940 = vmatprep.subr.mxu0 0.0
        %7941 = vmatpush1.msra.mxu0 0.0
        %7942 = vmatprep.subr.mxu0 0.0
        %7943 = vmatpush1.msra.mxu0 0.0
        %7944 = vmatprep.subr.mxu0 0.0
        %7945 = vmatpush1.msra.mxu0 0.0
        %7946 = vmatprep.subr.mxu0 0.0
        %7947 = vmatpush1.msra.mxu0 0.0
        %7948 = vmatprep.subr.mxu0 0.0
        %7949 = vmatpush1.msra.mxu0 0.0
        %7950 = vmatprep.subr.mxu0 0.0
        %7951 = vmatpush1.msra.mxu0 0.0
        %7952 = vmatprep.subr.mxu0 0.0
        %7953 = vmatpush1.msra.mxu0 0.0
        %7954 = vmatprep.subr.mxu0 0.0
        %7955 = vmatpush1.msra.mxu0 0.0
        %7956 = vmatprep.subr.mxu0 0.0
        %7957 = vmatpush1.msra.mxu0 0.0
        %7958 = vmatprep.subr.mxu0 0.0
        %7959 = vmatpush1.msra.mxu0 0.0
        %7960 = vmatprep.subr.mxu0 0.0
        %7961 = vmatpush1.msra.mxu0 0.0
        %7962 = vmatprep.subr.mxu0 0.0
        %7963 = vmatpush1.msra.mxu0 0.0
        %7964 = vmatprep.subr.mxu0 0.0
        %7965 = vmatpush1.msra.mxu0 0.0
        %7966 = vmatprep.subr.mxu0 0.0
        %7967 = vmatpush1.msra.mxu0 0.0
        %7968 = vmatprep.subr.mxu0 0.0
        %7969 = vmatpush1.msra.mxu0 0.0
        %7970 = vmatprep.subr.mxu0 0.0
        %7971 = vmatpush1.msra.mxu0 0.0
        %7972 = vmatprep.subr.mxu0 0.0
        %7973 = vmatpush1.msra.mxu0 0.0
        %7974 = vmatprep.subr.mxu0 0.0
        %7975 = vmatpush1.msra.mxu0 0.0
        %7976 = vmatprep.subr.mxu0 0.0
        %7977 = vmatpush1.msra.mxu0 0.0
        %7978 = vmatprep.subr.mxu0 0.0
        %7979 = vmatpush1.msra.mxu0 0.0
        %7980 = vmatprep.subr.mxu0 0.0
        %7981 = vmatpush1.msra.mxu0 0.0
        %7982 = vmatprep.mubr.f32.mxu0 0.0
        %7983 = vmatmul.mubr.f32.gmra.mrb[0].mxu0 %v7907
        %v7984 = vpop.f32.mrb[0].mxu0
        %v7985 = vadd.f32 %v7888, %v7984
        %v7986 = vpop.f32.mrb[0].mxu0
        %7987 = vmatprep.mubr.f32.mxu0 0.0
        %7988 = vmatmul.mubr.f32.gmra.mrb[0].mxu0 %v7910
        %v7989 = vpop.f32.mrb[0].mxu0
        %v7990 = vadd.f32 %v7893, %v7989
        %v7991 = vpop.f32.mrb[0].mxu0
        %7992 = vmatprep.mubr.f32.mxu0 0.0
        %7993 = vmatmul.mubr.f32.gmra.mrb[0].mxu0 %v7913
        %v7994 = vpop.f32.mrb[0].mxu0
        %v7995 = vadd.f32 %v7898, %v7994
        %v7996 = vpop.f32.mrb[0].mxu0
        %7997 = vmatprep.mubr.f32.mxu0 0.0
        %7998 = vmatmul.mubr.f32.gmra.mrb[0].mxu0 %v7916
        %v7999 = vpop.f32.mrb[0].mxu0
        %v8000 = vadd.f32 %v7903, %v7999
        %v8001 = vpop.f32.mrb[0].mxu0
        %8002 = vdwg.mxu0
        %v8003 = vadd.s32 %v7777, 2
        %v8004 = vadd.s32 %v7778, 2
        %v8005 = vadd.s32 %v7779, 2
        %v8006 = vadd.s32 %v7780, 2
        %vm8007 = vcmp.eq.s32.totalorder %v181, %v8003
        %vm8008 = vcmp.eq.s32.totalorder %v181, %v8004
        %vm8009 = vcmp.eq.s32.totalorder %v181, %v8005
        %vm8010 = vcmp.eq.s32.totalorder %v181, %v8006
        %v8011 = vsel %vm8007, 1, 0
        %v8012 = vsel %vm8008, 1, 0
        %v8013 = vsel %vm8009, 1, 0
        %v8014 = vsel %vm8010, 1, 0
        %v8015 = vcvt.s32.f32 %v8011
        %v8016 = vcvt.s32.f32 %v8012
        %v8017 = vcvt.s32.f32 %v8013
        %v8018 = vcvt.s32.f32 %v8014
        %v8020 = vsel %vm1468, %v7700, 0
        %v8023 = vsel %vm1468, %v7701, 0
        %v8026 = vsel %vm1468, %v7702, 0
        %v8029 = vsel %vm1468, %v7703, 0
        %8031 = vmatprep.subr.mxu0 0.0
        %8032 = vmatpush1.msra.mxu0 %v8015
        %8033 = vmatprep.subr.mxu0 0.0
        %8034 = vmatpush1.msra.mxu0 %v8016
        %8035 = vmatprep.subr.mxu0 0.0
        %8036 = vmatpush1.msra.mxu0 %v8017
        %8037 = vmatprep.subr.mxu0 0.0
        %8038 = vmatpush1.msra.mxu0 %v8018
        %8039 = vmatprep.subr.mxu0 0.0
        %8040 = vmatpush1.msra.mxu0 0.0
        %8041 = vmatprep.subr.mxu0 0.0
        %8042 = vmatpush1.msra.mxu0 0.0
        %8043 = vmatprep.subr.mxu0 0.0
        %8044 = vmatpush1.msra.mxu0 0.0
        %8045 = vmatprep.subr.mxu0 0.0
        %8046 = vmatpush1.msra.mxu0 0.0
        %8047 = vmatprep.subr.mxu0 0.0
        %8048 = vmatpush1.msra.mxu0 0.0
        %8049 = vmatprep.subr.mxu0 0.0
        %8050 = vmatpush1.msra.mxu0 0.0
        %8051 = vmatprep.subr.mxu0 0.0
        %8052 = vmatpush1.msra.mxu0 0.0
        %8053 = vmatprep.subr.mxu0 0.0
        %8054 = vmatpush1.msra.mxu0 0.0
        %8055 = vmatprep.subr.mxu0 0.0
        %8056 = vmatpush1.msra.mxu0 0.0
        %8057 = vmatprep.subr.mxu0 0.0
        %8058 = vmatpush1.msra.mxu0 0.0
        %8059 = vmatprep.subr.mxu0 0.0
        %8060 = vmatpush1.msra.mxu0 0.0
        %8061 = vmatprep.subr.mxu0 0.0
        %8062 = vmatpush1.msra.mxu0 0.0
        %8063 = vmatprep.subr.mxu0 0.0
        %8064 = vmatpush1.msra.mxu0 0.0
        %8065 = vmatprep.subr.mxu0 0.0
        %8066 = vmatpush1.msra.mxu0 0.0
        %8067 = vmatprep.subr.mxu0 0.0
        %8068 = vmatpush1.msra.mxu0 0.0
        %8069 = vmatprep.subr.mxu0 0.0
        %8070 = vmatpush1.msra.mxu0 0.0
        %8071 = vmatprep.subr.mxu0 0.0
        %8072 = vmatpush1.msra.mxu0 0.0
        %8073 = vmatprep.subr.mxu0 0.0
        %8074 = vmatpush1.msra.mxu0 0.0
        %8075 = vmatprep.subr.mxu0 0.0
        %8076 = vmatpush1.msra.mxu0 0.0
        %8077 = vmatprep.subr.mxu0 0.0
        %8078 = vmatpush1.msra.mxu0 0.0
        %8079 = vmatprep.subr.mxu0 0.0
        %8080 = vmatpush1.msra.mxu0 0.0
        %8081 = vmatprep.subr.mxu0 0.0
        %8082 = vmatpush1.msra.mxu0 0.0
        %8083 = vmatprep.subr.mxu0 0.0
        %8084 = vmatpush1.msra.mxu0 0.0
        %8085 = vmatprep.subr.mxu0 0.0
        %8086 = vmatpush1.msra.mxu0 0.0
        %8087 = vmatprep.subr.mxu0 0.0
        %8088 = vmatpush1.msra.mxu0 0.0
        %8089 = vmatprep.subr.mxu0 0.0
        %8090 = vmatpush1.msra.mxu0 0.0
        %8091 = vmatprep.subr.mxu0 0.0
        %8092 = vmatpush1.msra.mxu0 0.0
        %8093 = vmatprep.subr.mxu0 0.0
        %8094 = vmatpush1.msra.mxu0 0.0
        %8095 = vmatprep.mubr.f32.mxu0 0.0
        %8096 = vmatmul.mubr.f32.gmra.mrb[0].mxu0 %v8020
        %v8097 = vpop.f32.mrb[0].mxu0
        %v8098 = vadd.f32 0.0, %v8097
        %v8099 = vpop.f32.mrb[0].mxu0
        %8100 = vmatprep.mubr.f32.mxu0 0.0
        %8101 = vmatmul.mubr.f32.gmra.mrb[0].mxu0 %v8023
        %v8102 = vpop.f32.mrb[0].mxu0
        %v8103 = vadd.f32 0.0, %v8102
        %v8104 = vpop.f32.mrb[0].mxu0
        %8105 = vmatprep.mubr.f32.mxu0 0.0
        %8106 = vmatmul.mubr.f32.gmra.mrb[0].mxu0 %v8026
        %v8107 = vpop.f32.mrb[0].mxu0
        %v8108 = vadd.f32 0.0, %v8107
        %v8109 = vpop.f32.mrb[0].mxu0
        %8110 = vmatprep.mubr.f32.mxu0 0.0
        %8111 = vmatmul.mubr.f32.gmra.mrb[0].mxu0 %v8029
        %v8112 = vpop.f32.mrb[0].mxu0
        %v8113 = vadd.f32 0.0, %v8112
        %v8114 = vpop.f32.mrb[0].mxu0
        %8115 = vdwg.mxu0
        %v8116 = vadd.f32 %v7985, %v8098
        %v8117 = vadd.f32 %v7990, %v8103
        %v8118 = vadd.f32 %v7995, %v8108
        %v8119 = vadd.f32 %v8000, %v8113
        %v8120 = vadd.s32 %v7777, 3
        %v8121 = vadd.s32 %v7778, 3
        %v8122 = vadd.s32 %v7779, 3
        %v8123 = vadd.s32 %v7780, 3
        %vm8124 = vcmp.eq.s32.totalorder %v181, %v8120
        %vm8125 = vcmp.eq.s32.totalorder %v181, %v8121
        %vm8126 = vcmp.eq.s32.totalorder %v181, %v8122
        %vm8127 = vcmp.eq.s32.totalorder %v181, %v8123
        %v8128 = vsel %vm8124, 1, 0
        %v8129 = vsel %vm8125, 1, 0
        %v8130 = vsel %vm8126, 1, 0
        %v8131 = vsel %vm8127, 1, 0
        %v8132 = vcvt.s32.f32 %v8128
        %v8133 = vcvt.s32.f32 %v8129
        %v8134 = vcvt.s32.f32 %v8130
        %v8135 = vcvt.s32.f32 %v8131
        %v8137 = vsel %vm1468, %v7773, 0
        %v8140 = vsel %vm1468, %v7774, 0
        %v8143 = vsel %vm1468, %v7775, 0
        %v8146 = vsel %vm1468, %v7776, 0
        %8148 = vmatprep.subr.mxu0 0.0
        %8149 = vmatpush1.msra.mxu0 %v8132
        %8150 = vmatprep.subr.mxu0 0.0
        %8151 = vmatpush1.msra.mxu0 %v8133
        %8152 = vmatprep.subr.mxu0 0.0
        %8153 = vmatpush1.msra.mxu0 %v8134
        %8154 = vmatprep.subr.mxu0 0.0
        %8155 = vmatpush1.msra.mxu0 %v8135
        %8156 = vmatprep.subr.mxu0 0.0
        %8157 = vmatpush1.msra.mxu0 0.0
        %8158 = vmatprep.subr.mxu0 0.0
        %8159 = vmatpush1.msra.mxu0 0.0
        %8160 = vmatprep.subr.mxu0 0.0
        %8161 = vmatpush1.msra.mxu0 0.0
        %8162 = vmatprep.subr.mxu0 0.0
        %8163 = vmatpush1.msra.mxu0 0.0
        %8164 = vmatprep.subr.mxu0 0.0
        %8165 = vmatpush1.msra.mxu0 0.0
        %8166 = vmatprep.subr.mxu0 0.0
        %8167 = vmatpush1.msra.mxu0 0.0
        %8168 = vmatprep.subr.mxu0 0.0
        %8169 = vmatpush1.msra.mxu0 0.0
        %8170 = vmatprep.subr.mxu0 0.0
        %8171 = vmatpush1.msra.mxu0 0.0
        %8172 = vmatprep.subr.mxu0 0.0
        %8173 = vmatpush1.msra.mxu0 0.0
        %8174 = vmatprep.subr.mxu0 0.0
        %8175 = vmatpush1.msra.mxu0 0.0
        %8176 = vmatprep.subr.mxu0 0.0
        %8177 = vmatpush1.msra.mxu0 0.0
        %8178 = vmatprep.subr.mxu0 0.0
        %8179 = vmatpush1.msra.mxu0 0.0
        %8180 = vmatprep.subr.mxu0 0.0
        %8181 = vmatpush1.msra.mxu0 0.0
        %8182 = vmatprep.subr.mxu0 0.0
        %8183 = vmatpush1.msra.mxu0 0.0
        %8184 = vmatprep.subr.mxu0 0.0
        %8185 = vmatpush1.msra.mxu0 0.0
        %8186 = vmatprep.subr.mxu0 0.0
        %8187 = vmatpush1.msra.mxu0 0.0
        %8188 = vmatprep.subr.mxu0 0.0
        %8189 = vmatpush1.msra.mxu0 0.0
        %8190 = vmatprep.subr.mxu0 0.0
        %8191 = vmatpush1.msra.mxu0 0.0
        %8192 = vmatprep.subr.mxu0 0.0
        %8193 = vmatpush1.msra.mxu0 0.0
        %8194 = vmatprep.subr.mxu0 0.0
        %8195 = vmatpush1.msra.mxu0 0.0
        %8196 = vmatprep.subr.mxu0 0.0
        %8197 = vmatpush1.msra.mxu0 0.0
        %8198 = vmatprep.subr.mxu0 0.0
        %8199 = vmatpush1.msra.mxu0 0.0
        %8200 = vmatprep.subr.mxu0 0.0
        %8201 = vmatpush1.msra.mxu0 0.0
        %8202 = vmatprep.subr.mxu0 0.0
        %8203 = vmatpush1.msra.mxu0 0.0
        %8204 = vmatprep.subr.mxu0 0.0
        %8205 = vmatpush1.msra.mxu0 0.0
        %8206 = vmatprep.subr.mxu0 0.0
        %8207 = vmatpush1.msra.mxu0 0.0
        %8208 = vmatprep.subr.mxu0 0.0
        %8209 = vmatpush1.msra.mxu0 0.0
        %8210 = vmatprep.subr.mxu0 0.0
        %8211 = vmatpush1.msra.mxu0 0.0
        %8212 = vmatprep.mubr.f32.mxu0 0.0
        %8213 = vmatmul.mubr.f32.gmra.mrb[0].mxu0 %v8137
        %v8214 = vpop.f32.mrb[0].mxu0
        %v8215 = vadd.f32 0.0, %v8214
        %v8216 = vpop.f32.mrb[0].mxu0
        %8217 = vmatprep.mubr.f32.mxu0 0.0
        %8218 = vmatmul.mubr.f32.gmra.mrb[0].mxu0 %v8140
        %v8219 = vpop.f32.mrb[0].mxu0
        %v8220 = vadd.f32 0.0, %v8219
        %v8221 = vpop.f32.mrb[0].mxu0
        %8222 = vmatprep.mubr.f32.mxu0 0.0
        %8223 = vmatmul.mubr.f32.gmra.mrb[0].mxu0 %v8143
        %v8224 = vpop.f32.mrb[0].mxu0
        %v8225 = vadd.f32 0.0, %v8224
        %v8226 = vpop.f32.mrb[0].mxu0
        %8227 = vmatprep.mubr.f32.mxu0 0.0
        %8228 = vmatmul.mubr.f32.gmra.mrb[0].mxu0 %v8146
        %v8229 = vpop.f32.mrb[0].mxu0
        %v8230 = vadd.f32 0.0, %v8229
        %v8231 = vpop.f32.mrb[0].mxu0
        %8232 = vdwg.mxu0
        %v8233 = vadd.f32 %v8116, %v8215
        %v8234 = vadd.f32 %v8117, %v8220
        %v8235 = vadd.f32 %v8118, %v8225
        %v8236 = vadd.f32 %v8119, %v8230
        %8237 = vst [vmem:[%s173] sm:$0xff] %v8233
        %8238 = vst [vmem:[%s173 + $0x8] sm:$0xff] %v8234
        %8239 = vst [vmem:[%s173 + $0x10] sm:$0xff] %v8235
        %8240 = vst [vmem:[%s173 + $0x18] sm:$0xff] %v8236
        %s8241 = sand.u32 %s75, 1
        %s8242 = scalar_lea.sflag [#allocation5], %s8241
        %s8243 = sand.u32 %s75, 1
        %s8244 = smul.addr %s8243, 32
        %s8245 = scalar_lea.vmem [#allocation8], %s8244
        // Predicated region
        $region37: #{tpu_custom_call.1} parent=27 // pred_check
          %p8246 = pneg %p85
        $region38: #{tpu_custom_call.1} parent=27 // pred_check_branch
          %8248 = sbr.rel (%p8246) target = $region40
        $region39: #{tpu_custom_call.1} parent=27 // pred_region
          %s8250 = ssub.s32 512, 512
          %8251 = vsyncadd %s8242, %s8250
          %s8252 = smul.addr %s20, 4
          %s8253 = smul.addr %s8252, 128
          %s8254 = scalar_lea.hbm %s2, %s8253
          %s8255 = sshll.u32 %s8245, 4
          %s8256 = int_to_ptr.vmem [resolvable:$true] %s8255
          %8261 = dma.vmem_to_hbm [thread:$0]  %s8256, 512, %s8254, %s8242, 128, 128, 8
        $region40: #{tpu_custom_call.1} parent=27 // pred_fallthru
          _
      $region28: #{tpu_custom_call.1} parent=5 // pred_fallthru
        _
      %p8262 = scmp.le.s32.totalorder 2, %s15
      // Predicated region
      $region41: #{tpu_custom_call.1} parent=5 // pred_check
        %p8263 = pneg %p8262
      $region42: #{tpu_custom_call.1} parent=5 // pred_check_branch
        %8265 = sbr.rel (%p8263) target = $region44
      $region43: #{tpu_custom_call.1} parent=5 // pred_region
        %s8266 = ssub.s32 %s15, 2
        // Predicated region
        $region45: #{tpu_custom_call.1} parent=43 // pred_check
          %p8267 = pneg %p91
        $region46: #{tpu_custom_call.1} parent=43 // pred_check_branch
          %8269 = sbr.rel (%p8267) target = $region48
        $region47: #{tpu_custom_call.1} parent=43 // pred_region
          %s8270 = sand.u32 %s76, 1
          %s8271 = scalar_lea.sflag [#allocation5], %s8270
          %s8272 = sand.u32 %s76, 1
          %s8273 = smul.addr %s8272, 32
          %s8274 = scalar_lea.vmem [#allocation8], %s8273
          %8275 = dma.done %s8271, 512
        $region48: #{tpu_custom_call.1} parent=43 // pred_fallthru
          _
      $region44: #{tpu_custom_call.1} parent=5 // pred_fallthru
        _
    $region6: #{tpu_custom_call.1} parent=1 // loop_footer
      %s19 = sadd.s32 1, %s15
    $region7: #{tpu_custom_call.1} parent=1 // loop_footer_branch
      %14 = sbr.rel target = $region3
    $region8: #{tpu_custom_call.1} parent=1 // loop_exit
      _
    %8276 = vsyncpa [#allocation4], 1
    %s8277 = scalar_lea.sflag [#allocation4], 1
    %8278 = vsyncpa %s8277, 1
    %8279 = vsyncpa [#allocation5], 1
    %s8280 = scalar_lea.sflag [#allocation5], 1
    %8281 = vsyncpa %s8280, 1
    %8282 = vsyncpa [#allocation6], 1
    %s8283 = scalar_lea.sflag [#allocation6], 1
    %8284 = vsyncpa %s8283, 1

</llo_original>
